<compile_context>
chip_gen: v5e
topology: v5e:2x2
jax: 0.10.0
libtpu: 0.0.40
codegen_flags: <defaults>
</compile_context>

<pallas_src>
import functools

import jax
import jax.numpy as jnp
from jax.experimental import pallas as pl
from jax.experimental.pallas import tpu as pltpu

LEAKY_SLOPE = 0.1
BN_EPS = 1e-5

# Conservative per-grid-step VMEM budget: fits v7x's 64 MiB/TC with headroom
# and is far under v5e/v6e's 128 MiB physical VMEM.
VMEM_BUDGET_BYTES = 40 << 20


def _lrelu(h):
    return jnp.where(h > 0, h, LEAKY_SLOPE * h)


def _lane(n):
    return -(-n // 128) * 128


def _vmem_estimate_bytes(tb, Ht, W, K1, chans):
    """Rough per-grid-step VMEM bytes (lane-padded): input double-buffer,
    weights/shifts, in-kernel activations, output block, pool accumulator."""
    F32, BF16 = 4, 2
    M1 = tb * Ht * W
    M2 = tb * (Ht // 2) * (W // 2)
    est = 0
    est += 2 * M1 * _lane(K1) * BF16                  # im2col input block (x2 bufs)
    est += M1 * _lane(K1) * BF16                      # patch value materialized in-kernel
    prev = K1
    for c in chans:
        est += 2 * max(prev, 16) * _lane(c) * BF16    # folded weights (x2 bufs)
        est += 2 * 8 * _lane(c) * F32                 # shifts (x2 bufs)
        prev = c
    est += M1 * _lane(chans[0]) * (F32 + BF16)        # layer-1 activation + pool temps
    for c in chans[1:]:
        est += M2 * _lane(c) * (F32 + BF16)           # 1x1-conv activations (f32 + bf16)
    est += 2 * max(tb, 8) * _lane(chans[-1]) * F32    # output block (x2 bufs)
    est += max(tb, 8) * _lane(chans[-1]) * F32        # avg-pool accumulator scratch
    return est


def _deep_image_kernel(TB, Ht, W, inv_pool,
                       xpatch_ref,
                       w1_ref, t1_ref,
                       w2_ref, t2_ref,
                       w3_ref, t3_ref,
                       w4_ref, t4_ref,
                       out_ref, acc_ref):
    """One (batch-tile, spatial-tile) grid step.

    xpatch_ref : (TB, Ht*W, K1) bf16  packed im2col patches of the 3x3/pad=1 conv
    w1_ref     : (K1, C1)       bf16  3x3 conv weight, BN scale folded, K zero-padded
    wK_ref     : (C_{k-1}, C_k) bf16  1x1 convs as matmuls, BN scale folded
    tK_ref     : (1, C_k)       f32   conv-bias + eval-mode BN shift
    out_ref    : (1, TB, C4)    f32   global-average-pooled features (written at last s)
    acc_ref    : (TB, C4)       f32   running spatial sum for the adaptive avg pool
    """
    c1 = t1_ref.shape[-1]
    c4 = t4_ref.shape[-1]
    K1 = w1_ref.shape[0]
    Hh, Wh = Ht // 2, W // 2
    M1 = TB * Ht * W
    M2 = TB * Hh * Wh
    s = pl.program_id(1)

    # ---- layer 1: 3x3 conv == ONE K=K1 bf16 matmul on the MXU (f32 accumulate) ----
    patch = xpatch_ref[...].reshape(M1, K1)
    z1 = jnp.dot(patch, w1_ref[...], preferred_element_type=jnp.float32)
    h1 = _lrelu(z1 + t1_ref[...])                               # (M1, C1) f32

    # ---- MaxPool2d(2, 2); channels stay on the lane axis throughout ----
    # (reshape/reduce formulation known to lower cleanly in Mosaic)
    h1 = h1.reshape(TB, Hh, 2, W, c1)
    h1 = jnp.max(h1, axis=2)                                    # H-direction pair max
    h1 = h1.reshape(TB, Hh, Wh, 2, c1)
    h1 = jnp.max(h1, axis=3)                                    # W-direction pair max
    h1 = h1.reshape(M2, c1).astype(jnp.bfloat16)

    # ---- layers 2-4: 1x1 convs == per-pixel bf16 matmuls (f32 accumulate) ----
    def conv1x1(h, w_ref, t_ref):
        z = jnp.dot(h, w_ref[...], preferred_element_type=jnp.float32)
        return _lrelu(z + t_ref[...])

    h2 = conv1x1(h1, w2_ref, t2_ref).astype(jnp.bfloat16)
    h3 = conv1x1(h2, w3_ref, t3_ref).astype(jnp.bfloat16)
    h4 = conv1x1(h3, w4_ref, t4_ref)                            # (M2, C4) f32

    # ---- AdaptiveAvgPool2d((1,1)) as a running sum over spatial tiles ----
    part = jnp.sum(h4.reshape(TB, Hh * Wh, c4), axis=1)         # (TB, C4)

    @pl.when(s == 0)
    def _():
        acc_ref[...] = jnp.zeros_like(acc_ref)

    acc_ref[...] += part

    @pl.when(s == pl.num_programs(1) - 1)
    def _():
        out_ref[...] = (acc_ref[...] * inv_pool).reshape(1, TB, c4)


def deep_image_forward(x_nchw, kern_params, tb=None, spatial_tiles=None):
    """x_nchw: (B, 3, H, W) float32 (PyTorch NCHW convention)."""
    B, Cin, H, W = x_nchw.shape
    assert H % 2 == 0 and W % 2 == 0, "MaxPool2d(2, 2) requires even H and W"

    (w1, t1), (w2, t2), (w3, t3), (w4, t4) = kern_params
    K1 = w1.shape[0]
    assert K1 == 9 * Cin + (-(9 * Cin)) % 8, (K1, Cin)
    chans = (w1.shape[-1], w2.shape[-1], w3.shape[-1], w4.shape[-1])
    c4 = chans[-1]

    # tb: sized from the POST-pool row count (layers 2-4 carry the FLOPs),
    # targeting >= 1024 rows per step; single-TC chips (v5e/v6e) want it as
    # large as the batch allows, and on v7x the spatial axis keeps the pipeline
    # busy when it is > 1 step.
    if tb is None:
        rows_per_img = (H // 2) * (W // 2)
        tb = max(1, min(B, pl.cdiv(1024, rows_per_img)))
        while B % tb:
            tb -= 1
    assert B % tb == 0, (B, tb)

    # Spatial tiling of the image rows (layers 1-4 + running-sum avg pool) so
    # the per-step VMEM footprint stays inside the budget at realistic H, W.
    st_cands = [s for s in range(1, H + 1) if H % s == 0 and (H // s) % 2 == 0]
    if spatial_tiles is None:
        spatial_tiles = st_cands[-1]
        for s in st_cands:
            if _vmem_estimate_bytes(tb, H // s, W, K1, chans) <= VMEM_BUDGET_BYTES:
                spatial_tiles = s
                break
    assert spatial_tiles in st_cands, (H, spatial_tiles)
    Ht = H // spatial_tiles

    # Host-side packed bf16 im2col for the 3x3/pad=1 conv: minor dim = 9*Cin
    # (zero-padded to K1) -> dense lane DMA, single K=K1 MXU matmul in-kernel.
    x = jnp.transpose(x_nchw, (0, 2, 3, 1))                     # NCHW -> NHWC
    xp = jnp.pad(x, ((0, 0), (1, 1), (1, 1), (0, 0)))
    taps = [xp[:, kh:kh + H, kw:kw + W, :] for kh in range(3) for kw in range(3)]
    patches = jnp.concatenate(taps, axis=-1)                    # (B, H, W, 9*Cin)
    patches = jnp.pad(patches, ((0, 0), (0, 0), (0, 0), (0, K1 - 9 * Cin)))
    patches = patches.reshape(B, H * W, K1).astype(jnp.bfloat16)

    est = _vmem_estimate_bytes(tb, Ht, W, K1, chans)
    vmem_limit = int(min(max(3 * est // 2 + (2 << 20), 32 << 20), 64 << 20))

    def whole(shape):
        # Weights / shifts: constant index_map -> DMA'd once, resident across grid.
        return pl.BlockSpec(shape, lambda b, s: (0,) * len(shape))

    inv_pool = 1.0 / float((H // 2) * (W // 2))

    out = pl.pallas_call(
        functools.partial(_deep_image_kernel, tb, Ht, W, inv_pool),
        out_shape=jax.ShapeDtypeStruct((B // tb, tb, c4), jnp.float32),
        grid=(B // tb, spatial_tiles),
        in_specs=[
            pl.BlockSpec((tb, Ht * W, K1), lambda b, s: (b, s, 0)),
            whole((K1, chans[0])), whole((1, chans[0])),
            whole((chans[0], chans[1])), whole((1, chans[1])),
            whole((chans[1], chans[2])), whole((1, chans[2])),
            whole((chans[2], chans[3])), whole((1, chans[3])),
        ],
        out_specs=pl.BlockSpec((1, tb, c4), lambda b, s: (b, 0, 0)),
        scratch_shapes=[pltpu.VMEM((tb, c4), jnp.float32)],
        compiler_params=pltpu.CompilerParams(
            dimension_semantics=("parallel", "arbitrary"),
            vmem_limit_bytes=vmem_limit),
    )(patches, w1, t1, w2, t2, w3, t3, w4, t4)

    return out.reshape(B, c4)                                   # == x.view(B, -1)


def make_params(key, cin=3, channels=(64, 128, 256, 512)):
    """Deterministic synthetic parameters for the 4 conv_layer blocks."""
    params = []
    prev = cin
    for li, cout in enumerate(channels):
        ks = 3 if li == 0 else 1
        key, kw_, kb, kg, kbe, km, kv = jax.random.split(key, 7)
        w_hwio = 0.1 * jax.random.normal(kw_, (ks, ks, prev, cout), jnp.float32)
        b = 0.1 * jax.random.normal(kb, (cout,), jnp.float32)
        gamma = 1.0 + 0.1 * jax.random.normal(kg, (cout,), jnp.float32)
        beta = 0.1 * jax.random.normal(kbe, (cout,), jnp.float32)
        mean = 0.1 * jax.random.normal(km, (cout,), jnp.float32)
        var = 0.5 + 0.1 * jnp.abs(jax.random.normal(kv, (cout,), jnp.float32))
        # Fold conv-bias + eval-mode BatchNorm into the weights and a shift:
        #   BN(conv(x, w) + b) = conv(x, w * s) + t,  s = gamma / sqrt(var + eps)
        s = gamma / jnp.sqrt(var + BN_EPS)
        t = (b - mean) * s + beta
        w_fold = (w_hwio * s).astype(jnp.bfloat16)               # per-out-channel scale
        if ks == 3:
            w_kern = w_fold.reshape(9 * prev, cout)              # rows ordered (kh, kw, cin)
            kpad = (-w_kern.shape[0]) % 8                        # 27 -> 32 for Cin=3
            if kpad:
                w_kern = jnp.pad(w_kern, ((0, kpad), (0, 0)))
        else:
            w_kern = w_fold.reshape(prev, cout)
        params.append(dict(
            w_kern=w_kern, t=t.reshape(1, cout).astype(jnp.float32),
            w_hwio=w_hwio, b=b, gamma=gamma, beta=beta, mean=mean, var=var))
        prev = cout
    return params


def ref_forward(x_nchw, params):
    """Pure-JAX f32 reference mirroring the PyTorch forward (eval-mode BN)."""
    x = jnp.transpose(x_nchw, (0, 2, 3, 1))
    for li, p in enumerate(params):
        y = jax.lax.conv_general_dilated(
            x, p["w_hwio"], window_strides=(1, 1),
            padding="SAME" if li == 0 else "VALID",
            dimension_numbers=("NHWC", "HWIO", "NHWC"),
            precision=jax.lax.Precision.HIGHEST)
        y = y + p["b"]
        y = (y - p["mean"]) / jnp.sqrt(p["var"] + BN_EPS) * p["gamma"] + p["beta"]
        y = jnp.where(y > 0, y, LEAKY_SLOPE * y)
        if li == 0:
            y = jax.lax.reduce_window(y, -jnp.inf, jax.lax.max,
                                      (1, 2, 2, 1), (1, 2, 2, 1), "VALID")
        x = y
    return jnp.mean(x, axis=(1, 2))                              # (B, 512)


if __name__ == "__main__":
    key = jax.random.PRNGKey(0)
    kx, kp = jax.random.split(key)

    B, Cin, H, W = 4, 3, 16, 16                                  # small NCHW input
    x = jax.random.normal(kx, (B, Cin, H, W), jnp.float32)

    params = make_params(kp, cin=Cin)
    kern_params = [(p["w_kern"], p["t"]) for p in params]

    ref = ref_forward(x, params)

    # Auto config (single spatial tile at this size): whole-image per step.
    out = jax.block_until_ready(deep_image_forward(x, kern_params))
    assert out.shape == (B, 512), out.shape
    err = float(jnp.max(jnp.abs(out - ref)))
    assert jnp.allclose(out, ref, rtol=2e-2, atol=2e-2), f"max abs err {err}"

    # Exercise the spatial-tiled running-sum avg-pool path (v7x VMEM-budget path).
    out2 = jax.block_until_ready(deep_image_forward(x, kern_params, spatial_tiles=2))
    err2 = float(jnp.max(jnp.abs(out2 - ref)))
    assert jnp.allclose(out2, ref, rtol=2e-2, atol=2e-2), f"max abs err {err2}"

    # TODO(synk): pretrained=True (torchvision ResNet backbone) and the optional
    # MLP imagehead (with dropout) are not reproduced here.
    print("KERNEL_OK")
</pallas_src>

<mosaic_0001>
module attributes {stable_mosaic.version = 11 : i64} {
  func.func @_deep_image_kernel(%arg0: i32, %arg1: i32, %arg2: memref<4x256x32xbf16, #tpu.memory_space<vmem>>, %arg3: memref<32x64xbf16, #tpu.memory_space<vmem>>, %arg4: memref<1x64xf32, #tpu.memory_space<vmem>>, %arg5: memref<64x128xbf16, #tpu.memory_space<vmem>>, %arg6: memref<1x128xf32, #tpu.memory_space<vmem>>, %arg7: memref<128x256xbf16, #tpu.memory_space<vmem>>, %arg8: memref<1x256xf32, #tpu.memory_space<vmem>>, %arg9: memref<256x512xbf16, #tpu.memory_space<vmem>>, %arg10: memref<1x512xf32, #tpu.memory_space<vmem>>, %arg11: memref<1x4x512xf32, #tpu.memory_space<vmem>>, %arg12: memref<4x512xf32, #tpu.memory_space<vmem>>) attributes {dimension_semantics = [#tpu.dimension_semantics<parallel>, #tpu.dimension_semantics<arbitrary>], iteration_bounds = array<i64: 1, 1>, scalar_prefetch = 0 : i64, scratch_operands = 1 : i64, tpu.core_type = #tpu.core_type<tc>, window_params = [{transform_indices = @transform_0, window_bounds = array<i64: 4, 256, 32>}, {pipeline_mode = #tpu.pipeline_mode<synchronous>, transform_indices = @transform_1, window_bounds = array<i64: 32, 64>}, {pipeline_mode = #tpu.pipeline_mode<synchronous>, transform_indices = @transform_2, window_bounds = array<i64: 1, 64>}, {pipeline_mode = #tpu.pipeline_mode<synchronous>, transform_indices = @transform_3, window_bounds = array<i64: 64, 128>}, {pipeline_mode = #tpu.pipeline_mode<synchronous>, transform_indices = @transform_4, window_bounds = array<i64: 1, 128>}, {pipeline_mode = #tpu.pipeline_mode<synchronous>, transform_indices = @transform_5, window_bounds = array<i64: 128, 256>}, {pipeline_mode = #tpu.pipeline_mode<synchronous>, transform_indices = @transform_6, window_bounds = array<i64: 1, 256>}, {pipeline_mode = #tpu.pipeline_mode<synchronous>, transform_indices = @transform_7, window_bounds = array<i64: 256, 512>}, {pipeline_mode = #tpu.pipeline_mode<synchronous>, transform_indices = @transform_8, window_bounds = array<i64: 1, 512>}, {transform_indices = @transform_9, window_bounds = array<i64: 1, 4, 512>}]} {
    %c0 = arith.constant 0 : index
    %c0_0 = arith.constant 0 : index
    %c0_1 = arith.constant 0 : index
    %0 = vector.load %arg2[%c0, %c0_0, %c0_1] : memref<4x256x32xbf16, #tpu.memory_space<vmem>>, vector<4x256x32xbf16>
    %1 = vector.shape_cast %0 : vector<4x256x32xbf16> to vector<1024x32xbf16>
    %c0_2 = arith.constant 0 : index
    %c0_3 = arith.constant 0 : index
    %2 = vector.load %arg3[%c0_2, %c0_3] : memref<32x64xbf16, #tpu.memory_space<vmem>>, vector<32x64xbf16>
    %cst = arith.constant dense<0.000000e+00> : vector<1024x64xf32>
    %3 = tpu.matmul %1, %2, %cst {dimension_numbers = #tpu.dot_dimension_numbers<[1], [0], [0], [1], [0, 0, 1, 1], [], []>} : vector<1024x32xbf16>, vector<32x64xbf16>, vector<1024x64xf32> -> vector<1024x64xf32>
    %c0_4 = arith.constant 0 : index
    %c0_5 = arith.constant 0 : index
    %4 = vector.load %arg4[%c0_4, %c0_5] : memref<1x64xf32, #tpu.memory_space<vmem>>, vector<1x64xf32>
    %5 = vector.broadcast %4 : vector<1x64xf32> to vector<1024x64xf32>
    %6 = arith.addf %3, %5 : vector<1024x64xf32>
    %cst_6 = arith.constant 0.000000e+00 : f32
    %7 = vector.broadcast %cst_6 : f32 to vector<1024x64xf32>
    %8 = arith.cmpf ogt, %6, %7 : vector<1024x64xf32>
    %cst_7 = arith.constant 1.000000e-01 : f32
    %9 = vector.broadcast %cst_7 : f32 to vector<1024x64xf32>
    %10 = arith.mulf %9, %6 : vector<1024x64xf32>
    %11 = arith.select %8, %6, %10 : vector<1024x64xi1>, vector<1024x64xf32>
    %12 = vector.shape_cast %11 : vector<1024x64xf32> to vector<4x8x2x16x64xf32>
    %cst_8 = arith.constant dense<0xFF800000> : vector<4x8x16x64xf32>
    %13 = vector.multi_reduction <maximumf>, %12, %cst_8 [2] : vector<4x8x2x16x64xf32> to vector<4x8x16x64xf32>
    %14 = vector.shape_cast %13 : vector<4x8x16x64xf32> to vector<4x8x8x2x64xf32>
    %cst_9 = arith.constant dense<0xFF800000> : vector<4x8x8x64xf32>
    %15 = vector.multi_reduction <maximumf>, %14, %cst_9 [3] : vector<4x8x8x2x64xf32> to vector<4x8x8x64xf32>
    %16 = vector.shape_cast %15 : vector<4x8x8x64xf32> to vector<256x64xf32>
    %17 = arith.truncf %16 : vector<256x64xf32> to vector<256x64xbf16>
    %c0_10 = arith.constant 0 : index
    %c0_11 = arith.constant 0 : index
    %18 = vector.load %arg5[%c0_10, %c0_11] : memref<64x128xbf16, #tpu.memory_space<vmem>>, vector<64x128xbf16>
    %cst_12 = arith.constant dense<0.000000e+00> : vector<256x128xf32>
    %19 = tpu.matmul %17, %18, %cst_12 {dimension_numbers = #tpu.dot_dimension_numbers<[1], [0], [0], [1], [0, 0, 1, 1], [], []>} : vector<256x64xbf16>, vector<64x128xbf16>, vector<256x128xf32> -> vector<256x128xf32>
    %c0_13 = arith.constant 0 : index
    %c0_14 = arith.constant 0 : index
    %20 = vector.load %arg6[%c0_13, %c0_14] : memref<1x128xf32, #tpu.memory_space<vmem>>, vector<1x128xf32>
    %21 = vector.broadcast %20 : vector<1x128xf32> to vector<256x128xf32>
    %22 = arith.addf %19, %21 : vector<256x128xf32>
    %cst_15 = arith.constant 0.000000e+00 : f32
    %23 = vector.broadcast %cst_15 : f32 to vector<256x128xf32>
    %24 = arith.cmpf ogt, %22, %23 : vector<256x128xf32>
    %cst_16 = arith.constant 1.000000e-01 : f32
    %25 = vector.broadcast %cst_16 : f32 to vector<256x128xf32>
    %26 = arith.mulf %25, %22 : vector<256x128xf32>
    %27 = arith.select %24, %22, %26 : vector<256x128xi1>, vector<256x128xf32>
    %28 = arith.truncf %27 : vector<256x128xf32> to vector<256x128xbf16>
    %c0_17 = arith.constant 0 : index
    %c0_18 = arith.constant 0 : index
    %29 = vector.load %arg7[%c0_17, %c0_18] : memref<128x256xbf16, #tpu.memory_space<vmem>>, vector<128x256xbf16>
    %cst_19 = arith.constant dense<0.000000e+00> : vector<256x256xf32>
    %30 = tpu.matmul %28, %29, %cst_19 {dimension_numbers = #tpu.dot_dimension_numbers<[1], [0], [0], [1], [0, 0, 1, 1], [], []>} : vector<256x128xbf16>, vector<128x256xbf16>, vector<256x256xf32> -> vector<256x256xf32>
    %c0_20 = arith.constant 0 : index
    %c0_21 = arith.constant 0 : index
    %31 = vector.load %arg8[%c0_20, %c0_21] : memref<1x256xf32, #tpu.memory_space<vmem>>, vector<1x256xf32>
    %32 = vector.broadcast %31 : vector<1x256xf32> to vector<256x256xf32>
    %33 = arith.addf %30, %32 : vector<256x256xf32>
    %cst_22 = arith.constant 0.000000e+00 : f32
    %34 = vector.broadcast %cst_22 : f32 to vector<256x256xf32>
    %35 = arith.cmpf ogt, %33, %34 : vector<256x256xf32>
    %cst_23 = arith.constant 1.000000e-01 : f32
    %36 = vector.broadcast %cst_23 : f32 to vector<256x256xf32>
    %37 = arith.mulf %36, %33 : vector<256x256xf32>
    %38 = arith.select %35, %33, %37 : vector<256x256xi1>, vector<256x256xf32>
    %39 = arith.truncf %38 : vector<256x256xf32> to vector<256x256xbf16>
    %c0_24 = arith.constant 0 : index
    %c0_25 = arith.constant 0 : index
    %40 = vector.load %arg9[%c0_24, %c0_25] : memref<256x512xbf16, #tpu.memory_space<vmem>>, vector<256x512xbf16>
    %cst_26 = arith.constant dense<0.000000e+00> : vector<256x512xf32>
    %41 = tpu.matmul %39, %40, %cst_26 {dimension_numbers = #tpu.dot_dimension_numbers<[1], [0], [0], [1], [0, 0, 1, 1], [], []>} : vector<256x256xbf16>, vector<256x512xbf16>, vector<256x512xf32> -> vector<256x512xf32>
    %c0_27 = arith.constant 0 : index
    %c0_28 = arith.constant 0 : index
    %42 = vector.load %arg10[%c0_27, %c0_28] : memref<1x512xf32, #tpu.memory_space<vmem>>, vector<1x512xf32>
    %43 = vector.broadcast %42 : vector<1x512xf32> to vector<256x512xf32>
    %44 = arith.addf %41, %43 : vector<256x512xf32>
    %cst_29 = arith.constant 0.000000e+00 : f32
    %45 = vector.broadcast %cst_29 : f32 to vector<256x512xf32>
    %46 = arith.cmpf ogt, %44, %45 : vector<256x512xf32>
    %cst_30 = arith.constant 1.000000e-01 : f32
    %47 = vector.broadcast %cst_30 : f32 to vector<256x512xf32>
    %48 = arith.mulf %47, %44 : vector<256x512xf32>
    %49 = arith.select %46, %44, %48 : vector<256x512xi1>, vector<256x512xf32>
    %50 = vector.shape_cast %49 : vector<256x512xf32> to vector<4x64x512xf32>
    %cst_31 = arith.constant dense<0.000000e+00> : vector<4x512xf32>
    %51 = vector.multi_reduction <add>, %50, %cst_31 [1] : vector<4x64x512xf32> to vector<4x512xf32>
    %c0_i32 = arith.constant 0 : i32
    %52 = arith.cmpi eq, %arg1, %c0_i32 : i32
    %53 = arith.extui %52 : i1 to i32
    %c0_i32_32 = arith.constant 0 : i32
    %54 = arith.cmpi ne, %53, %c0_i32_32 : i32
    scf.if %54 {
      %cst_39 = arith.constant 0.000000e+00 : f32
      %61 = vector.broadcast %cst_39 : f32 to vector<4x512xf32>
      %c0_40 = arith.constant 0 : index
      %c0_41 = arith.constant 0 : index
      %62 = vector.load %arg12[%c0_40, %c0_41] : memref<4x512xf32, #tpu.memory_space<vmem>>, vector<4x512xf32>
      tpu.vector_store %arg12[%c0_40, %c0_41], %61 {strides = array<i32>} : memref<4x512xf32, #tpu.memory_space<vmem>>, vector<4x512xf32>,
    } else {
    }
    %c0_33 = arith.constant 0 : index
    %c0_34 = arith.constant 0 : index
    %55 = vector.load %arg12[%c0_33, %c0_34] : memref<4x512xf32, #tpu.memory_space<vmem>>, vector<4x512xf32>
    %56 = arith.addf %55, %51 : vector<4x512xf32>
    %c0_35 = arith.constant 0 : index
    %c0_36 = arith.constant 0 : index
    %57 = vector.load %arg12[%c0_35, %c0_36] : memref<4x512xf32, #tpu.memory_space<vmem>>, vector<4x512xf32>
    tpu.vector_store %arg12[%c0_35, %c0_36], %56 {strides = array<i32>} : memref<4x512xf32, #tpu.memory_space<vmem>>, vector<4x512xf32>,
    %c0_i32_37 = arith.constant 0 : i32
    %58 = arith.cmpi eq, %arg1, %c0_i32_37 : i32
    %59 = arith.extui %58 : i1 to i32
    %c0_i32_38 = arith.constant 0 : i32
    %60 = arith.cmpi ne, %59, %c0_i32_38 : i32
    scf.if %60 {
      %c0_39 = arith.constant 0 : index
      %c0_40 = arith.constant 0 : index
      %61 = vector.load %arg12[%c0_39, %c0_40] : memref<4x512xf32, #tpu.memory_space<vmem>>, vector<4x512xf32>
      %cst_41 = arith.constant 1.562500e-02 : f32
      %62 = vector.broadcast %cst_41 : f32 to vector<4x512xf32>
      %63 = arith.mulf %61, %62 : vector<4x512xf32>
      %64 = vector.shape_cast %63 : vector<4x512xf32> to vector<1x4x512xf32>
      %c0_42 = arith.constant 0 : index
      %c0_43 = arith.constant 0 : index
      %c0_44 = arith.constant 0 : index
      %65 = vector.load %arg11[%c0_42, %c0_43, %c0_44] : memref<1x4x512xf32, #tpu.memory_space<vmem>>, vector<1x4x512xf32>
      tpu.vector_store %arg11[%c0_42, %c0_43, %c0_44], %64 {strides = array<i32>} : memref<1x4x512xf32, #tpu.memory_space<vmem>>, vector<1x4x512xf32>,
    } else {
    }
    return
  }
  func.func @transform_0(%arg0: i32, %arg1: i32) -> (i32, i32, i32) {
    %c0_i32 = arith.constant 0 : i32
    %c0_i32_0 = arith.constant 0 : i32
    return %arg0, %arg1, %c0_i32 : i32, i32, i32
  }
  func.func @transform_1(%arg0: i32, %arg1: i32) -> (i32, i32) {
    %c0_i32 = arith.constant 0 : i32
    %c0_i32_0 = arith.constant 0 : i32
    %c0_i32_1 = arith.constant 0 : i32
    return %c0_i32, %c0_i32_0 : i32, i32
  }
  func.func @transform_2(%arg0: i32, %arg1: i32) -> (i32, i32) {
    %c0_i32 = arith.constant 0 : i32
    %c0_i32_0 = arith.constant 0 : i32
    %c0_i32_1 = arith.constant 0 : i32
    return %c0_i32, %c0_i32_0 : i32, i32
  }
  func.func @transform_3(%arg0: i32, %arg1: i32) -> (i32, i32) {
    %c0_i32 = arith.constant 0 : i32
    %c0_i32_0 = arith.constant 0 : i32
    %c0_i32_1 = arith.constant 0 : i32
    return %c0_i32, %c0_i32_0 : i32, i32
  }
  func.func @transform_4(%arg0: i32, %arg1: i32) -> (i32, i32) {
    %c0_i32 = arith.constant 0 : i32
    %c0_i32_0 = arith.constant 0 : i32
    %c0_i32_1 = arith.constant 0 : i32
    return %c0_i32, %c0_i32_0 : i32, i32
  }
  func.func @transform_5(%arg0: i32, %arg1: i32) -> (i32, i32) {
    %c0_i32 = arith.constant 0 : i32
    %c0_i32_0 = arith.constant 0 : i32
    %c0_i32_1 = arith.constant 0 : i32
    return %c0_i32, %c0_i32_0 : i32, i32
  }
  func.func @transform_6(%arg0: i32, %arg1: i32) -> (i32, i32) {
    %c0_i32 = arith.constant 0 : i32
    %c0_i32_0 = arith.constant 0 : i32
    %c0_i32_1 = arith.constant 0 : i32
    return %c0_i32, %c0_i32_0 : i32, i32
  }
  func.func @transform_7(%arg0: i32, %arg1: i32) -> (i32, i32) {
    %c0_i32 = arith.constant 0 : i32
    %c0_i32_0 = arith.constant 0 : i32
    %c0_i32_1 = arith.constant 0 : i32
    return %c0_i32, %c0_i32_0 : i32, i32
  }
  func.func @transform_8(%arg0: i32, %arg1: i32) -> (i32, i32) {
    %c0_i32 = arith.constant 0 : i32
    %c0_i32_0 = arith.constant 0 : i32
    %c0_i32_1 = arith.constant 0 : i32
    return %c0_i32, %c0_i32_0 : i32, i32
  }
  func.func @transform_9(%arg0: i32, %arg1: i32) -> (i32, i32, i32) {
    %c0_i32 = arith.constant 0 : i32
    %c0_i32_0 = arith.constant 0 : i32
    %c0_i32_1 = arith.constant 0 : i32
    return %arg0, %c0_i32, %c0_i32_0 : i32, i32, i32
  }
}

</mosaic_0001>

<llo_original>
// kernel: tpu_custom_call.1
$region0: #{tpu_custom_call.1}
  #allocation0 [shape = 'u32[]', space=smem, size = 0x4, offset = 0x4, fixed_abs, tag = 'smem constant byte address 0x4 - core index']
  #allocation1 [shape = 'u32[72,128]{1,0:T(1,128)}', space=vmem, size = 0x9000, scoped, tag = 'internal scratch']
  #allocation2 [shape = 'f32[4,512]{1,0:T(4,128)}', space=vmem, size = 0x2000, scoped, tag = 'scratch operand']
  %s0 = inlined_call_operand.vmem [shape: bf16[4,256,32], index: 0, kind: input, shape index: {}]
  %s1 = inlined_call_operand.hbm [shape: bf16[32,64], index: 1, kind: input, shape index: {}]
  %s2 = inlined_call_operand.hbm [shape: f32[1,64], index: 2, kind: input, shape index: {}]
  %s3 = inlined_call_operand.hbm [shape: bf16[64,128], index: 3, kind: input, shape index: {}]
  %s4 = inlined_call_operand.hbm [shape: f32[1,128], index: 4, kind: input, shape index: {}]
  %s5 = inlined_call_operand.vmem [shape: bf16[128,256], index: 5, kind: input, shape index: {}]
  %s6 = inlined_call_operand.vmem [shape: f32[1,256], index: 6, kind: input, shape index: {}]
  %s7 = inlined_call_operand.vmem [shape: bf16[256,512], index: 7, kind: input, shape index: {}]
  %s8 = inlined_call_operand.vmem [shape: f32[1,512], index: 8, kind: input, shape index: {}]
  %s9 = inlined_call_operand.hbm [shape: f32[1,4,512], index: 9, kind: output, shape index: {}]
  %s10 = sld [smem:[#allocation0]]
  $region70: #{tpu_custom_call.1} parent=0
    _
  %s12 = ssub.s32 1, %s10
  %s13 = scalar_select 0, %s12, %s10
  $region1: #{tpu_custom_call.1} parent=0
    #allocation3 [shape = 'u8[8192]{0}', space=vmem, size = 0x2000, scoped, tag = 'input window, operand 1, single buffered']
    #allocation4 [shape = 's32[1]{0}', space=sflag, size = 0x4, scoped, tag = 'scoped memory for tpu_custom_call.1']
    #allocation5 [shape = 's32[1]{0}', space=sflag, size = 0x4, scoped, tag = 'scoped memory for tpu_custom_call.1']
    #allocation6 [shape = 'u8[512]{0}', space=vmem, size = 0x400, scoped, tag = 'input window, operand 2, single buffered']
    #allocation7 [shape = 's32[1]{0}', space=sflag, size = 0x4, scoped, tag = 'scoped memory for tpu_custom_call.1']
    #allocation8 [shape = 'u8[16384]{0}', space=vmem, size = 0x4000, scoped, tag = 'input window, operand 3, single buffered']
    #allocation9 [shape = 'u8[512]{0}', space=vmem, size = 0x400, scoped, tag = 'input window, operand 4, single buffered']
    #allocation10 [shape = 's32[1]{0}', space=sflag, size = 0x4, scoped, tag = 'scoped memory for tpu_custom_call.1']
    #allocation11 [shape = 'u8[8192]{0}', space=vmem, size = 0x2000, scoped, tag = 'output window, operand 0, single buffered']
    %14 = vsyncpa [#allocation4], 0
    %15 = vsyncpa [#allocation7], 0
    %16 = vsyncpa [#allocation10], 0
    %17 = vsyncpa [#allocation5], 0
    // Predicated region
    $region2: #{tpu_custom_call.1} parent=1 // pred_check
      _
    $region3: #{tpu_custom_call.1} parent=1 // pred_check_branch
      %19 = sbr.rel (0) target = $region5
    $region4: #{tpu_custom_call.1} parent=1 // pred_region
      _
    $region5: #{tpu_custom_call.1} parent=1 // pred_fallthru
      _
    // Predicated region
    $region6: #{tpu_custom_call.1} parent=1 // pred_check
      _
    $region7: #{tpu_custom_call.1} parent=1 // pred_check_branch
      %21 = sbr.rel (0) target = $region9
    $region8: #{tpu_custom_call.1} parent=1 // pred_region
      %23 = vsyncadd [#allocation4], 0
      %s24 = sshll.u32 %s1, 4
      %s25 = int_to_ptr.hbm [resolvable:$true] %s24
      %s26 = sshll.u32 [#allocation3], 4
      %s27 = int_to_ptr.vmem [resolvable:$true] %s26
      %32 = dma.hbm_to_vmem [thread:$0]  %s25, 256, %s27, [#allocation4], 64, 64, 4
    $region9: #{tpu_custom_call.1} parent=1 // pred_fallthru
      _
    // Predicated region
    $region10: #{tpu_custom_call.1} parent=1 // pred_check
      _
    $region11: #{tpu_custom_call.1} parent=1 // pred_check_branch
      %34 = sbr.rel (0) target = $region13
    $region12: #{tpu_custom_call.1} parent=1 // pred_region
      %36 = vsyncadd [#allocation7], 0
      %s38 = sshll.u32 %s2, 4
      %s39 = int_to_ptr.hbm [resolvable:$true] %s38
      %s40 = sshll.u32 [#allocation6], 4
      %s41 = int_to_ptr.vmem [resolvable:$true] %s40
      %43 = dma.hbm_to_vmem [thread:$0]  %s39, 16, %s41, [#allocation7]
    $region13: #{tpu_custom_call.1} parent=1 // pred_fallthru
      _
    // Predicated region
    $region14: #{tpu_custom_call.1} parent=1 // pred_check
      _
    $region15: #{tpu_custom_call.1} parent=1 // pred_check_branch
      %45 = sbr.rel (0) target = $region17
    $region16: #{tpu_custom_call.1} parent=1 // pred_region
      %47 = vsyncadd [#allocation7], 0
      %s48 = sshll.u32 %s3, 4
      %s49 = int_to_ptr.hbm [resolvable:$true] %s48
      %s50 = sshll.u32 [#allocation8], 4
      %s51 = int_to_ptr.vmem [resolvable:$true] %s50
      %56 = dma.hbm_to_vmem [thread:$0]  %s49, 512, %s51, [#allocation7], 64, 64, 4
    $region17: #{tpu_custom_call.1} parent=1 // pred_fallthru
      _
    // Predicated region
    $region18: #{tpu_custom_call.1} parent=1 // pred_check
      _
    $region19: #{tpu_custom_call.1} parent=1 // pred_check_branch
      %58 = sbr.rel (0) target = $region21
    $region20: #{tpu_custom_call.1} parent=1 // pred_region
      %60 = vsyncadd [#allocation10], 0
      %s62 = sshll.u32 %s4, 4
      %s63 = int_to_ptr.hbm [resolvable:$true] %s62
      %s64 = sshll.u32 [#allocation9], 4
      %s65 = int_to_ptr.vmem [resolvable:$true] %s64
      %67 = dma.hbm_to_vmem [thread:$0]  %s63, 16, %s65, [#allocation10]
    $region21: #{tpu_custom_call.1} parent=1 // pred_fallthru
      _
    // Predicated region
    $region22: #{tpu_custom_call.1} parent=1 // pred_check
      _
    $region23: #{tpu_custom_call.1} parent=1 // pred_check_branch
      %69 = sbr.rel (0) target = $region25
    $region24: #{tpu_custom_call.1} parent=1 // pred_region
      _
    $region25: #{tpu_custom_call.1} parent=1 // pred_fallthru
      _
    // Predicated region
    $region26: #{tpu_custom_call.1} parent=1 // pred_check
      _
    $region27: #{tpu_custom_call.1} parent=1 // pred_check_branch
      %71 = sbr.rel (0) target = $region29
    $region28: #{tpu_custom_call.1} parent=1 // pred_region
      _
    $region29: #{tpu_custom_call.1} parent=1 // pred_fallthru
      _
    // Predicated region
    $region30: #{tpu_custom_call.1} parent=1 // pred_check
      _
    $region31: #{tpu_custom_call.1} parent=1 // pred_check_branch
      %73 = sbr.rel (0) target = $region33
    $region32: #{tpu_custom_call.1} parent=1 // pred_region
      _
    $region33: #{tpu_custom_call.1} parent=1 // pred_fallthru
      _
    // Predicated region
    $region34: #{tpu_custom_call.1} parent=1 // pred_check
      _
    $region35: #{tpu_custom_call.1} parent=1 // pred_check_branch
      %75 = sbr.rel (0) target = $region37
    $region36: #{tpu_custom_call.1} parent=1 // pred_region
      _
    $region37: #{tpu_custom_call.1} parent=1 // pred_fallthru
      _
    // Predicated region
    $region38: #{tpu_custom_call.1} parent=1 // pred_check
      _
    $region39: #{tpu_custom_call.1} parent=1 // pred_check_branch
      %77 = sbr.rel (0) target = $region41
    $region40: #{tpu_custom_call.1} parent=1 // pred_region
      %79 = dma.done [#allocation4], 256
    $region41: #{tpu_custom_call.1} parent=1 // pred_fallthru
      _
    // Predicated region
    $region42: #{tpu_custom_call.1} parent=1 // pred_check
      _
    $region43: #{tpu_custom_call.1} parent=1 // pred_check_branch
      %81 = sbr.rel (0) target = $region45
    $region44: #{tpu_custom_call.1} parent=1 // pred_region
      %83 = dma.done [#allocation7], 16
    $region45: #{tpu_custom_call.1} parent=1 // pred_fallthru
      _
    // Predicated region
    $region46: #{tpu_custom_call.1} parent=1 // pred_check
      _
    $region47: #{tpu_custom_call.1} parent=1 // pred_check_branch
      %85 = sbr.rel (0) target = $region49
    $region48: #{tpu_custom_call.1} parent=1 // pred_region
      %87 = dma.done [#allocation7], 512
    $region49: #{tpu_custom_call.1} parent=1 // pred_fallthru
      _
    // Predicated region
    $region50: #{tpu_custom_call.1} parent=1 // pred_check
      _
    $region51: #{tpu_custom_call.1} parent=1 // pred_check_branch
      %89 = sbr.rel (0) target = $region53
    $region52: #{tpu_custom_call.1} parent=1 // pred_region
      %91 = dma.done [#allocation10], 16
    $region53: #{tpu_custom_call.1} parent=1 // pred_fallthru
      _
    %v93 = vld [vmem:[%s0] sm:$0xf]
    %v94 = vld [vmem:[%s0 + $0x4] sm:$0xf]
    %v95 = vld [vmem:[%s0 + $0x8] sm:$0xf]
    %v96 = vld [vmem:[%s0 + $0xc] sm:$0xf]
    %v97 = vld [vmem:[%s0 + $0x10] sm:$0xf]
    %v98 = vld [vmem:[%s0 + $0x14] sm:$0xf]
    %v99 = vld [vmem:[%s0 + $0x18] sm:$0xf]
    %v100 = vld [vmem:[%s0 + $0x1c] sm:$0xf]
    %v101 = vld [vmem:[%s0 + $0x20] sm:$0xf]
    %v102 = vld [vmem:[%s0 + $0x24] sm:$0xf]
    %v103 = vld [vmem:[%s0 + $0x28] sm:$0xf]
    %v104 = vld [vmem:[%s0 + $0x2c] sm:$0xf]
    %v105 = vld [vmem:[%s0 + $0x30] sm:$0xf]
    %v106 = vld [vmem:[%s0 + $0x34] sm:$0xf]
    %v107 = vld [vmem:[%s0 + $0x38] sm:$0xf]
    %v108 = vld [vmem:[%s0 + $0x3c] sm:$0xf]
    %v109 = vld [vmem:[%s0 + $0x40] sm:$0xf]
    %v110 = vld [vmem:[%s0 + $0x44] sm:$0xf]
    %v111 = vld [vmem:[%s0 + $0x48] sm:$0xf]
    %v112 = vld [vmem:[%s0 + $0x4c] sm:$0xf]
    %v113 = vld [vmem:[%s0 + $0x50] sm:$0xf]
    %v114 = vld [vmem:[%s0 + $0x54] sm:$0xf]
    %v115 = vld [vmem:[%s0 + $0x58] sm:$0xf]
    %v116 = vld [vmem:[%s0 + $0x5c] sm:$0xf]
    %v117 = vld [vmem:[%s0 + $0x60] sm:$0xf]
    %v118 = vld [vmem:[%s0 + $0x64] sm:$0xf]
    %v119 = vld [vmem:[%s0 + $0x68] sm:$0xf]
    %v120 = vld [vmem:[%s0 + $0x6c] sm:$0xf]
    %v121 = vld [vmem:[%s0 + $0x70] sm:$0xf]
    %v122 = vld [vmem:[%s0 + $0x74] sm:$0xf]
    %v123 = vld [vmem:[%s0 + $0x78] sm:$0xf]
    %v124 = vld [vmem:[%s0 + $0x7c] sm:$0xf]
    %v125 = vld [vmem:[%s0 + $0x80] sm:$0xf]
    %v126 = vld [vmem:[%s0 + $0x84] sm:$0xf]
    %v127 = vld [vmem:[%s0 + $0x88] sm:$0xf]
    %v128 = vld [vmem:[%s0 + $0x8c] sm:$0xf]
    %v129 = vld [vmem:[%s0 + $0x90] sm:$0xf]
    %v130 = vld [vmem:[%s0 + $0x94] sm:$0xf]
    %v131 = vld [vmem:[%s0 + $0x98] sm:$0xf]
    %v132 = vld [vmem:[%s0 + $0x9c] sm:$0xf]
    %v133 = vld [vmem:[%s0 + $0xa0] sm:$0xf]
    %v134 = vld [vmem:[%s0 + $0xa4] sm:$0xf]
    %v135 = vld [vmem:[%s0 + $0xa8] sm:$0xf]
    %v136 = vld [vmem:[%s0 + $0xac] sm:$0xf]
    %v137 = vld [vmem:[%s0 + $0xb0] sm:$0xf]
    %v138 = vld [vmem:[%s0 + $0xb4] sm:$0xf]
    %v139 = vld [vmem:[%s0 + $0xb8] sm:$0xf]
    %v140 = vld [vmem:[%s0 + $0xbc] sm:$0xf]
    %v141 = vld [vmem:[%s0 + $0xc0] sm:$0xf]
    %v142 = vld [vmem:[%s0 + $0xc4] sm:$0xf]
    %v143 = vld [vmem:[%s0 + $0xc8] sm:$0xf]
    %v144 = vld [vmem:[%s0 + $0xcc] sm:$0xf]
    %v145 = vld [vmem:[%s0 + $0xd0] sm:$0xf]
    %v146 = vld [vmem:[%s0 + $0xd4] sm:$0xf]
    %v147 = vld [vmem:[%s0 + $0xd8] sm:$0xf]
    %v148 = vld [vmem:[%s0 + $0xdc] sm:$0xf]
    %v149 = vld [vmem:[%s0 + $0xe0] sm:$0xf]
    %v150 = vld [vmem:[%s0 + $0xe4] sm:$0xf]
    %v151 = vld [vmem:[%s0 + $0xe8] sm:$0xf]
    %v152 = vld [vmem:[%s0 + $0xec] sm:$0xf]
    %v153 = vld [vmem:[%s0 + $0xf0] sm:$0xf]
    %v154 = vld [vmem:[%s0 + $0xf4] sm:$0xf]
    %v155 = vld [vmem:[%s0 + $0xf8] sm:$0xf]
    %v156 = vld [vmem:[%s0 + $0xfc] sm:$0xf]
    %v157 = vld [vmem:[%s0 + $0x100] sm:$0xf]
    %v158 = vld [vmem:[%s0 + $0x104] sm:$0xf]
    %v159 = vld [vmem:[%s0 + $0x108] sm:$0xf]
    %v160 = vld [vmem:[%s0 + $0x10c] sm:$0xf]
    %v161 = vld [vmem:[%s0 + $0x110] sm:$0xf]
    %v162 = vld [vmem:[%s0 + $0x114] sm:$0xf]
    %v163 = vld [vmem:[%s0 + $0x118] sm:$0xf]
    %v164 = vld [vmem:[%s0 + $0x11c] sm:$0xf]
    %v165 = vld [vmem:[%s0 + $0x120] sm:$0xf]
    %v166 = vld [vmem:[%s0 + $0x124] sm:$0xf]
    %v167 = vld [vmem:[%s0 + $0x128] sm:$0xf]
    %v168 = vld [vmem:[%s0 + $0x12c] sm:$0xf]
    %v169 = vld [vmem:[%s0 + $0x130] sm:$0xf]
    %v170 = vld [vmem:[%s0 + $0x134] sm:$0xf]
    %v171 = vld [vmem:[%s0 + $0x138] sm:$0xf]
    %v172 = vld [vmem:[%s0 + $0x13c] sm:$0xf]
    %v173 = vld [vmem:[%s0 + $0x140] sm:$0xf]
    %v174 = vld [vmem:[%s0 + $0x144] sm:$0xf]
    %v175 = vld [vmem:[%s0 + $0x148] sm:$0xf]
    %v176 = vld [vmem:[%s0 + $0x14c] sm:$0xf]
    %v177 = vld [vmem:[%s0 + $0x150] sm:$0xf]
    %v178 = vld [vmem:[%s0 + $0x154] sm:$0xf]
    %v179 = vld [vmem:[%s0 + $0x158] sm:$0xf]
    %v180 = vld [vmem:[%s0 + $0x15c] sm:$0xf]
    %v181 = vld [vmem:[%s0 + $0x160] sm:$0xf]
    %v182 = vld [vmem:[%s0 + $0x164] sm:$0xf]
    %v183 = vld [vmem:[%s0 + $0x168] sm:$0xf]
    %v184 = vld [vmem:[%s0 + $0x16c] sm:$0xf]
    %v185 = vld [vmem:[%s0 + $0x170] sm:$0xf]
    %v186 = vld [vmem:[%s0 + $0x174] sm:$0xf]
    %v187 = vld [vmem:[%s0 + $0x178] sm:$0xf]
    %v188 = vld [vmem:[%s0 + $0x17c] sm:$0xf]
    %v189 = vld [vmem:[%s0 + $0x180] sm:$0xf]
    %v190 = vld [vmem:[%s0 + $0x184] sm:$0xf]
    %v191 = vld [vmem:[%s0 + $0x188] sm:$0xf]
    %v192 = vld [vmem:[%s0 + $0x18c] sm:$0xf]
    %v193 = vld [vmem:[%s0 + $0x190] sm:$0xf]
    %v194 = vld [vmem:[%s0 + $0x194] sm:$0xf]
    %v195 = vld [vmem:[%s0 + $0x198] sm:$0xf]
    %v196 = vld [vmem:[%s0 + $0x19c] sm:$0xf]
    %v197 = vld [vmem:[%s0 + $0x1a0] sm:$0xf]
    %v198 = vld [vmem:[%s0 + $0x1a4] sm:$0xf]
    %v199 = vld [vmem:[%s0 + $0x1a8] sm:$0xf]
    %v200 = vld [vmem:[%s0 + $0x1ac] sm:$0xf]
    %v201 = vld [vmem:[%s0 + $0x1b0] sm:$0xf]
    %v202 = vld [vmem:[%s0 + $0x1b4] sm:$0xf]
    %v203 = vld [vmem:[%s0 + $0x1b8] sm:$0xf]
    %v204 = vld [vmem:[%s0 + $0x1bc] sm:$0xf]
    %v205 = vld [vmem:[%s0 + $0x1c0] sm:$0xf]
    %v206 = vld [vmem:[%s0 + $0x1c4] sm:$0xf]
    %v207 = vld [vmem:[%s0 + $0x1c8] sm:$0xf]
    %v208 = vld [vmem:[%s0 + $0x1cc] sm:$0xf]
    %v209 = vld [vmem:[%s0 + $0x1d0] sm:$0xf]
    %v210 = vld [vmem:[%s0 + $0x1d4] sm:$0xf]
    %v211 = vld [vmem:[%s0 + $0x1d8] sm:$0xf]
    %v212 = vld [vmem:[%s0 + $0x1dc] sm:$0xf]
    %v213 = vld [vmem:[%s0 + $0x1e0] sm:$0xf]
    %v214 = vld [vmem:[%s0 + $0x1e4] sm:$0xf]
    %v215 = vld [vmem:[%s0 + $0x1e8] sm:$0xf]
    %v216 = vld [vmem:[%s0 + $0x1ec] sm:$0xf]
    %v217 = vld [vmem:[%s0 + $0x1f0] sm:$0xf]
    %v218 = vld [vmem:[%s0 + $0x1f4] sm:$0xf]
    %v219 = vld [vmem:[%s0 + $0x1f8] sm:$0xf]
    %v220 = vld [vmem:[%s0 + $0x1fc] sm:$0xf]
    %v221 = vld [vmem:[#allocation3] sm:$0xf]
    %v222 = vld [vmem:[#allocation3 + $0x4] sm:$0xf]
    %v223 = vld [vmem:[#allocation3 + $0x8] sm:$0xf]
    %v224 = vld [vmem:[#allocation3 + $0xc] sm:$0xf]
    %v225 = vld [vmem:[#allocation6] sm:$0x1]
    %v227 = vperm.slane %v225, 0
    %v357 = vunpack.c.l.b16 %v93
    %v358 = vunpack.c.l.b16 %v94
    %v359 = vunpack.c.l.b16 %v95
    %v360 = vunpack.c.l.b16 %v96
    %v361 = vunpack.c.l.b16 %v97
    %v362 = vunpack.c.l.b16 %v98
    %v363 = vunpack.c.l.b16 %v99
    %v364 = vunpack.c.l.b16 %v100
    %v365 = vunpack.c.l.b16 %v101
    %v366 = vunpack.c.l.b16 %v102
    %v367 = vunpack.c.l.b16 %v103
    %v368 = vunpack.c.l.b16 %v104
    %v369 = vunpack.c.l.b16 %v105
    %v370 = vunpack.c.l.b16 %v106
    %v371 = vunpack.c.l.b16 %v107
    %v372 = vunpack.c.l.b16 %v108
    %v373 = vunpack.c.l.b16 %v109
    %v374 = vunpack.c.l.b16 %v110
    %v375 = vunpack.c.l.b16 %v111
    %v376 = vunpack.c.l.b16 %v112
    %v377 = vunpack.c.l.b16 %v113
    %v378 = vunpack.c.l.b16 %v114
    %v379 = vunpack.c.l.b16 %v115
    %v380 = vunpack.c.l.b16 %v116
    %v381 = vunpack.c.l.b16 %v117
    %v382 = vunpack.c.l.b16 %v118
    %v383 = vunpack.c.l.b16 %v119
    %v384 = vunpack.c.l.b16 %v120
    %v385 = vunpack.c.l.b16 %v121
    %v386 = vunpack.c.l.b16 %v122
    %v387 = vunpack.c.l.b16 %v123
    %v388 = vunpack.c.l.b16 %v124
    %v389 = vunpack.c.l.b16 %v125
    %v390 = vunpack.c.l.b16 %v126
    %v391 = vunpack.c.l.b16 %v127
    %v392 = vunpack.c.l.b16 %v128
    %v393 = vunpack.c.l.b16 %v129
    %v394 = vunpack.c.l.b16 %v130
    %v395 = vunpack.c.l.b16 %v131
    %v396 = vunpack.c.l.b16 %v132
    %v397 = vunpack.c.l.b16 %v133
    %v398 = vunpack.c.l.b16 %v134
    %v399 = vunpack.c.l.b16 %v135
    %v400 = vunpack.c.l.b16 %v136
    %v401 = vunpack.c.l.b16 %v137
    %v402 = vunpack.c.l.b16 %v138
    %v403 = vunpack.c.l.b16 %v139
    %v404 = vunpack.c.l.b16 %v140
    %v405 = vunpack.c.l.b16 %v141
    %v406 = vunpack.c.l.b16 %v142
    %v407 = vunpack.c.l.b16 %v143
    %v408 = vunpack.c.l.b16 %v144
    %v409 = vunpack.c.l.b16 %v145
    %v410 = vunpack.c.l.b16 %v146
    %v411 = vunpack.c.l.b16 %v147
    %v412 = vunpack.c.l.b16 %v148
    %v413 = vunpack.c.l.b16 %v149
    %v414 = vunpack.c.l.b16 %v150
    %v415 = vunpack.c.l.b16 %v151
    %v416 = vunpack.c.l.b16 %v152
    %v417 = vunpack.c.l.b16 %v153
    %v418 = vunpack.c.l.b16 %v154
    %v419 = vunpack.c.l.b16 %v155
    %v420 = vunpack.c.l.b16 %v156
    %v421 = vunpack.c.l.b16 %v157
    %v422 = vunpack.c.l.b16 %v158
    %v423 = vunpack.c.l.b16 %v159
    %v424 = vunpack.c.l.b16 %v160
    %v425 = vunpack.c.l.b16 %v161
    %v426 = vunpack.c.l.b16 %v162
    %v427 = vunpack.c.l.b16 %v163
    %v428 = vunpack.c.l.b16 %v164
    %v429 = vunpack.c.l.b16 %v165
    %v430 = vunpack.c.l.b16 %v166
    %v431 = vunpack.c.l.b16 %v167
    %v432 = vunpack.c.l.b16 %v168
    %v433 = vunpack.c.l.b16 %v169
    %v434 = vunpack.c.l.b16 %v170
    %v435 = vunpack.c.l.b16 %v171
    %v436 = vunpack.c.l.b16 %v172
    %v437 = vunpack.c.l.b16 %v173
    %v438 = vunpack.c.l.b16 %v174
    %v439 = vunpack.c.l.b16 %v175
    %v440 = vunpack.c.l.b16 %v176
    %v441 = vunpack.c.l.b16 %v177
    %v442 = vunpack.c.l.b16 %v178
    %v443 = vunpack.c.l.b16 %v179
    %v444 = vunpack.c.l.b16 %v180
    %v445 = vunpack.c.l.b16 %v181
    %v446 = vunpack.c.l.b16 %v182
    %v447 = vunpack.c.l.b16 %v183
    %v448 = vunpack.c.l.b16 %v184
    %v449 = vunpack.c.l.b16 %v185
    %v450 = vunpack.c.l.b16 %v186
    %v451 = vunpack.c.l.b16 %v187
    %v452 = vunpack.c.l.b16 %v188
    %v453 = vunpack.c.l.b16 %v189
    %v454 = vunpack.c.l.b16 %v190
    %v455 = vunpack.c.l.b16 %v191
    %v456 = vunpack.c.l.b16 %v192
    %v457 = vunpack.c.l.b16 %v193
    %v458 = vunpack.c.l.b16 %v194
    %v459 = vunpack.c.l.b16 %v195
    %v460 = vunpack.c.l.b16 %v196
    %v461 = vunpack.c.l.b16 %v197
    %v462 = vunpack.c.l.b16 %v198
    %v463 = vunpack.c.l.b16 %v199
    %v464 = vunpack.c.l.b16 %v200
    %v465 = vunpack.c.l.b16 %v201
    %v466 = vunpack.c.l.b16 %v202
    %v467 = vunpack.c.l.b16 %v203
    %v468 = vunpack.c.l.b16 %v204
    %v469 = vunpack.c.l.b16 %v205
    %v470 = vunpack.c.l.b16 %v206
    %v471 = vunpack.c.l.b16 %v207
    %v472 = vunpack.c.l.b16 %v208
    %v473 = vunpack.c.l.b16 %v209
    %v474 = vunpack.c.l.b16 %v210
    %v475 = vunpack.c.l.b16 %v211
    %v476 = vunpack.c.l.b16 %v212
    %v477 = vunpack.c.l.b16 %v213
    %v478 = vunpack.c.l.b16 %v214
    %v479 = vunpack.c.l.b16 %v215
    %v480 = vunpack.c.l.b16 %v216
    %v481 = vunpack.c.l.b16 %v217
    %v482 = vunpack.c.l.b16 %v218
    %v483 = vunpack.c.l.b16 %v219
    %v484 = vunpack.c.l.b16 %v220
    %v485 = vpack.c.b16 %v358, %v357
    %v486 = vpack.c.b16 %v360, %v359
    %v487 = vpack.c.b16 %v362, %v361
    %v488 = vpack.c.b16 %v364, %v363
    %v489 = vpack.c.b16 %v366, %v365
    %v490 = vpack.c.b16 %v368, %v367
    %v491 = vpack.c.b16 %v370, %v369
    %v492 = vpack.c.b16 %v372, %v371
    %v493 = vpack.c.b16 %v374, %v373
    %v494 = vpack.c.b16 %v376, %v375
    %v495 = vpack.c.b16 %v378, %v377
    %v496 = vpack.c.b16 %v380, %v379
    %v497 = vpack.c.b16 %v382, %v381
    %v498 = vpack.c.b16 %v384, %v383
    %v499 = vpack.c.b16 %v386, %v385
    %v500 = vpack.c.b16 %v388, %v387
    %v501 = vpack.c.b16 %v390, %v389
    %v502 = vpack.c.b16 %v392, %v391
    %v503 = vpack.c.b16 %v394, %v393
    %v504 = vpack.c.b16 %v396, %v395
    %v505 = vpack.c.b16 %v398, %v397
    %v506 = vpack.c.b16 %v400, %v399
    %v507 = vpack.c.b16 %v402, %v401
    %v508 = vpack.c.b16 %v404, %v403
    %v509 = vpack.c.b16 %v406, %v405
    %v510 = vpack.c.b16 %v408, %v407
    %v511 = vpack.c.b16 %v410, %v409
    %v512 = vpack.c.b16 %v412, %v411
    %v513 = vpack.c.b16 %v414, %v413
    %v514 = vpack.c.b16 %v416, %v415
    %v515 = vpack.c.b16 %v418, %v417
    %v516 = vpack.c.b16 %v420, %v419
    %v517 = vpack.c.b16 %v422, %v421
    %v518 = vpack.c.b16 %v424, %v423
    %v519 = vpack.c.b16 %v426, %v425
    %v520 = vpack.c.b16 %v428, %v427
    %v521 = vpack.c.b16 %v430, %v429
    %v522 = vpack.c.b16 %v432, %v431
    %v523 = vpack.c.b16 %v434, %v433
    %v524 = vpack.c.b16 %v436, %v435
    %v525 = vpack.c.b16 %v438, %v437
    %v526 = vpack.c.b16 %v440, %v439
    %v527 = vpack.c.b16 %v442, %v441
    %v528 = vpack.c.b16 %v444, %v443
    %v529 = vpack.c.b16 %v446, %v445
    %v530 = vpack.c.b16 %v448, %v447
    %v531 = vpack.c.b16 %v450, %v449
    %v532 = vpack.c.b16 %v452, %v451
    %v533 = vpack.c.b16 %v454, %v453
    %v534 = vpack.c.b16 %v456, %v455
    %v535 = vpack.c.b16 %v458, %v457
    %v536 = vpack.c.b16 %v460, %v459
    %v537 = vpack.c.b16 %v462, %v461
    %v538 = vpack.c.b16 %v464, %v463
    %v539 = vpack.c.b16 %v466, %v465
    %v540 = vpack.c.b16 %v468, %v467
    %v541 = vpack.c.b16 %v470, %v469
    %v542 = vpack.c.b16 %v472, %v471
    %v543 = vpack.c.b16 %v474, %v473
    %v544 = vpack.c.b16 %v476, %v475
    %v545 = vpack.c.b16 %v478, %v477
    %v546 = vpack.c.b16 %v480, %v479
    %v547 = vpack.c.b16 %v482, %v481
    %v548 = vpack.c.b16 %v484, %v483
    %v553 = vunpack.c.l.b16 %v221
    %v554 = vunpack.c.l.b16 %v222
    %v555 = vunpack.c.l.b16 %v223
    %v556 = vunpack.c.l.b16 %v224
    %v557 = vpack.c.b16 %v554, %v553
    %v558 = vpack.c.b16 %v556, %v555
    %vm561 = vcmask 261120
    %v563 = vsel %vm561, %v485, 0
    %v566 = vsel %vm561, %v486, 0
    %v569 = vsel %vm561, %v487, 0
    %v572 = vsel %vm561, %v488, 0
    %v575 = vsel %vm561, %v489, 0
    %v578 = vsel %vm561, %v490, 0
    %v581 = vsel %vm561, %v491, 0
    %v584 = vsel %vm561, %v492, 0
    %v587 = vsel %vm561, %v493, 0
    %v590 = vsel %vm561, %v494, 0
    %v593 = vsel %vm561, %v495, 0
    %v596 = vsel %vm561, %v496, 0
    %v599 = vsel %vm561, %v497, 0
    %v602 = vsel %vm561, %v498, 0
    %v605 = vsel %vm561, %v499, 0
    %v608 = vsel %vm561, %v500, 0
    %v611 = vsel %vm561, %v501, 0
    %v614 = vsel %vm561, %v502, 0
    %v617 = vsel %vm561, %v503, 0
    %v620 = vsel %vm561, %v504, 0
    %v623 = vsel %vm561, %v505, 0
    %v626 = vsel %vm561, %v506, 0
    %v629 = vsel %vm561, %v507, 0
    %v632 = vsel %vm561, %v508, 0
    %v635 = vsel %vm561, %v509, 0
    %v638 = vsel %vm561, %v510, 0
    %v641 = vsel %vm561, %v511, 0
    %v644 = vsel %vm561, %v512, 0
    %v647 = vsel %vm561, %v513, 0
    %v650 = vsel %vm561, %v514, 0
    %v653 = vsel %vm561, %v515, 0
    %v656 = vsel %vm561, %v516, 0
    %v659 = vsel %vm561, %v517, 0
    %v662 = vsel %vm561, %v518, 0
    %v665 = vsel %vm561, %v519, 0
    %v668 = vsel %vm561, %v520, 0
    %v671 = vsel %vm561, %v521, 0
    %v674 = vsel %vm561, %v522, 0
    %v677 = vsel %vm561, %v523, 0
    %v680 = vsel %vm561, %v524, 0
    %v683 = vsel %vm561, %v525, 0
    %v686 = vsel %vm561, %v526, 0
    %v689 = vsel %vm561, %v527, 0
    %v692 = vsel %vm561, %v528, 0
    %v695 = vsel %vm561, %v529, 0
    %v698 = vsel %vm561, %v530, 0
    %v701 = vsel %vm561, %v531, 0
    %v704 = vsel %vm561, %v532, 0
    %v707 = vsel %vm561, %v533, 0
    %v710 = vsel %vm561, %v534, 0
    %v713 = vsel %vm561, %v535, 0
    %v716 = vsel %vm561, %v536, 0
    %v719 = vsel %vm561, %v537, 0
    %v722 = vsel %vm561, %v538, 0
    %v725 = vsel %vm561, %v539, 0
    %v728 = vsel %vm561, %v540, 0
    %v731 = vsel %vm561, %v541, 0
    %v734 = vsel %vm561, %v542, 0
    %v737 = vsel %vm561, %v543, 0
    %v740 = vsel %vm561, %v544, 0
    %v743 = vsel %vm561, %v545, 0
    %v746 = vsel %vm561, %v546, 0
    %v749 = vsel %vm561, %v547, 0
    %v752 = vsel %vm561, %v548, 0
    %754 = vmatpush.bf16.msra.mxu0 0
    %755 = vmatpush.bf16.msra.mxu0 0
    %756 = vmatpush.bf16.msra.mxu0 0
    %757 = vmatpush.bf16.msra.mxu0 0
    %758 = vmatpush.bf16.msra.mxu0 0
    %759 = vmatpush.bf16.msra.mxu0 0
    %760 = vmatpush.bf16.msra.mxu0 %v558
    %761 = vmatpush.bf16.msra.mxu0 %v557
    %762 = vmatmul.bf16.gmra.mxu0 %v563
    %v763 = vpop.f32.mrf.mxu0
    %v764 = vadd.f32 %v227, %v763
    %v765 = vpop.f32.mrf.mxu0
    %v766 = vadd.f32 %v227, %v765
    %767 = vmatmul.bf16.gmra.mxu0 %v566
    %v768 = vpop.f32.mrf.mxu0
    %v769 = vadd.f32 %v227, %v768
    %v770 = vpop.f32.mrf.mxu0
    %v771 = vadd.f32 %v227, %v770
    %772 = vmatmul.bf16.gmra.mxu0 %v569
    %v773 = vpop.f32.mrf.mxu0
    %v774 = vadd.f32 %v227, %v773
    %v775 = vpop.f32.mrf.mxu0
    %v776 = vadd.f32 %v227, %v775
    %777 = vmatmul.bf16.gmra.mxu0 %v572
    %v778 = vpop.f32.mrf.mxu0
    %v779 = vadd.f32 %v227, %v778
    %v780 = vpop.f32.mrf.mxu0
    %v781 = vadd.f32 %v227, %v780
    %782 = vmatmul.bf16.gmra.mxu0 %v575
    %v783 = vpop.f32.mrf.mxu0
    %v784 = vadd.f32 %v227, %v783
    %v785 = vpop.f32.mrf.mxu0
    %v786 = vadd.f32 %v227, %v785
    %787 = vmatmul.bf16.gmra.mxu0 %v578
    %v788 = vpop.f32.mrf.mxu0
    %v789 = vadd.f32 %v227, %v788
    %v790 = vpop.f32.mrf.mxu0
    %v791 = vadd.f32 %v227, %v790
    %792 = vmatmul.bf16.gmra.mxu0 %v581
    %v793 = vpop.f32.mrf.mxu0
    %v794 = vadd.f32 %v227, %v793
    %v795 = vpop.f32.mrf.mxu0
    %v796 = vadd.f32 %v227, %v795
    %797 = vmatmul.bf16.gmra.mxu0 %v584
    %v798 = vpop.f32.mrf.mxu0
    %v799 = vadd.f32 %v227, %v798
    %v800 = vpop.f32.mrf.mxu0
    %v801 = vadd.f32 %v227, %v800
    %802 = vmatmul.bf16.gmra.mxu0 %v587
    %v803 = vpop.f32.mrf.mxu0
    %v804 = vadd.f32 %v227, %v803
    %v805 = vpop.f32.mrf.mxu0
    %v806 = vadd.f32 %v227, %v805
    %807 = vmatmul.bf16.gmra.mxu0 %v590
    %v808 = vpop.f32.mrf.mxu0
    %v809 = vadd.f32 %v227, %v808
    %v810 = vpop.f32.mrf.mxu0
    %v811 = vadd.f32 %v227, %v810
    %812 = vmatmul.bf16.gmra.mxu0 %v593
    %v813 = vpop.f32.mrf.mxu0
    %v814 = vadd.f32 %v227, %v813
    %v815 = vpop.f32.mrf.mxu0
    %v816 = vadd.f32 %v227, %v815
    %817 = vmatmul.bf16.gmra.mxu0 %v596
    %v818 = vpop.f32.mrf.mxu0
    %v819 = vadd.f32 %v227, %v818
    %v820 = vpop.f32.mrf.mxu0
    %v821 = vadd.f32 %v227, %v820
    %822 = vmatmul.bf16.gmra.mxu0 %v599
    %v823 = vpop.f32.mrf.mxu0
    %v824 = vadd.f32 %v227, %v823
    %v825 = vpop.f32.mrf.mxu0
    %v826 = vadd.f32 %v227, %v825
    %827 = vmatmul.bf16.gmra.mxu0 %v602
    %v828 = vpop.f32.mrf.mxu0
    %v829 = vadd.f32 %v227, %v828
    %v830 = vpop.f32.mrf.mxu0
    %v831 = vadd.f32 %v227, %v830
    %832 = vmatmul.bf16.gmra.mxu0 %v605
    %v833 = vpop.f32.mrf.mxu0
    %v834 = vadd.f32 %v227, %v833
    %v835 = vpop.f32.mrf.mxu0
    %v836 = vadd.f32 %v227, %v835
    %837 = vmatmul.bf16.gmra.mxu0 %v608
    %v838 = vpop.f32.mrf.mxu0
    %v839 = vadd.f32 %v227, %v838
    %v840 = vpop.f32.mrf.mxu0
    %v841 = vadd.f32 %v227, %v840
    %842 = vmatmul.bf16.gmra.mxu0 %v611
    %v843 = vpop.f32.mrf.mxu0
    %v844 = vadd.f32 %v227, %v843
    %v845 = vpop.f32.mrf.mxu0
    %v846 = vadd.f32 %v227, %v845
    %847 = vmatmul.bf16.gmra.mxu0 %v614
    %v848 = vpop.f32.mrf.mxu0
    %v849 = vadd.f32 %v227, %v848
    %v850 = vpop.f32.mrf.mxu0
    %v851 = vadd.f32 %v227, %v850
    %852 = vmatmul.bf16.gmra.mxu0 %v617
    %v853 = vpop.f32.mrf.mxu0
    %v854 = vadd.f32 %v227, %v853
    %v855 = vpop.f32.mrf.mxu0
    %v856 = vadd.f32 %v227, %v855
    %857 = vmatmul.bf16.gmra.mxu0 %v620
    %v858 = vpop.f32.mrf.mxu0
    %v859 = vadd.f32 %v227, %v858
    %v860 = vpop.f32.mrf.mxu0
    %v861 = vadd.f32 %v227, %v860
    %862 = vmatmul.bf16.gmra.mxu0 %v623
    %v863 = vpop.f32.mrf.mxu0
    %v864 = vadd.f32 %v227, %v863
    %v865 = vpop.f32.mrf.mxu0
    %v866 = vadd.f32 %v227, %v865
    %867 = vmatmul.bf16.gmra.mxu0 %v626
    %v868 = vpop.f32.mrf.mxu0
    %v869 = vadd.f32 %v227, %v868
    %v870 = vpop.f32.mrf.mxu0
    %v871 = vadd.f32 %v227, %v870
    %872 = vmatmul.bf16.gmra.mxu0 %v629
    %v873 = vpop.f32.mrf.mxu0
    %v874 = vadd.f32 %v227, %v873
    %v875 = vpop.f32.mrf.mxu0
    %v876 = vadd.f32 %v227, %v875
    %877 = vmatmul.bf16.gmra.mxu0 %v632
    %v878 = vpop.f32.mrf.mxu0
    %v879 = vadd.f32 %v227, %v878
    %v880 = vpop.f32.mrf.mxu0
    %v881 = vadd.f32 %v227, %v880
    %882 = vmatmul.bf16.gmra.mxu0 %v635
    %v883 = vpop.f32.mrf.mxu0
    %v884 = vadd.f32 %v227, %v883
    %v885 = vpop.f32.mrf.mxu0
    %v886 = vadd.f32 %v227, %v885
    %887 = vmatmul.bf16.gmra.mxu0 %v638
    %v888 = vpop.f32.mrf.mxu0
    %v889 = vadd.f32 %v227, %v888
    %v890 = vpop.f32.mrf.mxu0
    %v891 = vadd.f32 %v227, %v890
    %892 = vmatmul.bf16.gmra.mxu0 %v641
    %v893 = vpop.f32.mrf.mxu0
    %v894 = vadd.f32 %v227, %v893
    %v895 = vpop.f32.mrf.mxu0
    %v896 = vadd.f32 %v227, %v895
    %897 = vmatmul.bf16.gmra.mxu0 %v644
    %v898 = vpop.f32.mrf.mxu0
    %v899 = vadd.f32 %v227, %v898
    %v900 = vpop.f32.mrf.mxu0
    %v901 = vadd.f32 %v227, %v900
    %902 = vmatmul.bf16.gmra.mxu0 %v647
    %v903 = vpop.f32.mrf.mxu0
    %v904 = vadd.f32 %v227, %v903
    %v905 = vpop.f32.mrf.mxu0
    %v906 = vadd.f32 %v227, %v905
    %907 = vmatmul.bf16.gmra.mxu0 %v650
    %v908 = vpop.f32.mrf.mxu0
    %v909 = vadd.f32 %v227, %v908
    %v910 = vpop.f32.mrf.mxu0
    %v911 = vadd.f32 %v227, %v910
    %912 = vmatmul.bf16.gmra.mxu0 %v653
    %v913 = vpop.f32.mrf.mxu0
    %v914 = vadd.f32 %v227, %v913
    %v915 = vpop.f32.mrf.mxu0
    %v916 = vadd.f32 %v227, %v915
    %917 = vmatmul.bf16.gmra.mxu0 %v656
    %v918 = vpop.f32.mrf.mxu0
    %v919 = vadd.f32 %v227, %v918
    %v920 = vpop.f32.mrf.mxu0
    %v921 = vadd.f32 %v227, %v920
    %922 = vmatmul.bf16.gmra.mxu0 %v659
    %v923 = vpop.f32.mrf.mxu0
    %v924 = vadd.f32 %v227, %v923
    %v925 = vpop.f32.mrf.mxu0
    %v926 = vadd.f32 %v227, %v925
    %927 = vmatmul.bf16.gmra.mxu0 %v662
    %v928 = vpop.f32.mrf.mxu0
    %v929 = vadd.f32 %v227, %v928
    %v930 = vpop.f32.mrf.mxu0
    %v931 = vadd.f32 %v227, %v930
    %932 = vmatmul.bf16.gmra.mxu0 %v665
    %v933 = vpop.f32.mrf.mxu0
    %v934 = vadd.f32 %v227, %v933
    %v935 = vpop.f32.mrf.mxu0
    %v936 = vadd.f32 %v227, %v935
    %937 = vmatmul.bf16.gmra.mxu0 %v668
    %v938 = vpop.f32.mrf.mxu0
    %v939 = vadd.f32 %v227, %v938
    %v940 = vpop.f32.mrf.mxu0
    %v941 = vadd.f32 %v227, %v940
    %942 = vmatmul.bf16.gmra.mxu0 %v671
    %v943 = vpop.f32.mrf.mxu0
    %v944 = vadd.f32 %v227, %v943
    %v945 = vpop.f32.mrf.mxu0
    %v946 = vadd.f32 %v227, %v945
    %947 = vmatmul.bf16.gmra.mxu0 %v674
    %v948 = vpop.f32.mrf.mxu0
    %v949 = vadd.f32 %v227, %v948
    %v950 = vpop.f32.mrf.mxu0
    %v951 = vadd.f32 %v227, %v950
    %952 = vmatmul.bf16.gmra.mxu0 %v677
    %v953 = vpop.f32.mrf.mxu0
    %v954 = vadd.f32 %v227, %v953
    %v955 = vpop.f32.mrf.mxu0
    %v956 = vadd.f32 %v227, %v955
    %957 = vmatmul.bf16.gmra.mxu0 %v680
    %v958 = vpop.f32.mrf.mxu0
    %v959 = vadd.f32 %v227, %v958
    %v960 = vpop.f32.mrf.mxu0
    %v961 = vadd.f32 %v227, %v960
    %962 = vmatmul.bf16.gmra.mxu0 %v683
    %v963 = vpop.f32.mrf.mxu0
    %v964 = vadd.f32 %v227, %v963
    %v965 = vpop.f32.mrf.mxu0
    %v966 = vadd.f32 %v227, %v965
    %967 = vmatmul.bf16.gmra.mxu0 %v686
    %v968 = vpop.f32.mrf.mxu0
    %v969 = vadd.f32 %v227, %v968
    %v970 = vpop.f32.mrf.mxu0
    %v971 = vadd.f32 %v227, %v970
    %972 = vmatmul.bf16.gmra.mxu0 %v689
    %v973 = vpop.f32.mrf.mxu0
    %v974 = vadd.f32 %v227, %v973
    %v975 = vpop.f32.mrf.mxu0
    %v976 = vadd.f32 %v227, %v975
    %977 = vmatmul.bf16.gmra.mxu0 %v692
    %v978 = vpop.f32.mrf.mxu0
    %v979 = vadd.f32 %v227, %v978
    %v980 = vpop.f32.mrf.mxu0
    %v981 = vadd.f32 %v227, %v980
    %982 = vmatmul.bf16.gmra.mxu0 %v695
    %v983 = vpop.f32.mrf.mxu0
    %v984 = vadd.f32 %v227, %v983
    %v985 = vpop.f32.mrf.mxu0
    %v986 = vadd.f32 %v227, %v985
    %987 = vmatmul.bf16.gmra.mxu0 %v698
    %v988 = vpop.f32.mrf.mxu0
    %v989 = vadd.f32 %v227, %v988
    %v990 = vpop.f32.mrf.mxu0
    %v991 = vadd.f32 %v227, %v990
    %992 = vmatmul.bf16.gmra.mxu0 %v701
    %v993 = vpop.f32.mrf.mxu0
    %v994 = vadd.f32 %v227, %v993
    %v995 = vpop.f32.mrf.mxu0
    %v996 = vadd.f32 %v227, %v995
    %997 = vmatmul.bf16.gmra.mxu0 %v704
    %v998 = vpop.f32.mrf.mxu0
    %v999 = vadd.f32 %v227, %v998
    %v1000 = vpop.f32.mrf.mxu0
    %v1001 = vadd.f32 %v227, %v1000
    %1002 = vmatmul.bf16.gmra.mxu0 %v707
    %v1003 = vpop.f32.mrf.mxu0
    %v1004 = vadd.f32 %v227, %v1003
    %v1005 = vpop.f32.mrf.mxu0
    %v1006 = vadd.f32 %v227, %v1005
    %1007 = vmatmul.bf16.gmra.mxu0 %v710
    %v1008 = vpop.f32.mrf.mxu0
    %v1009 = vadd.f32 %v227, %v1008
    %v1010 = vpop.f32.mrf.mxu0
    %v1011 = vadd.f32 %v227, %v1010
    %1012 = vmatmul.bf16.gmra.mxu0 %v713
    %v1013 = vpop.f32.mrf.mxu0
    %v1014 = vadd.f32 %v227, %v1013
    %v1015 = vpop.f32.mrf.mxu0
    %v1016 = vadd.f32 %v227, %v1015
    %1017 = vmatmul.bf16.gmra.mxu0 %v716
    %v1018 = vpop.f32.mrf.mxu0
    %v1019 = vadd.f32 %v227, %v1018
    %v1020 = vpop.f32.mrf.mxu0
    %v1021 = vadd.f32 %v227, %v1020
    %1022 = vmatmul.bf16.gmra.mxu0 %v719
    %v1023 = vpop.f32.mrf.mxu0
    %v1024 = vadd.f32 %v227, %v1023
    %v1025 = vpop.f32.mrf.mxu0
    %v1026 = vadd.f32 %v227, %v1025
    %1027 = vmatmul.bf16.gmra.mxu0 %v722
    %v1028 = vpop.f32.mrf.mxu0
    %v1029 = vadd.f32 %v227, %v1028
    %v1030 = vpop.f32.mrf.mxu0
    %v1031 = vadd.f32 %v227, %v1030
    %1032 = vmatmul.bf16.gmra.mxu0 %v725
    %v1033 = vpop.f32.mrf.mxu0
    %v1034 = vadd.f32 %v227, %v1033
    %v1035 = vpop.f32.mrf.mxu0
    %v1036 = vadd.f32 %v227, %v1035
    %1037 = vmatmul.bf16.gmra.mxu0 %v728
    %v1038 = vpop.f32.mrf.mxu0
    %v1039 = vadd.f32 %v227, %v1038
    %v1040 = vpop.f32.mrf.mxu0
    %v1041 = vadd.f32 %v227, %v1040
    %1042 = vmatmul.bf16.gmra.mxu0 %v731
    %v1043 = vpop.f32.mrf.mxu0
    %v1044 = vadd.f32 %v227, %v1043
    %v1045 = vpop.f32.mrf.mxu0
    %v1046 = vadd.f32 %v227, %v1045
    %1047 = vmatmul.bf16.gmra.mxu0 %v734
    %v1048 = vpop.f32.mrf.mxu0
    %v1049 = vadd.f32 %v227, %v1048
    %v1050 = vpop.f32.mrf.mxu0
    %v1051 = vadd.f32 %v227, %v1050
    %1052 = vmatmul.bf16.gmra.mxu0 %v737
    %v1053 = vpop.f32.mrf.mxu0
    %v1054 = vadd.f32 %v227, %v1053
    %v1055 = vpop.f32.mrf.mxu0
    %v1056 = vadd.f32 %v227, %v1055
    %1057 = vmatmul.bf16.gmra.mxu0 %v740
    %v1058 = vpop.f32.mrf.mxu0
    %v1059 = vadd.f32 %v227, %v1058
    %v1060 = vpop.f32.mrf.mxu0
    %v1061 = vadd.f32 %v227, %v1060
    %1062 = vmatmul.bf16.gmra.mxu0 %v743
    %v1063 = vpop.f32.mrf.mxu0
    %v1064 = vadd.f32 %v227, %v1063
    %v1065 = vpop.f32.mrf.mxu0
    %v1066 = vadd.f32 %v227, %v1065
    %1067 = vmatmul.bf16.gmra.mxu0 %v746
    %v1068 = vpop.f32.mrf.mxu0
    %v1069 = vadd.f32 %v227, %v1068
    %v1070 = vpop.f32.mrf.mxu0
    %v1071 = vadd.f32 %v227, %v1070
    %1072 = vmatmul.bf16.gmra.mxu0 %v749
    %v1073 = vpop.f32.mrf.mxu0
    %v1074 = vadd.f32 %v227, %v1073
    %v1075 = vpop.f32.mrf.mxu0
    %v1076 = vadd.f32 %v227, %v1075
    %1077 = vmatmul.bf16.gmra.mxu0 %v752
    %v1078 = vpop.f32.mrf.mxu0
    %v1079 = vadd.f32 %v227, %v1078
    %v1080 = vpop.f32.mrf.mxu0
    %v1081 = vadd.f32 %v227, %v1080
    %1082 = vdwg.mxu0
    %vm1083 = vcmp.gt.f32.partialorder %v764, 0.0
    %vm1084 = vcmp.gt.f32.partialorder %v766, 0.0
    %vm1085 = vcmp.gt.f32.partialorder %v769, 0.0
    %vm1086 = vcmp.gt.f32.partialorder %v771, 0.0
    %vm1087 = vcmp.gt.f32.partialorder %v774, 0.0
    %vm1088 = vcmp.gt.f32.partialorder %v776, 0.0
    %vm1089 = vcmp.gt.f32.partialorder %v779, 0.0
    %vm1090 = vcmp.gt.f32.partialorder %v781, 0.0
    %vm1091 = vcmp.gt.f32.partialorder %v784, 0.0
    %vm1092 = vcmp.gt.f32.partialorder %v786, 0.0
    %vm1093 = vcmp.gt.f32.partialorder %v789, 0.0
    %vm1094 = vcmp.gt.f32.partialorder %v791, 0.0
    %vm1095 = vcmp.gt.f32.partialorder %v794, 0.0
    %vm1096 = vcmp.gt.f32.partialorder %v796, 0.0
    %vm1097 = vcmp.gt.f32.partialorder %v799, 0.0
    %vm1098 = vcmp.gt.f32.partialorder %v801, 0.0
    %vm1099 = vcmp.gt.f32.partialorder %v804, 0.0
    %vm1100 = vcmp.gt.f32.partialorder %v806, 0.0
    %vm1101 = vcmp.gt.f32.partialorder %v809, 0.0
    %vm1102 = vcmp.gt.f32.partialorder %v811, 0.0
    %vm1103 = vcmp.gt.f32.partialorder %v814, 0.0
    %vm1104 = vcmp.gt.f32.partialorder %v816, 0.0
    %vm1105 = vcmp.gt.f32.partialorder %v819, 0.0
    %vm1106 = vcmp.gt.f32.partialorder %v821, 0.0
    %vm1107 = vcmp.gt.f32.partialorder %v824, 0.0
    %vm1108 = vcmp.gt.f32.partialorder %v826, 0.0
    %vm1109 = vcmp.gt.f32.partialorder %v829, 0.0
    %vm1110 = vcmp.gt.f32.partialorder %v831, 0.0
    %vm1111 = vcmp.gt.f32.partialorder %v834, 0.0
    %vm1112 = vcmp.gt.f32.partialorder %v836, 0.0
    %vm1113 = vcmp.gt.f32.partialorder %v839, 0.0
    %vm1114 = vcmp.gt.f32.partialorder %v841, 0.0
    %vm1115 = vcmp.gt.f32.partialorder %v844, 0.0
    %vm1116 = vcmp.gt.f32.partialorder %v846, 0.0
    %vm1117 = vcmp.gt.f32.partialorder %v849, 0.0
    %vm1118 = vcmp.gt.f32.partialorder %v851, 0.0
    %vm1119 = vcmp.gt.f32.partialorder %v854, 0.0
    %vm1120 = vcmp.gt.f32.partialorder %v856, 0.0
    %vm1121 = vcmp.gt.f32.partialorder %v859, 0.0
    %vm1122 = vcmp.gt.f32.partialorder %v861, 0.0
    %vm1123 = vcmp.gt.f32.partialorder %v864, 0.0
    %vm1124 = vcmp.gt.f32.partialorder %v866, 0.0
    %vm1125 = vcmp.gt.f32.partialorder %v869, 0.0
    %vm1126 = vcmp.gt.f32.partialorder %v871, 0.0
    %vm1127 = vcmp.gt.f32.partialorder %v874, 0.0
    %vm1128 = vcmp.gt.f32.partialorder %v876, 0.0
    %vm1129 = vcmp.gt.f32.partialorder %v879, 0.0
    %vm1130 = vcmp.gt.f32.partialorder %v881, 0.0
    %vm1131 = vcmp.gt.f32.partialorder %v884, 0.0
    %vm1132 = vcmp.gt.f32.partialorder %v886, 0.0
    %vm1133 = vcmp.gt.f32.partialorder %v889, 0.0
    %vm1134 = vcmp.gt.f32.partialorder %v891, 0.0
    %vm1135 = vcmp.gt.f32.partialorder %v894, 0.0
    %vm1136 = vcmp.gt.f32.partialorder %v896, 0.0
    %vm1137 = vcmp.gt.f32.partialorder %v899, 0.0
    %vm1138 = vcmp.gt.f32.partialorder %v901, 0.0
    %vm1139 = vcmp.gt.f32.partialorder %v904, 0.0
    %vm1140 = vcmp.gt.f32.partialorder %v906, 0.0
    %vm1141 = vcmp.gt.f32.partialorder %v909, 0.0
    %vm1142 = vcmp.gt.f32.partialorder %v911, 0.0
    %vm1143 = vcmp.gt.f32.partialorder %v914, 0.0
    %vm1144 = vcmp.gt.f32.partialorder %v916, 0.0
    %vm1145 = vcmp.gt.f32.partialorder %v919, 0.0
    %vm1146 = vcmp.gt.f32.partialorder %v921, 0.0
    %vm1147 = vcmp.gt.f32.partialorder %v924, 0.0
    %vm1148 = vcmp.gt.f32.partialorder %v926, 0.0
    %vm1149 = vcmp.gt.f32.partialorder %v929, 0.0
    %vm1150 = vcmp.gt.f32.partialorder %v931, 0.0
    %vm1151 = vcmp.gt.f32.partialorder %v934, 0.0
    %vm1152 = vcmp.gt.f32.partialorder %v936, 0.0
    %vm1153 = vcmp.gt.f32.partialorder %v939, 0.0
    %vm1154 = vcmp.gt.f32.partialorder %v941, 0.0
    %vm1155 = vcmp.gt.f32.partialorder %v944, 0.0
    %vm1156 = vcmp.gt.f32.partialorder %v946, 0.0
    %vm1157 = vcmp.gt.f32.partialorder %v949, 0.0
    %vm1158 = vcmp.gt.f32.partialorder %v951, 0.0
    %vm1159 = vcmp.gt.f32.partialorder %v954, 0.0
    %vm1160 = vcmp.gt.f32.partialorder %v956, 0.0
    %vm1161 = vcmp.gt.f32.partialorder %v959, 0.0
    %vm1162 = vcmp.gt.f32.partialorder %v961, 0.0
    %vm1163 = vcmp.gt.f32.partialorder %v964, 0.0
    %vm1164 = vcmp.gt.f32.partialorder %v966, 0.0
    %vm1165 = vcmp.gt.f32.partialorder %v969, 0.0
    %vm1166 = vcmp.gt.f32.partialorder %v971, 0.0
    %vm1167 = vcmp.gt.f32.partialorder %v974, 0.0
    %vm1168 = vcmp.gt.f32.partialorder %v976, 0.0
    %vm1169 = vcmp.gt.f32.partialorder %v979, 0.0
    %vm1170 = vcmp.gt.f32.partialorder %v981, 0.0
    %vm1171 = vcmp.gt.f32.partialorder %v984, 0.0
    %vm1172 = vcmp.gt.f32.partialorder %v986, 0.0
    %vm1173 = vcmp.gt.f32.partialorder %v989, 0.0
    %vm1174 = vcmp.gt.f32.partialorder %v991, 0.0
    %vm1175 = vcmp.gt.f32.partialorder %v994, 0.0
    %vm1176 = vcmp.gt.f32.partialorder %v996, 0.0
    %vm1177 = vcmp.gt.f32.partialorder %v999, 0.0
    %vm1178 = vcmp.gt.f32.partialorder %v1001, 0.0
    %vm1179 = vcmp.gt.f32.partialorder %v1004, 0.0
    %vm1180 = vcmp.gt.f32.partialorder %v1006, 0.0
    %vm1181 = vcmp.gt.f32.partialorder %v1009, 0.0
    %vm1182 = vcmp.gt.f32.partialorder %v1011, 0.0
    %vm1183 = vcmp.gt.f32.partialorder %v1014, 0.0
    %vm1184 = vcmp.gt.f32.partialorder %v1016, 0.0
    %vm1185 = vcmp.gt.f32.partialorder %v1019, 0.0
    %vm1186 = vcmp.gt.f32.partialorder %v1021, 0.0
    %vm1187 = vcmp.gt.f32.partialorder %v1024, 0.0
    %vm1188 = vcmp.gt.f32.partialorder %v1026, 0.0
    %vm1189 = vcmp.gt.f32.partialorder %v1029, 0.0
    %vm1190 = vcmp.gt.f32.partialorder %v1031, 0.0
    %vm1191 = vcmp.gt.f32.partialorder %v1034, 0.0
    %vm1192 = vcmp.gt.f32.partialorder %v1036, 0.0
    %vm1193 = vcmp.gt.f32.partialorder %v1039, 0.0
    %vm1194 = vcmp.gt.f32.partialorder %v1041, 0.0
    %vm1195 = vcmp.gt.f32.partialorder %v1044, 0.0
    %vm1196 = vcmp.gt.f32.partialorder %v1046, 0.0
    %vm1197 = vcmp.gt.f32.partialorder %v1049, 0.0
    %vm1198 = vcmp.gt.f32.partialorder %v1051, 0.0
    %vm1199 = vcmp.gt.f32.partialorder %v1054, 0.0
    %vm1200 = vcmp.gt.f32.partialorder %v1056, 0.0
    %vm1201 = vcmp.gt.f32.partialorder %v1059, 0.0
    %vm1202 = vcmp.gt.f32.partialorder %v1061, 0.0
    %vm1203 = vcmp.gt.f32.partialorder %v1064, 0.0
    %vm1204 = vcmp.gt.f32.partialorder %v1066, 0.0
    %vm1205 = vcmp.gt.f32.partialorder %v1069, 0.0
    %vm1206 = vcmp.gt.f32.partialorder %v1071, 0.0
    %vm1207 = vcmp.gt.f32.partialorder %v1074, 0.0
    %vm1208 = vcmp.gt.f32.partialorder %v1076, 0.0
    %vm1209 = vcmp.gt.f32.partialorder %v1079, 0.0
    %vm1210 = vcmp.gt.f32.partialorder %v1081, 0.0
    %v1211 = vmul.f32 %v764, 0.1
    %v1212 = vmul.f32 %v766, 0.1
    %v1213 = vmul.f32 %v769, 0.1
    %v1214 = vmul.f32 %v771, 0.1
    %v1215 = vmul.f32 %v774, 0.1
    %v1216 = vmul.f32 %v776, 0.1
    %v1217 = vmul.f32 %v779, 0.1
    %v1218 = vmul.f32 %v781, 0.1
    %v1219 = vmul.f32 %v784, 0.1
    %v1220 = vmul.f32 %v786, 0.1
    %v1221 = vmul.f32 %v789, 0.1
    %v1222 = vmul.f32 %v791, 0.1
    %v1223 = vmul.f32 %v794, 0.1
    %v1224 = vmul.f32 %v796, 0.1
    %v1225 = vmul.f32 %v799, 0.1
    %v1226 = vmul.f32 %v801, 0.1
    %v1227 = vmul.f32 %v804, 0.1
    %v1228 = vmul.f32 %v806, 0.1
    %v1229 = vmul.f32 %v809, 0.1
    %v1230 = vmul.f32 %v811, 0.1
    %v1231 = vmul.f32 %v814, 0.1
    %v1232 = vmul.f32 %v816, 0.1
    %v1233 = vmul.f32 %v819, 0.1
    %v1234 = vmul.f32 %v821, 0.1
    %v1235 = vmul.f32 %v824, 0.1
    %v1236 = vmul.f32 %v826, 0.1
    %v1237 = vmul.f32 %v829, 0.1
    %v1238 = vmul.f32 %v831, 0.1
    %v1239 = vmul.f32 %v834, 0.1
    %v1240 = vmul.f32 %v836, 0.1
    %v1241 = vmul.f32 %v839, 0.1
    %v1242 = vmul.f32 %v841, 0.1
    %v1243 = vmul.f32 %v844, 0.1
    %v1244 = vmul.f32 %v846, 0.1
    %v1245 = vmul.f32 %v849, 0.1
    %v1246 = vmul.f32 %v851, 0.1
    %v1247 = vmul.f32 %v854, 0.1
    %v1248 = vmul.f32 %v856, 0.1
    %v1249 = vmul.f32 %v859, 0.1
    %v1250 = vmul.f32 %v861, 0.1
    %v1251 = vmul.f32 %v864, 0.1
    %v1252 = vmul.f32 %v866, 0.1
    %v1253 = vmul.f32 %v869, 0.1
    %v1254 = vmul.f32 %v871, 0.1
    %v1255 = vmul.f32 %v874, 0.1
    %v1256 = vmul.f32 %v876, 0.1
    %v1257 = vmul.f32 %v879, 0.1
    %v1258 = vmul.f32 %v881, 0.1
    %v1259 = vmul.f32 %v884, 0.1
    %v1260 = vmul.f32 %v886, 0.1
    %v1261 = vmul.f32 %v889, 0.1
    %v1262 = vmul.f32 %v891, 0.1
    %v1263 = vmul.f32 %v894, 0.1
    %v1264 = vmul.f32 %v896, 0.1
    %v1265 = vmul.f32 %v899, 0.1
    %v1266 = vmul.f32 %v901, 0.1
    %v1267 = vmul.f32 %v904, 0.1
    %v1268 = vmul.f32 %v906, 0.1
    %v1269 = vmul.f32 %v909, 0.1
    %v1270 = vmul.f32 %v911, 0.1
    %v1271 = vmul.f32 %v914, 0.1
    %v1272 = vmul.f32 %v916, 0.1
    %v1273 = vmul.f32 %v919, 0.1
    %v1274 = vmul.f32 %v921, 0.1
    %v1275 = vmul.f32 %v924, 0.1
    %v1276 = vmul.f32 %v926, 0.1
    %v1277 = vmul.f32 %v929, 0.1
    %v1278 = vmul.f32 %v931, 0.1
    %v1279 = vmul.f32 %v934, 0.1
    %v1280 = vmul.f32 %v936, 0.1
    %v1281 = vmul.f32 %v939, 0.1
    %v1282 = vmul.f32 %v941, 0.1
    %v1283 = vmul.f32 %v944, 0.1
    %v1284 = vmul.f32 %v946, 0.1
    %v1285 = vmul.f32 %v949, 0.1
    %v1286 = vmul.f32 %v951, 0.1
    %v1287 = vmul.f32 %v954, 0.1
    %v1288 = vmul.f32 %v956, 0.1
    %v1289 = vmul.f32 %v959, 0.1
    %v1290 = vmul.f32 %v961, 0.1
    %v1291 = vmul.f32 %v964, 0.1
    %v1292 = vmul.f32 %v966, 0.1
    %v1293 = vmul.f32 %v969, 0.1
    %v1294 = vmul.f32 %v971, 0.1
    %v1295 = vmul.f32 %v974, 0.1
    %v1296 = vmul.f32 %v976, 0.1
    %v1297 = vmul.f32 %v979, 0.1
    %v1298 = vmul.f32 %v981, 0.1
    %v1299 = vmul.f32 %v984, 0.1
    %v1300 = vmul.f32 %v986, 0.1
    %v1301 = vmul.f32 %v989, 0.1
    %v1302 = vmul.f32 %v991, 0.1
    %v1303 = vmul.f32 %v994, 0.1
    %v1304 = vmul.f32 %v996, 0.1
    %v1305 = vmul.f32 %v999, 0.1
    %v1306 = vmul.f32 %v1001, 0.1
    %v1307 = vmul.f32 %v1004, 0.1
    %v1308 = vmul.f32 %v1006, 0.1
    %v1309 = vmul.f32 %v1009, 0.1
    %v1310 = vmul.f32 %v1011, 0.1
    %v1311 = vmul.f32 %v1014, 0.1
    %v1312 = vmul.f32 %v1016, 0.1
    %v1313 = vmul.f32 %v1019, 0.1
    %v1314 = vmul.f32 %v1021, 0.1
    %v1315 = vmul.f32 %v1024, 0.1
    %v1316 = vmul.f32 %v1026, 0.1
    %v1317 = vmul.f32 %v1029, 0.1
    %v1318 = vmul.f32 %v1031, 0.1
    %v1319 = vmul.f32 %v1034, 0.1
    %v1320 = vmul.f32 %v1036, 0.1
    %v1321 = vmul.f32 %v1039, 0.1
    %v1322 = vmul.f32 %v1041, 0.1
    %v1323 = vmul.f32 %v1044, 0.1
    %v1324 = vmul.f32 %v1046, 0.1
    %v1325 = vmul.f32 %v1049, 0.1
    %v1326 = vmul.f32 %v1051, 0.1
    %v1327 = vmul.f32 %v1054, 0.1
    %v1328 = vmul.f32 %v1056, 0.1
    %v1329 = vmul.f32 %v1059, 0.1
    %v1330 = vmul.f32 %v1061, 0.1
    %v1331 = vmul.f32 %v1064, 0.1
    %v1332 = vmul.f32 %v1066, 0.1
    %v1333 = vmul.f32 %v1069, 0.1
    %v1334 = vmul.f32 %v1071, 0.1
    %v1335 = vmul.f32 %v1074, 0.1
    %v1336 = vmul.f32 %v1076, 0.1
    %v1337 = vmul.f32 %v1079, 0.1
    %v1338 = vmul.f32 %v1081, 0.1
    %v1339 = vsel %vm1083, %v764, %v1211
    %v1340 = vsel %vm1084, %v766, %v1212
    %v1341 = vsel %vm1085, %v769, %v1213
    %v1342 = vsel %vm1086, %v771, %v1214
    %v1343 = vsel %vm1087, %v774, %v1215
    %v1344 = vsel %vm1088, %v776, %v1216
    %v1345 = vsel %vm1089, %v779, %v1217
    %v1346 = vsel %vm1090, %v781, %v1218
    %v1347 = vsel %vm1091, %v784, %v1219
    %v1348 = vsel %vm1092, %v786, %v1220
    %v1349 = vsel %vm1093, %v789, %v1221
    %v1350 = vsel %vm1094, %v791, %v1222
    %v1351 = vsel %vm1095, %v794, %v1223
    %v1352 = vsel %vm1096, %v796, %v1224
    %v1353 = vsel %vm1097, %v799, %v1225
    %v1354 = vsel %vm1098, %v801, %v1226
    %v1355 = vsel %vm1099, %v804, %v1227
    %v1356 = vsel %vm1100, %v806, %v1228
    %v1357 = vsel %vm1101, %v809, %v1229
    %v1358 = vsel %vm1102, %v811, %v1230
    %v1359 = vsel %vm1103, %v814, %v1231
    %v1360 = vsel %vm1104, %v816, %v1232
    %v1361 = vsel %vm1105, %v819, %v1233
    %v1362 = vsel %vm1106, %v821, %v1234
    %v1363 = vsel %vm1107, %v824, %v1235
    %v1364 = vsel %vm1108, %v826, %v1236
    %v1365 = vsel %vm1109, %v829, %v1237
    %v1366 = vsel %vm1110, %v831, %v1238
    %v1367 = vsel %vm1111, %v834, %v1239
    %v1368 = vsel %vm1112, %v836, %v1240
    %v1369 = vsel %vm1113, %v839, %v1241
    %v1370 = vsel %vm1114, %v841, %v1242
    %v1371 = vsel %vm1115, %v844, %v1243
    %v1372 = vsel %vm1116, %v846, %v1244
    %v1373 = vsel %vm1117, %v849, %v1245
    %v1374 = vsel %vm1118, %v851, %v1246
    %v1375 = vsel %vm1119, %v854, %v1247
    %v1376 = vsel %vm1120, %v856, %v1248
    %v1377 = vsel %vm1121, %v859, %v1249
    %v1378 = vsel %vm1122, %v861, %v1250
    %v1379 = vsel %vm1123, %v864, %v1251
    %v1380 = vsel %vm1124, %v866, %v1252
    %v1381 = vsel %vm1125, %v869, %v1253
    %v1382 = vsel %vm1126, %v871, %v1254
    %v1383 = vsel %vm1127, %v874, %v1255
    %v1384 = vsel %vm1128, %v876, %v1256
    %v1385 = vsel %vm1129, %v879, %v1257
    %v1386 = vsel %vm1130, %v881, %v1258
    %v1387 = vsel %vm1131, %v884, %v1259
    %v1388 = vsel %vm1132, %v886, %v1260
    %v1389 = vsel %vm1133, %v889, %v1261
    %v1390 = vsel %vm1134, %v891, %v1262
    %v1391 = vsel %vm1135, %v894, %v1263
    %v1392 = vsel %vm1136, %v896, %v1264
    %v1393 = vsel %vm1137, %v899, %v1265
    %v1394 = vsel %vm1138, %v901, %v1266
    %v1395 = vsel %vm1139, %v904, %v1267
    %v1396 = vsel %vm1140, %v906, %v1268
    %v1397 = vsel %vm1141, %v909, %v1269
    %v1398 = vsel %vm1142, %v911, %v1270
    %v1399 = vsel %vm1143, %v914, %v1271
    %v1400 = vsel %vm1144, %v916, %v1272
    %v1401 = vsel %vm1145, %v919, %v1273
    %v1402 = vsel %vm1146, %v921, %v1274
    %v1403 = vsel %vm1147, %v924, %v1275
    %v1404 = vsel %vm1148, %v926, %v1276
    %v1405 = vsel %vm1149, %v929, %v1277
    %v1406 = vsel %vm1150, %v931, %v1278
    %v1407 = vsel %vm1151, %v934, %v1279
    %v1408 = vsel %vm1152, %v936, %v1280
    %v1409 = vsel %vm1153, %v939, %v1281
    %v1410 = vsel %vm1154, %v941, %v1282
    %v1411 = vsel %vm1155, %v944, %v1283
    %v1412 = vsel %vm1156, %v946, %v1284
    %v1413 = vsel %vm1157, %v949, %v1285
    %v1414 = vsel %vm1158, %v951, %v1286
    %v1415 = vsel %vm1159, %v954, %v1287
    %v1416 = vsel %vm1160, %v956, %v1288
    %v1417 = vsel %vm1161, %v959, %v1289
    %v1418 = vsel %vm1162, %v961, %v1290
    %v1419 = vsel %vm1163, %v964, %v1291
    %v1420 = vsel %vm1164, %v966, %v1292
    %v1421 = vsel %vm1165, %v969, %v1293
    %v1422 = vsel %vm1166, %v971, %v1294
    %v1423 = vsel %vm1167, %v974, %v1295
    %v1424 = vsel %vm1168, %v976, %v1296
    %v1425 = vsel %vm1169, %v979, %v1297
    %v1426 = vsel %vm1170, %v981, %v1298
    %v1427 = vsel %vm1171, %v984, %v1299
    %v1428 = vsel %vm1172, %v986, %v1300
    %v1429 = vsel %vm1173, %v989, %v1301
    %v1430 = vsel %vm1174, %v991, %v1302
    %v1431 = vsel %vm1175, %v994, %v1303
    %v1432 = vsel %vm1176, %v996, %v1304
    %v1433 = vsel %vm1177, %v999, %v1305
    %v1434 = vsel %vm1178, %v1001, %v1306
    %v1435 = vsel %vm1179, %v1004, %v1307
    %v1436 = vsel %vm1180, %v1006, %v1308
    %v1437 = vsel %vm1181, %v1009, %v1309
    %v1438 = vsel %vm1182, %v1011, %v1310
    %v1439 = vsel %vm1183, %v1014, %v1311
    %v1440 = vsel %vm1184, %v1016, %v1312
    %v1441 = vsel %vm1185, %v1019, %v1313
    %v1442 = vsel %vm1186, %v1021, %v1314
    %v1443 = vsel %vm1187, %v1024, %v1315
    %v1444 = vsel %vm1188, %v1026, %v1316
    %v1445 = vsel %vm1189, %v1029, %v1317
    %v1446 = vsel %vm1190, %v1031, %v1318
    %v1447 = vsel %vm1191, %v1034, %v1319
    %v1448 = vsel %vm1192, %v1036, %v1320
    %v1449 = vsel %vm1193, %v1039, %v1321
    %v1450 = vsel %vm1194, %v1041, %v1322
    %v1451 = vsel %vm1195, %v1044, %v1323
    %v1452 = vsel %vm1196, %v1046, %v1324
    %v1453 = vsel %vm1197, %v1049, %v1325
    %v1454 = vsel %vm1198, %v1051, %v1326
    %v1455 = vsel %vm1199, %v1054, %v1327
    %v1456 = vsel %vm1200, %v1056, %v1328
    %v1457 = vsel %vm1201, %v1059, %v1329
    %v1458 = vsel %vm1202, %v1061, %v1330
    %v1459 = vsel %vm1203, %v1064, %v1331
    %v1460 = vsel %vm1204, %v1066, %v1332
    %v1461 = vsel %vm1205, %v1069, %v1333
    %v1462 = vsel %vm1206, %v1071, %v1334
    %v1463 = vsel %vm1207, %v1074, %v1335
    %v1464 = vsel %vm1208, %v1076, %v1336
    %v1465 = vsel %vm1209, %v1079, %v1337
    %v1466 = vsel %vm1210, %v1081, %v1338
    %vm1467 = vcmask 523264
    %v1468 = vsel %vm1467, %v1339, -inf
    %v1469 = vsel %vm1467, %v1341, -inf
    %v1470 = vmax.f32 %v1468, %v1469
    %v1471 = vsel %vm1467, %v1340, -inf
    %v1472 = vsel %vm1467, %v1342, -inf
    %v1473 = vmax.f32 %v1471, %v1472
    %v1474 = vsel %vm1467, %v1343, -inf
    %v1475 = vsel %vm1467, %v1345, -inf
    %v1476 = vmax.f32 %v1474, %v1475
    %v1477 = vsel %vm1467, %v1344, -inf
    %v1478 = vsel %vm1467, %v1346, -inf
    %v1479 = vmax.f32 %v1477, %v1478
    %v1480 = vsel %vm1467, %v1347, -inf
    %v1481 = vsel %vm1467, %v1349, -inf
    %v1482 = vmax.f32 %v1480, %v1481
    %v1483 = vsel %vm1467, %v1348, -inf
    %v1484 = vsel %vm1467, %v1350, -inf
    %v1485 = vmax.f32 %v1483, %v1484
    %v1486 = vsel %vm1467, %v1351, -inf
    %v1487 = vsel %vm1467, %v1353, -inf
    %v1488 = vmax.f32 %v1486, %v1487
    %v1489 = vsel %vm1467, %v1352, -inf
    %v1490 = vsel %vm1467, %v1354, -inf
    %v1491 = vmax.f32 %v1489, %v1490
    %v1492 = vsel %vm1467, %v1355, -inf
    %v1493 = vsel %vm1467, %v1357, -inf
    %v1494 = vmax.f32 %v1492, %v1493
    %v1495 = vsel %vm1467, %v1356, -inf
    %v1496 = vsel %vm1467, %v1358, -inf
    %v1497 = vmax.f32 %v1495, %v1496
    %v1498 = vsel %vm1467, %v1359, -inf
    %v1499 = vsel %vm1467, %v1361, -inf
    %v1500 = vmax.f32 %v1498, %v1499
    %v1501 = vsel %vm1467, %v1360, -inf
    %v1502 = vsel %vm1467, %v1362, -inf
    %v1503 = vmax.f32 %v1501, %v1502
    %v1504 = vsel %vm1467, %v1363, -inf
    %v1505 = vsel %vm1467, %v1365, -inf
    %v1506 = vmax.f32 %v1504, %v1505
    %v1507 = vsel %vm1467, %v1364, -inf
    %v1508 = vsel %vm1467, %v1366, -inf
    %v1509 = vmax.f32 %v1507, %v1508
    %v1510 = vsel %vm1467, %v1367, -inf
    %v1511 = vsel %vm1467, %v1369, -inf
    %v1512 = vmax.f32 %v1510, %v1511
    %v1513 = vsel %vm1467, %v1368, -inf
    %v1514 = vsel %vm1467, %v1370, -inf
    %v1515 = vmax.f32 %v1513, %v1514
    %v1516 = vsel %vm1467, %v1371, -inf
    %v1517 = vsel %vm1467, %v1373, -inf
    %v1518 = vmax.f32 %v1516, %v1517
    %v1519 = vsel %vm1467, %v1372, -inf
    %v1520 = vsel %vm1467, %v1374, -inf
    %v1521 = vmax.f32 %v1519, %v1520
    %v1522 = vsel %vm1467, %v1375, -inf
    %v1523 = vsel %vm1467, %v1377, -inf
    %v1524 = vmax.f32 %v1522, %v1523
    %v1525 = vsel %vm1467, %v1376, -inf
    %v1526 = vsel %vm1467, %v1378, -inf
    %v1527 = vmax.f32 %v1525, %v1526
    %v1528 = vsel %vm1467, %v1379, -inf
    %v1529 = vsel %vm1467, %v1381, -inf
    %v1530 = vmax.f32 %v1528, %v1529
    %v1531 = vsel %vm1467, %v1380, -inf
    %v1532 = vsel %vm1467, %v1382, -inf
    %v1533 = vmax.f32 %v1531, %v1532
    %v1534 = vsel %vm1467, %v1383, -inf
    %v1535 = vsel %vm1467, %v1385, -inf
    %v1536 = vmax.f32 %v1534, %v1535
    %v1537 = vsel %vm1467, %v1384, -inf
    %v1538 = vsel %vm1467, %v1386, -inf
    %v1539 = vmax.f32 %v1537, %v1538
    %v1540 = vsel %vm1467, %v1387, -inf
    %v1541 = vsel %vm1467, %v1389, -inf
    %v1542 = vmax.f32 %v1540, %v1541
    %v1543 = vsel %vm1467, %v1388, -inf
    %v1544 = vsel %vm1467, %v1390, -inf
    %v1545 = vmax.f32 %v1543, %v1544
    %v1546 = vsel %vm1467, %v1391, -inf
    %v1547 = vsel %vm1467, %v1393, -inf
    %v1548 = vmax.f32 %v1546, %v1547
    %v1549 = vsel %vm1467, %v1392, -inf
    %v1550 = vsel %vm1467, %v1394, -inf
    %v1551 = vmax.f32 %v1549, %v1550
    %v1552 = vsel %vm1467, %v1395, -inf
    %v1553 = vsel %vm1467, %v1397, -inf
    %v1554 = vmax.f32 %v1552, %v1553
    %v1555 = vsel %vm1467, %v1396, -inf
    %v1556 = vsel %vm1467, %v1398, -inf
    %v1557 = vmax.f32 %v1555, %v1556
    %v1558 = vsel %vm1467, %v1399, -inf
    %v1559 = vsel %vm1467, %v1401, -inf
    %v1560 = vmax.f32 %v1558, %v1559
    %v1561 = vsel %vm1467, %v1400, -inf
    %v1562 = vsel %vm1467, %v1402, -inf
    %v1563 = vmax.f32 %v1561, %v1562
    %v1564 = vsel %vm1467, %v1403, -inf
    %v1565 = vsel %vm1467, %v1405, -inf
    %v1566 = vmax.f32 %v1564, %v1565
    %v1567 = vsel %vm1467, %v1404, -inf
    %v1568 = vsel %vm1467, %v1406, -inf
    %v1569 = vmax.f32 %v1567, %v1568
    %v1570 = vsel %vm1467, %v1407, -inf
    %v1571 = vsel %vm1467, %v1409, -inf
    %v1572 = vmax.f32 %v1570, %v1571
    %v1573 = vsel %vm1467, %v1408, -inf
    %v1574 = vsel %vm1467, %v1410, -inf
    %v1575 = vmax.f32 %v1573, %v1574
    %v1576 = vsel %vm1467, %v1411, -inf
    %v1577 = vsel %vm1467, %v1413, -inf
    %v1578 = vmax.f32 %v1576, %v1577
    %v1579 = vsel %vm1467, %v1412, -inf
    %v1580 = vsel %vm1467, %v1414, -inf
    %v1581 = vmax.f32 %v1579, %v1580
    %v1582 = vsel %vm1467, %v1415, -inf
    %v1583 = vsel %vm1467, %v1417, -inf
    %v1584 = vmax.f32 %v1582, %v1583
    %v1585 = vsel %vm1467, %v1416, -inf
    %v1586 = vsel %vm1467, %v1418, -inf
    %v1587 = vmax.f32 %v1585, %v1586
    %v1588 = vsel %vm1467, %v1419, -inf
    %v1589 = vsel %vm1467, %v1421, -inf
    %v1590 = vmax.f32 %v1588, %v1589
    %v1591 = vsel %vm1467, %v1420, -inf
    %v1592 = vsel %vm1467, %v1422, -inf
    %v1593 = vmax.f32 %v1591, %v1592
    %v1594 = vsel %vm1467, %v1423, -inf
    %v1595 = vsel %vm1467, %v1425, -inf
    %v1596 = vmax.f32 %v1594, %v1595
    %v1597 = vsel %vm1467, %v1424, -inf
    %v1598 = vsel %vm1467, %v1426, -inf
    %v1599 = vmax.f32 %v1597, %v1598
    %v1600 = vsel %vm1467, %v1427, -inf
    %v1601 = vsel %vm1467, %v1429, -inf
    %v1602 = vmax.f32 %v1600, %v1601
    %v1603 = vsel %vm1467, %v1428, -inf
    %v1604 = vsel %vm1467, %v1430, -inf
    %v1605 = vmax.f32 %v1603, %v1604
    %v1606 = vsel %vm1467, %v1431, -inf
    %v1607 = vsel %vm1467, %v1433, -inf
    %v1608 = vmax.f32 %v1606, %v1607
    %v1609 = vsel %vm1467, %v1432, -inf
    %v1610 = vsel %vm1467, %v1434, -inf
    %v1611 = vmax.f32 %v1609, %v1610
    %v1612 = vsel %vm1467, %v1435, -inf
    %v1613 = vsel %vm1467, %v1437, -inf
    %v1614 = vmax.f32 %v1612, %v1613
    %v1615 = vsel %vm1467, %v1436, -inf
    %v1616 = vsel %vm1467, %v1438, -inf
    %v1617 = vmax.f32 %v1615, %v1616
    %v1618 = vsel %vm1467, %v1439, -inf
    %v1619 = vsel %vm1467, %v1441, -inf
    %v1620 = vmax.f32 %v1618, %v1619
    %v1621 = vsel %vm1467, %v1440, -inf
    %v1622 = vsel %vm1467, %v1442, -inf
    %v1623 = vmax.f32 %v1621, %v1622
    %v1624 = vsel %vm1467, %v1443, -inf
    %v1625 = vsel %vm1467, %v1445, -inf
    %v1626 = vmax.f32 %v1624, %v1625
    %v1627 = vsel %vm1467, %v1444, -inf
    %v1628 = vsel %vm1467, %v1446, -inf
    %v1629 = vmax.f32 %v1627, %v1628
    %v1630 = vsel %vm1467, %v1447, -inf
    %v1631 = vsel %vm1467, %v1449, -inf
    %v1632 = vmax.f32 %v1630, %v1631
    %v1633 = vsel %vm1467, %v1448, -inf
    %v1634 = vsel %vm1467, %v1450, -inf
    %v1635 = vmax.f32 %v1633, %v1634
    %v1636 = vsel %vm1467, %v1451, -inf
    %v1637 = vsel %vm1467, %v1453, -inf
    %v1638 = vmax.f32 %v1636, %v1637
    %v1639 = vsel %vm1467, %v1452, -inf
    %v1640 = vsel %vm1467, %v1454, -inf
    %v1641 = vmax.f32 %v1639, %v1640
    %v1642 = vsel %vm1467, %v1455, -inf
    %v1643 = vsel %vm1467, %v1457, -inf
    %v1644 = vmax.f32 %v1642, %v1643
    %v1645 = vsel %vm1467, %v1456, -inf
    %v1646 = vsel %vm1467, %v1458, -inf
    %v1647 = vmax.f32 %v1645, %v1646
    %v1648 = vsel %vm1467, %v1459, -inf
    %v1649 = vsel %vm1467, %v1461, -inf
    %v1650 = vmax.f32 %v1648, %v1649
    %v1651 = vsel %vm1467, %v1460, -inf
    %v1652 = vsel %vm1467, %v1462, -inf
    %v1653 = vmax.f32 %v1651, %v1652
    %v1654 = vsel %vm1467, %v1463, -inf
    %v1655 = vsel %vm1467, %v1465, -inf
    %v1656 = vmax.f32 %v1654, %v1655
    %v1657 = vsel %vm1467, %v1464, -inf
    %v1658 = vsel %vm1467, %v1466, -inf
    %v1659 = vmax.f32 %v1657, %v1658
    %v1724 = vrot.slane %v1470, 2
    %v1725 = vrot.slane %v1470, 4
    %v1726 = vrot.slane %v1470, 6
    %v1727 = vrot.slane %v1473, 2
    %v1728 = vrot.slane %v1473, 4
    %v1729 = vrot.slane %v1473, 6
    %v1730 = vrot.slane %v1476, 2
    %v1731 = vrot.slane %v1476, 4
    %v1732 = vrot.slane %v1476, 6
    %v1733 = vrot.slane %v1479, 2
    %v1734 = vrot.slane %v1479, 4
    %v1735 = vrot.slane %v1479, 6
    %v1736 = vrot.slane %v1482, 2
    %v1737 = vrot.slane %v1482, 4
    %v1738 = vrot.slane %v1482, 6
    %v1739 = vrot.slane %v1485, 2
    %v1740 = vrot.slane %v1485, 4
    %v1741 = vrot.slane %v1485, 6
    %v1742 = vrot.slane %v1488, 2
    %v1743 = vrot.slane %v1488, 4
    %v1744 = vrot.slane %v1488, 6
    %v1745 = vrot.slane %v1491, 2
    %v1746 = vrot.slane %v1491, 4
    %v1747 = vrot.slane %v1491, 6
    %v1748 = vrot.slane %v1494, 2
    %v1749 = vrot.slane %v1494, 4
    %v1750 = vrot.slane %v1494, 6
    %v1751 = vrot.slane %v1497, 2
    %v1752 = vrot.slane %v1497, 4
    %v1753 = vrot.slane %v1497, 6
    %v1754 = vrot.slane %v1500, 2
    %v1755 = vrot.slane %v1500, 4
    %v1756 = vrot.slane %v1500, 6
    %v1757 = vrot.slane %v1503, 2
    %v1758 = vrot.slane %v1503, 4
    %v1759 = vrot.slane %v1503, 6
    %v1760 = vrot.slane %v1506, 2
    %v1761 = vrot.slane %v1506, 4
    %v1762 = vrot.slane %v1506, 6
    %v1763 = vrot.slane %v1509, 2
    %v1764 = vrot.slane %v1509, 4
    %v1765 = vrot.slane %v1509, 6
    %v1766 = vrot.slane %v1512, 2
    %v1767 = vrot.slane %v1512, 4
    %v1768 = vrot.slane %v1512, 6
    %v1769 = vrot.slane %v1515, 2
    %v1770 = vrot.slane %v1515, 4
    %v1771 = vrot.slane %v1515, 6
    %v1772 = vrot.slane %v1518, 2
    %v1773 = vrot.slane %v1518, 4
    %v1774 = vrot.slane %v1518, 6
    %v1775 = vrot.slane %v1521, 2
    %v1776 = vrot.slane %v1521, 4
    %v1777 = vrot.slane %v1521, 6
    %v1778 = vrot.slane %v1524, 2
    %v1779 = vrot.slane %v1524, 4
    %v1780 = vrot.slane %v1524, 6
    %v1781 = vrot.slane %v1527, 2
    %v1782 = vrot.slane %v1527, 4
    %v1783 = vrot.slane %v1527, 6
    %v1784 = vrot.slane %v1530, 2
    %v1785 = vrot.slane %v1530, 4
    %v1786 = vrot.slane %v1530, 6
    %v1787 = vrot.slane %v1533, 2
    %v1788 = vrot.slane %v1533, 4
    %v1789 = vrot.slane %v1533, 6
    %v1790 = vrot.slane %v1536, 2
    %v1791 = vrot.slane %v1536, 4
    %v1792 = vrot.slane %v1536, 6
    %v1793 = vrot.slane %v1539, 2
    %v1794 = vrot.slane %v1539, 4
    %v1795 = vrot.slane %v1539, 6
    %v1796 = vrot.slane %v1542, 2
    %v1797 = vrot.slane %v1542, 4
    %v1798 = vrot.slane %v1542, 6
    %v1799 = vrot.slane %v1545, 2
    %v1800 = vrot.slane %v1545, 4
    %v1801 = vrot.slane %v1545, 6
    %v1802 = vrot.slane %v1548, 2
    %v1803 = vrot.slane %v1548, 4
    %v1804 = vrot.slane %v1548, 6
    %v1805 = vrot.slane %v1551, 2
    %v1806 = vrot.slane %v1551, 4
    %v1807 = vrot.slane %v1551, 6
    %v1808 = vrot.slane %v1554, 2
    %v1809 = vrot.slane %v1554, 4
    %v1810 = vrot.slane %v1554, 6
    %v1811 = vrot.slane %v1557, 2
    %v1812 = vrot.slane %v1557, 4
    %v1813 = vrot.slane %v1557, 6
    %v1814 = vrot.slane %v1560, 2
    %v1815 = vrot.slane %v1560, 4
    %v1816 = vrot.slane %v1560, 6
    %v1817 = vrot.slane %v1563, 2
    %v1818 = vrot.slane %v1563, 4
    %v1819 = vrot.slane %v1563, 6
    %v1820 = vrot.slane %v1566, 2
    %v1821 = vrot.slane %v1566, 4
    %v1822 = vrot.slane %v1566, 6
    %v1823 = vrot.slane %v1569, 2
    %v1824 = vrot.slane %v1569, 4
    %v1825 = vrot.slane %v1569, 6
    %v1826 = vrot.slane %v1572, 2
    %v1827 = vrot.slane %v1572, 4
    %v1828 = vrot.slane %v1572, 6
    %v1829 = vrot.slane %v1575, 2
    %v1830 = vrot.slane %v1575, 4
    %v1831 = vrot.slane %v1575, 6
    %v1832 = vrot.slane %v1578, 2
    %v1833 = vrot.slane %v1578, 4
    %v1834 = vrot.slane %v1578, 6
    %v1835 = vrot.slane %v1581, 2
    %v1836 = vrot.slane %v1581, 4
    %v1837 = vrot.slane %v1581, 6
    %v1838 = vrot.slane %v1584, 2
    %v1839 = vrot.slane %v1584, 4
    %v1840 = vrot.slane %v1584, 6
    %v1841 = vrot.slane %v1587, 2
    %v1842 = vrot.slane %v1587, 4
    %v1843 = vrot.slane %v1587, 6
    %v1844 = vrot.slane %v1590, 2
    %v1845 = vrot.slane %v1590, 4
    %v1846 = vrot.slane %v1590, 6
    %v1847 = vrot.slane %v1593, 2
    %v1848 = vrot.slane %v1593, 4
    %v1849 = vrot.slane %v1593, 6
    %v1850 = vrot.slane %v1596, 2
    %v1851 = vrot.slane %v1596, 4
    %v1852 = vrot.slane %v1596, 6
    %v1853 = vrot.slane %v1599, 2
    %v1854 = vrot.slane %v1599, 4
    %v1855 = vrot.slane %v1599, 6
    %v1856 = vrot.slane %v1602, 2
    %v1857 = vrot.slane %v1602, 4
    %v1858 = vrot.slane %v1602, 6
    %v1859 = vrot.slane %v1605, 2
    %v1860 = vrot.slane %v1605, 4
    %v1861 = vrot.slane %v1605, 6
    %v1862 = vrot.slane %v1608, 2
    %v1863 = vrot.slane %v1608, 4
    %v1864 = vrot.slane %v1608, 6
    %v1865 = vrot.slane %v1611, 2
    %v1866 = vrot.slane %v1611, 4
    %v1867 = vrot.slane %v1611, 6
    %v1868 = vrot.slane %v1614, 2
    %v1869 = vrot.slane %v1614, 4
    %v1870 = vrot.slane %v1614, 6
    %v1871 = vrot.slane %v1617, 2
    %v1872 = vrot.slane %v1617, 4
    %v1873 = vrot.slane %v1617, 6
    %v1874 = vrot.slane %v1620, 2
    %v1875 = vrot.slane %v1620, 4
    %v1876 = vrot.slane %v1620, 6
    %v1877 = vrot.slane %v1623, 2
    %v1878 = vrot.slane %v1623, 4
    %v1879 = vrot.slane %v1623, 6
    %v1880 = vrot.slane %v1626, 2
    %v1881 = vrot.slane %v1626, 4
    %v1882 = vrot.slane %v1626, 6
    %v1883 = vrot.slane %v1629, 2
    %v1884 = vrot.slane %v1629, 4
    %v1885 = vrot.slane %v1629, 6
    %v1886 = vrot.slane %v1632, 2
    %v1887 = vrot.slane %v1632, 4
    %v1888 = vrot.slane %v1632, 6
    %v1889 = vrot.slane %v1635, 2
    %v1890 = vrot.slane %v1635, 4
    %v1891 = vrot.slane %v1635, 6
    %v1892 = vrot.slane %v1638, 2
    %v1893 = vrot.slane %v1638, 4
    %v1894 = vrot.slane %v1638, 6
    %v1895 = vrot.slane %v1641, 2
    %v1896 = vrot.slane %v1641, 4
    %v1897 = vrot.slane %v1641, 6
    %v1898 = vrot.slane %v1644, 2
    %v1899 = vrot.slane %v1644, 4
    %v1900 = vrot.slane %v1644, 6
    %v1901 = vrot.slane %v1647, 2
    %v1902 = vrot.slane %v1647, 4
    %v1903 = vrot.slane %v1647, 6
    %v1904 = vrot.slane %v1650, 2
    %v1905 = vrot.slane %v1650, 4
    %v1906 = vrot.slane %v1650, 6
    %v1907 = vrot.slane %v1653, 2
    %v1908 = vrot.slane %v1653, 4
    %v1909 = vrot.slane %v1653, 6
    %v1910 = vrot.slane %v1656, 2
    %v1911 = vrot.slane %v1656, 4
    %v1912 = vrot.slane %v1656, 6
    %v1913 = vrot.slane %v1659, 2
    %v1914 = vrot.slane %v1659, 4
    %v1915 = vrot.slane %v1659, 6
    %vm2108 = vcmask 517120
    %v2109 = vsel %vm2108, %v1470, -inf
    %v2110 = vrot.slane %v2109, 4
    %v2111 = vmax.f32 %v2109, %v2110
    %v2112 = vrot.slane %v2111, 2
    %v2113 = vmax.f32 %v2111, %v2112
    %v2114 = vrot.slane %v2113, 1
    %v2115 = vmax.f32 %v2113, %v2114
    %v2116 = vsel %vm2108, %v1724, -inf
    %v2117 = vrot.slane %v2116, 4
    %v2118 = vmax.f32 %v2116, %v2117
    %v2119 = vrot.slane %v2118, 2
    %v2120 = vmax.f32 %v2118, %v2119
    %v2121 = vrot.slane %v2120, 1
    %v2122 = vmax.f32 %v2120, %v2121
    %v2123 = vsel %vm2108, %v1725, -inf
    %v2124 = vrot.slane %v2123, 4
    %v2125 = vmax.f32 %v2123, %v2124
    %v2126 = vrot.slane %v2125, 2
    %v2127 = vmax.f32 %v2125, %v2126
    %v2128 = vrot.slane %v2127, 1
    %v2129 = vmax.f32 %v2127, %v2128
    %v2130 = vsel %vm2108, %v1726, -inf
    %v2131 = vrot.slane %v2130, 4
    %v2132 = vmax.f32 %v2130, %v2131
    %v2133 = vrot.slane %v2132, 2
    %v2134 = vmax.f32 %v2132, %v2133
    %v2135 = vrot.slane %v2134, 1
    %v2136 = vmax.f32 %v2134, %v2135
    %v2137 = vsel %vm2108, %v1473, -inf
    %v2138 = vrot.slane %v2137, 4
    %v2139 = vmax.f32 %v2137, %v2138
    %v2140 = vrot.slane %v2139, 2
    %v2141 = vmax.f32 %v2139, %v2140
    %v2142 = vrot.slane %v2141, 1
    %v2143 = vmax.f32 %v2141, %v2142
    %v2144 = vsel %vm2108, %v1727, -inf
    %v2145 = vrot.slane %v2144, 4
    %v2146 = vmax.f32 %v2144, %v2145
    %v2147 = vrot.slane %v2146, 2
    %v2148 = vmax.f32 %v2146, %v2147
    %v2149 = vrot.slane %v2148, 1
    %v2150 = vmax.f32 %v2148, %v2149
    %v2151 = vsel %vm2108, %v1728, -inf
    %v2152 = vrot.slane %v2151, 4
    %v2153 = vmax.f32 %v2151, %v2152
    %v2154 = vrot.slane %v2153, 2
    %v2155 = vmax.f32 %v2153, %v2154
    %v2156 = vrot.slane %v2155, 1
    %v2157 = vmax.f32 %v2155, %v2156
    %v2158 = vsel %vm2108, %v1729, -inf
    %v2159 = vrot.slane %v2158, 4
    %v2160 = vmax.f32 %v2158, %v2159
    %v2161 = vrot.slane %v2160, 2
    %v2162 = vmax.f32 %v2160, %v2161
    %v2163 = vrot.slane %v2162, 1
    %v2164 = vmax.f32 %v2162, %v2163
    %v2165 = vsel %vm2108, %v1476, -inf
    %v2166 = vrot.slane %v2165, 4
    %v2167 = vmax.f32 %v2165, %v2166
    %v2168 = vrot.slane %v2167, 2
    %v2169 = vmax.f32 %v2167, %v2168
    %v2170 = vrot.slane %v2169, 1
    %v2171 = vmax.f32 %v2169, %v2170
    %v2172 = vsel %vm2108, %v1730, -inf
    %v2173 = vrot.slane %v2172, 4
    %v2174 = vmax.f32 %v2172, %v2173
    %v2175 = vrot.slane %v2174, 2
    %v2176 = vmax.f32 %v2174, %v2175
    %v2177 = vrot.slane %v2176, 1
    %v2178 = vmax.f32 %v2176, %v2177
    %v2179 = vsel %vm2108, %v1731, -inf
    %v2180 = vrot.slane %v2179, 4
    %v2181 = vmax.f32 %v2179, %v2180
    %v2182 = vrot.slane %v2181, 2
    %v2183 = vmax.f32 %v2181, %v2182
    %v2184 = vrot.slane %v2183, 1
    %v2185 = vmax.f32 %v2183, %v2184
    %v2186 = vsel %vm2108, %v1732, -inf
    %v2187 = vrot.slane %v2186, 4
    %v2188 = vmax.f32 %v2186, %v2187
    %v2189 = vrot.slane %v2188, 2
    %v2190 = vmax.f32 %v2188, %v2189
    %v2191 = vrot.slane %v2190, 1
    %v2192 = vmax.f32 %v2190, %v2191
    %v2193 = vsel %vm2108, %v1479, -inf
    %v2194 = vrot.slane %v2193, 4
    %v2195 = vmax.f32 %v2193, %v2194
    %v2196 = vrot.slane %v2195, 2
    %v2197 = vmax.f32 %v2195, %v2196
    %v2198 = vrot.slane %v2197, 1
    %v2199 = vmax.f32 %v2197, %v2198
    %v2200 = vsel %vm2108, %v1733, -inf
    %v2201 = vrot.slane %v2200, 4
    %v2202 = vmax.f32 %v2200, %v2201
    %v2203 = vrot.slane %v2202, 2
    %v2204 = vmax.f32 %v2202, %v2203
    %v2205 = vrot.slane %v2204, 1
    %v2206 = vmax.f32 %v2204, %v2205
    %v2207 = vsel %vm2108, %v1734, -inf
    %v2208 = vrot.slane %v2207, 4
    %v2209 = vmax.f32 %v2207, %v2208
    %v2210 = vrot.slane %v2209, 2
    %v2211 = vmax.f32 %v2209, %v2210
    %v2212 = vrot.slane %v2211, 1
    %v2213 = vmax.f32 %v2211, %v2212
    %v2214 = vsel %vm2108, %v1735, -inf
    %v2215 = vrot.slane %v2214, 4
    %v2216 = vmax.f32 %v2214, %v2215
    %v2217 = vrot.slane %v2216, 2
    %v2218 = vmax.f32 %v2216, %v2217
    %v2219 = vrot.slane %v2218, 1
    %v2220 = vmax.f32 %v2218, %v2219
    %v2221 = vsel %vm2108, %v1482, -inf
    %v2222 = vrot.slane %v2221, 4
    %v2223 = vmax.f32 %v2221, %v2222
    %v2224 = vrot.slane %v2223, 2
    %v2225 = vmax.f32 %v2223, %v2224
    %v2226 = vrot.slane %v2225, 1
    %v2227 = vmax.f32 %v2225, %v2226
    %v2228 = vsel %vm2108, %v1736, -inf
    %v2229 = vrot.slane %v2228, 4
    %v2230 = vmax.f32 %v2228, %v2229
    %v2231 = vrot.slane %v2230, 2
    %v2232 = vmax.f32 %v2230, %v2231
    %v2233 = vrot.slane %v2232, 1
    %v2234 = vmax.f32 %v2232, %v2233
    %v2235 = vsel %vm2108, %v1737, -inf
    %v2236 = vrot.slane %v2235, 4
    %v2237 = vmax.f32 %v2235, %v2236
    %v2238 = vrot.slane %v2237, 2
    %v2239 = vmax.f32 %v2237, %v2238
    %v2240 = vrot.slane %v2239, 1
    %v2241 = vmax.f32 %v2239, %v2240
    %v2242 = vsel %vm2108, %v1738, -inf
    %v2243 = vrot.slane %v2242, 4
    %v2244 = vmax.f32 %v2242, %v2243
    %v2245 = vrot.slane %v2244, 2
    %v2246 = vmax.f32 %v2244, %v2245
    %v2247 = vrot.slane %v2246, 1
    %v2248 = vmax.f32 %v2246, %v2247
    %v2249 = vsel %vm2108, %v1485, -inf
    %v2250 = vrot.slane %v2249, 4
    %v2251 = vmax.f32 %v2249, %v2250
    %v2252 = vrot.slane %v2251, 2
    %v2253 = vmax.f32 %v2251, %v2252
    %v2254 = vrot.slane %v2253, 1
    %v2255 = vmax.f32 %v2253, %v2254
    %v2256 = vsel %vm2108, %v1739, -inf
    %v2257 = vrot.slane %v2256, 4
    %v2258 = vmax.f32 %v2256, %v2257
    %v2259 = vrot.slane %v2258, 2
    %v2260 = vmax.f32 %v2258, %v2259
    %v2261 = vrot.slane %v2260, 1
    %v2262 = vmax.f32 %v2260, %v2261
    %v2263 = vsel %vm2108, %v1740, -inf
    %v2264 = vrot.slane %v2263, 4
    %v2265 = vmax.f32 %v2263, %v2264
    %v2266 = vrot.slane %v2265, 2
    %v2267 = vmax.f32 %v2265, %v2266
    %v2268 = vrot.slane %v2267, 1
    %v2269 = vmax.f32 %v2267, %v2268
    %v2270 = vsel %vm2108, %v1741, -inf
    %v2271 = vrot.slane %v2270, 4
    %v2272 = vmax.f32 %v2270, %v2271
    %v2273 = vrot.slane %v2272, 2
    %v2274 = vmax.f32 %v2272, %v2273
    %v2275 = vrot.slane %v2274, 1
    %v2276 = vmax.f32 %v2274, %v2275
    %v2277 = vsel %vm2108, %v1488, -inf
    %v2278 = vrot.slane %v2277, 4
    %v2279 = vmax.f32 %v2277, %v2278
    %v2280 = vrot.slane %v2279, 2
    %v2281 = vmax.f32 %v2279, %v2280
    %v2282 = vrot.slane %v2281, 1
    %v2283 = vmax.f32 %v2281, %v2282
    %v2284 = vsel %vm2108, %v1742, -inf
    %v2285 = vrot.slane %v2284, 4
    %v2286 = vmax.f32 %v2284, %v2285
    %v2287 = vrot.slane %v2286, 2
    %v2288 = vmax.f32 %v2286, %v2287
    %v2289 = vrot.slane %v2288, 1
    %v2290 = vmax.f32 %v2288, %v2289
    %v2291 = vsel %vm2108, %v1743, -inf
    %v2292 = vrot.slane %v2291, 4
    %v2293 = vmax.f32 %v2291, %v2292
    %v2294 = vrot.slane %v2293, 2
    %v2295 = vmax.f32 %v2293, %v2294
    %v2296 = vrot.slane %v2295, 1
    %v2297 = vmax.f32 %v2295, %v2296
    %v2298 = vsel %vm2108, %v1744, -inf
    %v2299 = vrot.slane %v2298, 4
    %v2300 = vmax.f32 %v2298, %v2299
    %v2301 = vrot.slane %v2300, 2
    %v2302 = vmax.f32 %v2300, %v2301
    %v2303 = vrot.slane %v2302, 1
    %v2304 = vmax.f32 %v2302, %v2303
    %v2305 = vsel %vm2108, %v1491, -inf
    %v2306 = vrot.slane %v2305, 4
    %v2307 = vmax.f32 %v2305, %v2306
    %v2308 = vrot.slane %v2307, 2
    %v2309 = vmax.f32 %v2307, %v2308
    %v2310 = vrot.slane %v2309, 1
    %v2311 = vmax.f32 %v2309, %v2310
    %v2312 = vsel %vm2108, %v1745, -inf
    %v2313 = vrot.slane %v2312, 4
    %v2314 = vmax.f32 %v2312, %v2313
    %v2315 = vrot.slane %v2314, 2
    %v2316 = vmax.f32 %v2314, %v2315
    %v2317 = vrot.slane %v2316, 1
    %v2318 = vmax.f32 %v2316, %v2317
    %v2319 = vsel %vm2108, %v1746, -inf
    %v2320 = vrot.slane %v2319, 4
    %v2321 = vmax.f32 %v2319, %v2320
    %v2322 = vrot.slane %v2321, 2
    %v2323 = vmax.f32 %v2321, %v2322
    %v2324 = vrot.slane %v2323, 1
    %v2325 = vmax.f32 %v2323, %v2324
    %v2326 = vsel %vm2108, %v1747, -inf
    %v2327 = vrot.slane %v2326, 4
    %v2328 = vmax.f32 %v2326, %v2327
    %v2329 = vrot.slane %v2328, 2
    %v2330 = vmax.f32 %v2328, %v2329
    %v2331 = vrot.slane %v2330, 1
    %v2332 = vmax.f32 %v2330, %v2331
    %v2333 = vsel %vm2108, %v1494, -inf
    %v2334 = vrot.slane %v2333, 4
    %v2335 = vmax.f32 %v2333, %v2334
    %v2336 = vrot.slane %v2335, 2
    %v2337 = vmax.f32 %v2335, %v2336
    %v2338 = vrot.slane %v2337, 1
    %v2339 = vmax.f32 %v2337, %v2338
    %v2340 = vsel %vm2108, %v1748, -inf
    %v2341 = vrot.slane %v2340, 4
    %v2342 = vmax.f32 %v2340, %v2341
    %v2343 = vrot.slane %v2342, 2
    %v2344 = vmax.f32 %v2342, %v2343
    %v2345 = vrot.slane %v2344, 1
    %v2346 = vmax.f32 %v2344, %v2345
    %v2347 = vsel %vm2108, %v1749, -inf
    %v2348 = vrot.slane %v2347, 4
    %v2349 = vmax.f32 %v2347, %v2348
    %v2350 = vrot.slane %v2349, 2
    %v2351 = vmax.f32 %v2349, %v2350
    %v2352 = vrot.slane %v2351, 1
    %v2353 = vmax.f32 %v2351, %v2352
    %v2354 = vsel %vm2108, %v1750, -inf
    %v2355 = vrot.slane %v2354, 4
    %v2356 = vmax.f32 %v2354, %v2355
    %v2357 = vrot.slane %v2356, 2
    %v2358 = vmax.f32 %v2356, %v2357
    %v2359 = vrot.slane %v2358, 1
    %v2360 = vmax.f32 %v2358, %v2359
    %v2361 = vsel %vm2108, %v1497, -inf
    %v2362 = vrot.slane %v2361, 4
    %v2363 = vmax.f32 %v2361, %v2362
    %v2364 = vrot.slane %v2363, 2
    %v2365 = vmax.f32 %v2363, %v2364
    %v2366 = vrot.slane %v2365, 1
    %v2367 = vmax.f32 %v2365, %v2366
    %v2368 = vsel %vm2108, %v1751, -inf
    %v2369 = vrot.slane %v2368, 4
    %v2370 = vmax.f32 %v2368, %v2369
    %v2371 = vrot.slane %v2370, 2
    %v2372 = vmax.f32 %v2370, %v2371
    %v2373 = vrot.slane %v2372, 1
    %v2374 = vmax.f32 %v2372, %v2373
    %v2375 = vsel %vm2108, %v1752, -inf
    %v2376 = vrot.slane %v2375, 4
    %v2377 = vmax.f32 %v2375, %v2376
    %v2378 = vrot.slane %v2377, 2
    %v2379 = vmax.f32 %v2377, %v2378
    %v2380 = vrot.slane %v2379, 1
    %v2381 = vmax.f32 %v2379, %v2380
    %v2382 = vsel %vm2108, %v1753, -inf
    %v2383 = vrot.slane %v2382, 4
    %v2384 = vmax.f32 %v2382, %v2383
    %v2385 = vrot.slane %v2384, 2
    %v2386 = vmax.f32 %v2384, %v2385
    %v2387 = vrot.slane %v2386, 1
    %v2388 = vmax.f32 %v2386, %v2387
    %v2389 = vsel %vm2108, %v1500, -inf
    %v2390 = vrot.slane %v2389, 4
    %v2391 = vmax.f32 %v2389, %v2390
    %v2392 = vrot.slane %v2391, 2
    %v2393 = vmax.f32 %v2391, %v2392
    %v2394 = vrot.slane %v2393, 1
    %v2395 = vmax.f32 %v2393, %v2394
    %v2396 = vsel %vm2108, %v1754, -inf
    %v2397 = vrot.slane %v2396, 4
    %v2398 = vmax.f32 %v2396, %v2397
    %v2399 = vrot.slane %v2398, 2
    %v2400 = vmax.f32 %v2398, %v2399
    %v2401 = vrot.slane %v2400, 1
    %v2402 = vmax.f32 %v2400, %v2401
    %v2403 = vsel %vm2108, %v1755, -inf
    %v2404 = vrot.slane %v2403, 4
    %v2405 = vmax.f32 %v2403, %v2404
    %v2406 = vrot.slane %v2405, 2
    %v2407 = vmax.f32 %v2405, %v2406
    %v2408 = vrot.slane %v2407, 1
    %v2409 = vmax.f32 %v2407, %v2408
    %v2410 = vsel %vm2108, %v1756, -inf
    %v2411 = vrot.slane %v2410, 4
    %v2412 = vmax.f32 %v2410, %v2411
    %v2413 = vrot.slane %v2412, 2
    %v2414 = vmax.f32 %v2412, %v2413
    %v2415 = vrot.slane %v2414, 1
    %v2416 = vmax.f32 %v2414, %v2415
    %v2417 = vsel %vm2108, %v1503, -inf
    %v2418 = vrot.slane %v2417, 4
    %v2419 = vmax.f32 %v2417, %v2418
    %v2420 = vrot.slane %v2419, 2
    %v2421 = vmax.f32 %v2419, %v2420
    %v2422 = vrot.slane %v2421, 1
    %v2423 = vmax.f32 %v2421, %v2422
    %v2424 = vsel %vm2108, %v1757, -inf
    %v2425 = vrot.slane %v2424, 4
    %v2426 = vmax.f32 %v2424, %v2425
    %v2427 = vrot.slane %v2426, 2
    %v2428 = vmax.f32 %v2426, %v2427
    %v2429 = vrot.slane %v2428, 1
    %v2430 = vmax.f32 %v2428, %v2429
    %v2431 = vsel %vm2108, %v1758, -inf
    %v2432 = vrot.slane %v2431, 4
    %v2433 = vmax.f32 %v2431, %v2432
    %v2434 = vrot.slane %v2433, 2
    %v2435 = vmax.f32 %v2433, %v2434
    %v2436 = vrot.slane %v2435, 1
    %v2437 = vmax.f32 %v2435, %v2436
    %v2438 = vsel %vm2108, %v1759, -inf
    %v2439 = vrot.slane %v2438, 4
    %v2440 = vmax.f32 %v2438, %v2439
    %v2441 = vrot.slane %v2440, 2
    %v2442 = vmax.f32 %v2440, %v2441
    %v2443 = vrot.slane %v2442, 1
    %v2444 = vmax.f32 %v2442, %v2443
    %v2445 = vsel %vm2108, %v1506, -inf
    %v2446 = vrot.slane %v2445, 4
    %v2447 = vmax.f32 %v2445, %v2446
    %v2448 = vrot.slane %v2447, 2
    %v2449 = vmax.f32 %v2447, %v2448
    %v2450 = vrot.slane %v2449, 1
    %v2451 = vmax.f32 %v2449, %v2450
    %v2452 = vsel %vm2108, %v1760, -inf
    %v2453 = vrot.slane %v2452, 4
    %v2454 = vmax.f32 %v2452, %v2453
    %v2455 = vrot.slane %v2454, 2
    %v2456 = vmax.f32 %v2454, %v2455
    %v2457 = vrot.slane %v2456, 1
    %v2458 = vmax.f32 %v2456, %v2457
    %v2459 = vsel %vm2108, %v1761, -inf
    %v2460 = vrot.slane %v2459, 4
    %v2461 = vmax.f32 %v2459, %v2460
    %v2462 = vrot.slane %v2461, 2
    %v2463 = vmax.f32 %v2461, %v2462
    %v2464 = vrot.slane %v2463, 1
    %v2465 = vmax.f32 %v2463, %v2464
    %v2466 = vsel %vm2108, %v1762, -inf
    %v2467 = vrot.slane %v2466, 4
    %v2468 = vmax.f32 %v2466, %v2467
    %v2469 = vrot.slane %v2468, 2
    %v2470 = vmax.f32 %v2468, %v2469
    %v2471 = vrot.slane %v2470, 1
    %v2472 = vmax.f32 %v2470, %v2471
    %v2473 = vsel %vm2108, %v1509, -inf
    %v2474 = vrot.slane %v2473, 4
    %v2475 = vmax.f32 %v2473, %v2474
    %v2476 = vrot.slane %v2475, 2
    %v2477 = vmax.f32 %v2475, %v2476
    %v2478 = vrot.slane %v2477, 1
    %v2479 = vmax.f32 %v2477, %v2478
    %v2480 = vsel %vm2108, %v1763, -inf
    %v2481 = vrot.slane %v2480, 4
    %v2482 = vmax.f32 %v2480, %v2481
    %v2483 = vrot.slane %v2482, 2
    %v2484 = vmax.f32 %v2482, %v2483
    %v2485 = vrot.slane %v2484, 1
    %v2486 = vmax.f32 %v2484, %v2485
    %v2487 = vsel %vm2108, %v1764, -inf
    %v2488 = vrot.slane %v2487, 4
    %v2489 = vmax.f32 %v2487, %v2488
    %v2490 = vrot.slane %v2489, 2
    %v2491 = vmax.f32 %v2489, %v2490
    %v2492 = vrot.slane %v2491, 1
    %v2493 = vmax.f32 %v2491, %v2492
    %v2494 = vsel %vm2108, %v1765, -inf
    %v2495 = vrot.slane %v2494, 4
    %v2496 = vmax.f32 %v2494, %v2495
    %v2497 = vrot.slane %v2496, 2
    %v2498 = vmax.f32 %v2496, %v2497
    %v2499 = vrot.slane %v2498, 1
    %v2500 = vmax.f32 %v2498, %v2499
    %v2501 = vsel %vm2108, %v1512, -inf
    %v2502 = vrot.slane %v2501, 4
    %v2503 = vmax.f32 %v2501, %v2502
    %v2504 = vrot.slane %v2503, 2
    %v2505 = vmax.f32 %v2503, %v2504
    %v2506 = vrot.slane %v2505, 1
    %v2507 = vmax.f32 %v2505, %v2506
    %v2508 = vsel %vm2108, %v1766, -inf
    %v2509 = vrot.slane %v2508, 4
    %v2510 = vmax.f32 %v2508, %v2509
    %v2511 = vrot.slane %v2510, 2
    %v2512 = vmax.f32 %v2510, %v2511
    %v2513 = vrot.slane %v2512, 1
    %v2514 = vmax.f32 %v2512, %v2513
    %v2515 = vsel %vm2108, %v1767, -inf
    %v2516 = vrot.slane %v2515, 4
    %v2517 = vmax.f32 %v2515, %v2516
    %v2518 = vrot.slane %v2517, 2
    %v2519 = vmax.f32 %v2517, %v2518
    %v2520 = vrot.slane %v2519, 1
    %v2521 = vmax.f32 %v2519, %v2520
    %v2522 = vsel %vm2108, %v1768, -inf
    %v2523 = vrot.slane %v2522, 4
    %v2524 = vmax.f32 %v2522, %v2523
    %v2525 = vrot.slane %v2524, 2
    %v2526 = vmax.f32 %v2524, %v2525
    %v2527 = vrot.slane %v2526, 1
    %v2528 = vmax.f32 %v2526, %v2527
    %v2529 = vsel %vm2108, %v1515, -inf
    %v2530 = vrot.slane %v2529, 4
    %v2531 = vmax.f32 %v2529, %v2530
    %v2532 = vrot.slane %v2531, 2
    %v2533 = vmax.f32 %v2531, %v2532
    %v2534 = vrot.slane %v2533, 1
    %v2535 = vmax.f32 %v2533, %v2534
    %v2536 = vsel %vm2108, %v1769, -inf
    %v2537 = vrot.slane %v2536, 4
    %v2538 = vmax.f32 %v2536, %v2537
    %v2539 = vrot.slane %v2538, 2
    %v2540 = vmax.f32 %v2538, %v2539
    %v2541 = vrot.slane %v2540, 1
    %v2542 = vmax.f32 %v2540, %v2541
    %v2543 = vsel %vm2108, %v1770, -inf
    %v2544 = vrot.slane %v2543, 4
    %v2545 = vmax.f32 %v2543, %v2544
    %v2546 = vrot.slane %v2545, 2
    %v2547 = vmax.f32 %v2545, %v2546
    %v2548 = vrot.slane %v2547, 1
    %v2549 = vmax.f32 %v2547, %v2548
    %v2550 = vsel %vm2108, %v1771, -inf
    %v2551 = vrot.slane %v2550, 4
    %v2552 = vmax.f32 %v2550, %v2551
    %v2553 = vrot.slane %v2552, 2
    %v2554 = vmax.f32 %v2552, %v2553
    %v2555 = vrot.slane %v2554, 1
    %v2556 = vmax.f32 %v2554, %v2555
    %v2557 = vsel %vm2108, %v1518, -inf
    %v2558 = vrot.slane %v2557, 4
    %v2559 = vmax.f32 %v2557, %v2558
    %v2560 = vrot.slane %v2559, 2
    %v2561 = vmax.f32 %v2559, %v2560
    %v2562 = vrot.slane %v2561, 1
    %v2563 = vmax.f32 %v2561, %v2562
    %v2564 = vsel %vm2108, %v1772, -inf
    %v2565 = vrot.slane %v2564, 4
    %v2566 = vmax.f32 %v2564, %v2565
    %v2567 = vrot.slane %v2566, 2
    %v2568 = vmax.f32 %v2566, %v2567
    %v2569 = vrot.slane %v2568, 1
    %v2570 = vmax.f32 %v2568, %v2569
    %v2571 = vsel %vm2108, %v1773, -inf
    %v2572 = vrot.slane %v2571, 4
    %v2573 = vmax.f32 %v2571, %v2572
    %v2574 = vrot.slane %v2573, 2
    %v2575 = vmax.f32 %v2573, %v2574
    %v2576 = vrot.slane %v2575, 1
    %v2577 = vmax.f32 %v2575, %v2576
    %v2578 = vsel %vm2108, %v1774, -inf
    %v2579 = vrot.slane %v2578, 4
    %v2580 = vmax.f32 %v2578, %v2579
    %v2581 = vrot.slane %v2580, 2
    %v2582 = vmax.f32 %v2580, %v2581
    %v2583 = vrot.slane %v2582, 1
    %v2584 = vmax.f32 %v2582, %v2583
    %v2585 = vsel %vm2108, %v1521, -inf
    %v2586 = vrot.slane %v2585, 4
    %v2587 = vmax.f32 %v2585, %v2586
    %v2588 = vrot.slane %v2587, 2
    %v2589 = vmax.f32 %v2587, %v2588
    %v2590 = vrot.slane %v2589, 1
    %v2591 = vmax.f32 %v2589, %v2590
    %v2592 = vsel %vm2108, %v1775, -inf
    %v2593 = vrot.slane %v2592, 4
    %v2594 = vmax.f32 %v2592, %v2593
    %v2595 = vrot.slane %v2594, 2
    %v2596 = vmax.f32 %v2594, %v2595
    %v2597 = vrot.slane %v2596, 1
    %v2598 = vmax.f32 %v2596, %v2597
    %v2599 = vsel %vm2108, %v1776, -inf
    %v2600 = vrot.slane %v2599, 4
    %v2601 = vmax.f32 %v2599, %v2600
    %v2602 = vrot.slane %v2601, 2
    %v2603 = vmax.f32 %v2601, %v2602
    %v2604 = vrot.slane %v2603, 1
    %v2605 = vmax.f32 %v2603, %v2604
    %v2606 = vsel %vm2108, %v1777, -inf
    %v2607 = vrot.slane %v2606, 4
    %v2608 = vmax.f32 %v2606, %v2607
    %v2609 = vrot.slane %v2608, 2
    %v2610 = vmax.f32 %v2608, %v2609
    %v2611 = vrot.slane %v2610, 1
    %v2612 = vmax.f32 %v2610, %v2611
    %v2613 = vsel %vm2108, %v1524, -inf
    %v2614 = vrot.slane %v2613, 4
    %v2615 = vmax.f32 %v2613, %v2614
    %v2616 = vrot.slane %v2615, 2
    %v2617 = vmax.f32 %v2615, %v2616
    %v2618 = vrot.slane %v2617, 1
    %v2619 = vmax.f32 %v2617, %v2618
    %v2620 = vsel %vm2108, %v1778, -inf
    %v2621 = vrot.slane %v2620, 4
    %v2622 = vmax.f32 %v2620, %v2621
    %v2623 = vrot.slane %v2622, 2
    %v2624 = vmax.f32 %v2622, %v2623
    %v2625 = vrot.slane %v2624, 1
    %v2626 = vmax.f32 %v2624, %v2625
    %v2627 = vsel %vm2108, %v1779, -inf
    %v2628 = vrot.slane %v2627, 4
    %v2629 = vmax.f32 %v2627, %v2628
    %v2630 = vrot.slane %v2629, 2
    %v2631 = vmax.f32 %v2629, %v2630
    %v2632 = vrot.slane %v2631, 1
    %v2633 = vmax.f32 %v2631, %v2632
    %v2634 = vsel %vm2108, %v1780, -inf
    %v2635 = vrot.slane %v2634, 4
    %v2636 = vmax.f32 %v2634, %v2635
    %v2637 = vrot.slane %v2636, 2
    %v2638 = vmax.f32 %v2636, %v2637
    %v2639 = vrot.slane %v2638, 1
    %v2640 = vmax.f32 %v2638, %v2639
    %v2641 = vsel %vm2108, %v1527, -inf
    %v2642 = vrot.slane %v2641, 4
    %v2643 = vmax.f32 %v2641, %v2642
    %v2644 = vrot.slane %v2643, 2
    %v2645 = vmax.f32 %v2643, %v2644
    %v2646 = vrot.slane %v2645, 1
    %v2647 = vmax.f32 %v2645, %v2646
    %v2648 = vsel %vm2108, %v1781, -inf
    %v2649 = vrot.slane %v2648, 4
    %v2650 = vmax.f32 %v2648, %v2649
    %v2651 = vrot.slane %v2650, 2
    %v2652 = vmax.f32 %v2650, %v2651
    %v2653 = vrot.slane %v2652, 1
    %v2654 = vmax.f32 %v2652, %v2653
    %v2655 = vsel %vm2108, %v1782, -inf
    %v2656 = vrot.slane %v2655, 4
    %v2657 = vmax.f32 %v2655, %v2656
    %v2658 = vrot.slane %v2657, 2
    %v2659 = vmax.f32 %v2657, %v2658
    %v2660 = vrot.slane %v2659, 1
    %v2661 = vmax.f32 %v2659, %v2660
    %v2662 = vsel %vm2108, %v1783, -inf
    %v2663 = vrot.slane %v2662, 4
    %v2664 = vmax.f32 %v2662, %v2663
    %v2665 = vrot.slane %v2664, 2
    %v2666 = vmax.f32 %v2664, %v2665
    %v2667 = vrot.slane %v2666, 1
    %v2668 = vmax.f32 %v2666, %v2667
    %v2669 = vsel %vm2108, %v1530, -inf
    %v2670 = vrot.slane %v2669, 4
    %v2671 = vmax.f32 %v2669, %v2670
    %v2672 = vrot.slane %v2671, 2
    %v2673 = vmax.f32 %v2671, %v2672
    %v2674 = vrot.slane %v2673, 1
    %v2675 = vmax.f32 %v2673, %v2674
    %v2676 = vsel %vm2108, %v1784, -inf
    %v2677 = vrot.slane %v2676, 4
    %v2678 = vmax.f32 %v2676, %v2677
    %v2679 = vrot.slane %v2678, 2
    %v2680 = vmax.f32 %v2678, %v2679
    %v2681 = vrot.slane %v2680, 1
    %v2682 = vmax.f32 %v2680, %v2681
    %v2683 = vsel %vm2108, %v1785, -inf
    %v2684 = vrot.slane %v2683, 4
    %v2685 = vmax.f32 %v2683, %v2684
    %v2686 = vrot.slane %v2685, 2
    %v2687 = vmax.f32 %v2685, %v2686
    %v2688 = vrot.slane %v2687, 1
    %v2689 = vmax.f32 %v2687, %v2688
    %v2690 = vsel %vm2108, %v1786, -inf
    %v2691 = vrot.slane %v2690, 4
    %v2692 = vmax.f32 %v2690, %v2691
    %v2693 = vrot.slane %v2692, 2
    %v2694 = vmax.f32 %v2692, %v2693
    %v2695 = vrot.slane %v2694, 1
    %v2696 = vmax.f32 %v2694, %v2695
    %v2697 = vsel %vm2108, %v1533, -inf
    %v2698 = vrot.slane %v2697, 4
    %v2699 = vmax.f32 %v2697, %v2698
    %v2700 = vrot.slane %v2699, 2
    %v2701 = vmax.f32 %v2699, %v2700
    %v2702 = vrot.slane %v2701, 1
    %v2703 = vmax.f32 %v2701, %v2702
    %v2704 = vsel %vm2108, %v1787, -inf
    %v2705 = vrot.slane %v2704, 4
    %v2706 = vmax.f32 %v2704, %v2705
    %v2707 = vrot.slane %v2706, 2
    %v2708 = vmax.f32 %v2706, %v2707
    %v2709 = vrot.slane %v2708, 1
    %v2710 = vmax.f32 %v2708, %v2709
    %v2711 = vsel %vm2108, %v1788, -inf
    %v2712 = vrot.slane %v2711, 4
    %v2713 = vmax.f32 %v2711, %v2712
    %v2714 = vrot.slane %v2713, 2
    %v2715 = vmax.f32 %v2713, %v2714
    %v2716 = vrot.slane %v2715, 1
    %v2717 = vmax.f32 %v2715, %v2716
    %v2718 = vsel %vm2108, %v1789, -inf
    %v2719 = vrot.slane %v2718, 4
    %v2720 = vmax.f32 %v2718, %v2719
    %v2721 = vrot.slane %v2720, 2
    %v2722 = vmax.f32 %v2720, %v2721
    %v2723 = vrot.slane %v2722, 1
    %v2724 = vmax.f32 %v2722, %v2723
    %v2725 = vsel %vm2108, %v1536, -inf
    %v2726 = vrot.slane %v2725, 4
    %v2727 = vmax.f32 %v2725, %v2726
    %v2728 = vrot.slane %v2727, 2
    %v2729 = vmax.f32 %v2727, %v2728
    %v2730 = vrot.slane %v2729, 1
    %v2731 = vmax.f32 %v2729, %v2730
    %v2732 = vsel %vm2108, %v1790, -inf
    %v2733 = vrot.slane %v2732, 4
    %v2734 = vmax.f32 %v2732, %v2733
    %v2735 = vrot.slane %v2734, 2
    %v2736 = vmax.f32 %v2734, %v2735
    %v2737 = vrot.slane %v2736, 1
    %v2738 = vmax.f32 %v2736, %v2737
    %v2739 = vsel %vm2108, %v1791, -inf
    %v2740 = vrot.slane %v2739, 4
    %v2741 = vmax.f32 %v2739, %v2740
    %v2742 = vrot.slane %v2741, 2
    %v2743 = vmax.f32 %v2741, %v2742
    %v2744 = vrot.slane %v2743, 1
    %v2745 = vmax.f32 %v2743, %v2744
    %v2746 = vsel %vm2108, %v1792, -inf
    %v2747 = vrot.slane %v2746, 4
    %v2748 = vmax.f32 %v2746, %v2747
    %v2749 = vrot.slane %v2748, 2
    %v2750 = vmax.f32 %v2748, %v2749
    %v2751 = vrot.slane %v2750, 1
    %v2752 = vmax.f32 %v2750, %v2751
    %v2753 = vsel %vm2108, %v1539, -inf
    %v2754 = vrot.slane %v2753, 4
    %v2755 = vmax.f32 %v2753, %v2754
    %v2756 = vrot.slane %v2755, 2
    %v2757 = vmax.f32 %v2755, %v2756
    %v2758 = vrot.slane %v2757, 1
    %v2759 = vmax.f32 %v2757, %v2758
    %v2760 = vsel %vm2108, %v1793, -inf
    %v2761 = vrot.slane %v2760, 4
    %v2762 = vmax.f32 %v2760, %v2761
    %v2763 = vrot.slane %v2762, 2
    %v2764 = vmax.f32 %v2762, %v2763
    %v2765 = vrot.slane %v2764, 1
    %v2766 = vmax.f32 %v2764, %v2765
    %v2767 = vsel %vm2108, %v1794, -inf
    %v2768 = vrot.slane %v2767, 4
    %v2769 = vmax.f32 %v2767, %v2768
    %v2770 = vrot.slane %v2769, 2
    %v2771 = vmax.f32 %v2769, %v2770
    %v2772 = vrot.slane %v2771, 1
    %v2773 = vmax.f32 %v2771, %v2772
    %v2774 = vsel %vm2108, %v1795, -inf
    %v2775 = vrot.slane %v2774, 4
    %v2776 = vmax.f32 %v2774, %v2775
    %v2777 = vrot.slane %v2776, 2
    %v2778 = vmax.f32 %v2776, %v2777
    %v2779 = vrot.slane %v2778, 1
    %v2780 = vmax.f32 %v2778, %v2779
    %v2781 = vsel %vm2108, %v1542, -inf
    %v2782 = vrot.slane %v2781, 4
    %v2783 = vmax.f32 %v2781, %v2782
    %v2784 = vrot.slane %v2783, 2
    %v2785 = vmax.f32 %v2783, %v2784
    %v2786 = vrot.slane %v2785, 1
    %v2787 = vmax.f32 %v2785, %v2786
    %v2788 = vsel %vm2108, %v1796, -inf
    %v2789 = vrot.slane %v2788, 4
    %v2790 = vmax.f32 %v2788, %v2789
    %v2791 = vrot.slane %v2790, 2
    %v2792 = vmax.f32 %v2790, %v2791
    %v2793 = vrot.slane %v2792, 1
    %v2794 = vmax.f32 %v2792, %v2793
    %v2795 = vsel %vm2108, %v1797, -inf
    %v2796 = vrot.slane %v2795, 4
    %v2797 = vmax.f32 %v2795, %v2796
    %v2798 = vrot.slane %v2797, 2
    %v2799 = vmax.f32 %v2797, %v2798
    %v2800 = vrot.slane %v2799, 1
    %v2801 = vmax.f32 %v2799, %v2800
    %v2802 = vsel %vm2108, %v1798, -inf
    %v2803 = vrot.slane %v2802, 4
    %v2804 = vmax.f32 %v2802, %v2803
    %v2805 = vrot.slane %v2804, 2
    %v2806 = vmax.f32 %v2804, %v2805
    %v2807 = vrot.slane %v2806, 1
    %v2808 = vmax.f32 %v2806, %v2807
    %v2809 = vsel %vm2108, %v1545, -inf
    %v2810 = vrot.slane %v2809, 4
    %v2811 = vmax.f32 %v2809, %v2810
    %v2812 = vrot.slane %v2811, 2
    %v2813 = vmax.f32 %v2811, %v2812
    %v2814 = vrot.slane %v2813, 1
    %v2815 = vmax.f32 %v2813, %v2814
    %v2816 = vsel %vm2108, %v1799, -inf
    %v2817 = vrot.slane %v2816, 4
    %v2818 = vmax.f32 %v2816, %v2817
    %v2819 = vrot.slane %v2818, 2
    %v2820 = vmax.f32 %v2818, %v2819
    %v2821 = vrot.slane %v2820, 1
    %v2822 = vmax.f32 %v2820, %v2821
    %v2823 = vsel %vm2108, %v1800, -inf
    %v2824 = vrot.slane %v2823, 4
    %v2825 = vmax.f32 %v2823, %v2824
    %v2826 = vrot.slane %v2825, 2
    %v2827 = vmax.f32 %v2825, %v2826
    %v2828 = vrot.slane %v2827, 1
    %v2829 = vmax.f32 %v2827, %v2828
    %v2830 = vsel %vm2108, %v1801, -inf
    %v2831 = vrot.slane %v2830, 4
    %v2832 = vmax.f32 %v2830, %v2831
    %v2833 = vrot.slane %v2832, 2
    %v2834 = vmax.f32 %v2832, %v2833
    %v2835 = vrot.slane %v2834, 1
    %v2836 = vmax.f32 %v2834, %v2835
    %v2837 = vsel %vm2108, %v1548, -inf
    %v2838 = vrot.slane %v2837, 4
    %v2839 = vmax.f32 %v2837, %v2838
    %v2840 = vrot.slane %v2839, 2
    %v2841 = vmax.f32 %v2839, %v2840
    %v2842 = vrot.slane %v2841, 1
    %v2843 = vmax.f32 %v2841, %v2842
    %v2844 = vsel %vm2108, %v1802, -inf
    %v2845 = vrot.slane %v2844, 4
    %v2846 = vmax.f32 %v2844, %v2845
    %v2847 = vrot.slane %v2846, 2
    %v2848 = vmax.f32 %v2846, %v2847
    %v2849 = vrot.slane %v2848, 1
    %v2850 = vmax.f32 %v2848, %v2849
    %v2851 = vsel %vm2108, %v1803, -inf
    %v2852 = vrot.slane %v2851, 4
    %v2853 = vmax.f32 %v2851, %v2852
    %v2854 = vrot.slane %v2853, 2
    %v2855 = vmax.f32 %v2853, %v2854
    %v2856 = vrot.slane %v2855, 1
    %v2857 = vmax.f32 %v2855, %v2856
    %v2858 = vsel %vm2108, %v1804, -inf
    %v2859 = vrot.slane %v2858, 4
    %v2860 = vmax.f32 %v2858, %v2859
    %v2861 = vrot.slane %v2860, 2
    %v2862 = vmax.f32 %v2860, %v2861
    %v2863 = vrot.slane %v2862, 1
    %v2864 = vmax.f32 %v2862, %v2863
    %v2865 = vsel %vm2108, %v1551, -inf
    %v2866 = vrot.slane %v2865, 4
    %v2867 = vmax.f32 %v2865, %v2866
    %v2868 = vrot.slane %v2867, 2
    %v2869 = vmax.f32 %v2867, %v2868
    %v2870 = vrot.slane %v2869, 1
    %v2871 = vmax.f32 %v2869, %v2870
    %v2872 = vsel %vm2108, %v1805, -inf
    %v2873 = vrot.slane %v2872, 4
    %v2874 = vmax.f32 %v2872, %v2873
    %v2875 = vrot.slane %v2874, 2
    %v2876 = vmax.f32 %v2874, %v2875
    %v2877 = vrot.slane %v2876, 1
    %v2878 = vmax.f32 %v2876, %v2877
    %v2879 = vsel %vm2108, %v1806, -inf
    %v2880 = vrot.slane %v2879, 4
    %v2881 = vmax.f32 %v2879, %v2880
    %v2882 = vrot.slane %v2881, 2
    %v2883 = vmax.f32 %v2881, %v2882
    %v2884 = vrot.slane %v2883, 1
    %v2885 = vmax.f32 %v2883, %v2884
    %v2886 = vsel %vm2108, %v1807, -inf
    %v2887 = vrot.slane %v2886, 4
    %v2888 = vmax.f32 %v2886, %v2887
    %v2889 = vrot.slane %v2888, 2
    %v2890 = vmax.f32 %v2888, %v2889
    %v2891 = vrot.slane %v2890, 1
    %v2892 = vmax.f32 %v2890, %v2891
    %v2893 = vsel %vm2108, %v1554, -inf
    %v2894 = vrot.slane %v2893, 4
    %v2895 = vmax.f32 %v2893, %v2894
    %v2896 = vrot.slane %v2895, 2
    %v2897 = vmax.f32 %v2895, %v2896
    %v2898 = vrot.slane %v2897, 1
    %v2899 = vmax.f32 %v2897, %v2898
    %v2900 = vsel %vm2108, %v1808, -inf
    %v2901 = vrot.slane %v2900, 4
    %v2902 = vmax.f32 %v2900, %v2901
    %v2903 = vrot.slane %v2902, 2
    %v2904 = vmax.f32 %v2902, %v2903
    %v2905 = vrot.slane %v2904, 1
    %v2906 = vmax.f32 %v2904, %v2905
    %v2907 = vsel %vm2108, %v1809, -inf
    %v2908 = vrot.slane %v2907, 4
    %v2909 = vmax.f32 %v2907, %v2908
    %v2910 = vrot.slane %v2909, 2
    %v2911 = vmax.f32 %v2909, %v2910
    %v2912 = vrot.slane %v2911, 1
    %v2913 = vmax.f32 %v2911, %v2912
    %v2914 = vsel %vm2108, %v1810, -inf
    %v2915 = vrot.slane %v2914, 4
    %v2916 = vmax.f32 %v2914, %v2915
    %v2917 = vrot.slane %v2916, 2
    %v2918 = vmax.f32 %v2916, %v2917
    %v2919 = vrot.slane %v2918, 1
    %v2920 = vmax.f32 %v2918, %v2919
    %v2921 = vsel %vm2108, %v1557, -inf
    %v2922 = vrot.slane %v2921, 4
    %v2923 = vmax.f32 %v2921, %v2922
    %v2924 = vrot.slane %v2923, 2
    %v2925 = vmax.f32 %v2923, %v2924
    %v2926 = vrot.slane %v2925, 1
    %v2927 = vmax.f32 %v2925, %v2926
    %v2928 = vsel %vm2108, %v1811, -inf
    %v2929 = vrot.slane %v2928, 4
    %v2930 = vmax.f32 %v2928, %v2929
    %v2931 = vrot.slane %v2930, 2
    %v2932 = vmax.f32 %v2930, %v2931
    %v2933 = vrot.slane %v2932, 1
    %v2934 = vmax.f32 %v2932, %v2933
    %v2935 = vsel %vm2108, %v1812, -inf
    %v2936 = vrot.slane %v2935, 4
    %v2937 = vmax.f32 %v2935, %v2936
    %v2938 = vrot.slane %v2937, 2
    %v2939 = vmax.f32 %v2937, %v2938
    %v2940 = vrot.slane %v2939, 1
    %v2941 = vmax.f32 %v2939, %v2940
    %v2942 = vsel %vm2108, %v1813, -inf
    %v2943 = vrot.slane %v2942, 4
    %v2944 = vmax.f32 %v2942, %v2943
    %v2945 = vrot.slane %v2944, 2
    %v2946 = vmax.f32 %v2944, %v2945
    %v2947 = vrot.slane %v2946, 1
    %v2948 = vmax.f32 %v2946, %v2947
    %v2949 = vsel %vm2108, %v1560, -inf
    %v2950 = vrot.slane %v2949, 4
    %v2951 = vmax.f32 %v2949, %v2950
    %v2952 = vrot.slane %v2951, 2
    %v2953 = vmax.f32 %v2951, %v2952
    %v2954 = vrot.slane %v2953, 1
    %v2955 = vmax.f32 %v2953, %v2954
    %v2956 = vsel %vm2108, %v1814, -inf
    %v2957 = vrot.slane %v2956, 4
    %v2958 = vmax.f32 %v2956, %v2957
    %v2959 = vrot.slane %v2958, 2
    %v2960 = vmax.f32 %v2958, %v2959
    %v2961 = vrot.slane %v2960, 1
    %v2962 = vmax.f32 %v2960, %v2961
    %v2963 = vsel %vm2108, %v1815, -inf
    %v2964 = vrot.slane %v2963, 4
    %v2965 = vmax.f32 %v2963, %v2964
    %v2966 = vrot.slane %v2965, 2
    %v2967 = vmax.f32 %v2965, %v2966
    %v2968 = vrot.slane %v2967, 1
    %v2969 = vmax.f32 %v2967, %v2968
    %v2970 = vsel %vm2108, %v1816, -inf
    %v2971 = vrot.slane %v2970, 4
    %v2972 = vmax.f32 %v2970, %v2971
    %v2973 = vrot.slane %v2972, 2
    %v2974 = vmax.f32 %v2972, %v2973
    %v2975 = vrot.slane %v2974, 1
    %v2976 = vmax.f32 %v2974, %v2975
    %v2977 = vsel %vm2108, %v1563, -inf
    %v2978 = vrot.slane %v2977, 4
    %v2979 = vmax.f32 %v2977, %v2978
    %v2980 = vrot.slane %v2979, 2
    %v2981 = vmax.f32 %v2979, %v2980
    %v2982 = vrot.slane %v2981, 1
    %v2983 = vmax.f32 %v2981, %v2982
    %v2984 = vsel %vm2108, %v1817, -inf
    %v2985 = vrot.slane %v2984, 4
    %v2986 = vmax.f32 %v2984, %v2985
    %v2987 = vrot.slane %v2986, 2
    %v2988 = vmax.f32 %v2986, %v2987
    %v2989 = vrot.slane %v2988, 1
    %v2990 = vmax.f32 %v2988, %v2989
    %v2991 = vsel %vm2108, %v1818, -inf
    %v2992 = vrot.slane %v2991, 4
    %v2993 = vmax.f32 %v2991, %v2992
    %v2994 = vrot.slane %v2993, 2
    %v2995 = vmax.f32 %v2993, %v2994
    %v2996 = vrot.slane %v2995, 1
    %v2997 = vmax.f32 %v2995, %v2996
    %v2998 = vsel %vm2108, %v1819, -inf
    %v2999 = vrot.slane %v2998, 4
    %v3000 = vmax.f32 %v2998, %v2999
    %v3001 = vrot.slane %v3000, 2
    %v3002 = vmax.f32 %v3000, %v3001
    %v3003 = vrot.slane %v3002, 1
    %v3004 = vmax.f32 %v3002, %v3003
    %v3005 = vsel %vm2108, %v1566, -inf
    %v3006 = vrot.slane %v3005, 4
    %v3007 = vmax.f32 %v3005, %v3006
    %v3008 = vrot.slane %v3007, 2
    %v3009 = vmax.f32 %v3007, %v3008
    %v3010 = vrot.slane %v3009, 1
    %v3011 = vmax.f32 %v3009, %v3010
    %v3012 = vsel %vm2108, %v1820, -inf
    %v3013 = vrot.slane %v3012, 4
    %v3014 = vmax.f32 %v3012, %v3013
    %v3015 = vrot.slane %v3014, 2
    %v3016 = vmax.f32 %v3014, %v3015
    %v3017 = vrot.slane %v3016, 1
    %v3018 = vmax.f32 %v3016, %v3017
    %v3019 = vsel %vm2108, %v1821, -inf
    %v3020 = vrot.slane %v3019, 4
    %v3021 = vmax.f32 %v3019, %v3020
    %v3022 = vrot.slane %v3021, 2
    %v3023 = vmax.f32 %v3021, %v3022
    %v3024 = vrot.slane %v3023, 1
    %v3025 = vmax.f32 %v3023, %v3024
    %v3026 = vsel %vm2108, %v1822, -inf
    %v3027 = vrot.slane %v3026, 4
    %v3028 = vmax.f32 %v3026, %v3027
    %v3029 = vrot.slane %v3028, 2
    %v3030 = vmax.f32 %v3028, %v3029
    %v3031 = vrot.slane %v3030, 1
    %v3032 = vmax.f32 %v3030, %v3031
    %v3033 = vsel %vm2108, %v1569, -inf
    %v3034 = vrot.slane %v3033, 4
    %v3035 = vmax.f32 %v3033, %v3034
    %v3036 = vrot.slane %v3035, 2
    %v3037 = vmax.f32 %v3035, %v3036
    %v3038 = vrot.slane %v3037, 1
    %v3039 = vmax.f32 %v3037, %v3038
    %v3040 = vsel %vm2108, %v1823, -inf
    %v3041 = vrot.slane %v3040, 4
    %v3042 = vmax.f32 %v3040, %v3041
    %v3043 = vrot.slane %v3042, 2
    %v3044 = vmax.f32 %v3042, %v3043
    %v3045 = vrot.slane %v3044, 1
    %v3046 = vmax.f32 %v3044, %v3045
    %v3047 = vsel %vm2108, %v1824, -inf
    %v3048 = vrot.slane %v3047, 4
    %v3049 = vmax.f32 %v3047, %v3048
    %v3050 = vrot.slane %v3049, 2
    %v3051 = vmax.f32 %v3049, %v3050
    %v3052 = vrot.slane %v3051, 1
    %v3053 = vmax.f32 %v3051, %v3052
    %v3054 = vsel %vm2108, %v1825, -inf
    %v3055 = vrot.slane %v3054, 4
    %v3056 = vmax.f32 %v3054, %v3055
    %v3057 = vrot.slane %v3056, 2
    %v3058 = vmax.f32 %v3056, %v3057
    %v3059 = vrot.slane %v3058, 1
    %v3060 = vmax.f32 %v3058, %v3059
    %v3061 = vsel %vm2108, %v1572, -inf
    %v3062 = vrot.slane %v3061, 4
    %v3063 = vmax.f32 %v3061, %v3062
    %v3064 = vrot.slane %v3063, 2
    %v3065 = vmax.f32 %v3063, %v3064
    %v3066 = vrot.slane %v3065, 1
    %v3067 = vmax.f32 %v3065, %v3066
    %v3068 = vsel %vm2108, %v1826, -inf
    %v3069 = vrot.slane %v3068, 4
    %v3070 = vmax.f32 %v3068, %v3069
    %v3071 = vrot.slane %v3070, 2
    %v3072 = vmax.f32 %v3070, %v3071
    %v3073 = vrot.slane %v3072, 1
    %v3074 = vmax.f32 %v3072, %v3073
    %v3075 = vsel %vm2108, %v1827, -inf
    %v3076 = vrot.slane %v3075, 4
    %v3077 = vmax.f32 %v3075, %v3076
    %v3078 = vrot.slane %v3077, 2
    %v3079 = vmax.f32 %v3077, %v3078
    %v3080 = vrot.slane %v3079, 1
    %v3081 = vmax.f32 %v3079, %v3080
    %v3082 = vsel %vm2108, %v1828, -inf
    %v3083 = vrot.slane %v3082, 4
    %v3084 = vmax.f32 %v3082, %v3083
    %v3085 = vrot.slane %v3084, 2
    %v3086 = vmax.f32 %v3084, %v3085
    %v3087 = vrot.slane %v3086, 1
    %v3088 = vmax.f32 %v3086, %v3087
    %v3089 = vsel %vm2108, %v1575, -inf
    %v3090 = vrot.slane %v3089, 4
    %v3091 = vmax.f32 %v3089, %v3090
    %v3092 = vrot.slane %v3091, 2
    %v3093 = vmax.f32 %v3091, %v3092
    %v3094 = vrot.slane %v3093, 1
    %v3095 = vmax.f32 %v3093, %v3094
    %v3096 = vsel %vm2108, %v1829, -inf
    %v3097 = vrot.slane %v3096, 4
    %v3098 = vmax.f32 %v3096, %v3097
    %v3099 = vrot.slane %v3098, 2
    %v3100 = vmax.f32 %v3098, %v3099
    %v3101 = vrot.slane %v3100, 1
    %v3102 = vmax.f32 %v3100, %v3101
    %v3103 = vsel %vm2108, %v1830, -inf
    %v3104 = vrot.slane %v3103, 4
    %v3105 = vmax.f32 %v3103, %v3104
    %v3106 = vrot.slane %v3105, 2
    %v3107 = vmax.f32 %v3105, %v3106
    %v3108 = vrot.slane %v3107, 1
    %v3109 = vmax.f32 %v3107, %v3108
    %v3110 = vsel %vm2108, %v1831, -inf
    %v3111 = vrot.slane %v3110, 4
    %v3112 = vmax.f32 %v3110, %v3111
    %v3113 = vrot.slane %v3112, 2
    %v3114 = vmax.f32 %v3112, %v3113
    %v3115 = vrot.slane %v3114, 1
    %v3116 = vmax.f32 %v3114, %v3115
    %v3117 = vsel %vm2108, %v1578, -inf
    %v3118 = vrot.slane %v3117, 4
    %v3119 = vmax.f32 %v3117, %v3118
    %v3120 = vrot.slane %v3119, 2
    %v3121 = vmax.f32 %v3119, %v3120
    %v3122 = vrot.slane %v3121, 1
    %v3123 = vmax.f32 %v3121, %v3122
    %v3124 = vsel %vm2108, %v1832, -inf
    %v3125 = vrot.slane %v3124, 4
    %v3126 = vmax.f32 %v3124, %v3125
    %v3127 = vrot.slane %v3126, 2
    %v3128 = vmax.f32 %v3126, %v3127
    %v3129 = vrot.slane %v3128, 1
    %v3130 = vmax.f32 %v3128, %v3129
    %v3131 = vsel %vm2108, %v1833, -inf
    %v3132 = vrot.slane %v3131, 4
    %v3133 = vmax.f32 %v3131, %v3132
    %v3134 = vrot.slane %v3133, 2
    %v3135 = vmax.f32 %v3133, %v3134
    %v3136 = vrot.slane %v3135, 1
    %v3137 = vmax.f32 %v3135, %v3136
    %v3138 = vsel %vm2108, %v1834, -inf
    %v3139 = vrot.slane %v3138, 4
    %v3140 = vmax.f32 %v3138, %v3139
    %v3141 = vrot.slane %v3140, 2
    %v3142 = vmax.f32 %v3140, %v3141
    %v3143 = vrot.slane %v3142, 1
    %v3144 = vmax.f32 %v3142, %v3143
    %v3145 = vsel %vm2108, %v1581, -inf
    %v3146 = vrot.slane %v3145, 4
    %v3147 = vmax.f32 %v3145, %v3146
    %v3148 = vrot.slane %v3147, 2
    %v3149 = vmax.f32 %v3147, %v3148
    %v3150 = vrot.slane %v3149, 1
    %v3151 = vmax.f32 %v3149, %v3150
    %v3152 = vsel %vm2108, %v1835, -inf
    %v3153 = vrot.slane %v3152, 4
    %v3154 = vmax.f32 %v3152, %v3153
    %v3155 = vrot.slane %v3154, 2
    %v3156 = vmax.f32 %v3154, %v3155
    %v3157 = vrot.slane %v3156, 1
    %v3158 = vmax.f32 %v3156, %v3157
    %v3159 = vsel %vm2108, %v1836, -inf
    %v3160 = vrot.slane %v3159, 4
    %v3161 = vmax.f32 %v3159, %v3160
    %v3162 = vrot.slane %v3161, 2
    %v3163 = vmax.f32 %v3161, %v3162
    %v3164 = vrot.slane %v3163, 1
    %v3165 = vmax.f32 %v3163, %v3164
    %v3166 = vsel %vm2108, %v1837, -inf
    %v3167 = vrot.slane %v3166, 4
    %v3168 = vmax.f32 %v3166, %v3167
    %v3169 = vrot.slane %v3168, 2
    %v3170 = vmax.f32 %v3168, %v3169
    %v3171 = vrot.slane %v3170, 1
    %v3172 = vmax.f32 %v3170, %v3171
    %v3173 = vsel %vm2108, %v1584, -inf
    %v3174 = vrot.slane %v3173, 4
    %v3175 = vmax.f32 %v3173, %v3174
    %v3176 = vrot.slane %v3175, 2
    %v3177 = vmax.f32 %v3175, %v3176
    %v3178 = vrot.slane %v3177, 1
    %v3179 = vmax.f32 %v3177, %v3178
    %v3180 = vsel %vm2108, %v1838, -inf
    %v3181 = vrot.slane %v3180, 4
    %v3182 = vmax.f32 %v3180, %v3181
    %v3183 = vrot.slane %v3182, 2
    %v3184 = vmax.f32 %v3182, %v3183
    %v3185 = vrot.slane %v3184, 1
    %v3186 = vmax.f32 %v3184, %v3185
    %v3187 = vsel %vm2108, %v1839, -inf
    %v3188 = vrot.slane %v3187, 4
    %v3189 = vmax.f32 %v3187, %v3188
    %v3190 = vrot.slane %v3189, 2
    %v3191 = vmax.f32 %v3189, %v3190
    %v3192 = vrot.slane %v3191, 1
    %v3193 = vmax.f32 %v3191, %v3192
    %v3194 = vsel %vm2108, %v1840, -inf
    %v3195 = vrot.slane %v3194, 4
    %v3196 = vmax.f32 %v3194, %v3195
    %v3197 = vrot.slane %v3196, 2
    %v3198 = vmax.f32 %v3196, %v3197
    %v3199 = vrot.slane %v3198, 1
    %v3200 = vmax.f32 %v3198, %v3199
    %v3201 = vsel %vm2108, %v1587, -inf
    %v3202 = vrot.slane %v3201, 4
    %v3203 = vmax.f32 %v3201, %v3202
    %v3204 = vrot.slane %v3203, 2
    %v3205 = vmax.f32 %v3203, %v3204
    %v3206 = vrot.slane %v3205, 1
    %v3207 = vmax.f32 %v3205, %v3206
    %v3208 = vsel %vm2108, %v1841, -inf
    %v3209 = vrot.slane %v3208, 4
    %v3210 = vmax.f32 %v3208, %v3209
    %v3211 = vrot.slane %v3210, 2
    %v3212 = vmax.f32 %v3210, %v3211
    %v3213 = vrot.slane %v3212, 1
    %v3214 = vmax.f32 %v3212, %v3213
    %v3215 = vsel %vm2108, %v1842, -inf
    %v3216 = vrot.slane %v3215, 4
    %v3217 = vmax.f32 %v3215, %v3216
    %v3218 = vrot.slane %v3217, 2
    %v3219 = vmax.f32 %v3217, %v3218
    %v3220 = vrot.slane %v3219, 1
    %v3221 = vmax.f32 %v3219, %v3220
    %v3222 = vsel %vm2108, %v1843, -inf
    %v3223 = vrot.slane %v3222, 4
    %v3224 = vmax.f32 %v3222, %v3223
    %v3225 = vrot.slane %v3224, 2
    %v3226 = vmax.f32 %v3224, %v3225
    %v3227 = vrot.slane %v3226, 1
    %v3228 = vmax.f32 %v3226, %v3227
    %v3229 = vsel %vm2108, %v1590, -inf
    %v3230 = vrot.slane %v3229, 4
    %v3231 = vmax.f32 %v3229, %v3230
    %v3232 = vrot.slane %v3231, 2
    %v3233 = vmax.f32 %v3231, %v3232
    %v3234 = vrot.slane %v3233, 1
    %v3235 = vmax.f32 %v3233, %v3234
    %v3236 = vsel %vm2108, %v1844, -inf
    %v3237 = vrot.slane %v3236, 4
    %v3238 = vmax.f32 %v3236, %v3237
    %v3239 = vrot.slane %v3238, 2
    %v3240 = vmax.f32 %v3238, %v3239
    %v3241 = vrot.slane %v3240, 1
    %v3242 = vmax.f32 %v3240, %v3241
    %v3243 = vsel %vm2108, %v1845, -inf
    %v3244 = vrot.slane %v3243, 4
    %v3245 = vmax.f32 %v3243, %v3244
    %v3246 = vrot.slane %v3245, 2
    %v3247 = vmax.f32 %v3245, %v3246
    %v3248 = vrot.slane %v3247, 1
    %v3249 = vmax.f32 %v3247, %v3248
    %v3250 = vsel %vm2108, %v1846, -inf
    %v3251 = vrot.slane %v3250, 4
    %v3252 = vmax.f32 %v3250, %v3251
    %v3253 = vrot.slane %v3252, 2
    %v3254 = vmax.f32 %v3252, %v3253
    %v3255 = vrot.slane %v3254, 1
    %v3256 = vmax.f32 %v3254, %v3255
    %v3257 = vsel %vm2108, %v1593, -inf
    %v3258 = vrot.slane %v3257, 4
    %v3259 = vmax.f32 %v3257, %v3258
    %v3260 = vrot.slane %v3259, 2
    %v3261 = vmax.f32 %v3259, %v3260
    %v3262 = vrot.slane %v3261, 1
    %v3263 = vmax.f32 %v3261, %v3262
    %v3264 = vsel %vm2108, %v1847, -inf
    %v3265 = vrot.slane %v3264, 4
    %v3266 = vmax.f32 %v3264, %v3265
    %v3267 = vrot.slane %v3266, 2
    %v3268 = vmax.f32 %v3266, %v3267
    %v3269 = vrot.slane %v3268, 1
    %v3270 = vmax.f32 %v3268, %v3269
    %v3271 = vsel %vm2108, %v1848, -inf
    %v3272 = vrot.slane %v3271, 4
    %v3273 = vmax.f32 %v3271, %v3272
    %v3274 = vrot.slane %v3273, 2
    %v3275 = vmax.f32 %v3273, %v3274
    %v3276 = vrot.slane %v3275, 1
    %v3277 = vmax.f32 %v3275, %v3276
    %v3278 = vsel %vm2108, %v1849, -inf
    %v3279 = vrot.slane %v3278, 4
    %v3280 = vmax.f32 %v3278, %v3279
    %v3281 = vrot.slane %v3280, 2
    %v3282 = vmax.f32 %v3280, %v3281
    %v3283 = vrot.slane %v3282, 1
    %v3284 = vmax.f32 %v3282, %v3283
    %v3285 = vsel %vm2108, %v1596, -inf
    %v3286 = vrot.slane %v3285, 4
    %v3287 = vmax.f32 %v3285, %v3286
    %v3288 = vrot.slane %v3287, 2
    %v3289 = vmax.f32 %v3287, %v3288
    %v3290 = vrot.slane %v3289, 1
    %v3291 = vmax.f32 %v3289, %v3290
    %v3292 = vsel %vm2108, %v1850, -inf
    %v3293 = vrot.slane %v3292, 4
    %v3294 = vmax.f32 %v3292, %v3293
    %v3295 = vrot.slane %v3294, 2
    %v3296 = vmax.f32 %v3294, %v3295
    %v3297 = vrot.slane %v3296, 1
    %v3298 = vmax.f32 %v3296, %v3297
    %v3299 = vsel %vm2108, %v1851, -inf
    %v3300 = vrot.slane %v3299, 4
    %v3301 = vmax.f32 %v3299, %v3300
    %v3302 = vrot.slane %v3301, 2
    %v3303 = vmax.f32 %v3301, %v3302
    %v3304 = vrot.slane %v3303, 1
    %v3305 = vmax.f32 %v3303, %v3304
    %v3306 = vsel %vm2108, %v1852, -inf
    %v3307 = vrot.slane %v3306, 4
    %v3308 = vmax.f32 %v3306, %v3307
    %v3309 = vrot.slane %v3308, 2
    %v3310 = vmax.f32 %v3308, %v3309
    %v3311 = vrot.slane %v3310, 1
    %v3312 = vmax.f32 %v3310, %v3311
    %v3313 = vsel %vm2108, %v1599, -inf
    %v3314 = vrot.slane %v3313, 4
    %v3315 = vmax.f32 %v3313, %v3314
    %v3316 = vrot.slane %v3315, 2
    %v3317 = vmax.f32 %v3315, %v3316
    %v3318 = vrot.slane %v3317, 1
    %v3319 = vmax.f32 %v3317, %v3318
    %v3320 = vsel %vm2108, %v1853, -inf
    %v3321 = vrot.slane %v3320, 4
    %v3322 = vmax.f32 %v3320, %v3321
    %v3323 = vrot.slane %v3322, 2
    %v3324 = vmax.f32 %v3322, %v3323
    %v3325 = vrot.slane %v3324, 1
    %v3326 = vmax.f32 %v3324, %v3325
    %v3327 = vsel %vm2108, %v1854, -inf
    %v3328 = vrot.slane %v3327, 4
    %v3329 = vmax.f32 %v3327, %v3328
    %v3330 = vrot.slane %v3329, 2
    %v3331 = vmax.f32 %v3329, %v3330
    %v3332 = vrot.slane %v3331, 1
    %v3333 = vmax.f32 %v3331, %v3332
    %v3334 = vsel %vm2108, %v1855, -inf
    %v3335 = vrot.slane %v3334, 4
    %v3336 = vmax.f32 %v3334, %v3335
    %v3337 = vrot.slane %v3336, 2
    %v3338 = vmax.f32 %v3336, %v3337
    %v3339 = vrot.slane %v3338, 1
    %v3340 = vmax.f32 %v3338, %v3339
    %v3341 = vsel %vm2108, %v1602, -inf
    %v3342 = vrot.slane %v3341, 4
    %v3343 = vmax.f32 %v3341, %v3342
    %v3344 = vrot.slane %v3343, 2
    %v3345 = vmax.f32 %v3343, %v3344
    %v3346 = vrot.slane %v3345, 1
    %v3347 = vmax.f32 %v3345, %v3346
    %v3348 = vsel %vm2108, %v1856, -inf
    %v3349 = vrot.slane %v3348, 4
    %v3350 = vmax.f32 %v3348, %v3349
    %v3351 = vrot.slane %v3350, 2
    %v3352 = vmax.f32 %v3350, %v3351
    %v3353 = vrot.slane %v3352, 1
    %v3354 = vmax.f32 %v3352, %v3353
    %v3355 = vsel %vm2108, %v1857, -inf
    %v3356 = vrot.slane %v3355, 4
    %v3357 = vmax.f32 %v3355, %v3356
    %v3358 = vrot.slane %v3357, 2
    %v3359 = vmax.f32 %v3357, %v3358
    %v3360 = vrot.slane %v3359, 1
    %v3361 = vmax.f32 %v3359, %v3360
    %v3362 = vsel %vm2108, %v1858, -inf
    %v3363 = vrot.slane %v3362, 4
    %v3364 = vmax.f32 %v3362, %v3363
    %v3365 = vrot.slane %v3364, 2
    %v3366 = vmax.f32 %v3364, %v3365
    %v3367 = vrot.slane %v3366, 1
    %v3368 = vmax.f32 %v3366, %v3367
    %v3369 = vsel %vm2108, %v1605, -inf
    %v3370 = vrot.slane %v3369, 4
    %v3371 = vmax.f32 %v3369, %v3370
    %v3372 = vrot.slane %v3371, 2
    %v3373 = vmax.f32 %v3371, %v3372
    %v3374 = vrot.slane %v3373, 1
    %v3375 = vmax.f32 %v3373, %v3374
    %v3376 = vsel %vm2108, %v1859, -inf
    %v3377 = vrot.slane %v3376, 4
    %v3378 = vmax.f32 %v3376, %v3377
    %v3379 = vrot.slane %v3378, 2
    %v3380 = vmax.f32 %v3378, %v3379
    %v3381 = vrot.slane %v3380, 1
    %v3382 = vmax.f32 %v3380, %v3381
    %v3383 = vsel %vm2108, %v1860, -inf
    %v3384 = vrot.slane %v3383, 4
    %v3385 = vmax.f32 %v3383, %v3384
    %v3386 = vrot.slane %v3385, 2
    %v3387 = vmax.f32 %v3385, %v3386
    %v3388 = vrot.slane %v3387, 1
    %v3389 = vmax.f32 %v3387, %v3388
    %v3390 = vsel %vm2108, %v1861, -inf
    %v3391 = vrot.slane %v3390, 4
    %v3392 = vmax.f32 %v3390, %v3391
    %v3393 = vrot.slane %v3392, 2
    %v3394 = vmax.f32 %v3392, %v3393
    %v3395 = vrot.slane %v3394, 1
    %v3396 = vmax.f32 %v3394, %v3395
    %v3397 = vsel %vm2108, %v1608, -inf
    %v3398 = vrot.slane %v3397, 4
    %v3399 = vmax.f32 %v3397, %v3398
    %v3400 = vrot.slane %v3399, 2
    %v3401 = vmax.f32 %v3399, %v3400
    %v3402 = vrot.slane %v3401, 1
    %v3403 = vmax.f32 %v3401, %v3402
    %v3404 = vsel %vm2108, %v1862, -inf
    %v3405 = vrot.slane %v3404, 4
    %v3406 = vmax.f32 %v3404, %v3405
    %v3407 = vrot.slane %v3406, 2
    %v3408 = vmax.f32 %v3406, %v3407
    %v3409 = vrot.slane %v3408, 1
    %v3410 = vmax.f32 %v3408, %v3409
    %v3411 = vsel %vm2108, %v1863, -inf
    %v3412 = vrot.slane %v3411, 4
    %v3413 = vmax.f32 %v3411, %v3412
    %v3414 = vrot.slane %v3413, 2
    %v3415 = vmax.f32 %v3413, %v3414
    %v3416 = vrot.slane %v3415, 1
    %v3417 = vmax.f32 %v3415, %v3416
    %v3418 = vsel %vm2108, %v1864, -inf
    %v3419 = vrot.slane %v3418, 4
    %v3420 = vmax.f32 %v3418, %v3419
    %v3421 = vrot.slane %v3420, 2
    %v3422 = vmax.f32 %v3420, %v3421
    %v3423 = vrot.slane %v3422, 1
    %v3424 = vmax.f32 %v3422, %v3423
    %v3425 = vsel %vm2108, %v1611, -inf
    %v3426 = vrot.slane %v3425, 4
    %v3427 = vmax.f32 %v3425, %v3426
    %v3428 = vrot.slane %v3427, 2
    %v3429 = vmax.f32 %v3427, %v3428
    %v3430 = vrot.slane %v3429, 1
    %v3431 = vmax.f32 %v3429, %v3430
    %v3432 = vsel %vm2108, %v1865, -inf
    %v3433 = vrot.slane %v3432, 4
    %v3434 = vmax.f32 %v3432, %v3433
    %v3435 = vrot.slane %v3434, 2
    %v3436 = vmax.f32 %v3434, %v3435
    %v3437 = vrot.slane %v3436, 1
    %v3438 = vmax.f32 %v3436, %v3437
    %v3439 = vsel %vm2108, %v1866, -inf
    %v3440 = vrot.slane %v3439, 4
    %v3441 = vmax.f32 %v3439, %v3440
    %v3442 = vrot.slane %v3441, 2
    %v3443 = vmax.f32 %v3441, %v3442
    %v3444 = vrot.slane %v3443, 1
    %v3445 = vmax.f32 %v3443, %v3444
    %v3446 = vsel %vm2108, %v1867, -inf
    %v3447 = vrot.slane %v3446, 4
    %v3448 = vmax.f32 %v3446, %v3447
    %v3449 = vrot.slane %v3448, 2
    %v3450 = vmax.f32 %v3448, %v3449
    %v3451 = vrot.slane %v3450, 1
    %v3452 = vmax.f32 %v3450, %v3451
    %v3453 = vsel %vm2108, %v1614, -inf
    %v3454 = vrot.slane %v3453, 4
    %v3455 = vmax.f32 %v3453, %v3454
    %v3456 = vrot.slane %v3455, 2
    %v3457 = vmax.f32 %v3455, %v3456
    %v3458 = vrot.slane %v3457, 1
    %v3459 = vmax.f32 %v3457, %v3458
    %v3460 = vsel %vm2108, %v1868, -inf
    %v3461 = vrot.slane %v3460, 4
    %v3462 = vmax.f32 %v3460, %v3461
    %v3463 = vrot.slane %v3462, 2
    %v3464 = vmax.f32 %v3462, %v3463
    %v3465 = vrot.slane %v3464, 1
    %v3466 = vmax.f32 %v3464, %v3465
    %v3467 = vsel %vm2108, %v1869, -inf
    %v3468 = vrot.slane %v3467, 4
    %v3469 = vmax.f32 %v3467, %v3468
    %v3470 = vrot.slane %v3469, 2
    %v3471 = vmax.f32 %v3469, %v3470
    %v3472 = vrot.slane %v3471, 1
    %v3473 = vmax.f32 %v3471, %v3472
    %v3474 = vsel %vm2108, %v1870, -inf
    %v3475 = vrot.slane %v3474, 4
    %v3476 = vmax.f32 %v3474, %v3475
    %v3477 = vrot.slane %v3476, 2
    %v3478 = vmax.f32 %v3476, %v3477
    %v3479 = vrot.slane %v3478, 1
    %v3480 = vmax.f32 %v3478, %v3479
    %v3481 = vsel %vm2108, %v1617, -inf
    %v3482 = vrot.slane %v3481, 4
    %v3483 = vmax.f32 %v3481, %v3482
    %v3484 = vrot.slane %v3483, 2
    %v3485 = vmax.f32 %v3483, %v3484
    %v3486 = vrot.slane %v3485, 1
    %v3487 = vmax.f32 %v3485, %v3486
    %v3488 = vsel %vm2108, %v1871, -inf
    %v3489 = vrot.slane %v3488, 4
    %v3490 = vmax.f32 %v3488, %v3489
    %v3491 = vrot.slane %v3490, 2
    %v3492 = vmax.f32 %v3490, %v3491
    %v3493 = vrot.slane %v3492, 1
    %v3494 = vmax.f32 %v3492, %v3493
    %v3495 = vsel %vm2108, %v1872, -inf
    %v3496 = vrot.slane %v3495, 4
    %v3497 = vmax.f32 %v3495, %v3496
    %v3498 = vrot.slane %v3497, 2
    %v3499 = vmax.f32 %v3497, %v3498
    %v3500 = vrot.slane %v3499, 1
    %v3501 = vmax.f32 %v3499, %v3500
    %v3502 = vsel %vm2108, %v1873, -inf
    %v3503 = vrot.slane %v3502, 4
    %v3504 = vmax.f32 %v3502, %v3503
    %v3505 = vrot.slane %v3504, 2
    %v3506 = vmax.f32 %v3504, %v3505
    %v3507 = vrot.slane %v3506, 1
    %v3508 = vmax.f32 %v3506, %v3507
    %v3509 = vsel %vm2108, %v1620, -inf
    %v3510 = vrot.slane %v3509, 4
    %v3511 = vmax.f32 %v3509, %v3510
    %v3512 = vrot.slane %v3511, 2
    %v3513 = vmax.f32 %v3511, %v3512
    %v3514 = vrot.slane %v3513, 1
    %v3515 = vmax.f32 %v3513, %v3514
    %v3516 = vsel %vm2108, %v1874, -inf
    %v3517 = vrot.slane %v3516, 4
    %v3518 = vmax.f32 %v3516, %v3517
    %v3519 = vrot.slane %v3518, 2
    %v3520 = vmax.f32 %v3518, %v3519
    %v3521 = vrot.slane %v3520, 1
    %v3522 = vmax.f32 %v3520, %v3521
    %v3523 = vsel %vm2108, %v1875, -inf
    %v3524 = vrot.slane %v3523, 4
    %v3525 = vmax.f32 %v3523, %v3524
    %v3526 = vrot.slane %v3525, 2
    %v3527 = vmax.f32 %v3525, %v3526
    %v3528 = vrot.slane %v3527, 1
    %v3529 = vmax.f32 %v3527, %v3528
    %v3530 = vsel %vm2108, %v1876, -inf
    %v3531 = vrot.slane %v3530, 4
    %v3532 = vmax.f32 %v3530, %v3531
    %v3533 = vrot.slane %v3532, 2
    %v3534 = vmax.f32 %v3532, %v3533
    %v3535 = vrot.slane %v3534, 1
    %v3536 = vmax.f32 %v3534, %v3535
    %v3537 = vsel %vm2108, %v1623, -inf
    %v3538 = vrot.slane %v3537, 4
    %v3539 = vmax.f32 %v3537, %v3538
    %v3540 = vrot.slane %v3539, 2
    %v3541 = vmax.f32 %v3539, %v3540
    %v3542 = vrot.slane %v3541, 1
    %v3543 = vmax.f32 %v3541, %v3542
    %v3544 = vsel %vm2108, %v1877, -inf
    %v3545 = vrot.slane %v3544, 4
    %v3546 = vmax.f32 %v3544, %v3545
    %v3547 = vrot.slane %v3546, 2
    %v3548 = vmax.f32 %v3546, %v3547
    %v3549 = vrot.slane %v3548, 1
    %v3550 = vmax.f32 %v3548, %v3549
    %v3551 = vsel %vm2108, %v1878, -inf
    %v3552 = vrot.slane %v3551, 4
    %v3553 = vmax.f32 %v3551, %v3552
    %v3554 = vrot.slane %v3553, 2
    %v3555 = vmax.f32 %v3553, %v3554
    %v3556 = vrot.slane %v3555, 1
    %v3557 = vmax.f32 %v3555, %v3556
    %v3558 = vsel %vm2108, %v1879, -inf
    %v3559 = vrot.slane %v3558, 4
    %v3560 = vmax.f32 %v3558, %v3559
    %v3561 = vrot.slane %v3560, 2
    %v3562 = vmax.f32 %v3560, %v3561
    %v3563 = vrot.slane %v3562, 1
    %v3564 = vmax.f32 %v3562, %v3563
    %v3565 = vsel %vm2108, %v1626, -inf
    %v3566 = vrot.slane %v3565, 4
    %v3567 = vmax.f32 %v3565, %v3566
    %v3568 = vrot.slane %v3567, 2
    %v3569 = vmax.f32 %v3567, %v3568
    %v3570 = vrot.slane %v3569, 1
    %v3571 = vmax.f32 %v3569, %v3570
    %v3572 = vsel %vm2108, %v1880, -inf
    %v3573 = vrot.slane %v3572, 4
    %v3574 = vmax.f32 %v3572, %v3573
    %v3575 = vrot.slane %v3574, 2
    %v3576 = vmax.f32 %v3574, %v3575
    %v3577 = vrot.slane %v3576, 1
    %v3578 = vmax.f32 %v3576, %v3577
    %v3579 = vsel %vm2108, %v1881, -inf
    %v3580 = vrot.slane %v3579, 4
    %v3581 = vmax.f32 %v3579, %v3580
    %v3582 = vrot.slane %v3581, 2
    %v3583 = vmax.f32 %v3581, %v3582
    %v3584 = vrot.slane %v3583, 1
    %v3585 = vmax.f32 %v3583, %v3584
    %v3586 = vsel %vm2108, %v1882, -inf
    %v3587 = vrot.slane %v3586, 4
    %v3588 = vmax.f32 %v3586, %v3587
    %v3589 = vrot.slane %v3588, 2
    %v3590 = vmax.f32 %v3588, %v3589
    %v3591 = vrot.slane %v3590, 1
    %v3592 = vmax.f32 %v3590, %v3591
    %v3593 = vsel %vm2108, %v1629, -inf
    %v3594 = vrot.slane %v3593, 4
    %v3595 = vmax.f32 %v3593, %v3594
    %v3596 = vrot.slane %v3595, 2
    %v3597 = vmax.f32 %v3595, %v3596
    %v3598 = vrot.slane %v3597, 1
    %v3599 = vmax.f32 %v3597, %v3598
    %v3600 = vsel %vm2108, %v1883, -inf
    %v3601 = vrot.slane %v3600, 4
    %v3602 = vmax.f32 %v3600, %v3601
    %v3603 = vrot.slane %v3602, 2
    %v3604 = vmax.f32 %v3602, %v3603
    %v3605 = vrot.slane %v3604, 1
    %v3606 = vmax.f32 %v3604, %v3605
    %v3607 = vsel %vm2108, %v1884, -inf
    %v3608 = vrot.slane %v3607, 4
    %v3609 = vmax.f32 %v3607, %v3608
    %v3610 = vrot.slane %v3609, 2
    %v3611 = vmax.f32 %v3609, %v3610
    %v3612 = vrot.slane %v3611, 1
    %v3613 = vmax.f32 %v3611, %v3612
    %v3614 = vsel %vm2108, %v1885, -inf
    %v3615 = vrot.slane %v3614, 4
    %v3616 = vmax.f32 %v3614, %v3615
    %v3617 = vrot.slane %v3616, 2
    %v3618 = vmax.f32 %v3616, %v3617
    %v3619 = vrot.slane %v3618, 1
    %v3620 = vmax.f32 %v3618, %v3619
    %v3621 = vsel %vm2108, %v1632, -inf
    %v3622 = vrot.slane %v3621, 4
    %v3623 = vmax.f32 %v3621, %v3622
    %v3624 = vrot.slane %v3623, 2
    %v3625 = vmax.f32 %v3623, %v3624
    %v3626 = vrot.slane %v3625, 1
    %v3627 = vmax.f32 %v3625, %v3626
    %v3628 = vsel %vm2108, %v1886, -inf
    %v3629 = vrot.slane %v3628, 4
    %v3630 = vmax.f32 %v3628, %v3629
    %v3631 = vrot.slane %v3630, 2
    %v3632 = vmax.f32 %v3630, %v3631
    %v3633 = vrot.slane %v3632, 1
    %v3634 = vmax.f32 %v3632, %v3633
    %v3635 = vsel %vm2108, %v1887, -inf
    %v3636 = vrot.slane %v3635, 4
    %v3637 = vmax.f32 %v3635, %v3636
    %v3638 = vrot.slane %v3637, 2
    %v3639 = vmax.f32 %v3637, %v3638
    %v3640 = vrot.slane %v3639, 1
    %v3641 = vmax.f32 %v3639, %v3640
    %v3642 = vsel %vm2108, %v1888, -inf
    %v3643 = vrot.slane %v3642, 4
    %v3644 = vmax.f32 %v3642, %v3643
    %v3645 = vrot.slane %v3644, 2
    %v3646 = vmax.f32 %v3644, %v3645
    %v3647 = vrot.slane %v3646, 1
    %v3648 = vmax.f32 %v3646, %v3647
    %v3649 = vsel %vm2108, %v1635, -inf
    %v3650 = vrot.slane %v3649, 4
    %v3651 = vmax.f32 %v3649, %v3650
    %v3652 = vrot.slane %v3651, 2
    %v3653 = vmax.f32 %v3651, %v3652
    %v3654 = vrot.slane %v3653, 1
    %v3655 = vmax.f32 %v3653, %v3654
    %v3656 = vsel %vm2108, %v1889, -inf
    %v3657 = vrot.slane %v3656, 4
    %v3658 = vmax.f32 %v3656, %v3657
    %v3659 = vrot.slane %v3658, 2
    %v3660 = vmax.f32 %v3658, %v3659
    %v3661 = vrot.slane %v3660, 1
    %v3662 = vmax.f32 %v3660, %v3661
    %v3663 = vsel %vm2108, %v1890, -inf
    %v3664 = vrot.slane %v3663, 4
    %v3665 = vmax.f32 %v3663, %v3664
    %v3666 = vrot.slane %v3665, 2
    %v3667 = vmax.f32 %v3665, %v3666
    %v3668 = vrot.slane %v3667, 1
    %v3669 = vmax.f32 %v3667, %v3668
    %v3670 = vsel %vm2108, %v1891, -inf
    %v3671 = vrot.slane %v3670, 4
    %v3672 = vmax.f32 %v3670, %v3671
    %v3673 = vrot.slane %v3672, 2
    %v3674 = vmax.f32 %v3672, %v3673
    %v3675 = vrot.slane %v3674, 1
    %v3676 = vmax.f32 %v3674, %v3675
    %v3677 = vsel %vm2108, %v1638, -inf
    %v3678 = vrot.slane %v3677, 4
    %v3679 = vmax.f32 %v3677, %v3678
    %v3680 = vrot.slane %v3679, 2
    %v3681 = vmax.f32 %v3679, %v3680
    %v3682 = vrot.slane %v3681, 1
    %v3683 = vmax.f32 %v3681, %v3682
    %v3684 = vsel %vm2108, %v1892, -inf
    %v3685 = vrot.slane %v3684, 4
    %v3686 = vmax.f32 %v3684, %v3685
    %v3687 = vrot.slane %v3686, 2
    %v3688 = vmax.f32 %v3686, %v3687
    %v3689 = vrot.slane %v3688, 1
    %v3690 = vmax.f32 %v3688, %v3689
    %v3691 = vsel %vm2108, %v1893, -inf
    %v3692 = vrot.slane %v3691, 4
    %v3693 = vmax.f32 %v3691, %v3692
    %v3694 = vrot.slane %v3693, 2
    %v3695 = vmax.f32 %v3693, %v3694
    %v3696 = vrot.slane %v3695, 1
    %v3697 = vmax.f32 %v3695, %v3696
    %v3698 = vsel %vm2108, %v1894, -inf
    %v3699 = vrot.slane %v3698, 4
    %v3700 = vmax.f32 %v3698, %v3699
    %v3701 = vrot.slane %v3700, 2
    %v3702 = vmax.f32 %v3700, %v3701
    %v3703 = vrot.slane %v3702, 1
    %v3704 = vmax.f32 %v3702, %v3703
    %v3705 = vsel %vm2108, %v1641, -inf
    %v3706 = vrot.slane %v3705, 4
    %v3707 = vmax.f32 %v3705, %v3706
    %v3708 = vrot.slane %v3707, 2
    %v3709 = vmax.f32 %v3707, %v3708
    %v3710 = vrot.slane %v3709, 1
    %v3711 = vmax.f32 %v3709, %v3710
    %v3712 = vsel %vm2108, %v1895, -inf
    %v3713 = vrot.slane %v3712, 4
    %v3714 = vmax.f32 %v3712, %v3713
    %v3715 = vrot.slane %v3714, 2
    %v3716 = vmax.f32 %v3714, %v3715
    %v3717 = vrot.slane %v3716, 1
    %v3718 = vmax.f32 %v3716, %v3717
    %v3719 = vsel %vm2108, %v1896, -inf
    %v3720 = vrot.slane %v3719, 4
    %v3721 = vmax.f32 %v3719, %v3720
    %v3722 = vrot.slane %v3721, 2
    %v3723 = vmax.f32 %v3721, %v3722
    %v3724 = vrot.slane %v3723, 1
    %v3725 = vmax.f32 %v3723, %v3724
    %v3726 = vsel %vm2108, %v1897, -inf
    %v3727 = vrot.slane %v3726, 4
    %v3728 = vmax.f32 %v3726, %v3727
    %v3729 = vrot.slane %v3728, 2
    %v3730 = vmax.f32 %v3728, %v3729
    %v3731 = vrot.slane %v3730, 1
    %v3732 = vmax.f32 %v3730, %v3731
    %v3733 = vsel %vm2108, %v1644, -inf
    %v3734 = vrot.slane %v3733, 4
    %v3735 = vmax.f32 %v3733, %v3734
    %v3736 = vrot.slane %v3735, 2
    %v3737 = vmax.f32 %v3735, %v3736
    %v3738 = vrot.slane %v3737, 1
    %v3739 = vmax.f32 %v3737, %v3738
    %v3740 = vsel %vm2108, %v1898, -inf
    %v3741 = vrot.slane %v3740, 4
    %v3742 = vmax.f32 %v3740, %v3741
    %v3743 = vrot.slane %v3742, 2
    %v3744 = vmax.f32 %v3742, %v3743
    %v3745 = vrot.slane %v3744, 1
    %v3746 = vmax.f32 %v3744, %v3745
    %v3747 = vsel %vm2108, %v1899, -inf
    %v3748 = vrot.slane %v3747, 4
    %v3749 = vmax.f32 %v3747, %v3748
    %v3750 = vrot.slane %v3749, 2
    %v3751 = vmax.f32 %v3749, %v3750
    %v3752 = vrot.slane %v3751, 1
    %v3753 = vmax.f32 %v3751, %v3752
    %v3754 = vsel %vm2108, %v1900, -inf
    %v3755 = vrot.slane %v3754, 4
    %v3756 = vmax.f32 %v3754, %v3755
    %v3757 = vrot.slane %v3756, 2
    %v3758 = vmax.f32 %v3756, %v3757
    %v3759 = vrot.slane %v3758, 1
    %v3760 = vmax.f32 %v3758, %v3759
    %v3761 = vsel %vm2108, %v1647, -inf
    %v3762 = vrot.slane %v3761, 4
    %v3763 = vmax.f32 %v3761, %v3762
    %v3764 = vrot.slane %v3763, 2
    %v3765 = vmax.f32 %v3763, %v3764
    %v3766 = vrot.slane %v3765, 1
    %v3767 = vmax.f32 %v3765, %v3766
    %v3768 = vsel %vm2108, %v1901, -inf
    %v3769 = vrot.slane %v3768, 4
    %v3770 = vmax.f32 %v3768, %v3769
    %v3771 = vrot.slane %v3770, 2
    %v3772 = vmax.f32 %v3770, %v3771
    %v3773 = vrot.slane %v3772, 1
    %v3774 = vmax.f32 %v3772, %v3773
    %v3775 = vsel %vm2108, %v1902, -inf
    %v3776 = vrot.slane %v3775, 4
    %v3777 = vmax.f32 %v3775, %v3776
    %v3778 = vrot.slane %v3777, 2
    %v3779 = vmax.f32 %v3777, %v3778
    %v3780 = vrot.slane %v3779, 1
    %v3781 = vmax.f32 %v3779, %v3780
    %v3782 = vsel %vm2108, %v1903, -inf
    %v3783 = vrot.slane %v3782, 4
    %v3784 = vmax.f32 %v3782, %v3783
    %v3785 = vrot.slane %v3784, 2
    %v3786 = vmax.f32 %v3784, %v3785
    %v3787 = vrot.slane %v3786, 1
    %v3788 = vmax.f32 %v3786, %v3787
    %v3789 = vsel %vm2108, %v1650, -inf
    %v3790 = vrot.slane %v3789, 4
    %v3791 = vmax.f32 %v3789, %v3790
    %v3792 = vrot.slane %v3791, 2
    %v3793 = vmax.f32 %v3791, %v3792
    %v3794 = vrot.slane %v3793, 1
    %v3795 = vmax.f32 %v3793, %v3794
    %v3796 = vsel %vm2108, %v1904, -inf
    %v3797 = vrot.slane %v3796, 4
    %v3798 = vmax.f32 %v3796, %v3797
    %v3799 = vrot.slane %v3798, 2
    %v3800 = vmax.f32 %v3798, %v3799
    %v3801 = vrot.slane %v3800, 1
    %v3802 = vmax.f32 %v3800, %v3801
    %v3803 = vsel %vm2108, %v1905, -inf
    %v3804 = vrot.slane %v3803, 4
    %v3805 = vmax.f32 %v3803, %v3804
    %v3806 = vrot.slane %v3805, 2
    %v3807 = vmax.f32 %v3805, %v3806
    %v3808 = vrot.slane %v3807, 1
    %v3809 = vmax.f32 %v3807, %v3808
    %v3810 = vsel %vm2108, %v1906, -inf
    %v3811 = vrot.slane %v3810, 4
    %v3812 = vmax.f32 %v3810, %v3811
    %v3813 = vrot.slane %v3812, 2
    %v3814 = vmax.f32 %v3812, %v3813
    %v3815 = vrot.slane %v3814, 1
    %v3816 = vmax.f32 %v3814, %v3815
    %v3817 = vsel %vm2108, %v1653, -inf
    %v3818 = vrot.slane %v3817, 4
    %v3819 = vmax.f32 %v3817, %v3818
    %v3820 = vrot.slane %v3819, 2
    %v3821 = vmax.f32 %v3819, %v3820
    %v3822 = vrot.slane %v3821, 1
    %v3823 = vmax.f32 %v3821, %v3822
    %v3824 = vsel %vm2108, %v1907, -inf
    %v3825 = vrot.slane %v3824, 4
    %v3826 = vmax.f32 %v3824, %v3825
    %v3827 = vrot.slane %v3826, 2
    %v3828 = vmax.f32 %v3826, %v3827
    %v3829 = vrot.slane %v3828, 1
    %v3830 = vmax.f32 %v3828, %v3829
    %v3831 = vsel %vm2108, %v1908, -inf
    %v3832 = vrot.slane %v3831, 4
    %v3833 = vmax.f32 %v3831, %v3832
    %v3834 = vrot.slane %v3833, 2
    %v3835 = vmax.f32 %v3833, %v3834
    %v3836 = vrot.slane %v3835, 1
    %v3837 = vmax.f32 %v3835, %v3836
    %v3838 = vsel %vm2108, %v1909, -inf
    %v3839 = vrot.slane %v3838, 4
    %v3840 = vmax.f32 %v3838, %v3839
    %v3841 = vrot.slane %v3840, 2
    %v3842 = vmax.f32 %v3840, %v3841
    %v3843 = vrot.slane %v3842, 1
    %v3844 = vmax.f32 %v3842, %v3843
    %v3845 = vsel %vm2108, %v1656, -inf
    %v3846 = vrot.slane %v3845, 4
    %v3847 = vmax.f32 %v3845, %v3846
    %v3848 = vrot.slane %v3847, 2
    %v3849 = vmax.f32 %v3847, %v3848
    %v3850 = vrot.slane %v3849, 1
    %v3851 = vmax.f32 %v3849, %v3850
    %v3852 = vsel %vm2108, %v1910, -inf
    %v3853 = vrot.slane %v3852, 4
    %v3854 = vmax.f32 %v3852, %v3853
    %v3855 = vrot.slane %v3854, 2
    %v3856 = vmax.f32 %v3854, %v3855
    %v3857 = vrot.slane %v3856, 1
    %v3858 = vmax.f32 %v3856, %v3857
    %v3859 = vsel %vm2108, %v1911, -inf
    %v3860 = vrot.slane %v3859, 4
    %v3861 = vmax.f32 %v3859, %v3860
    %v3862 = vrot.slane %v3861, 2
    %v3863 = vmax.f32 %v3861, %v3862
    %v3864 = vrot.slane %v3863, 1
    %v3865 = vmax.f32 %v3863, %v3864
    %v3866 = vsel %vm2108, %v1912, -inf
    %v3867 = vrot.slane %v3866, 4
    %v3868 = vmax.f32 %v3866, %v3867
    %v3869 = vrot.slane %v3868, 2
    %v3870 = vmax.f32 %v3868, %v3869
    %v3871 = vrot.slane %v3870, 1
    %v3872 = vmax.f32 %v3870, %v3871
    %v3873 = vsel %vm2108, %v1659, -inf
    %v3874 = vrot.slane %v3873, 4
    %v3875 = vmax.f32 %v3873, %v3874
    %v3876 = vrot.slane %v3875, 2
    %v3877 = vmax.f32 %v3875, %v3876
    %v3878 = vrot.slane %v3877, 1
    %v3879 = vmax.f32 %v3877, %v3878
    %v3880 = vsel %vm2108, %v1913, -inf
    %v3881 = vrot.slane %v3880, 4
    %v3882 = vmax.f32 %v3880, %v3881
    %v3883 = vrot.slane %v3882, 2
    %v3884 = vmax.f32 %v3882, %v3883
    %v3885 = vrot.slane %v3884, 1
    %v3886 = vmax.f32 %v3884, %v3885
    %v3887 = vsel %vm2108, %v1914, -inf
    %v3888 = vrot.slane %v3887, 4
    %v3889 = vmax.f32 %v3887, %v3888
    %v3890 = vrot.slane %v3889, 2
    %v3891 = vmax.f32 %v3889, %v3890
    %v3892 = vrot.slane %v3891, 1
    %v3893 = vmax.f32 %v3891, %v3892
    %v3894 = vsel %vm2108, %v1915, -inf
    %v3895 = vrot.slane %v3894, 4
    %v3896 = vmax.f32 %v3894, %v3895
    %v3897 = vrot.slane %v3896, 2
    %v3898 = vmax.f32 %v3896, %v3897
    %v3899 = vrot.slane %v3898, 1
    %v3900 = vmax.f32 %v3898, %v3899
    %v3901 = vpack.c.bf16 %v2115, %v2115
    %v3902 = vpack.c.bf16 %v2122, %v2122
    %v3903 = vpack.c.bf16 %v2129, %v2129
    %v3904 = vpack.c.bf16 %v2136, %v2136
    %v3905 = vpack.c.bf16 %v2143, %v2143
    %v3906 = vpack.c.bf16 %v2150, %v2150
    %v3907 = vpack.c.bf16 %v2157, %v2157
    %v3908 = vpack.c.bf16 %v2164, %v2164
    %v3909 = vpack.c.bf16 %v2171, %v2171
    %v3910 = vpack.c.bf16 %v2178, %v2178
    %v3911 = vpack.c.bf16 %v2185, %v2185
    %v3912 = vpack.c.bf16 %v2192, %v2192
    %v3913 = vpack.c.bf16 %v2199, %v2199
    %v3914 = vpack.c.bf16 %v2206, %v2206
    %v3915 = vpack.c.bf16 %v2213, %v2213
    %v3916 = vpack.c.bf16 %v2220, %v2220
    %v3917 = vpack.c.bf16 %v2227, %v2227
    %v3918 = vpack.c.bf16 %v2234, %v2234
    %v3919 = vpack.c.bf16 %v2241, %v2241
    %v3920 = vpack.c.bf16 %v2248, %v2248
    %v3921 = vpack.c.bf16 %v2255, %v2255
    %v3922 = vpack.c.bf16 %v2262, %v2262
    %v3923 = vpack.c.bf16 %v2269, %v2269
    %v3924 = vpack.c.bf16 %v2276, %v2276
    %v3925 = vpack.c.bf16 %v2283, %v2283
    %v3926 = vpack.c.bf16 %v2290, %v2290
    %v3927 = vpack.c.bf16 %v2297, %v2297
    %v3928 = vpack.c.bf16 %v2304, %v2304
    %v3929 = vpack.c.bf16 %v2311, %v2311
    %v3930 = vpack.c.bf16 %v2318, %v2318
    %v3931 = vpack.c.bf16 %v2325, %v2325
    %v3932 = vpack.c.bf16 %v2332, %v2332
    %v3933 = vpack.c.bf16 %v2339, %v2339
    %v3934 = vpack.c.bf16 %v2346, %v2346
    %v3935 = vpack.c.bf16 %v2353, %v2353
    %v3936 = vpack.c.bf16 %v2360, %v2360
    %v3937 = vpack.c.bf16 %v2367, %v2367
    %v3938 = vpack.c.bf16 %v2374, %v2374
    %v3939 = vpack.c.bf16 %v2381, %v2381
    %v3940 = vpack.c.bf16 %v2388, %v2388
    %v3941 = vpack.c.bf16 %v2395, %v2395
    %v3942 = vpack.c.bf16 %v2402, %v2402
    %v3943 = vpack.c.bf16 %v2409, %v2409
    %v3944 = vpack.c.bf16 %v2416, %v2416
    %v3945 = vpack.c.bf16 %v2423, %v2423
    %v3946 = vpack.c.bf16 %v2430, %v2430
    %v3947 = vpack.c.bf16 %v2437, %v2437
    %v3948 = vpack.c.bf16 %v2444, %v2444
    %v3949 = vpack.c.bf16 %v2451, %v2451
    %v3950 = vpack.c.bf16 %v2458, %v2458
    %v3951 = vpack.c.bf16 %v2465, %v2465
    %v3952 = vpack.c.bf16 %v2472, %v2472
    %v3953 = vpack.c.bf16 %v2479, %v2479
    %v3954 = vpack.c.bf16 %v2486, %v2486
    %v3955 = vpack.c.bf16 %v2493, %v2493
    %v3956 = vpack.c.bf16 %v2500, %v2500
    %v3957 = vpack.c.bf16 %v2507, %v2507
    %v3958 = vpack.c.bf16 %v2514, %v2514
    %v3959 = vpack.c.bf16 %v2521, %v2521
    %v3960 = vpack.c.bf16 %v2528, %v2528
    %v3961 = vpack.c.bf16 %v2535, %v2535
    %v3962 = vpack.c.bf16 %v2542, %v2542
    %v3963 = vpack.c.bf16 %v2549, %v2549
    %v3964 = vpack.c.bf16 %v2556, %v2556
    %v3965 = vpack.c.bf16 %v2563, %v2563
    %v3966 = vpack.c.bf16 %v2570, %v2570
    %v3967 = vpack.c.bf16 %v2577, %v2577
    %v3968 = vpack.c.bf16 %v2584, %v2584
    %v3969 = vpack.c.bf16 %v2591, %v2591
    %v3970 = vpack.c.bf16 %v2598, %v2598
    %v3971 = vpack.c.bf16 %v2605, %v2605
    %v3972 = vpack.c.bf16 %v2612, %v2612
    %v3973 = vpack.c.bf16 %v2619, %v2619
    %v3974 = vpack.c.bf16 %v2626, %v2626
    %v3975 = vpack.c.bf16 %v2633, %v2633
    %v3976 = vpack.c.bf16 %v2640, %v2640
    %v3977 = vpack.c.bf16 %v2647, %v2647
    %v3978 = vpack.c.bf16 %v2654, %v2654
    %v3979 = vpack.c.bf16 %v2661, %v2661
    %v3980 = vpack.c.bf16 %v2668, %v2668
    %v3981 = vpack.c.bf16 %v2675, %v2675
    %v3982 = vpack.c.bf16 %v2682, %v2682
    %v3983 = vpack.c.bf16 %v2689, %v2689
    %v3984 = vpack.c.bf16 %v2696, %v2696
    %v3985 = vpack.c.bf16 %v2703, %v2703
    %v3986 = vpack.c.bf16 %v2710, %v2710
    %v3987 = vpack.c.bf16 %v2717, %v2717
    %v3988 = vpack.c.bf16 %v2724, %v2724
    %v3989 = vpack.c.bf16 %v2731, %v2731
    %v3990 = vpack.c.bf16 %v2738, %v2738
    %v3991 = vpack.c.bf16 %v2745, %v2745
    %v3992 = vpack.c.bf16 %v2752, %v2752
    %v3993 = vpack.c.bf16 %v2759, %v2759
    %v3994 = vpack.c.bf16 %v2766, %v2766
    %v3995 = vpack.c.bf16 %v2773, %v2773
    %v3996 = vpack.c.bf16 %v2780, %v2780
    %v3997 = vpack.c.bf16 %v2787, %v2787
    %v3998 = vpack.c.bf16 %v2794, %v2794
    %v3999 = vpack.c.bf16 %v2801, %v2801
    %v4000 = vpack.c.bf16 %v2808, %v2808
    %v4001 = vpack.c.bf16 %v2815, %v2815
    %v4002 = vpack.c.bf16 %v2822, %v2822
    %v4003 = vpack.c.bf16 %v2829, %v2829
    %v4004 = vpack.c.bf16 %v2836, %v2836
    %v4005 = vpack.c.bf16 %v2843, %v2843
    %v4006 = vpack.c.bf16 %v2850, %v2850
    %v4007 = vpack.c.bf16 %v2857, %v2857
    %v4008 = vpack.c.bf16 %v2864, %v2864
    %v4009 = vpack.c.bf16 %v2871, %v2871
    %v4010 = vpack.c.bf16 %v2878, %v2878
    %v4011 = vpack.c.bf16 %v2885, %v2885
    %v4012 = vpack.c.bf16 %v2892, %v2892
    %v4013 = vpack.c.bf16 %v2899, %v2899
    %v4014 = vpack.c.bf16 %v2906, %v2906
    %v4015 = vpack.c.bf16 %v2913, %v2913
    %v4016 = vpack.c.bf16 %v2920, %v2920
    %v4017 = vpack.c.bf16 %v2927, %v2927
    %v4018 = vpack.c.bf16 %v2934, %v2934
    %v4019 = vpack.c.bf16 %v2941, %v2941
    %v4020 = vpack.c.bf16 %v2948, %v2948
    %v4021 = vpack.c.bf16 %v2955, %v2955
    %v4022 = vpack.c.bf16 %v2962, %v2962
    %v4023 = vpack.c.bf16 %v2969, %v2969
    %v4024 = vpack.c.bf16 %v2976, %v2976
    %v4025 = vpack.c.bf16 %v2983, %v2983
    %v4026 = vpack.c.bf16 %v2990, %v2990
    %v4027 = vpack.c.bf16 %v2997, %v2997
    %v4028 = vpack.c.bf16 %v3004, %v3004
    %v4029 = vpack.c.bf16 %v3011, %v3011
    %v4030 = vpack.c.bf16 %v3018, %v3018
    %v4031 = vpack.c.bf16 %v3025, %v3025
    %v4032 = vpack.c.bf16 %v3032, %v3032
    %v4033 = vpack.c.bf16 %v3039, %v3039
    %v4034 = vpack.c.bf16 %v3046, %v3046
    %v4035 = vpack.c.bf16 %v3053, %v3053
    %v4036 = vpack.c.bf16 %v3060, %v3060
    %v4037 = vpack.c.bf16 %v3067, %v3067
    %v4038 = vpack.c.bf16 %v3074, %v3074
    %v4039 = vpack.c.bf16 %v3081, %v3081
    %v4040 = vpack.c.bf16 %v3088, %v3088
    %v4041 = vpack.c.bf16 %v3095, %v3095
    %v4042 = vpack.c.bf16 %v3102, %v3102
    %v4043 = vpack.c.bf16 %v3109, %v3109
    %v4044 = vpack.c.bf16 %v3116, %v3116
    %v4045 = vpack.c.bf16 %v3123, %v3123
    %v4046 = vpack.c.bf16 %v3130, %v3130
    %v4047 = vpack.c.bf16 %v3137, %v3137
    %v4048 = vpack.c.bf16 %v3144, %v3144
    %v4049 = vpack.c.bf16 %v3151, %v3151
    %v4050 = vpack.c.bf16 %v3158, %v3158
    %v4051 = vpack.c.bf16 %v3165, %v3165
    %v4052 = vpack.c.bf16 %v3172, %v3172
    %v4053 = vpack.c.bf16 %v3179, %v3179
    %v4054 = vpack.c.bf16 %v3186, %v3186
    %v4055 = vpack.c.bf16 %v3193, %v3193
    %v4056 = vpack.c.bf16 %v3200, %v3200
    %v4057 = vpack.c.bf16 %v3207, %v3207
    %v4058 = vpack.c.bf16 %v3214, %v3214
    %v4059 = vpack.c.bf16 %v3221, %v3221
    %v4060 = vpack.c.bf16 %v3228, %v3228
    %v4061 = vpack.c.bf16 %v3235, %v3235
    %v4062 = vpack.c.bf16 %v3242, %v3242
    %v4063 = vpack.c.bf16 %v3249, %v3249
    %v4064 = vpack.c.bf16 %v3256, %v3256
    %v4065 = vpack.c.bf16 %v3263, %v3263
    %v4066 = vpack.c.bf16 %v3270, %v3270
    %v4067 = vpack.c.bf16 %v3277, %v3277
    %v4068 = vpack.c.bf16 %v3284, %v3284
    %v4069 = vpack.c.bf16 %v3291, %v3291
    %v4070 = vpack.c.bf16 %v3298, %v3298
    %v4071 = vpack.c.bf16 %v3305, %v3305
    %v4072 = vpack.c.bf16 %v3312, %v3312
    %v4073 = vpack.c.bf16 %v3319, %v3319
    %v4074 = vpack.c.bf16 %v3326, %v3326
    %v4075 = vpack.c.bf16 %v3333, %v3333
    %v4076 = vpack.c.bf16 %v3340, %v3340
    %v4077 = vpack.c.bf16 %v3347, %v3347
    %v4078 = vpack.c.bf16 %v3354, %v3354
    %v4079 = vpack.c.bf16 %v3361, %v3361
    %v4080 = vpack.c.bf16 %v3368, %v3368
    %v4081 = vpack.c.bf16 %v3375, %v3375
    %v4082 = vpack.c.bf16 %v3382, %v3382
    %v4083 = vpack.c.bf16 %v3389, %v3389
    %v4084 = vpack.c.bf16 %v3396, %v3396
    %v4085 = vpack.c.bf16 %v3403, %v3403
    %v4086 = vpack.c.bf16 %v3410, %v3410
    %v4087 = vpack.c.bf16 %v3417, %v3417
    %v4088 = vpack.c.bf16 %v3424, %v3424
    %v4089 = vpack.c.bf16 %v3431, %v3431
    %v4090 = vpack.c.bf16 %v3438, %v3438
    %v4091 = vpack.c.bf16 %v3445, %v3445
    %v4092 = vpack.c.bf16 %v3452, %v3452
    %v4093 = vpack.c.bf16 %v3459, %v3459
    %v4094 = vpack.c.bf16 %v3466, %v3466
    %v4095 = vpack.c.bf16 %v3473, %v3473
    %v4096 = vpack.c.bf16 %v3480, %v3480
    %v4097 = vpack.c.bf16 %v3487, %v3487
    %v4098 = vpack.c.bf16 %v3494, %v3494
    %v4099 = vpack.c.bf16 %v3501, %v3501
    %v4100 = vpack.c.bf16 %v3508, %v3508
    %v4101 = vpack.c.bf16 %v3515, %v3515
    %v4102 = vpack.c.bf16 %v3522, %v3522
    %v4103 = vpack.c.bf16 %v3529, %v3529
    %v4104 = vpack.c.bf16 %v3536, %v3536
    %v4105 = vpack.c.bf16 %v3543, %v3543
    %v4106 = vpack.c.bf16 %v3550, %v3550
    %v4107 = vpack.c.bf16 %v3557, %v3557
    %v4108 = vpack.c.bf16 %v3564, %v3564
    %v4109 = vpack.c.bf16 %v3571, %v3571
    %v4110 = vpack.c.bf16 %v3578, %v3578
    %v4111 = vpack.c.bf16 %v3585, %v3585
    %v4112 = vpack.c.bf16 %v3592, %v3592
    %v4113 = vpack.c.bf16 %v3599, %v3599
    %v4114 = vpack.c.bf16 %v3606, %v3606
    %v4115 = vpack.c.bf16 %v3613, %v3613
    %v4116 = vpack.c.bf16 %v3620, %v3620
    %v4117 = vpack.c.bf16 %v3627, %v3627
    %v4118 = vpack.c.bf16 %v3634, %v3634
    %v4119 = vpack.c.bf16 %v3641, %v3641
    %v4120 = vpack.c.bf16 %v3648, %v3648
    %v4121 = vpack.c.bf16 %v3655, %v3655
    %v4122 = vpack.c.bf16 %v3662, %v3662
    %v4123 = vpack.c.bf16 %v3669, %v3669
    %v4124 = vpack.c.bf16 %v3676, %v3676
    %v4125 = vpack.c.bf16 %v3683, %v3683
    %v4126 = vpack.c.bf16 %v3690, %v3690
    %v4127 = vpack.c.bf16 %v3697, %v3697
    %v4128 = vpack.c.bf16 %v3704, %v3704
    %v4129 = vpack.c.bf16 %v3711, %v3711
    %v4130 = vpack.c.bf16 %v3718, %v3718
    %v4131 = vpack.c.bf16 %v3725, %v3725
    %v4132 = vpack.c.bf16 %v3732, %v3732
    %v4133 = vpack.c.bf16 %v3739, %v3739
    %v4134 = vpack.c.bf16 %v3746, %v3746
    %v4135 = vpack.c.bf16 %v3753, %v3753
    %v4136 = vpack.c.bf16 %v3760, %v3760
    %v4137 = vpack.c.bf16 %v3767, %v3767
    %v4138 = vpack.c.bf16 %v3774, %v3774
    %v4139 = vpack.c.bf16 %v3781, %v3781
    %v4140 = vpack.c.bf16 %v3788, %v3788
    %v4141 = vpack.c.bf16 %v3795, %v3795
    %v4142 = vpack.c.bf16 %v3802, %v3802
    %v4143 = vpack.c.bf16 %v3809, %v3809
    %v4144 = vpack.c.bf16 %v3816, %v3816
    %v4145 = vpack.c.bf16 %v3823, %v3823
    %v4146 = vpack.c.bf16 %v3830, %v3830
    %v4147 = vpack.c.bf16 %v3837, %v3837
    %v4148 = vpack.c.bf16 %v3844, %v3844
    %v4149 = vpack.c.bf16 %v3851, %v3851
    %v4150 = vpack.c.bf16 %v3858, %v3858
    %v4151 = vpack.c.bf16 %v3865, %v3865
    %v4152 = vpack.c.bf16 %v3872, %v3872
    %v4153 = vpack.c.bf16 %v3879, %v3879
    %v4154 = vpack.c.bf16 %v3886, %v3886
    %v4155 = vpack.c.bf16 %v3893, %v3893
    %v4156 = vpack.c.bf16 %v3900, %v3900
    %v4157 = vld [vmem:[#allocation8] sm:$0xf]
    %v4158 = vld [vmem:[#allocation8 + $0x4] sm:$0xf]
    %v4159 = vld [vmem:[#allocation8 + $0x8] sm:$0xf]
    %v4160 = vld [vmem:[#allocation8 + $0xc] sm:$0xf]
    %v4161 = vld [vmem:[#allocation8 + $0x10] sm:$0xf]
    %v4162 = vld [vmem:[#allocation8 + $0x14] sm:$0xf]
    %v4163 = vld [vmem:[#allocation8 + $0x18] sm:$0xf]
    %v4164 = vld [vmem:[#allocation8 + $0x1c] sm:$0xf]
    %v4165 = vld [vmem:[#allocation9] sm:$0x1]
    %v4167 = vperm.slane %v4165, 0
    %v4425 = vunpack.c.l.b16 %v3901
    %v4426 = vunpack.c.l.b16 %v3902
    %v4427 = vunpack.c.l.b16 %v3903
    %v4428 = vunpack.c.l.b16 %v3904
    %v4429 = vunpack.c.l.b16 %v3905
    %v4430 = vunpack.c.l.b16 %v3906
    %v4431 = vunpack.c.l.b16 %v3907
    %v4432 = vunpack.c.l.b16 %v3908
    %v4433 = vunpack.c.l.b16 %v3909
    %v4434 = vunpack.c.l.b16 %v3910
    %v4435 = vunpack.c.l.b16 %v3911
    %v4436 = vunpack.c.l.b16 %v3912
    %v4437 = vunpack.c.l.b16 %v3913
    %v4438 = vunpack.c.l.b16 %v3914
    %v4439 = vunpack.c.l.b16 %v3915
    %v4440 = vunpack.c.l.b16 %v3916
    %v4441 = vunpack.c.l.b16 %v3917
    %v4442 = vunpack.c.l.b16 %v3918
    %v4443 = vunpack.c.l.b16 %v3919
    %v4444 = vunpack.c.l.b16 %v3920
    %v4445 = vunpack.c.l.b16 %v3921
    %v4446 = vunpack.c.l.b16 %v3922
    %v4447 = vunpack.c.l.b16 %v3923
    %v4448 = vunpack.c.l.b16 %v3924
    %v4449 = vunpack.c.l.b16 %v3925
    %v4450 = vunpack.c.l.b16 %v3926
    %v4451 = vunpack.c.l.b16 %v3927
    %v4452 = vunpack.c.l.b16 %v3928
    %v4453 = vunpack.c.l.b16 %v3929
    %v4454 = vunpack.c.l.b16 %v3930
    %v4455 = vunpack.c.l.b16 %v3931
    %v4456 = vunpack.c.l.b16 %v3932
    %v4457 = vunpack.c.l.b16 %v3933
    %v4458 = vunpack.c.l.b16 %v3934
    %v4459 = vunpack.c.l.b16 %v3935
    %v4460 = vunpack.c.l.b16 %v3936
    %v4461 = vunpack.c.l.b16 %v3937
    %v4462 = vunpack.c.l.b16 %v3938
    %v4463 = vunpack.c.l.b16 %v3939
    %v4464 = vunpack.c.l.b16 %v3940
    %v4465 = vunpack.c.l.b16 %v3941
    %v4466 = vunpack.c.l.b16 %v3942
    %v4467 = vunpack.c.l.b16 %v3943
    %v4468 = vunpack.c.l.b16 %v3944
    %v4469 = vunpack.c.l.b16 %v3945
    %v4470 = vunpack.c.l.b16 %v3946
    %v4471 = vunpack.c.l.b16 %v3947
    %v4472 = vunpack.c.l.b16 %v3948
    %v4473 = vunpack.c.l.b16 %v3949
    %v4474 = vunpack.c.l.b16 %v3950
    %v4475 = vunpack.c.l.b16 %v3951
    %v4476 = vunpack.c.l.b16 %v3952
    %v4477 = vunpack.c.l.b16 %v3953
    %v4478 = vunpack.c.l.b16 %v3954
    %v4479 = vunpack.c.l.b16 %v3955
    %v4480 = vunpack.c.l.b16 %v3956
    %v4481 = vunpack.c.l.b16 %v3957
    %v4482 = vunpack.c.l.b16 %v3958
    %v4483 = vunpack.c.l.b16 %v3959
    %v4484 = vunpack.c.l.b16 %v3960
    %v4485 = vunpack.c.l.b16 %v3961
    %v4486 = vunpack.c.l.b16 %v3962
    %v4487 = vunpack.c.l.b16 %v3963
    %v4488 = vunpack.c.l.b16 %v3964
    %v4489 = vunpack.c.l.b16 %v3965
    %v4490 = vunpack.c.l.b16 %v3966
    %v4491 = vunpack.c.l.b16 %v3967
    %v4492 = vunpack.c.l.b16 %v3968
    %v4493 = vunpack.c.l.b16 %v3969
    %v4494 = vunpack.c.l.b16 %v3970
    %v4495 = vunpack.c.l.b16 %v3971
    %v4496 = vunpack.c.l.b16 %v3972
    %v4497 = vunpack.c.l.b16 %v3973
    %v4498 = vunpack.c.l.b16 %v3974
    %v4499 = vunpack.c.l.b16 %v3975
    %v4500 = vunpack.c.l.b16 %v3976
    %v4501 = vunpack.c.l.b16 %v3977
    %v4502 = vunpack.c.l.b16 %v3978
    %v4503 = vunpack.c.l.b16 %v3979
    %v4504 = vunpack.c.l.b16 %v3980
    %v4505 = vunpack.c.l.b16 %v3981
    %v4506 = vunpack.c.l.b16 %v3982
    %v4507 = vunpack.c.l.b16 %v3983
    %v4508 = vunpack.c.l.b16 %v3984
    %v4509 = vunpack.c.l.b16 %v3985
    %v4510 = vunpack.c.l.b16 %v3986
    %v4511 = vunpack.c.l.b16 %v3987
    %v4512 = vunpack.c.l.b16 %v3988
    %v4513 = vunpack.c.l.b16 %v3989
    %v4514 = vunpack.c.l.b16 %v3990
    %v4515 = vunpack.c.l.b16 %v3991
    %v4516 = vunpack.c.l.b16 %v3992
    %v4517 = vunpack.c.l.b16 %v3993
    %v4518 = vunpack.c.l.b16 %v3994
    %v4519 = vunpack.c.l.b16 %v3995
    %v4520 = vunpack.c.l.b16 %v3996
    %v4521 = vunpack.c.l.b16 %v3997
    %v4522 = vunpack.c.l.b16 %v3998
    %v4523 = vunpack.c.l.b16 %v3999
    %v4524 = vunpack.c.l.b16 %v4000
    %v4525 = vunpack.c.l.b16 %v4001
    %v4526 = vunpack.c.l.b16 %v4002
    %v4527 = vunpack.c.l.b16 %v4003
    %v4528 = vunpack.c.l.b16 %v4004
    %v4529 = vunpack.c.l.b16 %v4005
    %v4530 = vunpack.c.l.b16 %v4006
    %v4531 = vunpack.c.l.b16 %v4007
    %v4532 = vunpack.c.l.b16 %v4008
    %v4533 = vunpack.c.l.b16 %v4009
    %v4534 = vunpack.c.l.b16 %v4010
    %v4535 = vunpack.c.l.b16 %v4011
    %v4536 = vunpack.c.l.b16 %v4012
    %v4537 = vunpack.c.l.b16 %v4013
    %v4538 = vunpack.c.l.b16 %v4014
    %v4539 = vunpack.c.l.b16 %v4015
    %v4540 = vunpack.c.l.b16 %v4016
    %v4541 = vunpack.c.l.b16 %v4017
    %v4542 = vunpack.c.l.b16 %v4018
    %v4543 = vunpack.c.l.b16 %v4019
    %v4544 = vunpack.c.l.b16 %v4020
    %v4545 = vunpack.c.l.b16 %v4021
    %v4546 = vunpack.c.l.b16 %v4022
    %v4547 = vunpack.c.l.b16 %v4023
    %v4548 = vunpack.c.l.b16 %v4024
    %v4549 = vunpack.c.l.b16 %v4025
    %v4550 = vunpack.c.l.b16 %v4026
    %v4551 = vunpack.c.l.b16 %v4027
    %v4552 = vunpack.c.l.b16 %v4028
    %v4553 = vunpack.c.l.b16 %v4029
    %v4554 = vunpack.c.l.b16 %v4030
    %v4555 = vunpack.c.l.b16 %v4031
    %v4556 = vunpack.c.l.b16 %v4032
    %v4557 = vunpack.c.l.b16 %v4033
    %v4558 = vunpack.c.l.b16 %v4034
    %v4559 = vunpack.c.l.b16 %v4035
    %v4560 = vunpack.c.l.b16 %v4036
    %v4561 = vunpack.c.l.b16 %v4037
    %v4562 = vunpack.c.l.b16 %v4038
    %v4563 = vunpack.c.l.b16 %v4039
    %v4564 = vunpack.c.l.b16 %v4040
    %v4565 = vunpack.c.l.b16 %v4041
    %v4566 = vunpack.c.l.b16 %v4042
    %v4567 = vunpack.c.l.b16 %v4043
    %v4568 = vunpack.c.l.b16 %v4044
    %v4569 = vunpack.c.l.b16 %v4045
    %v4570 = vunpack.c.l.b16 %v4046
    %v4571 = vunpack.c.l.b16 %v4047
    %v4572 = vunpack.c.l.b16 %v4048
    %v4573 = vunpack.c.l.b16 %v4049
    %v4574 = vunpack.c.l.b16 %v4050
    %v4575 = vunpack.c.l.b16 %v4051
    %v4576 = vunpack.c.l.b16 %v4052
    %v4577 = vunpack.c.l.b16 %v4053
    %v4578 = vunpack.c.l.b16 %v4054
    %v4579 = vunpack.c.l.b16 %v4055
    %v4580 = vunpack.c.l.b16 %v4056
    %v4581 = vunpack.c.l.b16 %v4057
    %v4582 = vunpack.c.l.b16 %v4058
    %v4583 = vunpack.c.l.b16 %v4059
    %v4584 = vunpack.c.l.b16 %v4060
    %v4585 = vunpack.c.l.b16 %v4061
    %v4586 = vunpack.c.l.b16 %v4062
    %v4587 = vunpack.c.l.b16 %v4063
    %v4588 = vunpack.c.l.b16 %v4064
    %v4589 = vunpack.c.l.b16 %v4065
    %v4590 = vunpack.c.l.b16 %v4066
    %v4591 = vunpack.c.l.b16 %v4067
    %v4592 = vunpack.c.l.b16 %v4068
    %v4593 = vunpack.c.l.b16 %v4069
    %v4594 = vunpack.c.l.b16 %v4070
    %v4595 = vunpack.c.l.b16 %v4071
    %v4596 = vunpack.c.l.b16 %v4072
    %v4597 = vunpack.c.l.b16 %v4073
    %v4598 = vunpack.c.l.b16 %v4074
    %v4599 = vunpack.c.l.b16 %v4075
    %v4600 = vunpack.c.l.b16 %v4076
    %v4601 = vunpack.c.l.b16 %v4077
    %v4602 = vunpack.c.l.b16 %v4078
    %v4603 = vunpack.c.l.b16 %v4079
    %v4604 = vunpack.c.l.b16 %v4080
    %v4605 = vunpack.c.l.b16 %v4081
    %v4606 = vunpack.c.l.b16 %v4082
    %v4607 = vunpack.c.l.b16 %v4083
    %v4608 = vunpack.c.l.b16 %v4084
    %v4609 = vunpack.c.l.b16 %v4085
    %v4610 = vunpack.c.l.b16 %v4086
    %v4611 = vunpack.c.l.b16 %v4087
    %v4612 = vunpack.c.l.b16 %v4088
    %v4613 = vunpack.c.l.b16 %v4089
    %v4614 = vunpack.c.l.b16 %v4090
    %v4615 = vunpack.c.l.b16 %v4091
    %v4616 = vunpack.c.l.b16 %v4092
    %v4617 = vunpack.c.l.b16 %v4093
    %v4618 = vunpack.c.l.b16 %v4094
    %v4619 = vunpack.c.l.b16 %v4095
    %v4620 = vunpack.c.l.b16 %v4096
    %v4621 = vunpack.c.l.b16 %v4097
    %v4622 = vunpack.c.l.b16 %v4098
    %v4623 = vunpack.c.l.b16 %v4099
    %v4624 = vunpack.c.l.b16 %v4100
    %v4625 = vunpack.c.l.b16 %v4101
    %v4626 = vunpack.c.l.b16 %v4102
    %v4627 = vunpack.c.l.b16 %v4103
    %v4628 = vunpack.c.l.b16 %v4104
    %v4629 = vunpack.c.l.b16 %v4105
    %v4630 = vunpack.c.l.b16 %v4106
    %v4631 = vunpack.c.l.b16 %v4107
    %v4632 = vunpack.c.l.b16 %v4108
    %v4633 = vunpack.c.l.b16 %v4109
    %v4634 = vunpack.c.l.b16 %v4110
    %v4635 = vunpack.c.l.b16 %v4111
    %v4636 = vunpack.c.l.b16 %v4112
    %v4637 = vunpack.c.l.b16 %v4113
    %v4638 = vunpack.c.l.b16 %v4114
    %v4639 = vunpack.c.l.b16 %v4115
    %v4640 = vunpack.c.l.b16 %v4116
    %v4641 = vunpack.c.l.b16 %v4117
    %v4642 = vunpack.c.l.b16 %v4118
    %v4643 = vunpack.c.l.b16 %v4119
    %v4644 = vunpack.c.l.b16 %v4120
    %v4645 = vunpack.c.l.b16 %v4121
    %v4646 = vunpack.c.l.b16 %v4122
    %v4647 = vunpack.c.l.b16 %v4123
    %v4648 = vunpack.c.l.b16 %v4124
    %v4649 = vunpack.c.l.b16 %v4125
    %v4650 = vunpack.c.l.b16 %v4126
    %v4651 = vunpack.c.l.b16 %v4127
    %v4652 = vunpack.c.l.b16 %v4128
    %v4653 = vunpack.c.l.b16 %v4129
    %v4654 = vunpack.c.l.b16 %v4130
    %v4655 = vunpack.c.l.b16 %v4131
    %v4656 = vunpack.c.l.b16 %v4132
    %v4657 = vunpack.c.l.b16 %v4133
    %v4658 = vunpack.c.l.b16 %v4134
    %v4659 = vunpack.c.l.b16 %v4135
    %v4660 = vunpack.c.l.b16 %v4136
    %v4661 = vunpack.c.l.b16 %v4137
    %v4662 = vunpack.c.l.b16 %v4138
    %v4663 = vunpack.c.l.b16 %v4139
    %v4664 = vunpack.c.l.b16 %v4140
    %v4665 = vunpack.c.l.b16 %v4141
    %v4666 = vunpack.c.l.b16 %v4142
    %v4667 = vunpack.c.l.b16 %v4143
    %v4668 = vunpack.c.l.b16 %v4144
    %v4669 = vunpack.c.l.b16 %v4145
    %v4670 = vunpack.c.l.b16 %v4146
    %v4671 = vunpack.c.l.b16 %v4147
    %v4672 = vunpack.c.l.b16 %v4148
    %v4673 = vunpack.c.l.b16 %v4149
    %v4674 = vunpack.c.l.b16 %v4150
    %v4675 = vunpack.c.l.b16 %v4151
    %v4676 = vunpack.c.l.b16 %v4152
    %v4677 = vunpack.c.l.b16 %v4153
    %v4678 = vunpack.c.l.b16 %v4154
    %v4679 = vunpack.c.l.b16 %v4155
    %v4680 = vunpack.c.l.b16 %v4156
    %vm4681 = vcmask 1041409
    %v4682 = vsel %vm4681, %v4426, %v4425
    %vm4683 = vcmask 1042434
    %v4684 = vsel %vm4683, %v4427, %v4682
    %vm4685 = vcmask 1043459
    %v4686 = vsel %vm4685, %v4428, %v4684
    %vm4687 = vcmask 1044484
    %v4688 = vsel %vm4687, %v4429, %v4686
    %vm4689 = vcmask 1045509
    %v4690 = vsel %vm4689, %v4430, %v4688
    %vm4691 = vcmask 1046534
    %v4692 = vsel %vm4691, %v4431, %v4690
    %vm4693 = vcmask 1047559
    %v4694 = vsel %vm4693, %v4432, %v4692
    %v4695 = vsel %vm4681, %v4434, %v4433
    %v4696 = vsel %vm4683, %v4435, %v4695
    %v4697 = vsel %vm4685, %v4436, %v4696
    %v4698 = vsel %vm4687, %v4437, %v4697
    %v4699 = vsel %vm4689, %v4438, %v4698
    %v4700 = vsel %vm4691, %v4439, %v4699
    %v4701 = vsel %vm4693, %v4440, %v4700
    %v4702 = vsel %vm4681, %v4442, %v4441
    %v4703 = vsel %vm4683, %v4443, %v4702
    %v4704 = vsel %vm4685, %v4444, %v4703
    %v4705 = vsel %vm4687, %v4445, %v4704
    %v4706 = vsel %vm4689, %v4446, %v4705
    %v4707 = vsel %vm4691, %v4447, %v4706
    %v4708 = vsel %vm4693, %v4448, %v4707
    %v4709 = vsel %vm4681, %v4450, %v4449
    %v4710 = vsel %vm4683, %v4451, %v4709
    %v4711 = vsel %vm4685, %v4452, %v4710
    %v4712 = vsel %vm4687, %v4453, %v4711
    %v4713 = vsel %vm4689, %v4454, %v4712
    %v4714 = vsel %vm4691, %v4455, %v4713
    %v4715 = vsel %vm4693, %v4456, %v4714
    %v4716 = vsel %vm4681, %v4458, %v4457
    %v4717 = vsel %vm4683, %v4459, %v4716
    %v4718 = vsel %vm4685, %v4460, %v4717
    %v4719 = vsel %vm4687, %v4461, %v4718
    %v4720 = vsel %vm4689, %v4462, %v4719
    %v4721 = vsel %vm4691, %v4463, %v4720
    %v4722 = vsel %vm4693, %v4464, %v4721
    %v4723 = vsel %vm4681, %v4466, %v4465
    %v4724 = vsel %vm4683, %v4467, %v4723
    %v4725 = vsel %vm4685, %v4468, %v4724
    %v4726 = vsel %vm4687, %v4469, %v4725
    %v4727 = vsel %vm4689, %v4470, %v4726
    %v4728 = vsel %vm4691, %v4471, %v4727
    %v4729 = vsel %vm4693, %v4472, %v4728
    %v4730 = vsel %vm4681, %v4474, %v4473
    %v4731 = vsel %vm4683, %v4475, %v4730
    %v4732 = vsel %vm4685, %v4476, %v4731
    %v4733 = vsel %vm4687, %v4477, %v4732
    %v4734 = vsel %vm4689, %v4478, %v4733
    %v4735 = vsel %vm4691, %v4479, %v4734
    %v4736 = vsel %vm4693, %v4480, %v4735
    %v4737 = vsel %vm4681, %v4482, %v4481
    %v4738 = vsel %vm4683, %v4483, %v4737
    %v4739 = vsel %vm4685, %v4484, %v4738
    %v4740 = vsel %vm4687, %v4485, %v4739
    %v4741 = vsel %vm4689, %v4486, %v4740
    %v4742 = vsel %vm4691, %v4487, %v4741
    %v4743 = vsel %vm4693, %v4488, %v4742
    %v4744 = vsel %vm4681, %v4490, %v4489
    %v4745 = vsel %vm4683, %v4491, %v4744
    %v4746 = vsel %vm4685, %v4492, %v4745
    %v4747 = vsel %vm4687, %v4493, %v4746
    %v4748 = vsel %vm4689, %v4494, %v4747
    %v4749 = vsel %vm4691, %v4495, %v4748
    %v4750 = vsel %vm4693, %v4496, %v4749
    %v4751 = vsel %vm4681, %v4498, %v4497
    %v4752 = vsel %vm4683, %v4499, %v4751
    %v4753 = vsel %vm4685, %v4500, %v4752
    %v4754 = vsel %vm4687, %v4501, %v4753
    %v4755 = vsel %vm4689, %v4502, %v4754
    %v4756 = vsel %vm4691, %v4503, %v4755
    %v4757 = vsel %vm4693, %v4504, %v4756
    %v4758 = vsel %vm4681, %v4506, %v4505
    %v4759 = vsel %vm4683, %v4507, %v4758
    %v4760 = vsel %vm4685, %v4508, %v4759
    %v4761 = vsel %vm4687, %v4509, %v4760
    %v4762 = vsel %vm4689, %v4510, %v4761
    %v4763 = vsel %vm4691, %v4511, %v4762
    %v4764 = vsel %vm4693, %v4512, %v4763
    %v4765 = vsel %vm4681, %v4514, %v4513
    %v4766 = vsel %vm4683, %v4515, %v4765
    %v4767 = vsel %vm4685, %v4516, %v4766
    %v4768 = vsel %vm4687, %v4517, %v4767
    %v4769 = vsel %vm4689, %v4518, %v4768
    %v4770 = vsel %vm4691, %v4519, %v4769
    %v4771 = vsel %vm4693, %v4520, %v4770
    %v4772 = vsel %vm4681, %v4522, %v4521
    %v4773 = vsel %vm4683, %v4523, %v4772
    %v4774 = vsel %vm4685, %v4524, %v4773
    %v4775 = vsel %vm4687, %v4525, %v4774
    %v4776 = vsel %vm4689, %v4526, %v4775
    %v4777 = vsel %vm4691, %v4527, %v4776
    %v4778 = vsel %vm4693, %v4528, %v4777
    %v4779 = vsel %vm4681, %v4530, %v4529
    %v4780 = vsel %vm4683, %v4531, %v4779
    %v4781 = vsel %vm4685, %v4532, %v4780
    %v4782 = vsel %vm4687, %v4533, %v4781
    %v4783 = vsel %vm4689, %v4534, %v4782
    %v4784 = vsel %vm4691, %v4535, %v4783
    %v4785 = vsel %vm4693, %v4536, %v4784
    %v4786 = vsel %vm4681, %v4538, %v4537
    %v4787 = vsel %vm4683, %v4539, %v4786
    %v4788 = vsel %vm4685, %v4540, %v4787
    %v4789 = vsel %vm4687, %v4541, %v4788
    %v4790 = vsel %vm4689, %v4542, %v4789
    %v4791 = vsel %vm4691, %v4543, %v4790
    %v4792 = vsel %vm4693, %v4544, %v4791
    %v4793 = vsel %vm4681, %v4546, %v4545
    %v4794 = vsel %vm4683, %v4547, %v4793
    %v4795 = vsel %vm4685, %v4548, %v4794
    %v4796 = vsel %vm4687, %v4549, %v4795
    %v4797 = vsel %vm4689, %v4550, %v4796
    %v4798 = vsel %vm4691, %v4551, %v4797
    %v4799 = vsel %vm4693, %v4552, %v4798
    %v4800 = vsel %vm4681, %v4554, %v4553
    %v4801 = vsel %vm4683, %v4555, %v4800
    %v4802 = vsel %vm4685, %v4556, %v4801
    %v4803 = vsel %vm4687, %v4557, %v4802
    %v4804 = vsel %vm4689, %v4558, %v4803
    %v4805 = vsel %vm4691, %v4559, %v4804
    %v4806 = vsel %vm4693, %v4560, %v4805
    %v4807 = vsel %vm4681, %v4562, %v4561
    %v4808 = vsel %vm4683, %v4563, %v4807
    %v4809 = vsel %vm4685, %v4564, %v4808
    %v4810 = vsel %vm4687, %v4565, %v4809
    %v4811 = vsel %vm4689, %v4566, %v4810
    %v4812 = vsel %vm4691, %v4567, %v4811
    %v4813 = vsel %vm4693, %v4568, %v4812
    %v4814 = vsel %vm4681, %v4570, %v4569
    %v4815 = vsel %vm4683, %v4571, %v4814
    %v4816 = vsel %vm4685, %v4572, %v4815
    %v4817 = vsel %vm4687, %v4573, %v4816
    %v4818 = vsel %vm4689, %v4574, %v4817
    %v4819 = vsel %vm4691, %v4575, %v4818
    %v4820 = vsel %vm4693, %v4576, %v4819
    %v4821 = vsel %vm4681, %v4578, %v4577
    %v4822 = vsel %vm4683, %v4579, %v4821
    %v4823 = vsel %vm4685, %v4580, %v4822
    %v4824 = vsel %vm4687, %v4581, %v4823
    %v4825 = vsel %vm4689, %v4582, %v4824
    %v4826 = vsel %vm4691, %v4583, %v4825
    %v4827 = vsel %vm4693, %v4584, %v4826
    %v4828 = vsel %vm4681, %v4586, %v4585
    %v4829 = vsel %vm4683, %v4587, %v4828
    %v4830 = vsel %vm4685, %v4588, %v4829
    %v4831 = vsel %vm4687, %v4589, %v4830
    %v4832 = vsel %vm4689, %v4590, %v4831
    %v4833 = vsel %vm4691, %v4591, %v4832
    %v4834 = vsel %vm4693, %v4592, %v4833
    %v4835 = vsel %vm4681, %v4594, %v4593
    %v4836 = vsel %vm4683, %v4595, %v4835
    %v4837 = vsel %vm4685, %v4596, %v4836
    %v4838 = vsel %vm4687, %v4597, %v4837
    %v4839 = vsel %vm4689, %v4598, %v4838
    %v4840 = vsel %vm4691, %v4599, %v4839
    %v4841 = vsel %vm4693, %v4600, %v4840
    %v4842 = vsel %vm4681, %v4602, %v4601
    %v4843 = vsel %vm4683, %v4603, %v4842
    %v4844 = vsel %vm4685, %v4604, %v4843
    %v4845 = vsel %vm4687, %v4605, %v4844
    %v4846 = vsel %vm4689, %v4606, %v4845
    %v4847 = vsel %vm4691, %v4607, %v4846
    %v4848 = vsel %vm4693, %v4608, %v4847
    %v4849 = vsel %vm4681, %v4610, %v4609
    %v4850 = vsel %vm4683, %v4611, %v4849
    %v4851 = vsel %vm4685, %v4612, %v4850
    %v4852 = vsel %vm4687, %v4613, %v4851
    %v4853 = vsel %vm4689, %v4614, %v4852
    %v4854 = vsel %vm4691, %v4615, %v4853
    %v4855 = vsel %vm4693, %v4616, %v4854
    %v4856 = vsel %vm4681, %v4618, %v4617
    %v4857 = vsel %vm4683, %v4619, %v4856
    %v4858 = vsel %vm4685, %v4620, %v4857
    %v4859 = vsel %vm4687, %v4621, %v4858
    %v4860 = vsel %vm4689, %v4622, %v4859
    %v4861 = vsel %vm4691, %v4623, %v4860
    %v4862 = vsel %vm4693, %v4624, %v4861
    %v4863 = vsel %vm4681, %v4626, %v4625
    %v4864 = vsel %vm4683, %v4627, %v4863
    %v4865 = vsel %vm4685, %v4628, %v4864
    %v4866 = vsel %vm4687, %v4629, %v4865
    %v4867 = vsel %vm4689, %v4630, %v4866
    %v4868 = vsel %vm4691, %v4631, %v4867
    %v4869 = vsel %vm4693, %v4632, %v4868
    %v4870 = vsel %vm4681, %v4634, %v4633
    %v4871 = vsel %vm4683, %v4635, %v4870
    %v4872 = vsel %vm4685, %v4636, %v4871
    %v4873 = vsel %vm4687, %v4637, %v4872
    %v4874 = vsel %vm4689, %v4638, %v4873
    %v4875 = vsel %vm4691, %v4639, %v4874
    %v4876 = vsel %vm4693, %v4640, %v4875
    %v4877 = vsel %vm4681, %v4642, %v4641
    %v4878 = vsel %vm4683, %v4643, %v4877
    %v4879 = vsel %vm4685, %v4644, %v4878
    %v4880 = vsel %vm4687, %v4645, %v4879
    %v4881 = vsel %vm4689, %v4646, %v4880
    %v4882 = vsel %vm4691, %v4647, %v4881
    %v4883 = vsel %vm4693, %v4648, %v4882
    %v4884 = vsel %vm4681, %v4650, %v4649
    %v4885 = vsel %vm4683, %v4651, %v4884
    %v4886 = vsel %vm4685, %v4652, %v4885
    %v4887 = vsel %vm4687, %v4653, %v4886
    %v4888 = vsel %vm4689, %v4654, %v4887
    %v4889 = vsel %vm4691, %v4655, %v4888
    %v4890 = vsel %vm4693, %v4656, %v4889
    %v4891 = vsel %vm4681, %v4658, %v4657
    %v4892 = vsel %vm4683, %v4659, %v4891
    %v4893 = vsel %vm4685, %v4660, %v4892
    %v4894 = vsel %vm4687, %v4661, %v4893
    %v4895 = vsel %vm4689, %v4662, %v4894
    %v4896 = vsel %vm4691, %v4663, %v4895
    %v4897 = vsel %vm4693, %v4664, %v4896
    %v4898 = vsel %vm4681, %v4666, %v4665
    %v4899 = vsel %vm4683, %v4667, %v4898
    %v4900 = vsel %vm4685, %v4668, %v4899
    %v4901 = vsel %vm4687, %v4669, %v4900
    %v4902 = vsel %vm4689, %v4670, %v4901
    %v4903 = vsel %vm4691, %v4671, %v4902
    %v4904 = vsel %vm4693, %v4672, %v4903
    %v4905 = vsel %vm4681, %v4674, %v4673
    %v4906 = vsel %vm4683, %v4675, %v4905
    %v4907 = vsel %vm4685, %v4676, %v4906
    %v4908 = vsel %vm4687, %v4677, %v4907
    %v4909 = vsel %vm4689, %v4678, %v4908
    %v4910 = vsel %vm4691, %v4679, %v4909
    %v4911 = vsel %vm4693, %v4680, %v4910
    %v4912 = vpack.c.b16 %v4701, %v4694
    %v4913 = vpack.c.b16 %v4715, %v4708
    %v4914 = vpack.c.b16 %v4729, %v4722
    %v4915 = vpack.c.b16 %v4743, %v4736
    %v4916 = vpack.c.b16 %v4757, %v4750
    %v4917 = vpack.c.b16 %v4771, %v4764
    %v4918 = vpack.c.b16 %v4785, %v4778
    %v4919 = vpack.c.b16 %v4799, %v4792
    %v4920 = vpack.c.b16 %v4813, %v4806
    %v4921 = vpack.c.b16 %v4827, %v4820
    %v4922 = vpack.c.b16 %v4841, %v4834
    %v4923 = vpack.c.b16 %v4855, %v4848
    %v4924 = vpack.c.b16 %v4869, %v4862
    %v4925 = vpack.c.b16 %v4883, %v4876
    %v4926 = vpack.c.b16 %v4897, %v4890
    %v4927 = vpack.c.b16 %v4911, %v4904
    %v4936 = vunpack.c.l.b16 %v4157
    %v4937 = vunpack.c.l.b16 %v4158
    %v4938 = vunpack.c.l.b16 %v4159
    %v4939 = vunpack.c.l.b16 %v4160
    %v4940 = vunpack.c.l.b16 %v4161
    %v4941 = vunpack.c.l.b16 %v4162
    %v4942 = vunpack.c.l.b16 %v4163
    %v4943 = vunpack.c.l.b16 %v4164
    %v4944 = vpack.c.b16 %v4937, %v4936
    %v4945 = vpack.c.b16 %v4939, %v4938
    %v4946 = vpack.c.b16 %v4941, %v4940
    %v4947 = vpack.c.b16 %v4943, %v4942
    %v4953 = vsel %vm1467, %v4912, 0
    %v4956 = vsel %vm1467, %v4913, 0
    %v4959 = vsel %vm1467, %v4914, 0
    %v4962 = vsel %vm1467, %v4915, 0
    %v4965 = vsel %vm1467, %v4916, 0
    %v4968 = vsel %vm1467, %v4917, 0
    %v4971 = vsel %vm1467, %v4918, 0
    %v4974 = vsel %vm1467, %v4919, 0
    %v4977 = vsel %vm1467, %v4920, 0
    %v4980 = vsel %vm1467, %v4921, 0
    %v4983 = vsel %vm1467, %v4922, 0
    %v4986 = vsel %vm1467, %v4923, 0
    %v4989 = vsel %vm1467, %v4924, 0
    %v4992 = vsel %vm1467, %v4925, 0
    %v4995 = vsel %vm1467, %v4926, 0
    %v4998 = vsel %vm1467, %v4927, 0
    %5000 = vmatpush.bf16.msra.mxu0 0
    %5001 = vmatpush.bf16.msra.mxu0 0
    %5002 = vmatpush.bf16.msra.mxu0 0
    %5003 = vmatpush.bf16.msra.mxu0 0
    %5004 = vmatpush.bf16.msra.mxu0 %v4947
    %5005 = vmatpush.bf16.msra.mxu0 %v4946
    %5006 = vmatpush.bf16.msra.mxu0 %v4945
    %5007 = vmatpush.bf16.msra.mxu0 %v4944
    %5008 = vmatmul.bf16.gmra.mxu0 %v4953
    %v5009 = vpop.f32.mrf.mxu0
    %v5010 = vadd.f32 %v4167, %v5009
    %v5011 = vpop.f32.mrf.mxu0
    %v5012 = vadd.f32 %v4167, %v5011
    %5013 = vmatmul.bf16.gmra.mxu0 %v4956
    %v5014 = vpop.f32.mrf.mxu0
    %v5015 = vadd.f32 %v4167, %v5014
    %v5016 = vpop.f32.mrf.mxu0
    %v5017 = vadd.f32 %v4167, %v5016
    %5018 = vmatmul.bf16.gmra.mxu0 %v4959
    %v5019 = vpop.f32.mrf.mxu0
    %v5020 = vadd.f32 %v4167, %v5019
    %v5021 = vpop.f32.mrf.mxu0
    %v5022 = vadd.f32 %v4167, %v5021
    %5023 = vmatmul.bf16.gmra.mxu0 %v4962
    %v5024 = vpop.f32.mrf.mxu0
    %v5025 = vadd.f32 %v4167, %v5024
    %v5026 = vpop.f32.mrf.mxu0
    %v5027 = vadd.f32 %v4167, %v5026
    %5028 = vmatmul.bf16.gmra.mxu0 %v4965
    %v5029 = vpop.f32.mrf.mxu0
    %v5030 = vadd.f32 %v4167, %v5029
    %v5031 = vpop.f32.mrf.mxu0
    %v5032 = vadd.f32 %v4167, %v5031
    %5033 = vmatmul.bf16.gmra.mxu0 %v4968
    %v5034 = vpop.f32.mrf.mxu0
    %v5035 = vadd.f32 %v4167, %v5034
    %v5036 = vpop.f32.mrf.mxu0
    %v5037 = vadd.f32 %v4167, %v5036
    %5038 = vmatmul.bf16.gmra.mxu0 %v4971
    %v5039 = vpop.f32.mrf.mxu0
    %v5040 = vadd.f32 %v4167, %v5039
    %v5041 = vpop.f32.mrf.mxu0
    %v5042 = vadd.f32 %v4167, %v5041
    %5043 = vmatmul.bf16.gmra.mxu0 %v4974
    %v5044 = vpop.f32.mrf.mxu0
    %v5045 = vadd.f32 %v4167, %v5044
    %v5046 = vpop.f32.mrf.mxu0
    %v5047 = vadd.f32 %v4167, %v5046
    %5048 = vmatmul.bf16.gmra.mxu0 %v4977
    %v5049 = vpop.f32.mrf.mxu0
    %v5050 = vadd.f32 %v4167, %v5049
    %v5051 = vpop.f32.mrf.mxu0
    %v5052 = vadd.f32 %v4167, %v5051
    %5053 = vmatmul.bf16.gmra.mxu0 %v4980
    %v5054 = vpop.f32.mrf.mxu0
    %v5055 = vadd.f32 %v4167, %v5054
    %v5056 = vpop.f32.mrf.mxu0
    %v5057 = vadd.f32 %v4167, %v5056
    %5058 = vmatmul.bf16.gmra.mxu0 %v4983
    %v5059 = vpop.f32.mrf.mxu0
    %v5060 = vadd.f32 %v4167, %v5059
    %v5061 = vpop.f32.mrf.mxu0
    %v5062 = vadd.f32 %v4167, %v5061
    %5063 = vmatmul.bf16.gmra.mxu0 %v4986
    %v5064 = vpop.f32.mrf.mxu0
    %v5065 = vadd.f32 %v4167, %v5064
    %v5066 = vpop.f32.mrf.mxu0
    %v5067 = vadd.f32 %v4167, %v5066
    %5068 = vmatmul.bf16.gmra.mxu0 %v4989
    %v5069 = vpop.f32.mrf.mxu0
    %v5070 = vadd.f32 %v4167, %v5069
    %v5071 = vpop.f32.mrf.mxu0
    %v5072 = vadd.f32 %v4167, %v5071
    %5073 = vmatmul.bf16.gmra.mxu0 %v4992
    %v5074 = vpop.f32.mrf.mxu0
    %v5075 = vadd.f32 %v4167, %v5074
    %v5076 = vpop.f32.mrf.mxu0
    %v5077 = vadd.f32 %v4167, %v5076
    %5078 = vmatmul.bf16.gmra.mxu0 %v4995
    %v5079 = vpop.f32.mrf.mxu0
    %v5080 = vadd.f32 %v4167, %v5079
    %v5081 = vpop.f32.mrf.mxu0
    %v5082 = vadd.f32 %v4167, %v5081
    %5083 = vmatmul.bf16.gmra.mxu0 %v4998
    %v5084 = vpop.f32.mrf.mxu0
    %v5085 = vadd.f32 %v4167, %v5084
    %v5086 = vpop.f32.mrf.mxu0
    %v5087 = vadd.f32 %v4167, %v5086
    %5088 = vdwg.mxu0
    %vm5089 = vcmp.gt.f32.partialorder %v5010, 0.0
    %vm5090 = vcmp.gt.f32.partialorder %v5012, 0.0
    %vm5091 = vcmp.gt.f32.partialorder %v5015, 0.0
    %vm5092 = vcmp.gt.f32.partialorder %v5017, 0.0
    %vm5093 = vcmp.gt.f32.partialorder %v5020, 0.0
    %vm5094 = vcmp.gt.f32.partialorder %v5022, 0.0
    %vm5095 = vcmp.gt.f32.partialorder %v5025, 0.0
    %vm5096 = vcmp.gt.f32.partialorder %v5027, 0.0
    %vm5097 = vcmp.gt.f32.partialorder %v5030, 0.0
    %vm5098 = vcmp.gt.f32.partialorder %v5032, 0.0
    %vm5099 = vcmp.gt.f32.partialorder %v5035, 0.0
    %vm5100 = vcmp.gt.f32.partialorder %v5037, 0.0
    %vm5101 = vcmp.gt.f32.partialorder %v5040, 0.0
    %vm5102 = vcmp.gt.f32.partialorder %v5042, 0.0
    %vm5103 = vcmp.gt.f32.partialorder %v5045, 0.0
    %vm5104 = vcmp.gt.f32.partialorder %v5047, 0.0
    %vm5105 = vcmp.gt.f32.partialorder %v5050, 0.0
    %vm5106 = vcmp.gt.f32.partialorder %v5052, 0.0
    %vm5107 = vcmp.gt.f32.partialorder %v5055, 0.0
    %vm5108 = vcmp.gt.f32.partialorder %v5057, 0.0
    %vm5109 = vcmp.gt.f32.partialorder %v5060, 0.0
    %vm5110 = vcmp.gt.f32.partialorder %v5062, 0.0
    %vm5111 = vcmp.gt.f32.partialorder %v5065, 0.0
    %vm5112 = vcmp.gt.f32.partialorder %v5067, 0.0
    %vm5113 = vcmp.gt.f32.partialorder %v5070, 0.0
    %vm5114 = vcmp.gt.f32.partialorder %v5072, 0.0
    %vm5115 = vcmp.gt.f32.partialorder %v5075, 0.0
    %vm5116 = vcmp.gt.f32.partialorder %v5077, 0.0
    %vm5117 = vcmp.gt.f32.partialorder %v5080, 0.0
    %vm5118 = vcmp.gt.f32.partialorder %v5082, 0.0
    %vm5119 = vcmp.gt.f32.partialorder %v5085, 0.0
    %vm5120 = vcmp.gt.f32.partialorder %v5087, 0.0
    %v5121 = vmul.f32 %v5010, 0.1
    %v5122 = vmul.f32 %v5012, 0.1
    %v5123 = vmul.f32 %v5015, 0.1
    %v5124 = vmul.f32 %v5017, 0.1
    %v5125 = vmul.f32 %v5020, 0.1
    %v5126 = vmul.f32 %v5022, 0.1
    %v5127 = vmul.f32 %v5025, 0.1
    %v5128 = vmul.f32 %v5027, 0.1
    %v5129 = vmul.f32 %v5030, 0.1
    %v5130 = vmul.f32 %v5032, 0.1
    %v5131 = vmul.f32 %v5035, 0.1
    %v5132 = vmul.f32 %v5037, 0.1
    %v5133 = vmul.f32 %v5040, 0.1
    %v5134 = vmul.f32 %v5042, 0.1
    %v5135 = vmul.f32 %v5045, 0.1
    %v5136 = vmul.f32 %v5047, 0.1
    %v5137 = vmul.f32 %v5050, 0.1
    %v5138 = vmul.f32 %v5052, 0.1
    %v5139 = vmul.f32 %v5055, 0.1
    %v5140 = vmul.f32 %v5057, 0.1
    %v5141 = vmul.f32 %v5060, 0.1
    %v5142 = vmul.f32 %v5062, 0.1
    %v5143 = vmul.f32 %v5065, 0.1
    %v5144 = vmul.f32 %v5067, 0.1
    %v5145 = vmul.f32 %v5070, 0.1
    %v5146 = vmul.f32 %v5072, 0.1
    %v5147 = vmul.f32 %v5075, 0.1
    %v5148 = vmul.f32 %v5077, 0.1
    %v5149 = vmul.f32 %v5080, 0.1
    %v5150 = vmul.f32 %v5082, 0.1
    %v5151 = vmul.f32 %v5085, 0.1
    %v5152 = vmul.f32 %v5087, 0.1
    %v5153 = vsel %vm5089, %v5010, %v5121
    %v5154 = vsel %vm5090, %v5012, %v5122
    %v5155 = vsel %vm5091, %v5015, %v5123
    %v5156 = vsel %vm5092, %v5017, %v5124
    %v5157 = vsel %vm5093, %v5020, %v5125
    %v5158 = vsel %vm5094, %v5022, %v5126
    %v5159 = vsel %vm5095, %v5025, %v5127
    %v5160 = vsel %vm5096, %v5027, %v5128
    %v5161 = vsel %vm5097, %v5030, %v5129
    %v5162 = vsel %vm5098, %v5032, %v5130
    %v5163 = vsel %vm5099, %v5035, %v5131
    %v5164 = vsel %vm5100, %v5037, %v5132
    %v5165 = vsel %vm5101, %v5040, %v5133
    %v5166 = vsel %vm5102, %v5042, %v5134
    %v5167 = vsel %vm5103, %v5045, %v5135
    %v5168 = vsel %vm5104, %v5047, %v5136
    %v5169 = vsel %vm5105, %v5050, %v5137
    %v5170 = vsel %vm5106, %v5052, %v5138
    %v5171 = vsel %vm5107, %v5055, %v5139
    %v5172 = vsel %vm5108, %v5057, %v5140
    %v5173 = vsel %vm5109, %v5060, %v5141
    %v5174 = vsel %vm5110, %v5062, %v5142
    %v5175 = vsel %vm5111, %v5065, %v5143
    %v5176 = vsel %vm5112, %v5067, %v5144
    %v5177 = vsel %vm5113, %v5070, %v5145
    %v5178 = vsel %vm5114, %v5072, %v5146
    %v5179 = vsel %vm5115, %v5075, %v5147
    %v5180 = vsel %vm5116, %v5077, %v5148
    %v5181 = vsel %vm5117, %v5080, %v5149
    %v5182 = vsel %vm5118, %v5082, %v5150
    %v5183 = vsel %vm5119, %v5085, %v5151
    %v5184 = vsel %vm5120, %v5087, %v5152
    %v5185 = vpack.c.bf16 %v5154, %v5153
    %v5186 = vpack.c.bf16 %v5156, %v5155
    %v5187 = vpack.c.bf16 %v5158, %v5157
    %v5188 = vpack.c.bf16 %v5160, %v5159
    %v5189 = vpack.c.bf16 %v5162, %v5161
    %v5190 = vpack.c.bf16 %v5164, %v5163
    %v5191 = vpack.c.bf16 %v5166, %v5165
    %v5192 = vpack.c.bf16 %v5168, %v5167
    %v5193 = vpack.c.bf16 %v5170, %v5169
    %v5194 = vpack.c.bf16 %v5172, %v5171
    %v5195 = vpack.c.bf16 %v5174, %v5173
    %v5196 = vpack.c.bf16 %v5176, %v5175
    %v5197 = vpack.c.bf16 %v5178, %v5177
    %v5198 = vpack.c.bf16 %v5180, %v5179
    %v5199 = vpack.c.bf16 %v5182, %v5181
    %v5200 = vpack.c.bf16 %v5184, %v5183
    %v5201 = vld [vmem:[%s5] sm:$0xff]
    %v5202 = vld [vmem:[%s5 + $0x8] sm:$0xff]
    %v5203 = vld [vmem:[%s5 + $0x10] sm:$0xff]
    %v5204 = vld [vmem:[%s5 + $0x18] sm:$0xff]
    %v5205 = vld [vmem:[%s5 + $0x20] sm:$0xff]
    %v5206 = vld [vmem:[%s5 + $0x28] sm:$0xff]
    %v5207 = vld [vmem:[%s5 + $0x30] sm:$0xff]
    %v5208 = vld [vmem:[%s5 + $0x38] sm:$0xff]
    %v5209 = vld [vmem:[%s5 + $0x40] sm:$0xff]
    %v5210 = vld [vmem:[%s5 + $0x48] sm:$0xff]
    %v5211 = vld [vmem:[%s5 + $0x50] sm:$0xff]
    %v5212 = vld [vmem:[%s5 + $0x58] sm:$0xff]
    %v5213 = vld [vmem:[%s5 + $0x60] sm:$0xff]
    %v5214 = vld [vmem:[%s5 + $0x68] sm:$0xff]
    %v5215 = vld [vmem:[%s5 + $0x70] sm:$0xff]
    %v5216 = vld [vmem:[%s5 + $0x78] sm:$0xff]
    %v5217 = vld [vmem:[%s6] sm:$0x3]
    %v5219 = vperm.slane %v5217, 0
    %v5220 = vperm.slane %v5217, 1
    %v5239 = vunpack.c.l.b16 %v5201
    %v5240 = vunpack.c.h.b16 %v5201
    %v5241 = vunpack.c.l.b16 %v5202
    %v5242 = vunpack.c.h.b16 %v5202
    %v5243 = vunpack.c.l.b16 %v5203
    %v5244 = vunpack.c.h.b16 %v5203
    %v5245 = vunpack.c.l.b16 %v5204
    %v5246 = vunpack.c.h.b16 %v5204
    %v5247 = vunpack.c.l.b16 %v5205
    %v5248 = vunpack.c.h.b16 %v5205
    %v5249 = vunpack.c.l.b16 %v5206
    %v5250 = vunpack.c.h.b16 %v5206
    %v5251 = vunpack.c.l.b16 %v5207
    %v5252 = vunpack.c.h.b16 %v5207
    %v5253 = vunpack.c.l.b16 %v5208
    %v5254 = vunpack.c.h.b16 %v5208
    %v5255 = vunpack.c.l.b16 %v5209
    %v5256 = vunpack.c.h.b16 %v5209
    %v5257 = vunpack.c.l.b16 %v5210
    %v5258 = vunpack.c.h.b16 %v5210
    %v5259 = vunpack.c.l.b16 %v5211
    %v5260 = vunpack.c.h.b16 %v5211
    %v5261 = vunpack.c.l.b16 %v5212
    %v5262 = vunpack.c.h.b16 %v5212
    %v5263 = vunpack.c.l.b16 %v5213
    %v5264 = vunpack.c.h.b16 %v5213
    %v5265 = vunpack.c.l.b16 %v5214
    %v5266 = vunpack.c.h.b16 %v5214
    %v5267 = vunpack.c.l.b16 %v5215
    %v5268 = vunpack.c.h.b16 %v5215
    %v5269 = vunpack.c.l.b16 %v5216
    %v5270 = vunpack.c.h.b16 %v5216
    %v5271 = vpack.c.b16 %v5241, %v5239
    %v5272 = vpack.c.b16 %v5242, %v5240
    %v5273 = vpack.c.b16 %v5245, %v5243
    %v5274 = vpack.c.b16 %v5246, %v5244
    %v5275 = vpack.c.b16 %v5249, %v5247
    %v5276 = vpack.c.b16 %v5250, %v5248
    %v5277 = vpack.c.b16 %v5253, %v5251
    %v5278 = vpack.c.b16 %v5254, %v5252
    %v5279 = vpack.c.b16 %v5257, %v5255
    %v5280 = vpack.c.b16 %v5258, %v5256
    %v5281 = vpack.c.b16 %v5261, %v5259
    %v5282 = vpack.c.b16 %v5262, %v5260
    %v5283 = vpack.c.b16 %v5265, %v5263
    %v5284 = vpack.c.b16 %v5266, %v5264
    %v5285 = vpack.c.b16 %v5269, %v5267
    %v5286 = vpack.c.b16 %v5270, %v5268
    %5303 = vmatpush.bf16.msra.mxu0 %v5285
    %5304 = vmatpush.bf16.msra.mxu0 %v5283
    %5305 = vmatpush.bf16.msra.mxu0 %v5281
    %5306 = vmatpush.bf16.msra.mxu0 %v5279
    %5307 = vmatpush.bf16.msra.mxu0 %v5277
    %5308 = vmatpush.bf16.msra.mxu0 %v5275
    %5309 = vmatpush.bf16.msra.mxu0 %v5273
    %5310 = vmatpush.bf16.msra.mxu0 %v5271
    %5311 = vmatmul.bf16.gmra.mxu0 %v5185
    %v5312 = vpop.f32.mrf.mxu0
    %v5313 = vadd.f32 %v5219, %v5312
    %v5314 = vpop.f32.mrf.mxu0
    %v5315 = vadd.f32 %v5219, %v5314
    %5316 = vmatmul.bf16.gmra.mxu0 %v5186
    %v5317 = vpop.f32.mrf.mxu0
    %v5318 = vadd.f32 %v5219, %v5317
    %v5319 = vpop.f32.mrf.mxu0
    %v5320 = vadd.f32 %v5219, %v5319
    %5321 = vmatmul.bf16.gmra.mxu0 %v5187
    %v5322 = vpop.f32.mrf.mxu0
    %v5323 = vadd.f32 %v5219, %v5322
    %v5324 = vpop.f32.mrf.mxu0
    %v5325 = vadd.f32 %v5219, %v5324
    %5326 = vmatmul.bf16.gmra.mxu0 %v5188
    %v5327 = vpop.f32.mrf.mxu0
    %v5328 = vadd.f32 %v5219, %v5327
    %v5329 = vpop.f32.mrf.mxu0
    %v5330 = vadd.f32 %v5219, %v5329
    %5331 = vmatmul.bf16.gmra.mxu0 %v5189
    %v5332 = vpop.f32.mrf.mxu0
    %v5333 = vadd.f32 %v5219, %v5332
    %v5334 = vpop.f32.mrf.mxu0
    %v5335 = vadd.f32 %v5219, %v5334
    %5336 = vmatmul.bf16.gmra.mxu0 %v5190
    %v5337 = vpop.f32.mrf.mxu0
    %v5338 = vadd.f32 %v5219, %v5337
    %v5339 = vpop.f32.mrf.mxu0
    %v5340 = vadd.f32 %v5219, %v5339
    %5341 = vmatmul.bf16.gmra.mxu0 %v5191
    %v5342 = vpop.f32.mrf.mxu0
    %v5343 = vadd.f32 %v5219, %v5342
    %v5344 = vpop.f32.mrf.mxu0
    %v5345 = vadd.f32 %v5219, %v5344
    %5346 = vmatmul.bf16.gmra.mxu0 %v5192
    %v5347 = vpop.f32.mrf.mxu0
    %v5348 = vadd.f32 %v5219, %v5347
    %v5349 = vpop.f32.mrf.mxu0
    %v5350 = vadd.f32 %v5219, %v5349
    %5351 = vmatmul.bf16.gmra.mxu0 %v5193
    %v5352 = vpop.f32.mrf.mxu0
    %v5353 = vadd.f32 %v5219, %v5352
    %v5354 = vpop.f32.mrf.mxu0
    %v5355 = vadd.f32 %v5219, %v5354
    %5356 = vmatmul.bf16.gmra.mxu0 %v5194
    %v5357 = vpop.f32.mrf.mxu0
    %v5358 = vadd.f32 %v5219, %v5357
    %v5359 = vpop.f32.mrf.mxu0
    %v5360 = vadd.f32 %v5219, %v5359
    %5361 = vmatmul.bf16.gmra.mxu0 %v5195
    %v5362 = vpop.f32.mrf.mxu0
    %v5363 = vadd.f32 %v5219, %v5362
    %v5364 = vpop.f32.mrf.mxu0
    %v5365 = vadd.f32 %v5219, %v5364
    %5366 = vmatmul.bf16.gmra.mxu0 %v5196
    %v5367 = vpop.f32.mrf.mxu0
    %v5368 = vadd.f32 %v5219, %v5367
    %v5369 = vpop.f32.mrf.mxu0
    %v5370 = vadd.f32 %v5219, %v5369
    %5371 = vmatmul.bf16.gmra.mxu0 %v5197
    %v5372 = vpop.f32.mrf.mxu0
    %v5373 = vadd.f32 %v5219, %v5372
    %v5374 = vpop.f32.mrf.mxu0
    %v5375 = vadd.f32 %v5219, %v5374
    %5376 = vmatmul.bf16.gmra.mxu0 %v5198
    %v5377 = vpop.f32.mrf.mxu0
    %v5378 = vadd.f32 %v5219, %v5377
    %v5379 = vpop.f32.mrf.mxu0
    %v5380 = vadd.f32 %v5219, %v5379
    %5381 = vmatmul.bf16.gmra.mxu0 %v5199
    %v5382 = vpop.f32.mrf.mxu0
    %v5383 = vadd.f32 %v5219, %v5382
    %v5384 = vpop.f32.mrf.mxu0
    %v5385 = vadd.f32 %v5219, %v5384
    %5386 = vmatmul.bf16.gmra.mxu0 %v5200
    %v5387 = vpop.f32.mrf.mxu0
    %v5388 = vadd.f32 %v5219, %v5387
    %v5389 = vpop.f32.mrf.mxu0
    %v5390 = vadd.f32 %v5219, %v5389
    %5391 = vdwg.mxu0
    %5392 = vmatpush.bf16.msra.mxu0 %v5286
    %5393 = vmatpush.bf16.msra.mxu0 %v5284
    %5394 = vmatpush.bf16.msra.mxu0 %v5282
    %5395 = vmatpush.bf16.msra.mxu0 %v5280
    %5396 = vmatpush.bf16.msra.mxu0 %v5278
    %5397 = vmatpush.bf16.msra.mxu0 %v5276
    %5398 = vmatpush.bf16.msra.mxu0 %v5274
    %5399 = vmatpush.bf16.msra.mxu0 %v5272
    %5400 = vmatmul.bf16.gmra.mxu0 %v5185
    %v5401 = vpop.f32.mrf.mxu0
    %v5402 = vadd.f32 %v5220, %v5401
    %v5403 = vpop.f32.mrf.mxu0
    %v5404 = vadd.f32 %v5220, %v5403
    %5405 = vmatmul.bf16.gmra.mxu0 %v5186
    %v5406 = vpop.f32.mrf.mxu0
    %v5407 = vadd.f32 %v5220, %v5406
    %v5408 = vpop.f32.mrf.mxu0
    %v5409 = vadd.f32 %v5220, %v5408
    %5410 = vmatmul.bf16.gmra.mxu0 %v5187
    %v5411 = vpop.f32.mrf.mxu0
    %v5412 = vadd.f32 %v5220, %v5411
    %v5413 = vpop.f32.mrf.mxu0
    %v5414 = vadd.f32 %v5220, %v5413
    %5415 = vmatmul.bf16.gmra.mxu0 %v5188
    %v5416 = vpop.f32.mrf.mxu0
    %v5417 = vadd.f32 %v5220, %v5416
    %v5418 = vpop.f32.mrf.mxu0
    %v5419 = vadd.f32 %v5220, %v5418
    %5420 = vmatmul.bf16.gmra.mxu0 %v5189
    %v5421 = vpop.f32.mrf.mxu0
    %v5422 = vadd.f32 %v5220, %v5421
    %v5423 = vpop.f32.mrf.mxu0
    %v5424 = vadd.f32 %v5220, %v5423
    %5425 = vmatmul.bf16.gmra.mxu0 %v5190
    %v5426 = vpop.f32.mrf.mxu0
    %v5427 = vadd.f32 %v5220, %v5426
    %v5428 = vpop.f32.mrf.mxu0
    %v5429 = vadd.f32 %v5220, %v5428
    %5430 = vmatmul.bf16.gmra.mxu0 %v5191
    %v5431 = vpop.f32.mrf.mxu0
    %v5432 = vadd.f32 %v5220, %v5431
    %v5433 = vpop.f32.mrf.mxu0
    %v5434 = vadd.f32 %v5220, %v5433
    %5435 = vmatmul.bf16.gmra.mxu0 %v5192
    %v5436 = vpop.f32.mrf.mxu0
    %v5437 = vadd.f32 %v5220, %v5436
    %v5438 = vpop.f32.mrf.mxu0
    %v5439 = vadd.f32 %v5220, %v5438
    %5440 = vmatmul.bf16.gmra.mxu0 %v5193
    %v5441 = vpop.f32.mrf.mxu0
    %v5442 = vadd.f32 %v5220, %v5441
    %v5443 = vpop.f32.mrf.mxu0
    %v5444 = vadd.f32 %v5220, %v5443
    %5445 = vmatmul.bf16.gmra.mxu0 %v5194
    %v5446 = vpop.f32.mrf.mxu0
    %v5447 = vadd.f32 %v5220, %v5446
    %v5448 = vpop.f32.mrf.mxu0
    %v5449 = vadd.f32 %v5220, %v5448
    %5450 = vmatmul.bf16.gmra.mxu0 %v5195
    %v5451 = vpop.f32.mrf.mxu0
    %v5452 = vadd.f32 %v5220, %v5451
    %v5453 = vpop.f32.mrf.mxu0
    %v5454 = vadd.f32 %v5220, %v5453
    %5455 = vmatmul.bf16.gmra.mxu0 %v5196
    %v5456 = vpop.f32.mrf.mxu0
    %v5457 = vadd.f32 %v5220, %v5456
    %v5458 = vpop.f32.mrf.mxu0
    %v5459 = vadd.f32 %v5220, %v5458
    %5460 = vmatmul.bf16.gmra.mxu0 %v5197
    %v5461 = vpop.f32.mrf.mxu0
    %v5462 = vadd.f32 %v5220, %v5461
    %v5463 = vpop.f32.mrf.mxu0
    %v5464 = vadd.f32 %v5220, %v5463
    %5465 = vmatmul.bf16.gmra.mxu0 %v5198
    %v5466 = vpop.f32.mrf.mxu0
    %v5467 = vadd.f32 %v5220, %v5466
    %v5468 = vpop.f32.mrf.mxu0
    %v5469 = vadd.f32 %v5220, %v5468
    %5470 = vmatmul.bf16.gmra.mxu0 %v5199
    %v5471 = vpop.f32.mrf.mxu0
    %v5472 = vadd.f32 %v5220, %v5471
    %v5473 = vpop.f32.mrf.mxu0
    %v5474 = vadd.f32 %v5220, %v5473
    %5475 = vmatmul.bf16.gmra.mxu0 %v5200
    %v5476 = vpop.f32.mrf.mxu0
    %v5477 = vadd.f32 %v5220, %v5476
    %v5478 = vpop.f32.mrf.mxu0
    %v5479 = vadd.f32 %v5220, %v5478
    %5480 = vdwg.mxu0
    %vm5481 = vcmp.gt.f32.partialorder %v5313, 0.0
    %vm5482 = vcmp.gt.f32.partialorder %v5402, 0.0
    %vm5483 = vcmp.gt.f32.partialorder %v5315, 0.0
    %vm5484 = vcmp.gt.f32.partialorder %v5404, 0.0
    %vm5485 = vcmp.gt.f32.partialorder %v5318, 0.0
    %vm5486 = vcmp.gt.f32.partialorder %v5407, 0.0
    %vm5487 = vcmp.gt.f32.partialorder %v5320, 0.0
    %vm5488 = vcmp.gt.f32.partialorder %v5409, 0.0
    %vm5489 = vcmp.gt.f32.partialorder %v5323, 0.0
    %vm5490 = vcmp.gt.f32.partialorder %v5412, 0.0
    %vm5491 = vcmp.gt.f32.partialorder %v5325, 0.0
    %vm5492 = vcmp.gt.f32.partialorder %v5414, 0.0
    %vm5493 = vcmp.gt.f32.partialorder %v5328, 0.0
    %vm5494 = vcmp.gt.f32.partialorder %v5417, 0.0
    %vm5495 = vcmp.gt.f32.partialorder %v5330, 0.0
    %vm5496 = vcmp.gt.f32.partialorder %v5419, 0.0
    %vm5497 = vcmp.gt.f32.partialorder %v5333, 0.0
    %vm5498 = vcmp.gt.f32.partialorder %v5422, 0.0
    %vm5499 = vcmp.gt.f32.partialorder %v5335, 0.0
    %vm5500 = vcmp.gt.f32.partialorder %v5424, 0.0
    %vm5501 = vcmp.gt.f32.partialorder %v5338, 0.0
    %vm5502 = vcmp.gt.f32.partialorder %v5427, 0.0
    %vm5503 = vcmp.gt.f32.partialorder %v5340, 0.0
    %vm5504 = vcmp.gt.f32.partialorder %v5429, 0.0
    %vm5505 = vcmp.gt.f32.partialorder %v5343, 0.0
    %vm5506 = vcmp.gt.f32.partialorder %v5432, 0.0
    %vm5507 = vcmp.gt.f32.partialorder %v5345, 0.0
    %vm5508 = vcmp.gt.f32.partialorder %v5434, 0.0
    %vm5509 = vcmp.gt.f32.partialorder %v5348, 0.0
    %vm5510 = vcmp.gt.f32.partialorder %v5437, 0.0
    %vm5511 = vcmp.gt.f32.partialorder %v5350, 0.0
    %vm5512 = vcmp.gt.f32.partialorder %v5439, 0.0
    %vm5513 = vcmp.gt.f32.partialorder %v5353, 0.0
    %vm5514 = vcmp.gt.f32.partialorder %v5442, 0.0
    %vm5515 = vcmp.gt.f32.partialorder %v5355, 0.0
    %vm5516 = vcmp.gt.f32.partialorder %v5444, 0.0
    %vm5517 = vcmp.gt.f32.partialorder %v5358, 0.0
    %vm5518 = vcmp.gt.f32.partialorder %v5447, 0.0
    %vm5519 = vcmp.gt.f32.partialorder %v5360, 0.0
    %vm5520 = vcmp.gt.f32.partialorder %v5449, 0.0
    %vm5521 = vcmp.gt.f32.partialorder %v5363, 0.0
    %vm5522 = vcmp.gt.f32.partialorder %v5452, 0.0
    %vm5523 = vcmp.gt.f32.partialorder %v5365, 0.0
    %vm5524 = vcmp.gt.f32.partialorder %v5454, 0.0
    %vm5525 = vcmp.gt.f32.partialorder %v5368, 0.0
    %vm5526 = vcmp.gt.f32.partialorder %v5457, 0.0
    %vm5527 = vcmp.gt.f32.partialorder %v5370, 0.0
    %vm5528 = vcmp.gt.f32.partialorder %v5459, 0.0
    %vm5529 = vcmp.gt.f32.partialorder %v5373, 0.0
    %vm5530 = vcmp.gt.f32.partialorder %v5462, 0.0
    %vm5531 = vcmp.gt.f32.partialorder %v5375, 0.0
    %vm5532 = vcmp.gt.f32.partialorder %v5464, 0.0
    %vm5533 = vcmp.gt.f32.partialorder %v5378, 0.0
    %vm5534 = vcmp.gt.f32.partialorder %v5467, 0.0
    %vm5535 = vcmp.gt.f32.partialorder %v5380, 0.0
    %vm5536 = vcmp.gt.f32.partialorder %v5469, 0.0
    %vm5537 = vcmp.gt.f32.partialorder %v5383, 0.0
    %vm5538 = vcmp.gt.f32.partialorder %v5472, 0.0
    %vm5539 = vcmp.gt.f32.partialorder %v5385, 0.0
    %vm5540 = vcmp.gt.f32.partialorder %v5474, 0.0
    %vm5541 = vcmp.gt.f32.partialorder %v5388, 0.0
    %vm5542 = vcmp.gt.f32.partialorder %v5477, 0.0
    %vm5543 = vcmp.gt.f32.partialorder %v5390, 0.0
    %vm5544 = vcmp.gt.f32.partialorder %v5479, 0.0
    %v5545 = vmul.f32 %v5313, 0.1
    %v5546 = vmul.f32 %v5402, 0.1
    %v5547 = vmul.f32 %v5315, 0.1
    %v5548 = vmul.f32 %v5404, 0.1
    %v5549 = vmul.f32 %v5318, 0.1
    %v5550 = vmul.f32 %v5407, 0.1
    %v5551 = vmul.f32 %v5320, 0.1
    %v5552 = vmul.f32 %v5409, 0.1
    %v5553 = vmul.f32 %v5323, 0.1
    %v5554 = vmul.f32 %v5412, 0.1
    %v5555 = vmul.f32 %v5325, 0.1
    %v5556 = vmul.f32 %v5414, 0.1
    %v5557 = vmul.f32 %v5328, 0.1
    %v5558 = vmul.f32 %v5417, 0.1
    %v5559 = vmul.f32 %v5330, 0.1
    %v5560 = vmul.f32 %v5419, 0.1
    %v5561 = vmul.f32 %v5333, 0.1
    %v5562 = vmul.f32 %v5422, 0.1
    %v5563 = vmul.f32 %v5335, 0.1
    %v5564 = vmul.f32 %v5424, 0.1
    %v5565 = vmul.f32 %v5338, 0.1
    %v5566 = vmul.f32 %v5427, 0.1
    %v5567 = vmul.f32 %v5340, 0.1
    %v5568 = vmul.f32 %v5429, 0.1
    %v5569 = vmul.f32 %v5343, 0.1
    %v5570 = vmul.f32 %v5432, 0.1
    %v5571 = vmul.f32 %v5345, 0.1
    %v5572 = vmul.f32 %v5434, 0.1
    %v5573 = vmul.f32 %v5348, 0.1
    %v5574 = vmul.f32 %v5437, 0.1
    %v5575 = vmul.f32 %v5350, 0.1
    %v5576 = vmul.f32 %v5439, 0.1
    %v5577 = vmul.f32 %v5353, 0.1
    %v5578 = vmul.f32 %v5442, 0.1
    %v5579 = vmul.f32 %v5355, 0.1
    %v5580 = vmul.f32 %v5444, 0.1
    %v5581 = vmul.f32 %v5358, 0.1
    %v5582 = vmul.f32 %v5447, 0.1
    %v5583 = vmul.f32 %v5360, 0.1
    %v5584 = vmul.f32 %v5449, 0.1
    %v5585 = vmul.f32 %v5363, 0.1
    %v5586 = vmul.f32 %v5452, 0.1
    %v5587 = vmul.f32 %v5365, 0.1
    %v5588 = vmul.f32 %v5454, 0.1
    %v5589 = vmul.f32 %v5368, 0.1
    %v5590 = vmul.f32 %v5457, 0.1
    %v5591 = vmul.f32 %v5370, 0.1
    %v5592 = vmul.f32 %v5459, 0.1
    %v5593 = vmul.f32 %v5373, 0.1
    %v5594 = vmul.f32 %v5462, 0.1
    %v5595 = vmul.f32 %v5375, 0.1
    %v5596 = vmul.f32 %v5464, 0.1
    %v5597 = vmul.f32 %v5378, 0.1
    %v5598 = vmul.f32 %v5467, 0.1
    %v5599 = vmul.f32 %v5380, 0.1
    %v5600 = vmul.f32 %v5469, 0.1
    %v5601 = vmul.f32 %v5383, 0.1
    %v5602 = vmul.f32 %v5472, 0.1
    %v5603 = vmul.f32 %v5385, 0.1
    %v5604 = vmul.f32 %v5474, 0.1
    %v5605 = vmul.f32 %v5388, 0.1
    %v5606 = vmul.f32 %v5477, 0.1
    %v5607 = vmul.f32 %v5390, 0.1
    %v5608 = vmul.f32 %v5479, 0.1
    %v5609 = vsel %vm5481, %v5313, %v5545
    %v5610 = vsel %vm5482, %v5402, %v5546
    %v5611 = vsel %vm5483, %v5315, %v5547
    %v5612 = vsel %vm5484, %v5404, %v5548
    %v5613 = vsel %vm5485, %v5318, %v5549
    %v5614 = vsel %vm5486, %v5407, %v5550
    %v5615 = vsel %vm5487, %v5320, %v5551
    %v5616 = vsel %vm5488, %v5409, %v5552
    %v5617 = vsel %vm5489, %v5323, %v5553
    %v5618 = vsel %vm5490, %v5412, %v5554
    %v5619 = vsel %vm5491, %v5325, %v5555
    %v5620 = vsel %vm5492, %v5414, %v5556
    %v5621 = vsel %vm5493, %v5328, %v5557
    %v5622 = vsel %vm5494, %v5417, %v5558
    %v5623 = vsel %vm5495, %v5330, %v5559
    %v5624 = vsel %vm5496, %v5419, %v5560
    %v5625 = vsel %vm5497, %v5333, %v5561
    %v5626 = vsel %vm5498, %v5422, %v5562
    %v5627 = vsel %vm5499, %v5335, %v5563
    %v5628 = vsel %vm5500, %v5424, %v5564
    %v5629 = vsel %vm5501, %v5338, %v5565
    %v5630 = vsel %vm5502, %v5427, %v5566
    %v5631 = vsel %vm5503, %v5340, %v5567
    %v5632 = vsel %vm5504, %v5429, %v5568
    %v5633 = vsel %vm5505, %v5343, %v5569
    %v5634 = vsel %vm5506, %v5432, %v5570
    %v5635 = vsel %vm5507, %v5345, %v5571
    %v5636 = vsel %vm5508, %v5434, %v5572
    %v5637 = vsel %vm5509, %v5348, %v5573
    %v5638 = vsel %vm5510, %v5437, %v5574
    %v5639 = vsel %vm5511, %v5350, %v5575
    %v5640 = vsel %vm5512, %v5439, %v5576
    %v5641 = vsel %vm5513, %v5353, %v5577
    %v5642 = vsel %vm5514, %v5442, %v5578
    %v5643 = vsel %vm5515, %v5355, %v5579
    %v5644 = vsel %vm5516, %v5444, %v5580
    %v5645 = vsel %vm5517, %v5358, %v5581
    %v5646 = vsel %vm5518, %v5447, %v5582
    %v5647 = vsel %vm5519, %v5360, %v5583
    %v5648 = vsel %vm5520, %v5449, %v5584
    %v5649 = vsel %vm5521, %v5363, %v5585
    %v5650 = vsel %vm5522, %v5452, %v5586
    %v5651 = vsel %vm5523, %v5365, %v5587
    %v5652 = vsel %vm5524, %v5454, %v5588
    %v5653 = vsel %vm5525, %v5368, %v5589
    %v5654 = vsel %vm5526, %v5457, %v5590
    %v5655 = vsel %vm5527, %v5370, %v5591
    %v5656 = vsel %vm5528, %v5459, %v5592
    %v5657 = vsel %vm5529, %v5373, %v5593
    %v5658 = vsel %vm5530, %v5462, %v5594
    %v5659 = vsel %vm5531, %v5375, %v5595
    %v5660 = vsel %vm5532, %v5464, %v5596
    %v5661 = vsel %vm5533, %v5378, %v5597
    %v5662 = vsel %vm5534, %v5467, %v5598
    %v5663 = vsel %vm5535, %v5380, %v5599
    %v5664 = vsel %vm5536, %v5469, %v5600
    %v5665 = vsel %vm5537, %v5383, %v5601
    %v5666 = vsel %vm5538, %v5472, %v5602
    %v5667 = vsel %vm5539, %v5385, %v5603
    %v5668 = vsel %vm5540, %v5474, %v5604
    %v5669 = vsel %vm5541, %v5388, %v5605
    %v5670 = vsel %vm5542, %v5477, %v5606
    %v5671 = vsel %vm5543, %v5390, %v5607
    %v5672 = vsel %vm5544, %v5479, %v5608
    %v5673 = vpack.c.bf16 %v5611, %v5609
    %v5674 = vpack.c.bf16 %v5612, %v5610
    %v5675 = vpack.c.bf16 %v5615, %v5613
    %v5676 = vpack.c.bf16 %v5616, %v5614
    %v5677 = vpack.c.bf16 %v5619, %v5617
    %v5678 = vpack.c.bf16 %v5620, %v5618
    %v5679 = vpack.c.bf16 %v5623, %v5621
    %v5680 = vpack.c.bf16 %v5624, %v5622
    %v5681 = vpack.c.bf16 %v5627, %v5625
    %v5682 = vpack.c.bf16 %v5628, %v5626
    %v5683 = vpack.c.bf16 %v5631, %v5629
    %v5684 = vpack.c.bf16 %v5632, %v5630
    %v5685 = vpack.c.bf16 %v5635, %v5633
    %v5686 = vpack.c.bf16 %v5636, %v5634
    %v5687 = vpack.c.bf16 %v5639, %v5637
    %v5688 = vpack.c.bf16 %v5640, %v5638
    %v5689 = vpack.c.bf16 %v5643, %v5641
    %v5690 = vpack.c.bf16 %v5644, %v5642
    %v5691 = vpack.c.bf16 %v5647, %v5645
    %v5692 = vpack.c.bf16 %v5648, %v5646
    %v5693 = vpack.c.bf16 %v5651, %v5649
    %v5694 = vpack.c.bf16 %v5652, %v5650
    %v5695 = vpack.c.bf16 %v5655, %v5653
    %v5696 = vpack.c.bf16 %v5656, %v5654
    %v5697 = vpack.c.bf16 %v5659, %v5657
    %v5698 = vpack.c.bf16 %v5660, %v5658
    %v5699 = vpack.c.bf16 %v5663, %v5661
    %v5700 = vpack.c.bf16 %v5664, %v5662
    %v5701 = vpack.c.bf16 %v5667, %v5665
    %v5702 = vpack.c.bf16 %v5668, %v5666
    %v5703 = vpack.c.bf16 %v5671, %v5669
    %v5704 = vpack.c.bf16 %v5672, %v5670
    %v5705 = vld [vmem:[%s7] sm:$0xff]
    %v5706 = vld [vmem:[%s7 + $0x8] sm:$0xff]
    %v5707 = vld [vmem:[%s7 + $0x10] sm:$0xff]
    %v5708 = vld [vmem:[%s7 + $0x18] sm:$0xff]
    %v5709 = vld [vmem:[%s7 + $0x20] sm:$0xff]
    %v5710 = vld [vmem:[%s7 + $0x28] sm:$0xff]
    %v5711 = vld [vmem:[%s7 + $0x30] sm:$0xff]
    %v5712 = vld [vmem:[%s7 + $0x38] sm:$0xff]
    %v5713 = vld [vmem:[%s7 + $0x40] sm:$0xff]
    %v5714 = vld [vmem:[%s7 + $0x48] sm:$0xff]
    %v5715 = vld [vmem:[%s7 + $0x50] sm:$0xff]
    %v5716 = vld [vmem:[%s7 + $0x58] sm:$0xff]
    %v5717 = vld [vmem:[%s7 + $0x60] sm:$0xff]
    %v5718 = vld [vmem:[%s7 + $0x68] sm:$0xff]
    %v5719 = vld [vmem:[%s7 + $0x70] sm:$0xff]
    %v5720 = vld [vmem:[%s7 + $0x78] sm:$0xff]
    %v5721 = vld [vmem:[%s7 + $0x80] sm:$0xff]
    %v5722 = vld [vmem:[%s7 + $0x88] sm:$0xff]
    %v5723 = vld [vmem:[%s7 + $0x90] sm:$0xff]
    %v5724 = vld [vmem:[%s7 + $0x98] sm:$0xff]
    %v5725 = vld [vmem:[%s7 + $0xa0] sm:$0xff]
    %v5726 = vld [vmem:[%s7 + $0xa8] sm:$0xff]
    %v5727 = vld [vmem:[%s7 + $0xb0] sm:$0xff]
    %v5728 = vld [vmem:[%s7 + $0xb8] sm:$0xff]
    %v5729 = vld [vmem:[%s7 + $0xc0] sm:$0xff]
    %v5730 = vld [vmem:[%s7 + $0xc8] sm:$0xff]
    %v5731 = vld [vmem:[%s7 + $0xd0] sm:$0xff]
    %v5732 = vld [vmem:[%s7 + $0xd8] sm:$0xff]
    %v5733 = vld [vmem:[%s7 + $0xe0] sm:$0xff]
    %v5734 = vld [vmem:[%s7 + $0xe8] sm:$0xff]
    %v5735 = vld [vmem:[%s7 + $0xf0] sm:$0xff]
    %v5736 = vld [vmem:[%s7 + $0xf8] sm:$0xff]
    %v5737 = vld [vmem:[%s7 + $0x100] sm:$0xff]
    %v5738 = vld [vmem:[%s7 + $0x108] sm:$0xff]
    %v5739 = vld [vmem:[%s7 + $0x110] sm:$0xff]
    %v5740 = vld [vmem:[%s7 + $0x118] sm:$0xff]
    %v5741 = vld [vmem:[%s7 + $0x120] sm:$0xff]
    %v5742 = vld [vmem:[%s7 + $0x128] sm:$0xff]
    %v5743 = vld [vmem:[%s7 + $0x130] sm:$0xff]
    %v5744 = vld [vmem:[%s7 + $0x138] sm:$0xff]
    %v5745 = vld [vmem:[%s7 + $0x140] sm:$0xff]
    %v5746 = vld [vmem:[%s7 + $0x148] sm:$0xff]
    %v5747 = vld [vmem:[%s7 + $0x150] sm:$0xff]
    %v5748 = vld [vmem:[%s7 + $0x158] sm:$0xff]
    %v5749 = vld [vmem:[%s7 + $0x160] sm:$0xff]
    %v5750 = vld [vmem:[%s7 + $0x168] sm:$0xff]
    %v5751 = vld [vmem:[%s7 + $0x170] sm:$0xff]
    %v5752 = vld [vmem:[%s7 + $0x178] sm:$0xff]
    %v5753 = vld [vmem:[%s7 + $0x180] sm:$0xff]
    %v5754 = vld [vmem:[%s7 + $0x188] sm:$0xff]
    %v5755 = vld [vmem:[%s7 + $0x190] sm:$0xff]
    %v5756 = vld [vmem:[%s7 + $0x198] sm:$0xff]
    %v5757 = vld [vmem:[%s7 + $0x1a0] sm:$0xff]
    %v5758 = vld [vmem:[%s7 + $0x1a8] sm:$0xff]
    %v5759 = vld [vmem:[%s7 + $0x1b0] sm:$0xff]
    %v5760 = vld [vmem:[%s7 + $0x1b8] sm:$0xff]
    %v5761 = vld [vmem:[%s7 + $0x1c0] sm:$0xff]
    %v5762 = vld [vmem:[%s7 + $0x1c8] sm:$0xff]
    %v5763 = vld [vmem:[%s7 + $0x1d0] sm:$0xff]
    %v5764 = vld [vmem:[%s7 + $0x1d8] sm:$0xff]
    %v5765 = vld [vmem:[%s7 + $0x1e0] sm:$0xff]
    %v5766 = vld [vmem:[%s7 + $0x1e8] sm:$0xff]
    %v5767 = vld [vmem:[%s7 + $0x1f0] sm:$0xff]
    %v5768 = vld [vmem:[%s7 + $0x1f8] sm:$0xff]
    %v5769 = vld [vmem:[%s8] sm:$0xf]
    %v5771 = vperm.slane %v5769, 0
    %v5772 = vperm.slane %v5769, 1
    %v5773 = vperm.slane %v5769, 2
    %v5774 = vperm.slane %v5769, 3
    %v5843 = vunpack.c.l.b16 %v5705
    %v5844 = vunpack.c.h.b16 %v5705
    %v5845 = vunpack.c.l.b16 %v5706
    %v5846 = vunpack.c.h.b16 %v5706
    %v5847 = vunpack.c.l.b16 %v5707
    %v5848 = vunpack.c.h.b16 %v5707
    %v5849 = vunpack.c.l.b16 %v5708
    %v5850 = vunpack.c.h.b16 %v5708
    %v5851 = vunpack.c.l.b16 %v5709
    %v5852 = vunpack.c.h.b16 %v5709
    %v5853 = vunpack.c.l.b16 %v5710
    %v5854 = vunpack.c.h.b16 %v5710
    %v5855 = vunpack.c.l.b16 %v5711
    %v5856 = vunpack.c.h.b16 %v5711
    %v5857 = vunpack.c.l.b16 %v5712
    %v5858 = vunpack.c.h.b16 %v5712
    %v5859 = vunpack.c.l.b16 %v5713
    %v5860 = vunpack.c.h.b16 %v5713
    %v5861 = vunpack.c.l.b16 %v5714
    %v5862 = vunpack.c.h.b16 %v5714
    %v5863 = vunpack.c.l.b16 %v5715
    %v5864 = vunpack.c.h.b16 %v5715
    %v5865 = vunpack.c.l.b16 %v5716
    %v5866 = vunpack.c.h.b16 %v5716
    %v5867 = vunpack.c.l.b16 %v5717
    %v5868 = vunpack.c.h.b16 %v5717
    %v5869 = vunpack.c.l.b16 %v5718
    %v5870 = vunpack.c.h.b16 %v5718
    %v5871 = vunpack.c.l.b16 %v5719
    %v5872 = vunpack.c.h.b16 %v5719
    %v5873 = vunpack.c.l.b16 %v5720
    %v5874 = vunpack.c.h.b16 %v5720
    %v5875 = vunpack.c.l.b16 %v5721
    %v5876 = vunpack.c.h.b16 %v5721
    %v5877 = vunpack.c.l.b16 %v5722
    %v5878 = vunpack.c.h.b16 %v5722
    %v5879 = vunpack.c.l.b16 %v5723
    %v5880 = vunpack.c.h.b16 %v5723
    %v5881 = vunpack.c.l.b16 %v5724
    %v5882 = vunpack.c.h.b16 %v5724
    %v5883 = vunpack.c.l.b16 %v5725
    %v5884 = vunpack.c.h.b16 %v5725
    %v5885 = vunpack.c.l.b16 %v5726
    %v5886 = vunpack.c.h.b16 %v5726
    %v5887 = vunpack.c.l.b16 %v5727
    %v5888 = vunpack.c.h.b16 %v5727
    %v5889 = vunpack.c.l.b16 %v5728
    %v5890 = vunpack.c.h.b16 %v5728
    %v5891 = vunpack.c.l.b16 %v5729
    %v5892 = vunpack.c.h.b16 %v5729
    %v5893 = vunpack.c.l.b16 %v5730
    %v5894 = vunpack.c.h.b16 %v5730
    %v5895 = vunpack.c.l.b16 %v5731
    %v5896 = vunpack.c.h.b16 %v5731
    %v5897 = vunpack.c.l.b16 %v5732
    %v5898 = vunpack.c.h.b16 %v5732
    %v5899 = vunpack.c.l.b16 %v5733
    %v5900 = vunpack.c.h.b16 %v5733
    %v5901 = vunpack.c.l.b16 %v5734
    %v5902 = vunpack.c.h.b16 %v5734
    %v5903 = vunpack.c.l.b16 %v5735
    %v5904 = vunpack.c.h.b16 %v5735
    %v5905 = vunpack.c.l.b16 %v5736
    %v5906 = vunpack.c.h.b16 %v5736
    %v5907 = vunpack.c.l.b16 %v5737
    %v5908 = vunpack.c.h.b16 %v5737
    %v5909 = vunpack.c.l.b16 %v5738
    %v5910 = vunpack.c.h.b16 %v5738
    %v5911 = vunpack.c.l.b16 %v5739
    %v5912 = vunpack.c.h.b16 %v5739
    %v5913 = vunpack.c.l.b16 %v5740
    %v5914 = vunpack.c.h.b16 %v5740
    %v5915 = vunpack.c.l.b16 %v5741
    %v5916 = vunpack.c.h.b16 %v5741
    %v5917 = vunpack.c.l.b16 %v5742
    %v5918 = vunpack.c.h.b16 %v5742
    %v5919 = vunpack.c.l.b16 %v5743
    %v5920 = vunpack.c.h.b16 %v5743
    %v5921 = vunpack.c.l.b16 %v5744
    %v5922 = vunpack.c.h.b16 %v5744
    %v5923 = vunpack.c.l.b16 %v5745
    %v5924 = vunpack.c.h.b16 %v5745
    %v5925 = vunpack.c.l.b16 %v5746
    %v5926 = vunpack.c.h.b16 %v5746
    %v5927 = vunpack.c.l.b16 %v5747
    %v5928 = vunpack.c.h.b16 %v5747
    %v5929 = vunpack.c.l.b16 %v5748
    %v5930 = vunpack.c.h.b16 %v5748
    %v5931 = vunpack.c.l.b16 %v5749
    %v5932 = vunpack.c.h.b16 %v5749
    %v5933 = vunpack.c.l.b16 %v5750
    %v5934 = vunpack.c.h.b16 %v5750
    %v5935 = vunpack.c.l.b16 %v5751
    %v5936 = vunpack.c.h.b16 %v5751
    %v5937 = vunpack.c.l.b16 %v5752
    %v5938 = vunpack.c.h.b16 %v5752
    %v5939 = vunpack.c.l.b16 %v5753
    %v5940 = vunpack.c.h.b16 %v5753
    %v5941 = vunpack.c.l.b16 %v5754
    %v5942 = vunpack.c.h.b16 %v5754
    %v5943 = vunpack.c.l.b16 %v5755
    %v5944 = vunpack.c.h.b16 %v5755
    %v5945 = vunpack.c.l.b16 %v5756
    %v5946 = vunpack.c.h.b16 %v5756
    %v5947 = vunpack.c.l.b16 %v5757
    %v5948 = vunpack.c.h.b16 %v5757
    %v5949 = vunpack.c.l.b16 %v5758
    %v5950 = vunpack.c.h.b16 %v5758
    %v5951 = vunpack.c.l.b16 %v5759
    %v5952 = vunpack.c.h.b16 %v5759
    %v5953 = vunpack.c.l.b16 %v5760
    %v5954 = vunpack.c.h.b16 %v5760
    %v5955 = vunpack.c.l.b16 %v5761
    %v5956 = vunpack.c.h.b16 %v5761
    %v5957 = vunpack.c.l.b16 %v5762
    %v5958 = vunpack.c.h.b16 %v5762
    %v5959 = vunpack.c.l.b16 %v5763
    %v5960 = vunpack.c.h.b16 %v5763
    %v5961 = vunpack.c.l.b16 %v5764
    %v5962 = vunpack.c.h.b16 %v5764
    %v5963 = vunpack.c.l.b16 %v5765
    %v5964 = vunpack.c.h.b16 %v5765
    %v5965 = vunpack.c.l.b16 %v5766
    %v5966 = vunpack.c.h.b16 %v5766
    %v5967 = vunpack.c.l.b16 %v5767
    %v5968 = vunpack.c.h.b16 %v5767
    %v5969 = vunpack.c.l.b16 %v5768
    %v5970 = vunpack.c.h.b16 %v5768
    %v5971 = vpack.c.b16 %v5847, %v5843
    %v5972 = vpack.c.b16 %v5848, %v5844
    %v5973 = vpack.c.b16 %v5849, %v5845
    %v5974 = vpack.c.b16 %v5850, %v5846
    %v5975 = vpack.c.b16 %v5855, %v5851
    %v5976 = vpack.c.b16 %v5856, %v5852
    %v5977 = vpack.c.b16 %v5857, %v5853
    %v5978 = vpack.c.b16 %v5858, %v5854
    %v5979 = vpack.c.b16 %v5863, %v5859
    %v5980 = vpack.c.b16 %v5864, %v5860
    %v5981 = vpack.c.b16 %v5865, %v5861
    %v5982 = vpack.c.b16 %v5866, %v5862
    %v5983 = vpack.c.b16 %v5871, %v5867
    %v5984 = vpack.c.b16 %v5872, %v5868
    %v5985 = vpack.c.b16 %v5873, %v5869
    %v5986 = vpack.c.b16 %v5874, %v5870
    %v5987 = vpack.c.b16 %v5879, %v5875
    %v5988 = vpack.c.b16 %v5880, %v5876
    %v5989 = vpack.c.b16 %v5881, %v5877
    %v5990 = vpack.c.b16 %v5882, %v5878
    %v5991 = vpack.c.b16 %v5887, %v5883
    %v5992 = vpack.c.b16 %v5888, %v5884
    %v5993 = vpack.c.b16 %v5889, %v5885
    %v5994 = vpack.c.b16 %v5890, %v5886
    %v5995 = vpack.c.b16 %v5895, %v5891
    %v5996 = vpack.c.b16 %v5896, %v5892
    %v5997 = vpack.c.b16 %v5897, %v5893
    %v5998 = vpack.c.b16 %v5898, %v5894
    %v5999 = vpack.c.b16 %v5903, %v5899
    %v6000 = vpack.c.b16 %v5904, %v5900
    %v6001 = vpack.c.b16 %v5905, %v5901
    %v6002 = vpack.c.b16 %v5906, %v5902
    %v6003 = vpack.c.b16 %v5911, %v5907
    %v6004 = vpack.c.b16 %v5912, %v5908
    %v6005 = vpack.c.b16 %v5913, %v5909
    %v6006 = vpack.c.b16 %v5914, %v5910
    %v6007 = vpack.c.b16 %v5919, %v5915
    %v6008 = vpack.c.b16 %v5920, %v5916
    %v6009 = vpack.c.b16 %v5921, %v5917
    %v6010 = vpack.c.b16 %v5922, %v5918
    %v6011 = vpack.c.b16 %v5927, %v5923
    %v6012 = vpack.c.b16 %v5928, %v5924
    %v6013 = vpack.c.b16 %v5929, %v5925
    %v6014 = vpack.c.b16 %v5930, %v5926
    %v6015 = vpack.c.b16 %v5935, %v5931
    %v6016 = vpack.c.b16 %v5936, %v5932
    %v6017 = vpack.c.b16 %v5937, %v5933
    %v6018 = vpack.c.b16 %v5938, %v5934
    %v6019 = vpack.c.b16 %v5943, %v5939
    %v6020 = vpack.c.b16 %v5944, %v5940
    %v6021 = vpack.c.b16 %v5945, %v5941
    %v6022 = vpack.c.b16 %v5946, %v5942
    %v6023 = vpack.c.b16 %v5951, %v5947
    %v6024 = vpack.c.b16 %v5952, %v5948
    %v6025 = vpack.c.b16 %v5953, %v5949
    %v6026 = vpack.c.b16 %v5954, %v5950
    %v6027 = vpack.c.b16 %v5959, %v5955
    %v6028 = vpack.c.b16 %v5960, %v5956
    %v6029 = vpack.c.b16 %v5961, %v5957
    %v6030 = vpack.c.b16 %v5962, %v5958
    %v6031 = vpack.c.b16 %v5967, %v5963
    %v6032 = vpack.c.b16 %v5968, %v5964
    %v6033 = vpack.c.b16 %v5969, %v5965
    %v6034 = vpack.c.b16 %v5970, %v5966
    %6099 = vmatpush.bf16.msra.mxu0 %v5999
    %6100 = vmatpush.bf16.msra.mxu0 %v5995
    %6101 = vmatpush.bf16.msra.mxu0 %v5991
    %6102 = vmatpush.bf16.msra.mxu0 %v5987
    %6103 = vmatpush.bf16.msra.mxu0 %v5983
    %6104 = vmatpush.bf16.msra.mxu0 %v5979
    %6105 = vmatpush.bf16.msra.mxu0 %v5975
    %6106 = vmatpush.bf16.msra.mxu0 %v5971
    %6107 = vmatmul.bf16.gmra.mxu0 %v5673
    %v6108 = vpop.f32.mrf.mxu0
    %v6109 = vadd.f32 %v5771, %v6108
    %v6110 = vpop.f32.mrf.mxu0
    %v6111 = vadd.f32 %v5771, %v6110
    %6112 = vmatmul.bf16.gmra.mxu0 %v5675
    %v6113 = vpop.f32.mrf.mxu0
    %v6114 = vadd.f32 %v5771, %v6113
    %v6115 = vpop.f32.mrf.mxu0
    %v6116 = vadd.f32 %v5771, %v6115
    %6117 = vmatmul.bf16.gmra.mxu0 %v5677
    %v6118 = vpop.f32.mrf.mxu0
    %v6119 = vadd.f32 %v5771, %v6118
    %v6120 = vpop.f32.mrf.mxu0
    %v6121 = vadd.f32 %v5771, %v6120
    %6122 = vmatmul.bf16.gmra.mxu0 %v5679
    %v6123 = vpop.f32.mrf.mxu0
    %v6124 = vadd.f32 %v5771, %v6123
    %v6125 = vpop.f32.mrf.mxu0
    %v6126 = vadd.f32 %v5771, %v6125
    %6127 = vmatmul.bf16.gmra.mxu0 %v5681
    %v6128 = vpop.f32.mrf.mxu0
    %v6129 = vadd.f32 %v5771, %v6128
    %v6130 = vpop.f32.mrf.mxu0
    %v6131 = vadd.f32 %v5771, %v6130
    %6132 = vmatmul.bf16.gmra.mxu0 %v5683
    %v6133 = vpop.f32.mrf.mxu0
    %v6134 = vadd.f32 %v5771, %v6133
    %v6135 = vpop.f32.mrf.mxu0
    %v6136 = vadd.f32 %v5771, %v6135
    %6137 = vmatmul.bf16.gmra.mxu0 %v5685
    %v6138 = vpop.f32.mrf.mxu0
    %v6139 = vadd.f32 %v5771, %v6138
    %v6140 = vpop.f32.mrf.mxu0
    %v6141 = vadd.f32 %v5771, %v6140
    %6142 = vmatmul.bf16.gmra.mxu0 %v5687
    %v6143 = vpop.f32.mrf.mxu0
    %v6144 = vadd.f32 %v5771, %v6143
    %v6145 = vpop.f32.mrf.mxu0
    %v6146 = vadd.f32 %v5771, %v6145
    %6147 = vmatmul.bf16.gmra.mxu0 %v5689
    %v6148 = vpop.f32.mrf.mxu0
    %v6149 = vadd.f32 %v5771, %v6148
    %v6150 = vpop.f32.mrf.mxu0
    %v6151 = vadd.f32 %v5771, %v6150
    %6152 = vmatmul.bf16.gmra.mxu0 %v5691
    %v6153 = vpop.f32.mrf.mxu0
    %v6154 = vadd.f32 %v5771, %v6153
    %v6155 = vpop.f32.mrf.mxu0
    %v6156 = vadd.f32 %v5771, %v6155
    %6157 = vmatmul.bf16.gmra.mxu0 %v5693
    %v6158 = vpop.f32.mrf.mxu0
    %v6159 = vadd.f32 %v5771, %v6158
    %v6160 = vpop.f32.mrf.mxu0
    %v6161 = vadd.f32 %v5771, %v6160
    %6162 = vmatmul.bf16.gmra.mxu0 %v5695
    %v6163 = vpop.f32.mrf.mxu0
    %v6164 = vadd.f32 %v5771, %v6163
    %v6165 = vpop.f32.mrf.mxu0
    %v6166 = vadd.f32 %v5771, %v6165
    %6167 = vmatmul.bf16.gmra.mxu0 %v5697
    %v6168 = vpop.f32.mrf.mxu0
    %v6169 = vadd.f32 %v5771, %v6168
    %v6170 = vpop.f32.mrf.mxu0
    %v6171 = vadd.f32 %v5771, %v6170
    %6172 = vmatmul.bf16.gmra.mxu0 %v5699
    %v6173 = vpop.f32.mrf.mxu0
    %v6174 = vadd.f32 %v5771, %v6173
    %v6175 = vpop.f32.mrf.mxu0
    %v6176 = vadd.f32 %v5771, %v6175
    %6177 = vmatmul.bf16.gmra.mxu0 %v5701
    %v6178 = vpop.f32.mrf.mxu0
    %v6179 = vadd.f32 %v5771, %v6178
    %v6180 = vpop.f32.mrf.mxu0
    %v6181 = vadd.f32 %v5771, %v6180
    %6182 = vmatmul.bf16.gmra.mxu0 %v5703
    %v6183 = vpop.f32.mrf.mxu0
    %v6184 = vadd.f32 %v5771, %v6183
    %v6185 = vpop.f32.mrf.mxu0
    %v6186 = vadd.f32 %v5771, %v6185
    %6187 = vdwg.mxu0
    %6188 = vmatpush.bf16.msra.mxu0 %v6031
    %6189 = vmatpush.bf16.msra.mxu0 %v6027
    %6190 = vmatpush.bf16.msra.mxu0 %v6023
    %6191 = vmatpush.bf16.msra.mxu0 %v6019
    %6192 = vmatpush.bf16.msra.mxu0 %v6015
    %6193 = vmatpush.bf16.msra.mxu0 %v6011
    %6194 = vmatpush.bf16.msra.mxu0 %v6007
    %6195 = vmatpush.bf16.msra.mxu0 %v6003
    %6196 = vmatmul.bf16.gmra.mxu0 %v5674
    %v6197 = vpop.f32.mrf.mxu0
    %v6198 = vadd.f32 %v6109, %v6197
    %v6199 = vpop.f32.mrf.mxu0
    %v6200 = vadd.f32 %v6111, %v6199
    %6201 = vmatmul.bf16.gmra.mxu0 %v5676
    %v6202 = vpop.f32.mrf.mxu0
    %v6203 = vadd.f32 %v6114, %v6202
    %v6204 = vpop.f32.mrf.mxu0
    %v6205 = vadd.f32 %v6116, %v6204
    %6206 = vmatmul.bf16.gmra.mxu0 %v5678
    %v6207 = vpop.f32.mrf.mxu0
    %v6208 = vadd.f32 %v6119, %v6207
    %v6209 = vpop.f32.mrf.mxu0
    %v6210 = vadd.f32 %v6121, %v6209
    %6211 = vmatmul.bf16.gmra.mxu0 %v5680
    %v6212 = vpop.f32.mrf.mxu0
    %v6213 = vadd.f32 %v6124, %v6212
    %v6214 = vpop.f32.mrf.mxu0
    %v6215 = vadd.f32 %v6126, %v6214
    %6216 = vmatmul.bf16.gmra.mxu0 %v5682
    %v6217 = vpop.f32.mrf.mxu0
    %v6218 = vadd.f32 %v6129, %v6217
    %v6219 = vpop.f32.mrf.mxu0
    %v6220 = vadd.f32 %v6131, %v6219
    %6221 = vmatmul.bf16.gmra.mxu0 %v5684
    %v6222 = vpop.f32.mrf.mxu0
    %v6223 = vadd.f32 %v6134, %v6222
    %v6224 = vpop.f32.mrf.mxu0
    %v6225 = vadd.f32 %v6136, %v6224
    %6226 = vmatmul.bf16.gmra.mxu0 %v5686
    %v6227 = vpop.f32.mrf.mxu0
    %v6228 = vadd.f32 %v6139, %v6227
    %v6229 = vpop.f32.mrf.mxu0
    %v6230 = vadd.f32 %v6141, %v6229
    %6231 = vmatmul.bf16.gmra.mxu0 %v5688
    %v6232 = vpop.f32.mrf.mxu0
    %v6233 = vadd.f32 %v6144, %v6232
    %v6234 = vpop.f32.mrf.mxu0
    %v6235 = vadd.f32 %v6146, %v6234
    %6236 = vmatmul.bf16.gmra.mxu0 %v5690
    %v6237 = vpop.f32.mrf.mxu0
    %v6238 = vadd.f32 %v6149, %v6237
    %v6239 = vpop.f32.mrf.mxu0
    %v6240 = vadd.f32 %v6151, %v6239
    %6241 = vmatmul.bf16.gmra.mxu0 %v5692
    %v6242 = vpop.f32.mrf.mxu0
    %v6243 = vadd.f32 %v6154, %v6242
    %v6244 = vpop.f32.mrf.mxu0
    %v6245 = vadd.f32 %v6156, %v6244
    %6246 = vmatmul.bf16.gmra.mxu0 %v5694
    %v6247 = vpop.f32.mrf.mxu0
    %v6248 = vadd.f32 %v6159, %v6247
    %v6249 = vpop.f32.mrf.mxu0
    %v6250 = vadd.f32 %v6161, %v6249
    %6251 = vmatmul.bf16.gmra.mxu0 %v5696
    %v6252 = vpop.f32.mrf.mxu0
    %v6253 = vadd.f32 %v6164, %v6252
    %v6254 = vpop.f32.mrf.mxu0
    %v6255 = vadd.f32 %v6166, %v6254
    %6256 = vmatmul.bf16.gmra.mxu0 %v5698
    %v6257 = vpop.f32.mrf.mxu0
    %v6258 = vadd.f32 %v6169, %v6257
    %v6259 = vpop.f32.mrf.mxu0
    %v6260 = vadd.f32 %v6171, %v6259
    %6261 = vmatmul.bf16.gmra.mxu0 %v5700
    %v6262 = vpop.f32.mrf.mxu0
    %v6263 = vadd.f32 %v6174, %v6262
    %v6264 = vpop.f32.mrf.mxu0
    %v6265 = vadd.f32 %v6176, %v6264
    %6266 = vmatmul.bf16.gmra.mxu0 %v5702
    %v6267 = vpop.f32.mrf.mxu0
    %v6268 = vadd.f32 %v6179, %v6267
    %v6269 = vpop.f32.mrf.mxu0
    %v6270 = vadd.f32 %v6181, %v6269
    %6271 = vmatmul.bf16.gmra.mxu0 %v5704
    %v6272 = vpop.f32.mrf.mxu0
    %v6273 = vadd.f32 %v6184, %v6272
    %v6274 = vpop.f32.mrf.mxu0
    %v6275 = vadd.f32 %v6186, %v6274
    %6276 = vdwg.mxu0
    %6277 = vmatpush.bf16.msra.mxu0 %v6000
    %6278 = vmatpush.bf16.msra.mxu0 %v5996
    %6279 = vmatpush.bf16.msra.mxu0 %v5992
    %6280 = vmatpush.bf16.msra.mxu0 %v5988
    %6281 = vmatpush.bf16.msra.mxu0 %v5984
    %6282 = vmatpush.bf16.msra.mxu0 %v5980
    %6283 = vmatpush.bf16.msra.mxu0 %v5976
    %6284 = vmatpush.bf16.msra.mxu0 %v5972
    %6285 = vmatmul.bf16.gmra.mxu0 %v5673
    %v6286 = vpop.f32.mrf.mxu0
    %v6287 = vadd.f32 %v5772, %v6286
    %v6288 = vpop.f32.mrf.mxu0
    %v6289 = vadd.f32 %v5772, %v6288
    %6290 = vmatmul.bf16.gmra.mxu0 %v5675
    %v6291 = vpop.f32.mrf.mxu0
    %v6292 = vadd.f32 %v5772, %v6291
    %v6293 = vpop.f32.mrf.mxu0
    %v6294 = vadd.f32 %v5772, %v6293
    %6295 = vmatmul.bf16.gmra.mxu0 %v5677
    %v6296 = vpop.f32.mrf.mxu0
    %v6297 = vadd.f32 %v5772, %v6296
    %v6298 = vpop.f32.mrf.mxu0
    %v6299 = vadd.f32 %v5772, %v6298
    %6300 = vmatmul.bf16.gmra.mxu0 %v5679
    %v6301 = vpop.f32.mrf.mxu0
    %v6302 = vadd.f32 %v5772, %v6301
    %v6303 = vpop.f32.mrf.mxu0
    %v6304 = vadd.f32 %v5772, %v6303
    %6305 = vmatmul.bf16.gmra.mxu0 %v5681
    %v6306 = vpop.f32.mrf.mxu0
    %v6307 = vadd.f32 %v5772, %v6306
    %v6308 = vpop.f32.mrf.mxu0
    %v6309 = vadd.f32 %v5772, %v6308
    %6310 = vmatmul.bf16.gmra.mxu0 %v5683
    %v6311 = vpop.f32.mrf.mxu0
    %v6312 = vadd.f32 %v5772, %v6311
    %v6313 = vpop.f32.mrf.mxu0
    %v6314 = vadd.f32 %v5772, %v6313
    %6315 = vmatmul.bf16.gmra.mxu0 %v5685
    %v6316 = vpop.f32.mrf.mxu0
    %v6317 = vadd.f32 %v5772, %v6316
    %v6318 = vpop.f32.mrf.mxu0
    %v6319 = vadd.f32 %v5772, %v6318
    %6320 = vmatmul.bf16.gmra.mxu0 %v5687
    %v6321 = vpop.f32.mrf.mxu0
    %v6322 = vadd.f32 %v5772, %v6321
    %v6323 = vpop.f32.mrf.mxu0
    %v6324 = vadd.f32 %v5772, %v6323
    %6325 = vmatmul.bf16.gmra.mxu0 %v5689
    %v6326 = vpop.f32.mrf.mxu0
    %v6327 = vadd.f32 %v5772, %v6326
    %v6328 = vpop.f32.mrf.mxu0
    %v6329 = vadd.f32 %v5772, %v6328
    %6330 = vmatmul.bf16.gmra.mxu0 %v5691
    %v6331 = vpop.f32.mrf.mxu0
    %v6332 = vadd.f32 %v5772, %v6331
    %v6333 = vpop.f32.mrf.mxu0
    %v6334 = vadd.f32 %v5772, %v6333
    %6335 = vmatmul.bf16.gmra.mxu0 %v5693
    %v6336 = vpop.f32.mrf.mxu0
    %v6337 = vadd.f32 %v5772, %v6336
    %v6338 = vpop.f32.mrf.mxu0
    %v6339 = vadd.f32 %v5772, %v6338
    %6340 = vmatmul.bf16.gmra.mxu0 %v5695
    %v6341 = vpop.f32.mrf.mxu0
    %v6342 = vadd.f32 %v5772, %v6341
    %v6343 = vpop.f32.mrf.mxu0
    %v6344 = vadd.f32 %v5772, %v6343
    %6345 = vmatmul.bf16.gmra.mxu0 %v5697
    %v6346 = vpop.f32.mrf.mxu0
    %v6347 = vadd.f32 %v5772, %v6346
    %v6348 = vpop.f32.mrf.mxu0
    %v6349 = vadd.f32 %v5772, %v6348
    %6350 = vmatmul.bf16.gmra.mxu0 %v5699
    %v6351 = vpop.f32.mrf.mxu0
    %v6352 = vadd.f32 %v5772, %v6351
    %v6353 = vpop.f32.mrf.mxu0
    %v6354 = vadd.f32 %v5772, %v6353
    %6355 = vmatmul.bf16.gmra.mxu0 %v5701
    %v6356 = vpop.f32.mrf.mxu0
    %v6357 = vadd.f32 %v5772, %v6356
    %v6358 = vpop.f32.mrf.mxu0
    %v6359 = vadd.f32 %v5772, %v6358
    %6360 = vmatmul.bf16.gmra.mxu0 %v5703
    %v6361 = vpop.f32.mrf.mxu0
    %v6362 = vadd.f32 %v5772, %v6361
    %v6363 = vpop.f32.mrf.mxu0
    %v6364 = vadd.f32 %v5772, %v6363
    %6365 = vdwg.mxu0
    %6366 = vmatpush.bf16.msra.mxu0 %v6032
    %6367 = vmatpush.bf16.msra.mxu0 %v6028
    %6368 = vmatpush.bf16.msra.mxu0 %v6024
    %6369 = vmatpush.bf16.msra.mxu0 %v6020
    %6370 = vmatpush.bf16.msra.mxu0 %v6016
    %6371 = vmatpush.bf16.msra.mxu0 %v6012
    %6372 = vmatpush.bf16.msra.mxu0 %v6008
    %6373 = vmatpush.bf16.msra.mxu0 %v6004
    %6374 = vmatmul.bf16.gmra.mxu0 %v5674
    %v6375 = vpop.f32.mrf.mxu0
    %v6376 = vadd.f32 %v6287, %v6375
    %v6377 = vpop.f32.mrf.mxu0
    %v6378 = vadd.f32 %v6289, %v6377
    %6379 = vmatmul.bf16.gmra.mxu0 %v5676
    %v6380 = vpop.f32.mrf.mxu0
    %v6381 = vadd.f32 %v6292, %v6380
    %v6382 = vpop.f32.mrf.mxu0
    %v6383 = vadd.f32 %v6294, %v6382
    %6384 = vmatmul.bf16.gmra.mxu0 %v5678
    %v6385 = vpop.f32.mrf.mxu0
    %v6386 = vadd.f32 %v6297, %v6385
    %v6387 = vpop.f32.mrf.mxu0
    %v6388 = vadd.f32 %v6299, %v6387
    %6389 = vmatmul.bf16.gmra.mxu0 %v5680
    %v6390 = vpop.f32.mrf.mxu0
    %v6391 = vadd.f32 %v6302, %v6390
    %v6392 = vpop.f32.mrf.mxu0
    %v6393 = vadd.f32 %v6304, %v6392
    %6394 = vmatmul.bf16.gmra.mxu0 %v5682
    %v6395 = vpop.f32.mrf.mxu0
    %v6396 = vadd.f32 %v6307, %v6395
    %v6397 = vpop.f32.mrf.mxu0
    %v6398 = vadd.f32 %v6309, %v6397
    %6399 = vmatmul.bf16.gmra.mxu0 %v5684
    %v6400 = vpop.f32.mrf.mxu0
    %v6401 = vadd.f32 %v6312, %v6400
    %v6402 = vpop.f32.mrf.mxu0
    %v6403 = vadd.f32 %v6314, %v6402
    %6404 = vmatmul.bf16.gmra.mxu0 %v5686
    %v6405 = vpop.f32.mrf.mxu0
    %v6406 = vadd.f32 %v6317, %v6405
    %v6407 = vpop.f32.mrf.mxu0
    %v6408 = vadd.f32 %v6319, %v6407
    %6409 = vmatmul.bf16.gmra.mxu0 %v5688
    %v6410 = vpop.f32.mrf.mxu0
    %v6411 = vadd.f32 %v6322, %v6410
    %v6412 = vpop.f32.mrf.mxu0
    %v6413 = vadd.f32 %v6324, %v6412
    %6414 = vmatmul.bf16.gmra.mxu0 %v5690
    %v6415 = vpop.f32.mrf.mxu0
    %v6416 = vadd.f32 %v6327, %v6415
    %v6417 = vpop.f32.mrf.mxu0
    %v6418 = vadd.f32 %v6329, %v6417
    %6419 = vmatmul.bf16.gmra.mxu0 %v5692
    %v6420 = vpop.f32.mrf.mxu0
    %v6421 = vadd.f32 %v6332, %v6420
    %v6422 = vpop.f32.mrf.mxu0
    %v6423 = vadd.f32 %v6334, %v6422
    %6424 = vmatmul.bf16.gmra.mxu0 %v5694
    %v6425 = vpop.f32.mrf.mxu0
    %v6426 = vadd.f32 %v6337, %v6425
    %v6427 = vpop.f32.mrf.mxu0
    %v6428 = vadd.f32 %v6339, %v6427
    %6429 = vmatmul.bf16.gmra.mxu0 %v5696
    %v6430 = vpop.f32.mrf.mxu0
    %v6431 = vadd.f32 %v6342, %v6430
    %v6432 = vpop.f32.mrf.mxu0
    %v6433 = vadd.f32 %v6344, %v6432
    %6434 = vmatmul.bf16.gmra.mxu0 %v5698
    %v6435 = vpop.f32.mrf.mxu0
    %v6436 = vadd.f32 %v6347, %v6435
    %v6437 = vpop.f32.mrf.mxu0
    %v6438 = vadd.f32 %v6349, %v6437
    %6439 = vmatmul.bf16.gmra.mxu0 %v5700
    %v6440 = vpop.f32.mrf.mxu0
    %v6441 = vadd.f32 %v6352, %v6440
    %v6442 = vpop.f32.mrf.mxu0
    %v6443 = vadd.f32 %v6354, %v6442
    %6444 = vmatmul.bf16.gmra.mxu0 %v5702
    %v6445 = vpop.f32.mrf.mxu0
    %v6446 = vadd.f32 %v6357, %v6445
    %v6447 = vpop.f32.mrf.mxu0
    %v6448 = vadd.f32 %v6359, %v6447
    %6449 = vmatmul.bf16.gmra.mxu0 %v5704
    %v6450 = vpop.f32.mrf.mxu0
    %v6451 = vadd.f32 %v6362, %v6450
    %v6452 = vpop.f32.mrf.mxu0
    %v6453 = vadd.f32 %v6364, %v6452
    %6454 = vdwg.mxu0
    %6455 = vmatpush.bf16.msra.mxu0 %v6001
    %6456 = vmatpush.bf16.msra.mxu0 %v5997
    %6457 = vmatpush.bf16.msra.mxu0 %v5993
    %6458 = vmatpush.bf16.msra.mxu0 %v5989
    %6459 = vmatpush.bf16.msra.mxu0 %v5985
    %6460 = vmatpush.bf16.msra.mxu0 %v5981
    %6461 = vmatpush.bf16.msra.mxu0 %v5977
    %6462 = vmatpush.bf16.msra.mxu0 %v5973
    %6463 = vmatmul.bf16.gmra.mxu0 %v5673
    %v6464 = vpop.f32.mrf.mxu0
    %v6465 = vadd.f32 %v5773, %v6464
    %v6466 = vpop.f32.mrf.mxu0
    %v6467 = vadd.f32 %v5773, %v6466
    %6468 = vmatmul.bf16.gmra.mxu0 %v5675
    %v6469 = vpop.f32.mrf.mxu0
    %v6470 = vadd.f32 %v5773, %v6469
    %v6471 = vpop.f32.mrf.mxu0
    %v6472 = vadd.f32 %v5773, %v6471
    %6473 = vmatmul.bf16.gmra.mxu0 %v5677
    %v6474 = vpop.f32.mrf.mxu0
    %v6475 = vadd.f32 %v5773, %v6474
    %v6476 = vpop.f32.mrf.mxu0
    %v6477 = vadd.f32 %v5773, %v6476
    %6478 = vmatmul.bf16.gmra.mxu0 %v5679
    %v6479 = vpop.f32.mrf.mxu0
    %v6480 = vadd.f32 %v5773, %v6479
    %v6481 = vpop.f32.mrf.mxu0
    %v6482 = vadd.f32 %v5773, %v6481
    %6483 = vmatmul.bf16.gmra.mxu0 %v5681
    %v6484 = vpop.f32.mrf.mxu0
    %v6485 = vadd.f32 %v5773, %v6484
    %v6486 = vpop.f32.mrf.mxu0
    %v6487 = vadd.f32 %v5773, %v6486
    %6488 = vmatmul.bf16.gmra.mxu0 %v5683
    %v6489 = vpop.f32.mrf.mxu0
    %v6490 = vadd.f32 %v5773, %v6489
    %v6491 = vpop.f32.mrf.mxu0
    %v6492 = vadd.f32 %v5773, %v6491
    %6493 = vmatmul.bf16.gmra.mxu0 %v5685
    %v6494 = vpop.f32.mrf.mxu0
    %v6495 = vadd.f32 %v5773, %v6494
    %v6496 = vpop.f32.mrf.mxu0
    %v6497 = vadd.f32 %v5773, %v6496
    %6498 = vmatmul.bf16.gmra.mxu0 %v5687
    %v6499 = vpop.f32.mrf.mxu0
    %v6500 = vadd.f32 %v5773, %v6499
    %v6501 = vpop.f32.mrf.mxu0
    %v6502 = vadd.f32 %v5773, %v6501
    %6503 = vmatmul.bf16.gmra.mxu0 %v5689
    %v6504 = vpop.f32.mrf.mxu0
    %v6505 = vadd.f32 %v5773, %v6504
    %v6506 = vpop.f32.mrf.mxu0
    %v6507 = vadd.f32 %v5773, %v6506
    %6508 = vmatmul.bf16.gmra.mxu0 %v5691
    %v6509 = vpop.f32.mrf.mxu0
    %v6510 = vadd.f32 %v5773, %v6509
    %v6511 = vpop.f32.mrf.mxu0
    %v6512 = vadd.f32 %v5773, %v6511
    %6513 = vmatmul.bf16.gmra.mxu0 %v5693
    %v6514 = vpop.f32.mrf.mxu0
    %v6515 = vadd.f32 %v5773, %v6514
    %v6516 = vpop.f32.mrf.mxu0
    %v6517 = vadd.f32 %v5773, %v6516
    %6518 = vmatmul.bf16.gmra.mxu0 %v5695
    %v6519 = vpop.f32.mrf.mxu0
    %v6520 = vadd.f32 %v5773, %v6519
    %v6521 = vpop.f32.mrf.mxu0
    %v6522 = vadd.f32 %v5773, %v6521
    %6523 = vmatmul.bf16.gmra.mxu0 %v5697
    %v6524 = vpop.f32.mrf.mxu0
    %v6525 = vadd.f32 %v5773, %v6524
    %v6526 = vpop.f32.mrf.mxu0
    %v6527 = vadd.f32 %v5773, %v6526
    %6528 = vmatmul.bf16.gmra.mxu0 %v5699
    %v6529 = vpop.f32.mrf.mxu0
    %v6530 = vadd.f32 %v5773, %v6529
    %v6531 = vpop.f32.mrf.mxu0
    %v6532 = vadd.f32 %v5773, %v6531
    %6533 = vmatmul.bf16.gmra.mxu0 %v5701
    %v6534 = vpop.f32.mrf.mxu0
    %v6535 = vadd.f32 %v5773, %v6534
    %v6536 = vpop.f32.mrf.mxu0
    %v6537 = vadd.f32 %v5773, %v6536
    %6538 = vmatmul.bf16.gmra.mxu0 %v5703
    %v6539 = vpop.f32.mrf.mxu0
    %v6540 = vadd.f32 %v5773, %v6539
    %v6541 = vpop.f32.mrf.mxu0
    %v6542 = vadd.f32 %v5773, %v6541
    %6543 = vdwg.mxu0
    %6544 = vmatpush.bf16.msra.mxu0 %v6033
    %6545 = vmatpush.bf16.msra.mxu0 %v6029
    %6546 = vmatpush.bf16.msra.mxu0 %v6025
    %6547 = vmatpush.bf16.msra.mxu0 %v6021
    %6548 = vmatpush.bf16.msra.mxu0 %v6017
    %6549 = vmatpush.bf16.msra.mxu0 %v6013
    %6550 = vmatpush.bf16.msra.mxu0 %v6009
    %6551 = vmatpush.bf16.msra.mxu0 %v6005
    %6552 = vmatmul.bf16.gmra.mxu0 %v5674
    %v6553 = vpop.f32.mrf.mxu0
    %v6554 = vadd.f32 %v6465, %v6553
    %v6555 = vpop.f32.mrf.mxu0
    %v6556 = vadd.f32 %v6467, %v6555
    %6557 = vmatmul.bf16.gmra.mxu0 %v5676
    %v6558 = vpop.f32.mrf.mxu0
    %v6559 = vadd.f32 %v6470, %v6558
    %v6560 = vpop.f32.mrf.mxu0
    %v6561 = vadd.f32 %v6472, %v6560
    %6562 = vmatmul.bf16.gmra.mxu0 %v5678
    %v6563 = vpop.f32.mrf.mxu0
    %v6564 = vadd.f32 %v6475, %v6563
    %v6565 = vpop.f32.mrf.mxu0
    %v6566 = vadd.f32 %v6477, %v6565
    %6567 = vmatmul.bf16.gmra.mxu0 %v5680
    %v6568 = vpop.f32.mrf.mxu0
    %v6569 = vadd.f32 %v6480, %v6568
    %v6570 = vpop.f32.mrf.mxu0
    %v6571 = vadd.f32 %v6482, %v6570
    %6572 = vmatmul.bf16.gmra.mxu0 %v5682
    %v6573 = vpop.f32.mrf.mxu0
    %v6574 = vadd.f32 %v6485, %v6573
    %v6575 = vpop.f32.mrf.mxu0
    %v6576 = vadd.f32 %v6487, %v6575
    %6577 = vmatmul.bf16.gmra.mxu0 %v5684
    %v6578 = vpop.f32.mrf.mxu0
    %v6579 = vadd.f32 %v6490, %v6578
    %v6580 = vpop.f32.mrf.mxu0
    %v6581 = vadd.f32 %v6492, %v6580
    %6582 = vmatmul.bf16.gmra.mxu0 %v5686
    %v6583 = vpop.f32.mrf.mxu0
    %v6584 = vadd.f32 %v6495, %v6583
    %v6585 = vpop.f32.mrf.mxu0
    %v6586 = vadd.f32 %v6497, %v6585
    %6587 = vmatmul.bf16.gmra.mxu0 %v5688
    %v6588 = vpop.f32.mrf.mxu0
    %v6589 = vadd.f32 %v6500, %v6588
    %v6590 = vpop.f32.mrf.mxu0
    %v6591 = vadd.f32 %v6502, %v6590
    %6592 = vmatmul.bf16.gmra.mxu0 %v5690
    %v6593 = vpop.f32.mrf.mxu0
    %v6594 = vadd.f32 %v6505, %v6593
    %v6595 = vpop.f32.mrf.mxu0
    %v6596 = vadd.f32 %v6507, %v6595
    %6597 = vmatmul.bf16.gmra.mxu0 %v5692
    %v6598 = vpop.f32.mrf.mxu0
    %v6599 = vadd.f32 %v6510, %v6598
    %v6600 = vpop.f32.mrf.mxu0
    %v6601 = vadd.f32 %v6512, %v6600
    %6602 = vmatmul.bf16.gmra.mxu0 %v5694
    %v6603 = vpop.f32.mrf.mxu0
    %v6604 = vadd.f32 %v6515, %v6603
    %v6605 = vpop.f32.mrf.mxu0
    %v6606 = vadd.f32 %v6517, %v6605
    %6607 = vmatmul.bf16.gmra.mxu0 %v5696
    %v6608 = vpop.f32.mrf.mxu0
    %v6609 = vadd.f32 %v6520, %v6608
    %v6610 = vpop.f32.mrf.mxu0
    %v6611 = vadd.f32 %v6522, %v6610
    %6612 = vmatmul.bf16.gmra.mxu0 %v5698
    %v6613 = vpop.f32.mrf.mxu0
    %v6614 = vadd.f32 %v6525, %v6613
    %v6615 = vpop.f32.mrf.mxu0
    %v6616 = vadd.f32 %v6527, %v6615
    %6617 = vmatmul.bf16.gmra.mxu0 %v5700
    %v6618 = vpop.f32.mrf.mxu0
    %v6619 = vadd.f32 %v6530, %v6618
    %v6620 = vpop.f32.mrf.mxu0
    %v6621 = vadd.f32 %v6532, %v6620
    %6622 = vmatmul.bf16.gmra.mxu0 %v5702
    %v6623 = vpop.f32.mrf.mxu0
    %v6624 = vadd.f32 %v6535, %v6623
    %v6625 = vpop.f32.mrf.mxu0
    %v6626 = vadd.f32 %v6537, %v6625
    %6627 = vmatmul.bf16.gmra.mxu0 %v5704
    %v6628 = vpop.f32.mrf.mxu0
    %v6629 = vadd.f32 %v6540, %v6628
    %v6630 = vpop.f32.mrf.mxu0
    %v6631 = vadd.f32 %v6542, %v6630
    %6632 = vdwg.mxu0
    %6633 = vmatpush.bf16.msra.mxu0 %v6002
    %6634 = vmatpush.bf16.msra.mxu0 %v5998
    %6635 = vmatpush.bf16.msra.mxu0 %v5994
    %6636 = vmatpush.bf16.msra.mxu0 %v5990
    %6637 = vmatpush.bf16.msra.mxu0 %v5986
    %6638 = vmatpush.bf16.msra.mxu0 %v5982
    %6639 = vmatpush.bf16.msra.mxu0 %v5978
    %6640 = vmatpush.bf16.msra.mxu0 %v5974
    %6641 = vmatmul.bf16.gmra.mxu0 %v5673
    %v6642 = vpop.f32.mrf.mxu0
    %v6643 = vadd.f32 %v5774, %v6642
    %v6644 = vpop.f32.mrf.mxu0
    %v6645 = vadd.f32 %v5774, %v6644
    %6646 = vmatmul.bf16.gmra.mxu0 %v5675
    %v6647 = vpop.f32.mrf.mxu0
    %v6648 = vadd.f32 %v5774, %v6647
    %v6649 = vpop.f32.mrf.mxu0
    %v6650 = vadd.f32 %v5774, %v6649
    %6651 = vmatmul.bf16.gmra.mxu0 %v5677
    %v6652 = vpop.f32.mrf.mxu0
    %v6653 = vadd.f32 %v5774, %v6652
    %v6654 = vpop.f32.mrf.mxu0
    %v6655 = vadd.f32 %v5774, %v6654
    %6656 = vmatmul.bf16.gmra.mxu0 %v5679
    %v6657 = vpop.f32.mrf.mxu0
    %v6658 = vadd.f32 %v5774, %v6657
    %v6659 = vpop.f32.mrf.mxu0
    %v6660 = vadd.f32 %v5774, %v6659
    %6661 = vmatmul.bf16.gmra.mxu0 %v5681
    %v6662 = vpop.f32.mrf.mxu0
    %v6663 = vadd.f32 %v5774, %v6662
    %v6664 = vpop.f32.mrf.mxu0
    %v6665 = vadd.f32 %v5774, %v6664
    %6666 = vmatmul.bf16.gmra.mxu0 %v5683
    %v6667 = vpop.f32.mrf.mxu0
    %v6668 = vadd.f32 %v5774, %v6667
    %v6669 = vpop.f32.mrf.mxu0
    %v6670 = vadd.f32 %v5774, %v6669
    %6671 = vmatmul.bf16.gmra.mxu0 %v5685
    %v6672 = vpop.f32.mrf.mxu0
    %v6673 = vadd.f32 %v5774, %v6672
    %v6674 = vpop.f32.mrf.mxu0
    %v6675 = vadd.f32 %v5774, %v6674
    %6676 = vmatmul.bf16.gmra.mxu0 %v5687
    %v6677 = vpop.f32.mrf.mxu0
    %v6678 = vadd.f32 %v5774, %v6677
    %v6679 = vpop.f32.mrf.mxu0
    %v6680 = vadd.f32 %v5774, %v6679
    %6681 = vmatmul.bf16.gmra.mxu0 %v5689
    %v6682 = vpop.f32.mrf.mxu0
    %v6683 = vadd.f32 %v5774, %v6682
    %v6684 = vpop.f32.mrf.mxu0
    %v6685 = vadd.f32 %v5774, %v6684
    %6686 = vmatmul.bf16.gmra.mxu0 %v5691
    %v6687 = vpop.f32.mrf.mxu0
    %v6688 = vadd.f32 %v5774, %v6687
    %v6689 = vpop.f32.mrf.mxu0
    %v6690 = vadd.f32 %v5774, %v6689
    %6691 = vmatmul.bf16.gmra.mxu0 %v5693
    %v6692 = vpop.f32.mrf.mxu0
    %v6693 = vadd.f32 %v5774, %v6692
    %v6694 = vpop.f32.mrf.mxu0
    %v6695 = vadd.f32 %v5774, %v6694
    %6696 = vmatmul.bf16.gmra.mxu0 %v5695
    %v6697 = vpop.f32.mrf.mxu0
    %v6698 = vadd.f32 %v5774, %v6697
    %v6699 = vpop.f32.mrf.mxu0
    %v6700 = vadd.f32 %v5774, %v6699
    %6701 = vmatmul.bf16.gmra.mxu0 %v5697
    %v6702 = vpop.f32.mrf.mxu0
    %v6703 = vadd.f32 %v5774, %v6702
    %v6704 = vpop.f32.mrf.mxu0
    %v6705 = vadd.f32 %v5774, %v6704
    %6706 = vmatmul.bf16.gmra.mxu0 %v5699
    %v6707 = vpop.f32.mrf.mxu0
    %v6708 = vadd.f32 %v5774, %v6707
    %v6709 = vpop.f32.mrf.mxu0
    %v6710 = vadd.f32 %v5774, %v6709
    %6711 = vmatmul.bf16.gmra.mxu0 %v5701
    %v6712 = vpop.f32.mrf.mxu0
    %v6713 = vadd.f32 %v5774, %v6712
    %v6714 = vpop.f32.mrf.mxu0
    %v6715 = vadd.f32 %v5774, %v6714
    %6716 = vmatmul.bf16.gmra.mxu0 %v5703
    %v6717 = vpop.f32.mrf.mxu0
    %v6718 = vadd.f32 %v5774, %v6717
    %v6719 = vpop.f32.mrf.mxu0
    %v6720 = vadd.f32 %v5774, %v6719
    %6721 = vdwg.mxu0
    %6722 = vmatpush.bf16.msra.mxu0 %v6034
    %6723 = vmatpush.bf16.msra.mxu0 %v6030
    %6724 = vmatpush.bf16.msra.mxu0 %v6026
    %6725 = vmatpush.bf16.msra.mxu0 %v6022
    %6726 = vmatpush.bf16.msra.mxu0 %v6018
    %6727 = vmatpush.bf16.msra.mxu0 %v6014
    %6728 = vmatpush.bf16.msra.mxu0 %v6010
    %6729 = vmatpush.bf16.msra.mxu0 %v6006
    %6730 = vmatmul.bf16.gmra.mxu0 %v5674
    %v6731 = vpop.f32.mrf.mxu0
    %v6732 = vadd.f32 %v6643, %v6731
    %v6733 = vpop.f32.mrf.mxu0
    %v6734 = vadd.f32 %v6645, %v6733
    %6735 = vmatmul.bf16.gmra.mxu0 %v5676
    %v6736 = vpop.f32.mrf.mxu0
    %v6737 = vadd.f32 %v6648, %v6736
    %v6738 = vpop.f32.mrf.mxu0
    %v6739 = vadd.f32 %v6650, %v6738
    %6740 = vmatmul.bf16.gmra.mxu0 %v5678
    %v6741 = vpop.f32.mrf.mxu0
    %v6742 = vadd.f32 %v6653, %v6741
    %v6743 = vpop.f32.mrf.mxu0
    %v6744 = vadd.f32 %v6655, %v6743
    %6745 = vmatmul.bf16.gmra.mxu0 %v5680
    %v6746 = vpop.f32.mrf.mxu0
    %v6747 = vadd.f32 %v6658, %v6746
    %v6748 = vpop.f32.mrf.mxu0
    %v6749 = vadd.f32 %v6660, %v6748
    %6750 = vmatmul.bf16.gmra.mxu0 %v5682
    %v6751 = vpop.f32.mrf.mxu0
    %v6752 = vadd.f32 %v6663, %v6751
    %v6753 = vpop.f32.mrf.mxu0
    %v6754 = vadd.f32 %v6665, %v6753
    %6755 = vmatmul.bf16.gmra.mxu0 %v5684
    %v6756 = vpop.f32.mrf.mxu0
    %v6757 = vadd.f32 %v6668, %v6756
    %v6758 = vpop.f32.mrf.mxu0
    %v6759 = vadd.f32 %v6670, %v6758
    %6760 = vmatmul.bf16.gmra.mxu0 %v5686
    %v6761 = vpop.f32.mrf.mxu0
    %v6762 = vadd.f32 %v6673, %v6761
    %v6763 = vpop.f32.mrf.mxu0
    %v6764 = vadd.f32 %v6675, %v6763
    %6765 = vmatmul.bf16.gmra.mxu0 %v5688
    %v6766 = vpop.f32.mrf.mxu0
    %v6767 = vadd.f32 %v6678, %v6766
    %v6768 = vpop.f32.mrf.mxu0
    %v6769 = vadd.f32 %v6680, %v6768
    %6770 = vmatmul.bf16.gmra.mxu0 %v5690
    %v6771 = vpop.f32.mrf.mxu0
    %v6772 = vadd.f32 %v6683, %v6771
    %v6773 = vpop.f32.mrf.mxu0
    %v6774 = vadd.f32 %v6685, %v6773
    %6775 = vmatmul.bf16.gmra.mxu0 %v5692
    %v6776 = vpop.f32.mrf.mxu0
    %v6777 = vadd.f32 %v6688, %v6776
    %v6778 = vpop.f32.mrf.mxu0
    %v6779 = vadd.f32 %v6690, %v6778
    %6780 = vmatmul.bf16.gmra.mxu0 %v5694
    %v6781 = vpop.f32.mrf.mxu0
    %v6782 = vadd.f32 %v6693, %v6781
    %v6783 = vpop.f32.mrf.mxu0
    %v6784 = vadd.f32 %v6695, %v6783
    %6785 = vmatmul.bf16.gmra.mxu0 %v5696
    %v6786 = vpop.f32.mrf.mxu0
    %v6787 = vadd.f32 %v6698, %v6786
    %v6788 = vpop.f32.mrf.mxu0
    %v6789 = vadd.f32 %v6700, %v6788
    %6790 = vmatmul.bf16.gmra.mxu0 %v5698
    %v6791 = vpop.f32.mrf.mxu0
    %v6792 = vadd.f32 %v6703, %v6791
    %v6793 = vpop.f32.mrf.mxu0
    %v6794 = vadd.f32 %v6705, %v6793
    %6795 = vmatmul.bf16.gmra.mxu0 %v5700
    %v6796 = vpop.f32.mrf.mxu0
    %v6797 = vadd.f32 %v6708, %v6796
    %v6798 = vpop.f32.mrf.mxu0
    %v6799 = vadd.f32 %v6710, %v6798
    %6800 = vmatmul.bf16.gmra.mxu0 %v5702
    %v6801 = vpop.f32.mrf.mxu0
    %v6802 = vadd.f32 %v6713, %v6801
    %v6803 = vpop.f32.mrf.mxu0
    %v6804 = vadd.f32 %v6715, %v6803
    %6805 = vmatmul.bf16.gmra.mxu0 %v5704
    %v6806 = vpop.f32.mrf.mxu0
    %v6807 = vadd.f32 %v6718, %v6806
    %v6808 = vpop.f32.mrf.mxu0
    %v6809 = vadd.f32 %v6720, %v6808
    %6810 = vdwg.mxu0
    %vm6811 = vcmp.gt.f32.partialorder %v6198, 0.0
    %vm6812 = vcmp.gt.f32.partialorder %v6376, 0.0
    %vm6813 = vcmp.gt.f32.partialorder %v6554, 0.0
    %vm6814 = vcmp.gt.f32.partialorder %v6732, 0.0
    %vm6815 = vcmp.gt.f32.partialorder %v6200, 0.0
    %vm6816 = vcmp.gt.f32.partialorder %v6378, 0.0
    %vm6817 = vcmp.gt.f32.partialorder %v6556, 0.0
    %vm6818 = vcmp.gt.f32.partialorder %v6734, 0.0
    %vm6819 = vcmp.gt.f32.partialorder %v6203, 0.0
    %vm6820 = vcmp.gt.f32.partialorder %v6381, 0.0
    %vm6821 = vcmp.gt.f32.partialorder %v6559, 0.0
    %vm6822 = vcmp.gt.f32.partialorder %v6737, 0.0
    %vm6823 = vcmp.gt.f32.partialorder %v6205, 0.0
    %vm6824 = vcmp.gt.f32.partialorder %v6383, 0.0
    %vm6825 = vcmp.gt.f32.partialorder %v6561, 0.0
    %vm6826 = vcmp.gt.f32.partialorder %v6739, 0.0
    %vm6827 = vcmp.gt.f32.partialorder %v6208, 0.0
    %vm6828 = vcmp.gt.f32.partialorder %v6386, 0.0
    %vm6829 = vcmp.gt.f32.partialorder %v6564, 0.0
    %vm6830 = vcmp.gt.f32.partialorder %v6742, 0.0
    %vm6831 = vcmp.gt.f32.partialorder %v6210, 0.0
    %vm6832 = vcmp.gt.f32.partialorder %v6388, 0.0
    %vm6833 = vcmp.gt.f32.partialorder %v6566, 0.0
    %vm6834 = vcmp.gt.f32.partialorder %v6744, 0.0
    %vm6835 = vcmp.gt.f32.partialorder %v6213, 0.0
    %vm6836 = vcmp.gt.f32.partialorder %v6391, 0.0
    %vm6837 = vcmp.gt.f32.partialorder %v6569, 0.0
    %vm6838 = vcmp.gt.f32.partialorder %v6747, 0.0
    %vm6839 = vcmp.gt.f32.partialorder %v6215, 0.0
    %vm6840 = vcmp.gt.f32.partialorder %v6393, 0.0
    %vm6841 = vcmp.gt.f32.partialorder %v6571, 0.0
    %vm6842 = vcmp.gt.f32.partialorder %v6749, 0.0
    %vm6843 = vcmp.gt.f32.partialorder %v6218, 0.0
    %vm6844 = vcmp.gt.f32.partialorder %v6396, 0.0
    %vm6845 = vcmp.gt.f32.partialorder %v6574, 0.0
    %vm6846 = vcmp.gt.f32.partialorder %v6752, 0.0
    %vm6847 = vcmp.gt.f32.partialorder %v6220, 0.0
    %vm6848 = vcmp.gt.f32.partialorder %v6398, 0.0
    %vm6849 = vcmp.gt.f32.partialorder %v6576, 0.0
    %vm6850 = vcmp.gt.f32.partialorder %v6754, 0.0
    %vm6851 = vcmp.gt.f32.partialorder %v6223, 0.0
    %vm6852 = vcmp.gt.f32.partialorder %v6401, 0.0
    %vm6853 = vcmp.gt.f32.partialorder %v6579, 0.0
    %vm6854 = vcmp.gt.f32.partialorder %v6757, 0.0
    %vm6855 = vcmp.gt.f32.partialorder %v6225, 0.0
    %vm6856 = vcmp.gt.f32.partialorder %v6403, 0.0
    %vm6857 = vcmp.gt.f32.partialorder %v6581, 0.0
    %vm6858 = vcmp.gt.f32.partialorder %v6759, 0.0
    %vm6859 = vcmp.gt.f32.partialorder %v6228, 0.0
    %vm6860 = vcmp.gt.f32.partialorder %v6406, 0.0
    %vm6861 = vcmp.gt.f32.partialorder %v6584, 0.0
    %vm6862 = vcmp.gt.f32.partialorder %v6762, 0.0
    %vm6863 = vcmp.gt.f32.partialorder %v6230, 0.0
    %vm6864 = vcmp.gt.f32.partialorder %v6408, 0.0
    %vm6865 = vcmp.gt.f32.partialorder %v6586, 0.0
    %vm6866 = vcmp.gt.f32.partialorder %v6764, 0.0
    %vm6867 = vcmp.gt.f32.partialorder %v6233, 0.0
    %vm6868 = vcmp.gt.f32.partialorder %v6411, 0.0
    %vm6869 = vcmp.gt.f32.partialorder %v6589, 0.0
    %vm6870 = vcmp.gt.f32.partialorder %v6767, 0.0
    %vm6871 = vcmp.gt.f32.partialorder %v6235, 0.0
    %vm6872 = vcmp.gt.f32.partialorder %v6413, 0.0
    %vm6873 = vcmp.gt.f32.partialorder %v6591, 0.0
    %vm6874 = vcmp.gt.f32.partialorder %v6769, 0.0
    %vm6875 = vcmp.gt.f32.partialorder %v6238, 0.0
    %vm6876 = vcmp.gt.f32.partialorder %v6416, 0.0
    %vm6877 = vcmp.gt.f32.partialorder %v6594, 0.0
    %vm6878 = vcmp.gt.f32.partialorder %v6772, 0.0
    %vm6879 = vcmp.gt.f32.partialorder %v6240, 0.0
    %vm6880 = vcmp.gt.f32.partialorder %v6418, 0.0
    %vm6881 = vcmp.gt.f32.partialorder %v6596, 0.0
    %vm6882 = vcmp.gt.f32.partialorder %v6774, 0.0
    %vm6883 = vcmp.gt.f32.partialorder %v6243, 0.0
    %vm6884 = vcmp.gt.f32.partialorder %v6421, 0.0
    %vm6885 = vcmp.gt.f32.partialorder %v6599, 0.0
    %vm6886 = vcmp.gt.f32.partialorder %v6777, 0.0
    %vm6887 = vcmp.gt.f32.partialorder %v6245, 0.0
    %vm6888 = vcmp.gt.f32.partialorder %v6423, 0.0
    %vm6889 = vcmp.gt.f32.partialorder %v6601, 0.0
    %vm6890 = vcmp.gt.f32.partialorder %v6779, 0.0
    %vm6891 = vcmp.gt.f32.partialorder %v6248, 0.0
    %vm6892 = vcmp.gt.f32.partialorder %v6426, 0.0
    %vm6893 = vcmp.gt.f32.partialorder %v6604, 0.0
    %vm6894 = vcmp.gt.f32.partialorder %v6782, 0.0
    %vm6895 = vcmp.gt.f32.partialorder %v6250, 0.0
    %vm6896 = vcmp.gt.f32.partialorder %v6428, 0.0
    %vm6897 = vcmp.gt.f32.partialorder %v6606, 0.0
    %vm6898 = vcmp.gt.f32.partialorder %v6784, 0.0
    %vm6899 = vcmp.gt.f32.partialorder %v6253, 0.0
    %vm6900 = vcmp.gt.f32.partialorder %v6431, 0.0
    %vm6901 = vcmp.gt.f32.partialorder %v6609, 0.0
    %vm6902 = vcmp.gt.f32.partialorder %v6787, 0.0
    %vm6903 = vcmp.gt.f32.partialorder %v6255, 0.0
    %vm6904 = vcmp.gt.f32.partialorder %v6433, 0.0
    %vm6905 = vcmp.gt.f32.partialorder %v6611, 0.0
    %vm6906 = vcmp.gt.f32.partialorder %v6789, 0.0
    %vm6907 = vcmp.gt.f32.partialorder %v6258, 0.0
    %vm6908 = vcmp.gt.f32.partialorder %v6436, 0.0
    %vm6909 = vcmp.gt.f32.partialorder %v6614, 0.0
    %vm6910 = vcmp.gt.f32.partialorder %v6792, 0.0
    %vm6911 = vcmp.gt.f32.partialorder %v6260, 0.0
    %vm6912 = vcmp.gt.f32.partialorder %v6438, 0.0
    %vm6913 = vcmp.gt.f32.partialorder %v6616, 0.0
    %vm6914 = vcmp.gt.f32.partialorder %v6794, 0.0
    %vm6915 = vcmp.gt.f32.partialorder %v6263, 0.0
    %vm6916 = vcmp.gt.f32.partialorder %v6441, 0.0
    %vm6917 = vcmp.gt.f32.partialorder %v6619, 0.0
    %vm6918 = vcmp.gt.f32.partialorder %v6797, 0.0
    %vm6919 = vcmp.gt.f32.partialorder %v6265, 0.0
    %vm6920 = vcmp.gt.f32.partialorder %v6443, 0.0
    %vm6921 = vcmp.gt.f32.partialorder %v6621, 0.0
    %vm6922 = vcmp.gt.f32.partialorder %v6799, 0.0
    %vm6923 = vcmp.gt.f32.partialorder %v6268, 0.0
    %vm6924 = vcmp.gt.f32.partialorder %v6446, 0.0
    %vm6925 = vcmp.gt.f32.partialorder %v6624, 0.0
    %vm6926 = vcmp.gt.f32.partialorder %v6802, 0.0
    %vm6927 = vcmp.gt.f32.partialorder %v6270, 0.0
    %vm6928 = vcmp.gt.f32.partialorder %v6448, 0.0
    %vm6929 = vcmp.gt.f32.partialorder %v6626, 0.0
    %vm6930 = vcmp.gt.f32.partialorder %v6804, 0.0
    %vm6931 = vcmp.gt.f32.partialorder %v6273, 0.0
    %vm6932 = vcmp.gt.f32.partialorder %v6451, 0.0
    %vm6933 = vcmp.gt.f32.partialorder %v6629, 0.0
    %vm6934 = vcmp.gt.f32.partialorder %v6807, 0.0
    %vm6935 = vcmp.gt.f32.partialorder %v6275, 0.0
    %vm6936 = vcmp.gt.f32.partialorder %v6453, 0.0
    %vm6937 = vcmp.gt.f32.partialorder %v6631, 0.0
    %vm6938 = vcmp.gt.f32.partialorder %v6809, 0.0
    %v6939 = vmul.f32 %v6198, 0.1
    %v6940 = vmul.f32 %v6376, 0.1
    %v6941 = vmul.f32 %v6554, 0.1
    %v6942 = vmul.f32 %v6732, 0.1
    %v6943 = vmul.f32 %v6200, 0.1
    %v6944 = vmul.f32 %v6378, 0.1
    %v6945 = vmul.f32 %v6556, 0.1
    %v6946 = vmul.f32 %v6734, 0.1
    %v6947 = vmul.f32 %v6203, 0.1
    %v6948 = vmul.f32 %v6381, 0.1
    %v6949 = vmul.f32 %v6559, 0.1
    %v6950 = vmul.f32 %v6737, 0.1
    %v6951 = vmul.f32 %v6205, 0.1
    %v6952 = vmul.f32 %v6383, 0.1
    %v6953 = vmul.f32 %v6561, 0.1
    %v6954 = vmul.f32 %v6739, 0.1
    %v6955 = vmul.f32 %v6208, 0.1
    %v6956 = vmul.f32 %v6386, 0.1
    %v6957 = vmul.f32 %v6564, 0.1
    %v6958 = vmul.f32 %v6742, 0.1
    %v6959 = vmul.f32 %v6210, 0.1
    %v6960 = vmul.f32 %v6388, 0.1
    %v6961 = vmul.f32 %v6566, 0.1
    %v6962 = vmul.f32 %v6744, 0.1
    %v6963 = vmul.f32 %v6213, 0.1
    %v6964 = vmul.f32 %v6391, 0.1
    %v6965 = vmul.f32 %v6569, 0.1
    %v6966 = vmul.f32 %v6747, 0.1
    %v6967 = vmul.f32 %v6215, 0.1
    %v6968 = vmul.f32 %v6393, 0.1
    %v6969 = vmul.f32 %v6571, 0.1
    %v6970 = vmul.f32 %v6749, 0.1
    %v6971 = vmul.f32 %v6218, 0.1
    %v6972 = vmul.f32 %v6396, 0.1
    %v6973 = vmul.f32 %v6574, 0.1
    %v6974 = vmul.f32 %v6752, 0.1
    %v6975 = vmul.f32 %v6220, 0.1
    %v6976 = vmul.f32 %v6398, 0.1
    %v6977 = vmul.f32 %v6576, 0.1
    %v6978 = vmul.f32 %v6754, 0.1
    %v6979 = vmul.f32 %v6223, 0.1
    %v6980 = vmul.f32 %v6401, 0.1
    %v6981 = vmul.f32 %v6579, 0.1
    %v6982 = vmul.f32 %v6757, 0.1
    %v6983 = vmul.f32 %v6225, 0.1
    %v6984 = vmul.f32 %v6403, 0.1
    %v6985 = vmul.f32 %v6581, 0.1
    %v6986 = vmul.f32 %v6759, 0.1
    %v6987 = vmul.f32 %v6228, 0.1
    %v6988 = vmul.f32 %v6406, 0.1
    %v6989 = vmul.f32 %v6584, 0.1
    %v6990 = vmul.f32 %v6762, 0.1
    %v6991 = vmul.f32 %v6230, 0.1
    %v6992 = vmul.f32 %v6408, 0.1
    %v6993 = vmul.f32 %v6586, 0.1
    %v6994 = vmul.f32 %v6764, 0.1
    %v6995 = vmul.f32 %v6233, 0.1
    %v6996 = vmul.f32 %v6411, 0.1
    %v6997 = vmul.f32 %v6589, 0.1
    %v6998 = vmul.f32 %v6767, 0.1
    %v6999 = vmul.f32 %v6235, 0.1
    %v7000 = vmul.f32 %v6413, 0.1
    %v7001 = vmul.f32 %v6591, 0.1
    %v7002 = vmul.f32 %v6769, 0.1
    %v7003 = vmul.f32 %v6238, 0.1
    %v7004 = vmul.f32 %v6416, 0.1
    %v7005 = vmul.f32 %v6594, 0.1
    %v7006 = vmul.f32 %v6772, 0.1
    %v7007 = vmul.f32 %v6240, 0.1
    %v7008 = vmul.f32 %v6418, 0.1
    %v7009 = vmul.f32 %v6596, 0.1
    %v7010 = vmul.f32 %v6774, 0.1
    %v7011 = vmul.f32 %v6243, 0.1
    %v7012 = vmul.f32 %v6421, 0.1
    %v7013 = vmul.f32 %v6599, 0.1
    %v7014 = vmul.f32 %v6777, 0.1
    %v7015 = vmul.f32 %v6245, 0.1
    %v7016 = vmul.f32 %v6423, 0.1
    %v7017 = vmul.f32 %v6601, 0.1
    %v7018 = vmul.f32 %v6779, 0.1
    %v7019 = vmul.f32 %v6248, 0.1
    %v7020 = vmul.f32 %v6426, 0.1
    %v7021 = vmul.f32 %v6604, 0.1
    %v7022 = vmul.f32 %v6782, 0.1
    %v7023 = vmul.f32 %v6250, 0.1
    %v7024 = vmul.f32 %v6428, 0.1
    %v7025 = vmul.f32 %v6606, 0.1
    %v7026 = vmul.f32 %v6784, 0.1
    %v7027 = vmul.f32 %v6253, 0.1
    %v7028 = vmul.f32 %v6431, 0.1
    %v7029 = vmul.f32 %v6609, 0.1
    %v7030 = vmul.f32 %v6787, 0.1
    %v7031 = vmul.f32 %v6255, 0.1
    %v7032 = vmul.f32 %v6433, 0.1
    %v7033 = vmul.f32 %v6611, 0.1
    %v7034 = vmul.f32 %v6789, 0.1
    %v7035 = vmul.f32 %v6258, 0.1
    %v7036 = vmul.f32 %v6436, 0.1
    %v7037 = vmul.f32 %v6614, 0.1
    %v7038 = vmul.f32 %v6792, 0.1
    %v7039 = vmul.f32 %v6260, 0.1
    %v7040 = vmul.f32 %v6438, 0.1
    %v7041 = vmul.f32 %v6616, 0.1
    %v7042 = vmul.f32 %v6794, 0.1
    %v7043 = vmul.f32 %v6263, 0.1
    %v7044 = vmul.f32 %v6441, 0.1
    %v7045 = vmul.f32 %v6619, 0.1
    %v7046 = vmul.f32 %v6797, 0.1
    %v7047 = vmul.f32 %v6265, 0.1
    %v7048 = vmul.f32 %v6443, 0.1
    %v7049 = vmul.f32 %v6621, 0.1
    %v7050 = vmul.f32 %v6799, 0.1
    %v7051 = vmul.f32 %v6268, 0.1
    %v7052 = vmul.f32 %v6446, 0.1
    %v7053 = vmul.f32 %v6624, 0.1
    %v7054 = vmul.f32 %v6802, 0.1
    %v7055 = vmul.f32 %v6270, 0.1
    %v7056 = vmul.f32 %v6448, 0.1
    %v7057 = vmul.f32 %v6626, 0.1
    %v7058 = vmul.f32 %v6804, 0.1
    %v7059 = vmul.f32 %v6273, 0.1
    %v7060 = vmul.f32 %v6451, 0.1
    %v7061 = vmul.f32 %v6629, 0.1
    %v7062 = vmul.f32 %v6807, 0.1
    %v7063 = vmul.f32 %v6275, 0.1
    %v7064 = vmul.f32 %v6453, 0.1
    %v7065 = vmul.f32 %v6631, 0.1
    %v7066 = vmul.f32 %v6809, 0.1
    %v7067 = vsel %vm6811, %v6198, %v6939
    %v7068 = vsel %vm6812, %v6376, %v6940
    %v7069 = vsel %vm6813, %v6554, %v6941
    %v7070 = vsel %vm6814, %v6732, %v6942
    %v7071 = vsel %vm6815, %v6200, %v6943
    %v7072 = vsel %vm6816, %v6378, %v6944
    %v7073 = vsel %vm6817, %v6556, %v6945
    %v7074 = vsel %vm6818, %v6734, %v6946
    %v7075 = vsel %vm6819, %v6203, %v6947
    %v7076 = vsel %vm6820, %v6381, %v6948
    %v7077 = vsel %vm6821, %v6559, %v6949
    %v7078 = vsel %vm6822, %v6737, %v6950
    %v7079 = vsel %vm6823, %v6205, %v6951
    %v7080 = vsel %vm6824, %v6383, %v6952
    %v7081 = vsel %vm6825, %v6561, %v6953
    %v7082 = vsel %vm6826, %v6739, %v6954
    %v7083 = vsel %vm6827, %v6208, %v6955
    %v7084 = vsel %vm6828, %v6386, %v6956
    %v7085 = vsel %vm6829, %v6564, %v6957
    %v7086 = vsel %vm6830, %v6742, %v6958
    %v7087 = vsel %vm6831, %v6210, %v6959
    %v7088 = vsel %vm6832, %v6388, %v6960
    %v7089 = vsel %vm6833, %v6566, %v6961
    %v7090 = vsel %vm6834, %v6744, %v6962
    %v7091 = vsel %vm6835, %v6213, %v6963
    %v7092 = vsel %vm6836, %v6391, %v6964
    %v7093 = vsel %vm6837, %v6569, %v6965
    %v7094 = vsel %vm6838, %v6747, %v6966
    %v7095 = vsel %vm6839, %v6215, %v6967
    %v7096 = vsel %vm6840, %v6393, %v6968
    %v7097 = vsel %vm6841, %v6571, %v6969
    %v7098 = vsel %vm6842, %v6749, %v6970
    %v7099 = vsel %vm6843, %v6218, %v6971
    %v7100 = vsel %vm6844, %v6396, %v6972
    %v7101 = vsel %vm6845, %v6574, %v6973
    %v7102 = vsel %vm6846, %v6752, %v6974
    %v7103 = vsel %vm6847, %v6220, %v6975
    %v7104 = vsel %vm6848, %v6398, %v6976
    %v7105 = vsel %vm6849, %v6576, %v6977
    %v7106 = vsel %vm6850, %v6754, %v6978
    %v7107 = vsel %vm6851, %v6223, %v6979
    %v7108 = vsel %vm6852, %v6401, %v6980
    %v7109 = vsel %vm6853, %v6579, %v6981
    %v7110 = vsel %vm6854, %v6757, %v6982
    %v7111 = vsel %vm6855, %v6225, %v6983
    %v7112 = vsel %vm6856, %v6403, %v6984
    %v7113 = vsel %vm6857, %v6581, %v6985
    %v7114 = vsel %vm6858, %v6759, %v6986
    %v7115 = vsel %vm6859, %v6228, %v6987
    %v7116 = vsel %vm6860, %v6406, %v6988
    %v7117 = vsel %vm6861, %v6584, %v6989
    %v7118 = vsel %vm6862, %v6762, %v6990
    %v7119 = vsel %vm6863, %v6230, %v6991
    %v7120 = vsel %vm6864, %v6408, %v6992
    %v7121 = vsel %vm6865, %v6586, %v6993
    %v7122 = vsel %vm6866, %v6764, %v6994
    %v7123 = vsel %vm6867, %v6233, %v6995
    %v7124 = vsel %vm6868, %v6411, %v6996
    %v7125 = vsel %vm6869, %v6589, %v6997
    %v7126 = vsel %vm6870, %v6767, %v6998
    %v7127 = vsel %vm6871, %v6235, %v6999
    %v7128 = vsel %vm6872, %v6413, %v7000
    %v7129 = vsel %vm6873, %v6591, %v7001
    %v7130 = vsel %vm6874, %v6769, %v7002
    %v7131 = vsel %vm6875, %v6238, %v7003
    %v7132 = vsel %vm6876, %v6416, %v7004
    %v7133 = vsel %vm6877, %v6594, %v7005
    %v7134 = vsel %vm6878, %v6772, %v7006
    %v7135 = vsel %vm6879, %v6240, %v7007
    %v7136 = vsel %vm6880, %v6418, %v7008
    %v7137 = vsel %vm6881, %v6596, %v7009
    %v7138 = vsel %vm6882, %v6774, %v7010
    %v7139 = vsel %vm6883, %v6243, %v7011
    %v7140 = vsel %vm6884, %v6421, %v7012
    %v7141 = vsel %vm6885, %v6599, %v7013
    %v7142 = vsel %vm6886, %v6777, %v7014
    %v7143 = vsel %vm6887, %v6245, %v7015
    %v7144 = vsel %vm6888, %v6423, %v7016
    %v7145 = vsel %vm6889, %v6601, %v7017
    %v7146 = vsel %vm6890, %v6779, %v7018
    %v7147 = vsel %vm6891, %v6248, %v7019
    %v7148 = vsel %vm6892, %v6426, %v7020
    %v7149 = vsel %vm6893, %v6604, %v7021
    %v7150 = vsel %vm6894, %v6782, %v7022
    %v7151 = vsel %vm6895, %v6250, %v7023
    %v7152 = vsel %vm6896, %v6428, %v7024
    %v7153 = vsel %vm6897, %v6606, %v7025
    %v7154 = vsel %vm6898, %v6784, %v7026
    %v7155 = vsel %vm6899, %v6253, %v7027
    %v7156 = vsel %vm6900, %v6431, %v7028
    %v7157 = vsel %vm6901, %v6609, %v7029
    %v7158 = vsel %vm6902, %v6787, %v7030
    %v7159 = vsel %vm6903, %v6255, %v7031
    %v7160 = vsel %vm6904, %v6433, %v7032
    %v7161 = vsel %vm6905, %v6611, %v7033
    %v7162 = vsel %vm6906, %v6789, %v7034
    %v7163 = vsel %vm6907, %v6258, %v7035
    %v7164 = vsel %vm6908, %v6436, %v7036
    %v7165 = vsel %vm6909, %v6614, %v7037
    %v7166 = vsel %vm6910, %v6792, %v7038
    %v7167 = vsel %vm6911, %v6260, %v7039
    %v7168 = vsel %vm6912, %v6438, %v7040
    %v7169 = vsel %vm6913, %v6616, %v7041
    %v7170 = vsel %vm6914, %v6794, %v7042
    %v7171 = vsel %vm6915, %v6263, %v7043
    %v7172 = vsel %vm6916, %v6441, %v7044
    %v7173 = vsel %vm6917, %v6619, %v7045
    %v7174 = vsel %vm6918, %v6797, %v7046
    %v7175 = vsel %vm6919, %v6265, %v7047
    %v7176 = vsel %vm6920, %v6443, %v7048
    %v7177 = vsel %vm6921, %v6621, %v7049
    %v7178 = vsel %vm6922, %v6799, %v7050
    %v7179 = vsel %vm6923, %v6268, %v7051
    %v7180 = vsel %vm6924, %v6446, %v7052
    %v7181 = vsel %vm6925, %v6624, %v7053
    %v7182 = vsel %vm6926, %v6802, %v7054
    %v7183 = vsel %vm6927, %v6270, %v7055
    %v7184 = vsel %vm6928, %v6448, %v7056
    %v7185 = vsel %vm6929, %v6626, %v7057
    %v7186 = vsel %vm6930, %v6804, %v7058
    %v7187 = vsel %vm6931, %v6273, %v7059
    %v7188 = vsel %vm6932, %v6451, %v7060
    %v7189 = vsel %vm6933, %v6629, %v7061
    %v7190 = vsel %vm6934, %v6807, %v7062
    %v7191 = vsel %vm6935, %v6275, %v7063
    %v7192 = vsel %vm6936, %v6453, %v7064
    %v7193 = vsel %vm6937, %v6631, %v7065
    %v7194 = vsel %vm6938, %v6809, %v7066
    %v7195 = vadd.f32 %v7067, %v7071
    %v7196 = vadd.f32 %v7195, %v7075
    %v7197 = vadd.f32 %v7196, %v7079
    %v7198 = vadd.f32 %v7197, %v7083
    %v7199 = vadd.f32 %v7198, %v7087
    %v7200 = vadd.f32 %v7199, %v7091
    %v7201 = vadd.f32 %v7200, %v7095
    %v7202 = vrot.slane %v7201, 4
    %v7203 = vadd.f32 %v7201, %v7202
    %v7204 = vrot.slane %v7203, 2
    %v7205 = vadd.f32 %v7203, %v7204
    %v7206 = vrot.slane %v7205, 1
    %v7207 = vadd.f32 %v7205, %v7206
    %v7208 = vadd.f32 %v7068, %v7072
    %v7209 = vadd.f32 %v7208, %v7076
    %v7210 = vadd.f32 %v7209, %v7080
    %v7211 = vadd.f32 %v7210, %v7084
    %v7212 = vadd.f32 %v7211, %v7088
    %v7213 = vadd.f32 %v7212, %v7092
    %v7214 = vadd.f32 %v7213, %v7096
    %v7215 = vrot.slane %v7214, 4
    %v7216 = vadd.f32 %v7214, %v7215
    %v7217 = vrot.slane %v7216, 2
    %v7218 = vadd.f32 %v7216, %v7217
    %v7219 = vrot.slane %v7218, 1
    %v7220 = vadd.f32 %v7218, %v7219
    %v7221 = vadd.f32 %v7069, %v7073
    %v7222 = vadd.f32 %v7221, %v7077
    %v7223 = vadd.f32 %v7222, %v7081
    %v7224 = vadd.f32 %v7223, %v7085
    %v7225 = vadd.f32 %v7224, %v7089
    %v7226 = vadd.f32 %v7225, %v7093
    %v7227 = vadd.f32 %v7226, %v7097
    %v7228 = vrot.slane %v7227, 4
    %v7229 = vadd.f32 %v7227, %v7228
    %v7230 = vrot.slane %v7229, 2
    %v7231 = vadd.f32 %v7229, %v7230
    %v7232 = vrot.slane %v7231, 1
    %v7233 = vadd.f32 %v7231, %v7232
    %v7234 = vadd.f32 %v7070, %v7074
    %v7235 = vadd.f32 %v7234, %v7078
    %v7236 = vadd.f32 %v7235, %v7082
    %v7237 = vadd.f32 %v7236, %v7086
    %v7238 = vadd.f32 %v7237, %v7090
    %v7239 = vadd.f32 %v7238, %v7094
    %v7240 = vadd.f32 %v7239, %v7098
    %v7241 = vrot.slane %v7240, 4
    %v7242 = vadd.f32 %v7240, %v7241
    %v7243 = vrot.slane %v7242, 2
    %v7244 = vadd.f32 %v7242, %v7243
    %v7245 = vrot.slane %v7244, 1
    %v7246 = vadd.f32 %v7244, %v7245
    %v7247 = vadd.f32 %v7099, %v7103
    %v7248 = vadd.f32 %v7247, %v7107
    %v7249 = vadd.f32 %v7248, %v7111
    %v7250 = vadd.f32 %v7249, %v7115
    %v7251 = vadd.f32 %v7250, %v7119
    %v7252 = vadd.f32 %v7251, %v7123
    %v7253 = vadd.f32 %v7252, %v7127
    %v7254 = vrot.slane %v7253, 4
    %v7255 = vadd.f32 %v7253, %v7254
    %v7256 = vrot.slane %v7255, 2
    %v7257 = vadd.f32 %v7255, %v7256
    %v7258 = vrot.slane %v7257, 1
    %v7259 = vadd.f32 %v7257, %v7258
    %v7260 = vadd.f32 %v7100, %v7104
    %v7261 = vadd.f32 %v7260, %v7108
    %v7262 = vadd.f32 %v7261, %v7112
    %v7263 = vadd.f32 %v7262, %v7116
    %v7264 = vadd.f32 %v7263, %v7120
    %v7265 = vadd.f32 %v7264, %v7124
    %v7266 = vadd.f32 %v7265, %v7128
    %v7267 = vrot.slane %v7266, 4
    %v7268 = vadd.f32 %v7266, %v7267
    %v7269 = vrot.slane %v7268, 2
    %v7270 = vadd.f32 %v7268, %v7269
    %v7271 = vrot.slane %v7270, 1
    %v7272 = vadd.f32 %v7270, %v7271
    %v7273 = vadd.f32 %v7101, %v7105
    %v7274 = vadd.f32 %v7273, %v7109
    %v7275 = vadd.f32 %v7274, %v7113
    %v7276 = vadd.f32 %v7275, %v7117
    %v7277 = vadd.f32 %v7276, %v7121
    %v7278 = vadd.f32 %v7277, %v7125
    %v7279 = vadd.f32 %v7278, %v7129
    %v7280 = vrot.slane %v7279, 4
    %v7281 = vadd.f32 %v7279, %v7280
    %v7282 = vrot.slane %v7281, 2
    %v7283 = vadd.f32 %v7281, %v7282
    %v7284 = vrot.slane %v7283, 1
    %v7285 = vadd.f32 %v7283, %v7284
    %v7286 = vadd.f32 %v7102, %v7106
    %v7287 = vadd.f32 %v7286, %v7110
    %v7288 = vadd.f32 %v7287, %v7114
    %v7289 = vadd.f32 %v7288, %v7118
    %v7290 = vadd.f32 %v7289, %v7122
    %v7291 = vadd.f32 %v7290, %v7126
    %v7292 = vadd.f32 %v7291, %v7130
    %v7293 = vrot.slane %v7292, 4
    %v7294 = vadd.f32 %v7292, %v7293
    %v7295 = vrot.slane %v7294, 2
    %v7296 = vadd.f32 %v7294, %v7295
    %v7297 = vrot.slane %v7296, 1
    %v7298 = vadd.f32 %v7296, %v7297
    %v7299 = vadd.f32 %v7131, %v7135
    %v7300 = vadd.f32 %v7299, %v7139
    %v7301 = vadd.f32 %v7300, %v7143
    %v7302 = vadd.f32 %v7301, %v7147
    %v7303 = vadd.f32 %v7302, %v7151
    %v7304 = vadd.f32 %v7303, %v7155
    %v7305 = vadd.f32 %v7304, %v7159
    %v7306 = vrot.slane %v7305, 4
    %v7307 = vadd.f32 %v7305, %v7306
    %v7308 = vrot.slane %v7307, 2
    %v7309 = vadd.f32 %v7307, %v7308
    %v7310 = vrot.slane %v7309, 1
    %v7311 = vadd.f32 %v7309, %v7310
    %v7312 = vadd.f32 %v7132, %v7136
    %v7313 = vadd.f32 %v7312, %v7140
    %v7314 = vadd.f32 %v7313, %v7144
    %v7315 = vadd.f32 %v7314, %v7148
    %v7316 = vadd.f32 %v7315, %v7152
    %v7317 = vadd.f32 %v7316, %v7156
    %v7318 = vadd.f32 %v7317, %v7160
    %v7319 = vrot.slane %v7318, 4
    %v7320 = vadd.f32 %v7318, %v7319
    %v7321 = vrot.slane %v7320, 2
    %v7322 = vadd.f32 %v7320, %v7321
    %v7323 = vrot.slane %v7322, 1
    %v7324 = vadd.f32 %v7322, %v7323
    %v7325 = vadd.f32 %v7133, %v7137
    %v7326 = vadd.f32 %v7325, %v7141
    %v7327 = vadd.f32 %v7326, %v7145
    %v7328 = vadd.f32 %v7327, %v7149
    %v7329 = vadd.f32 %v7328, %v7153
    %v7330 = vadd.f32 %v7329, %v7157
    %v7331 = vadd.f32 %v7330, %v7161
    %v7332 = vrot.slane %v7331, 4
    %v7333 = vadd.f32 %v7331, %v7332
    %v7334 = vrot.slane %v7333, 2
    %v7335 = vadd.f32 %v7333, %v7334
    %v7336 = vrot.slane %v7335, 1
    %v7337 = vadd.f32 %v7335, %v7336
    %v7338 = vadd.f32 %v7134, %v7138
    %v7339 = vadd.f32 %v7338, %v7142
    %v7340 = vadd.f32 %v7339, %v7146
    %v7341 = vadd.f32 %v7340, %v7150
    %v7342 = vadd.f32 %v7341, %v7154
    %v7343 = vadd.f32 %v7342, %v7158
    %v7344 = vadd.f32 %v7343, %v7162
    %v7345 = vrot.slane %v7344, 4
    %v7346 = vadd.f32 %v7344, %v7345
    %v7347 = vrot.slane %v7346, 2
    %v7348 = vadd.f32 %v7346, %v7347
    %v7349 = vrot.slane %v7348, 1
    %v7350 = vadd.f32 %v7348, %v7349
    %v7351 = vadd.f32 %v7163, %v7167
    %v7352 = vadd.f32 %v7351, %v7171
    %v7353 = vadd.f32 %v7352, %v7175
    %v7354 = vadd.f32 %v7353, %v7179
    %v7355 = vadd.f32 %v7354, %v7183
    %v7356 = vadd.f32 %v7355, %v7187
    %v7357 = vadd.f32 %v7356, %v7191
    %v7358 = vrot.slane %v7357, 4
    %v7359 = vadd.f32 %v7357, %v7358
    %v7360 = vrot.slane %v7359, 2
    %v7361 = vadd.f32 %v7359, %v7360
    %v7362 = vrot.slane %v7361, 1
    %v7363 = vadd.f32 %v7361, %v7362
    %v7364 = vadd.f32 %v7164, %v7168
    %v7365 = vadd.f32 %v7364, %v7172
    %v7366 = vadd.f32 %v7365, %v7176
    %v7367 = vadd.f32 %v7366, %v7180
    %v7368 = vadd.f32 %v7367, %v7184
    %v7369 = vadd.f32 %v7368, %v7188
    %v7370 = vadd.f32 %v7369, %v7192
    %v7371 = vrot.slane %v7370, 4
    %v7372 = vadd.f32 %v7370, %v7371
    %v7373 = vrot.slane %v7372, 2
    %v7374 = vadd.f32 %v7372, %v7373
    %v7375 = vrot.slane %v7374, 1
    %v7376 = vadd.f32 %v7374, %v7375
    %v7377 = vadd.f32 %v7165, %v7169
    %v7378 = vadd.f32 %v7377, %v7173
    %v7379 = vadd.f32 %v7378, %v7177
    %v7380 = vadd.f32 %v7379, %v7181
    %v7381 = vadd.f32 %v7380, %v7185
    %v7382 = vadd.f32 %v7381, %v7189
    %v7383 = vadd.f32 %v7382, %v7193
    %v7384 = vrot.slane %v7383, 4
    %v7385 = vadd.f32 %v7383, %v7384
    %v7386 = vrot.slane %v7385, 2
    %v7387 = vadd.f32 %v7385, %v7386
    %v7388 = vrot.slane %v7387, 1
    %v7389 = vadd.f32 %v7387, %v7388
    %v7390 = vadd.f32 %v7166, %v7170
    %v7391 = vadd.f32 %v7390, %v7174
    %v7392 = vadd.f32 %v7391, %v7178
    %v7393 = vadd.f32 %v7392, %v7182
    %v7394 = vadd.f32 %v7393, %v7186
    %v7395 = vadd.f32 %v7394, %v7190
    %v7396 = vadd.f32 %v7395, %v7194
    %v7397 = vrot.slane %v7396, 4
    %v7398 = vadd.f32 %v7396, %v7397
    %v7399 = vrot.slane %v7398, 2
    %v7400 = vadd.f32 %v7398, %v7399
    %v7401 = vrot.slane %v7400, 1
    %v7402 = vadd.f32 %v7400, %v7401
    %p7403 = scmp.eq.s32.totalorder 0, 0
    // Predicated region
    $region54: #{tpu_custom_call.1} parent=1 // pred_check
      %p7404 = pneg %p7403
    $region55: #{tpu_custom_call.1} parent=1 // pred_check_branch
      %7406 = sbr.rel (%p7404) target = $region57
    $region56: #{tpu_custom_call.1} parent=1 // pred_region
      %7407 = vst [vmem:[#allocation2] sm:$0xff] 0.0
      %7408 = vst [vmem:[#allocation2 + $0x8] sm:$0xff] 0.0
    $region57: #{tpu_custom_call.1} parent=1 // pred_fallthru
      _
    %v7409 = vld [vmem:[#allocation2] sm:$0xff]
    %v7410 = vld [vmem:[#allocation2 + $0x8] sm:$0xff]
    %v7427 = vrot.slane %v7220, 4
    %v7428 = vrot.slane %v7246, 4
    %v7429 = vrot.slane %v7272, 4
    %v7430 = vrot.slane %v7298, 4
    %v7431 = vrot.slane %v7324, 4
    %v7432 = vrot.slane %v7350, 4
    %v7433 = vrot.slane %v7376, 4
    %v7434 = vrot.slane %v7402, 4
    %vm7435 = vcmask 1043456
    %v7436 = vsel %vm7435, %v7207, %v7427
    %v7437 = vsel %vm7435, %v7233, %v7428
    %v7438 = vsel %vm7435, %v7259, %v7429
    %v7439 = vsel %vm7435, %v7285, %v7430
    %v7440 = vsel %vm7435, %v7311, %v7431
    %v7441 = vsel %vm7435, %v7337, %v7432
    %v7442 = vsel %vm7435, %v7363, %v7433
    %v7443 = vsel %vm7435, %v7389, %v7434
    %v7444 = vrot.slane %v7438, 7
    %v7445 = vsel %vm4681, %v7444, %v7436
    %v7446 = vsel %vm4689, %v7444, %v7445
    %v7447 = vrot.slane %v7440, 6
    %v7448 = vsel %vm4683, %v7447, %v7446
    %v7449 = vsel %vm4691, %v7447, %v7448
    %v7450 = vrot.slane %v7442, 5
    %v7451 = vsel %vm4685, %v7450, %v7449
    %v7452 = vsel %vm4693, %v7450, %v7451
    %v7453 = vrot.slane %v7439, 7
    %v7454 = vsel %vm4681, %v7453, %v7437
    %v7455 = vsel %vm4689, %v7453, %v7454
    %v7456 = vrot.slane %v7441, 6
    %v7457 = vsel %vm4683, %v7456, %v7455
    %v7458 = vsel %vm4691, %v7456, %v7457
    %v7459 = vrot.slane %v7443, 5
    %v7460 = vsel %vm4685, %v7459, %v7458
    %v7461 = vsel %vm4693, %v7459, %v7460
    %v7464 = vadd.f32 %v7409, %v7452
    %v7465 = vadd.f32 %v7410, %v7461
    %7466 = vst [vmem:[#allocation2] sm:$0xff] %v7464
    %7467 = vst [vmem:[#allocation2 + $0x8] sm:$0xff] %v7465
    // Predicated region
    $region58: #{tpu_custom_call.1} parent=1 // pred_check
      %p7468 = pneg %p7403
    $region59: #{tpu_custom_call.1} parent=1 // pred_check_branch
      %7470 = sbr.rel (%p7468) target = $region61
    $region60: #{tpu_custom_call.1} parent=1 // pred_region
      %v7471 = vld [vmem:[#allocation2] sm:$0xff]
      %v7472 = vld [vmem:[#allocation2 + $0x8] sm:$0xff]
      %v7473 = vmul.f32 %v7471, 0.015625
      %v7474 = vmul.f32 %v7472, 0.015625
      %7475 = vst [vmem:[#allocation11] sm:$0xff] %v7473
      %7476 = vst [vmem:[#allocation11 + $0x8] sm:$0xff] %v7474
    $region61: #{tpu_custom_call.1} parent=1 // pred_fallthru
      _
    // Predicated region
    $region62: #{tpu_custom_call.1} parent=1 // pred_check
      _
    $region63: #{tpu_custom_call.1} parent=1 // pred_check_branch
      %7478 = sbr.rel (0) target = $region65
    $region64: #{tpu_custom_call.1} parent=1 // pred_region
      %7480 = vsyncadd [#allocation5], 0
      %s7482 = sshll.u32 [#allocation11], 4
      %s7483 = int_to_ptr.vmem [resolvable:$true] %s7482
      %s7484 = sshll.u32 %s9, 4
      %s7485 = int_to_ptr.hbm [resolvable:$true] %s7484
      %7487 = dma.vmem_to_hbm [thread:$0]  %s7483, 256, %s7485, [#allocation5]
    $region65: #{tpu_custom_call.1} parent=1 // pred_fallthru
      _
    // Predicated region
    $region66: #{tpu_custom_call.1} parent=1 // pred_check
      _
    $region67: #{tpu_custom_call.1} parent=1 // pred_check_branch
      %7489 = sbr.rel (0) target = $region69
    $region68: #{tpu_custom_call.1} parent=1 // pred_region
      %7491 = dma.done [#allocation5], 256
    $region69: #{tpu_custom_call.1} parent=1 // pred_fallthru
      _
    %7492 = vsyncpa [#allocation4], 1
    %7493 = vsyncpa [#allocation7], 1
    %7494 = vsyncpa [#allocation10], 1
    %7495 = vsyncpa [#allocation5], 1

</llo_original>
